<compile_context>
chip_gen: v5e
topology: v5e:2x2
jax: 0.10.0
libtpu: 0.0.40
codegen_flags: <defaults>
</compile_context>

<pallas_src>
import functools
import math

import jax
import jax.numpy as jnp
from jax.experimental import pallas as pl
from jax.experimental.pallas import tpu as pltpu


def _decoder_kernel(params_ref, grids_ref, *refs, use_noise: bool):
    if use_noise:
        nz_ref, nu_ref, out_ref = refs
    else:
        (out_ref,) = refs

    G = grids_ref[...]                  # (8, N) image-constant grids
    xx, yy = G[0:1, :], G[1:2, :]       # row / col index
    r, theta = G[2:3, :], G[3:4, :]
    yys = G[4:5, :]                     # yy * pi / H
    xxc, yyc = G[5:6, :], G[6:7, :]     # xx - c, yy - c
    xy = G[7:8, :]                      # xx + yy

    P = params_ref[...]                 # (TB, 19) per-image precomputed scalars
    p = lambda k: P[:, k:k + 1]         # (TB, 1); lane-broadcasts against (TB, N)

    # 1) filled circle: clamp(w0*6 - r, 0, 1)
    img = jnp.clip(p(0) - r, 0.0, 1.0)

    # 2) centered square (+0.5); lo/hi = c -/+ half precomputed
    lo, hi = p(1), p(2)
    sq = (xx >= lo) & (xx < hi) & (yy >= lo) & (yy < hi)
    img = img + 0.5 * sq.astype(jnp.float32)

    # 3) sinusoids (per-image coefficients folded in the wrapper)
    img = img + 0.5 * jnp.sin(p(3) * xx)          # sin(w2*2pi*xx/H)
    img = img + 0.5 * jnp.sin(p(4) * yy)          # sin(w3*2pi*yy/H)
    img = img + 0.5 * jnp.sin(p(5) * xy)          # sin(w4*pi*(xx+yy)/(2H))
    img = img + 0.5 * jnp.sin(yys + p(6))         # sin((yy + 10*w5)*pi/H)

    # 4) global bias
    img = img + p(7)

    # 5) gaussian blob: exp(-((xx-bx)^2 + (yy-by)^2) / (2*sigma^2))
    dx = xx - p(8)
    dy = yy - p(8)
    img = img + jnp.exp((dx * dx + dy * dy) * p(9))   # p(9) = -1/(2*sigma^2)

    # 6) ring
    d = r - p(10)
    img = img + (d * d < 10.0).astype(jnp.float32)

    # 7) checkerboard.  floor(x * (1/cb) + 1e-4) == floor(x / cb) exactly here:
    # x <= 31 and cb in [2, 16] integer, so rounding error of x*(1/cb) is < 4e-6
    # while non-integer quotients are >= 1/16 away from the next integer; the
    # 1e-4 nudge only repairs the exact-multiple case.
    inv_cb = p(11)
    s = jnp.floor(xx * inv_cb + 1e-4) + jnp.floor(yy * inv_cb + 1e-4)
    parity = s - 2.0 * jnp.floor(s * 0.5)             # s % 2, s >= 0 integer
    img = img + parity * 0.3

    # 8) rotated line (cos/sin of the per-image angle precomputed)
    rot = p(12) * xxc + p(13) * yyc
    img = img + (jnp.abs(rot) < 3.0).astype(jnp.float32) * 0.6

    # 9) angular sinusoid
    img = img + 0.5 * jnp.sin(theta * p(14))          # p(14) = 4*w11

    # 10) noise (host-generated standard normal and U[0,1))
    if use_noise:
        img = img + nz_ref[...] * p(15)               # 0.2*w12
        img = img + (nu_ref[...] - 0.5) * p(16)       # 0.2*w13

    # 11+12) contrast and conditional invert folded into one per-image affine
    img = img * p(17) + p(18)

    # 13) per-image min-max normalization (reduction over the lane axis)
    imin = jnp.min(img, axis=1, keepdims=True)
    imax = jnp.max(img, axis=1, keepdims=True)
    inv = 1.0 / (imax - imin + 1e-8)                  # one divide per image
    out_ref[...] = (img - imin) * inv


def _per_image_params(W, image_size):
    """Hoist all per-image scalar math out of the kernel.  W: (B, 16) f32."""
    H = float(image_size)
    c = float(image_size // 2)
    pi = math.pi
    w = [W[:, k] for k in range(16)]

    c0 = w[0] * 6.0
    half = jnp.floor(jnp.clip(jnp.abs(w[1]) * 8.0 + 2.0, 2.0, 12.0))
    lo, hi = c - half, c + half
    a2 = w[2] * (2.0 * pi / H)
    a3 = w[3] * (2.0 * pi / H)
    a4 = w[4] * (pi / (2.0 * H))
    phase5 = w[5] * (10.0 * pi / H)
    bias6 = w[6]
    bx = c + jnp.trunc(w[7] * 5.0)                    # int() truncates toward 0
    sigma = 4.0 + jnp.abs(w[7]) * 5.0
    ninv = -1.0 / (2.0 * sigma * sigma)
    rw = w[8] * 10.0
    cb = jnp.floor(jnp.clip(jnp.abs(w[9]) * 8.0 + 2.0, 2.0, 16.0))
    inv_cb = 1.0 / cb
    angle = w[10] * pi
    ca, sa = jnp.cos(angle), jnp.sin(angle)
    a11 = w[11] * 4.0
    c12 = 0.2 * w[12]
    c13 = 0.2 * w[13]
    k14 = 1.0 + w[14]
    invert = w[15] > 0.0                              # "if w[15] > 0: img = 1 - img"
    scale15 = jnp.where(invert, -k14, k14)
    off15 = jnp.where(invert, 0.5 + 0.5 * k14, 0.5 - 0.5 * k14)

    return jnp.stack([c0, lo, hi, a2, a3, a4, phase5, bias6, bx, ninv, rw,
                      inv_cb, ca, sa, a11, c12, c13, scale15, off15],
                     axis=1).astype(jnp.float32)


def _constant_grids(image_size):
    """Image-independent grids stacked into one (8, H*W) block."""
    H = image_size
    c = float(image_size // 2)
    pi = math.pi
    ar = jnp.arange(H, dtype=jnp.float32)
    xx = jnp.broadcast_to(ar[:, None], (H, H)).reshape(-1)   # row index
    yy = jnp.broadcast_to(ar[None, :], (H, H)).reshape(-1)   # col index
    r = jnp.sqrt((xx - c) ** 2 + (yy - c) ** 2)
    theta = jnp.arctan2(yy - c, xx - c)
    return jnp.stack([xx, yy, r, theta,
                      yy * (pi / float(H)),
                      xx - c, yy - c,
                      xx + yy],
                     axis=0).astype(jnp.float32)


def _round_up(n, m):
    return ((n + m - 1) // m) * m


def image_decoder(W, noise_normal=None, noise_uniform=None, *,
                  image_size=32, use_noise=True, tile_b=128):
    """W: (B, 16) float32 -> images (B, 1, H, W) float32 in [0, 1]."""
    B = W.shape[0]
    H = image_size
    N = H * H

    params = _per_image_params(W.astype(jnp.float32), image_size)   # (B, 19)
    grids = _constant_grids(image_size)                             # (8, N)

    # Batch many images per grid step; tiles stay sublane-aligned (mult. of 8).
    # tile_b=128 keeps the double-buffered VMEM footprint well under the
    # scoped-VMEM defaults on v5e/v6e/v7x.
    tb = min(_round_up(tile_b, 8), _round_up(B, 8))
    B_pad = _round_up(B, tb)
    n_param = params.shape[1]

    def pad_rows(x):
        extra = B_pad - x.shape[0]
        if extra:
            x = jnp.concatenate(
                [x, jnp.zeros((extra,) + x.shape[1:], x.dtype)], axis=0)
        return x

    inputs = [pad_rows(params), grids]
    in_specs = [
        pl.BlockSpec((tb, n_param), lambda i: (i, 0)),
        pl.BlockSpec((8, N), lambda i: (0, 0)),      # constant across grid steps
    ]
    if use_noise:
        # TODO(synk): noise could be generated in-kernel via pltpu.prng_seed /
        # pltpu.prng_random_bits to cut ~2/3 of HBM input traffic; host noise is
        # kept so results match the deterministic host-provided random inputs.
        nz = pad_rows(noise_normal.astype(jnp.float32).reshape(B, N))
        nu = pad_rows(noise_uniform.astype(jnp.float32).reshape(B, N))
        inputs += [nz, nu]
        in_specs += [pl.BlockSpec((tb, N), lambda i: (i, 0)),
                     pl.BlockSpec((tb, N), lambda i: (i, 0))]

    kernel = functools.partial(_decoder_kernel, use_noise=use_noise)

    out = pl.pallas_call(
        kernel,
        out_shape=jax.ShapeDtypeStruct((B_pad, N), jnp.float32),
        grid=(B_pad // tb,),
        in_specs=in_specs,
        out_specs=pl.BlockSpec((tb, N), lambda i: (i, 0)),
        compiler_params=pltpu.CompilerParams(
            # batch axis is fully independent -> shardable over v7x's two TCs
            dimension_semantics=("parallel",),
            vmem_limit_bytes=32 * 1024 * 1024,
        ),
    )(*inputs)

    return out[:B].reshape(B, 1, H, H)


if __name__ == "__main__":
    B = 2
    image_size = 32

    key = jax.random.PRNGKey(0)
    k_w, k_n, k_u = jax.random.split(key, 3)

    # deterministic example inputs
    W = jax.random.normal(k_w, (B, 16), dtype=jnp.float32) * 0.5
    noise_normal = jax.random.normal(k_n, (B, 1, image_size, image_size),
                                     dtype=jnp.float32)
    noise_uniform = jax.random.uniform(k_u, (B, 1, image_size, image_size),
                                       dtype=jnp.float32)

    imgs = image_decoder(W, noise_normal, noise_uniform,
                         image_size=image_size, use_noise=True)
    imgs = jax.block_until_ready(imgs)

    assert imgs.shape == (B, 1, image_size, image_size), imgs.shape
    assert bool(jnp.all(jnp.isfinite(imgs)))
    assert float(jnp.min(imgs)) >= -1e-5 and float(jnp.max(imgs)) <= 1.0 + 1e-5

    print("KERNEL_OK")
</pallas_src>

<mosaic_0001>
module attributes {stable_mosaic.version = 11 : i64} {
  func.func @_decoder_kernel(%arg0: i32, %arg1: memref<8x19xf32, #tpu.memory_space<vmem>>, %arg2: memref<8x1024xf32, #tpu.memory_space<vmem>>, %arg3: memref<8x1024xf32, #tpu.memory_space<vmem>>, %arg4: memref<8x1024xf32, #tpu.memory_space<vmem>>, %arg5: memref<8x1024xf32, #tpu.memory_space<vmem>>) attributes {dimension_semantics = [#tpu.dimension_semantics<parallel>], iteration_bounds = array<i64: 1>, scalar_prefetch = 0 : i64, scratch_operands = 0 : i64, tpu.core_type = #tpu.core_type<tc>, window_params = [{transform_indices = @transform_0, window_bounds = array<i64: 8, 19>}, {pipeline_mode = #tpu.pipeline_mode<synchronous>, transform_indices = @transform_1, window_bounds = array<i64: 8, 1024>}, {transform_indices = @transform_2, window_bounds = array<i64: 8, 1024>}, {transform_indices = @transform_3, window_bounds = array<i64: 8, 1024>}, {transform_indices = @transform_4, window_bounds = array<i64: 8, 1024>}]} {
    %c0 = arith.constant 0 : index
    %c0_0 = arith.constant 0 : index
    %0 = vector.load %arg2[%c0, %c0_0] : memref<8x1024xf32, #tpu.memory_space<vmem>>, vector<8x1024xf32>
    %1 = vector.extract_strided_slice %0 {offsets = [0, 0], sizes = [1, 1024], strides = [1, 1]} : vector<8x1024xf32> to vector<1x1024xf32>
    %2 = vector.extract_strided_slice %0 {offsets = [1, 0], sizes = [1, 1024], strides = [1, 1]} : vector<8x1024xf32> to vector<1x1024xf32>
    %3 = vector.extract_strided_slice %0 {offsets = [2, 0], sizes = [1, 1024], strides = [1, 1]} : vector<8x1024xf32> to vector<1x1024xf32>
    %4 = vector.extract_strided_slice %0 {offsets = [3, 0], sizes = [1, 1024], strides = [1, 1]} : vector<8x1024xf32> to vector<1x1024xf32>
    %5 = vector.extract_strided_slice %0 {offsets = [4, 0], sizes = [1, 1024], strides = [1, 1]} : vector<8x1024xf32> to vector<1x1024xf32>
    %6 = vector.extract_strided_slice %0 {offsets = [5, 0], sizes = [1, 1024], strides = [1, 1]} : vector<8x1024xf32> to vector<1x1024xf32>
    %7 = vector.extract_strided_slice %0 {offsets = [6, 0], sizes = [1, 1024], strides = [1, 1]} : vector<8x1024xf32> to vector<1x1024xf32>
    %8 = vector.extract_strided_slice %0 {offsets = [7, 0], sizes = [1, 1024], strides = [1, 1]} : vector<8x1024xf32> to vector<1x1024xf32>
    %c0_1 = arith.constant 0 : index
    %c0_2 = arith.constant 0 : index
    %9 = vector.load %arg1[%c0_1, %c0_2] : memref<8x19xf32, #tpu.memory_space<vmem>>, vector<8x19xf32>
    %10 = vector.extract_strided_slice %9 {offsets = [0, 0], sizes = [8, 1], strides = [1, 1]} : vector<8x19xf32> to vector<8x1xf32>
    %11 = vector.broadcast %10 : vector<8x1xf32> to vector<8x1024xf32>
    %12 = vector.broadcast %3 : vector<1x1024xf32> to vector<8x1024xf32>
    %13 = arith.subf %11, %12 : vector<8x1024xf32>
    %cst = arith.constant 0.000000e+00 : f32
    %cst_3 = arith.constant 1.000000e+00 : f32
    %14 = vector.broadcast %cst : f32 to vector<8x1024xf32>
    %15 = arith.maximumf %14, %13 : vector<8x1024xf32>
    %16 = vector.broadcast %cst_3 : f32 to vector<8x1024xf32>
    %17 = arith.minimumf %16, %15 : vector<8x1024xf32>
    %18 = vector.extract_strided_slice %9 {offsets = [0, 1], sizes = [8, 1], strides = [1, 1]} : vector<8x19xf32> to vector<8x1xf32>
    %19 = vector.extract_strided_slice %9 {offsets = [0, 2], sizes = [8, 1], strides = [1, 1]} : vector<8x19xf32> to vector<8x1xf32>
    %20 = vector.broadcast %1 : vector<1x1024xf32> to vector<8x1024xf32>
    %21 = vector.broadcast %18 : vector<8x1xf32> to vector<8x1024xf32>
    %22 = arith.cmpf oge, %20, %21 : vector<8x1024xf32>
    %23 = vector.broadcast %1 : vector<1x1024xf32> to vector<8x1024xf32>
    %24 = vector.broadcast %19 : vector<8x1xf32> to vector<8x1024xf32>
    %25 = arith.cmpf olt, %23, %24 : vector<8x1024xf32>
    %26 = arith.andi %22, %25 : vector<8x1024xi1>
    %27 = vector.broadcast %2 : vector<1x1024xf32> to vector<8x1024xf32>
    %28 = vector.broadcast %18 : vector<8x1xf32> to vector<8x1024xf32>
    %29 = arith.cmpf oge, %27, %28 : vector<8x1024xf32>
    %30 = arith.andi %26, %29 : vector<8x1024xi1>
    %31 = vector.broadcast %2 : vector<1x1024xf32> to vector<8x1024xf32>
    %32 = vector.broadcast %19 : vector<8x1xf32> to vector<8x1024xf32>
    %33 = arith.cmpf olt, %31, %32 : vector<8x1024xf32>
    %34 = arith.andi %30, %33 : vector<8x1024xi1>
    %35 = arith.extui %34 : vector<8x1024xi1> to vector<8x1024xi32>
    %36 = arith.sitofp %35 : vector<8x1024xi32> to vector<8x1024xf32>
    %cst_4 = arith.constant 5.000000e-01 : f32
    %37 = vector.broadcast %cst_4 : f32 to vector<8x1024xf32>
    %38 = arith.mulf %37, %36 : vector<8x1024xf32>
    %39 = arith.addf %17, %38 : vector<8x1024xf32>
    %40 = vector.extract_strided_slice %9 {offsets = [0, 3], sizes = [8, 1], strides = [1, 1]} : vector<8x19xf32> to vector<8x1xf32>
    %41 = vector.broadcast %40 : vector<8x1xf32> to vector<8x1024xf32>
    %42 = vector.broadcast %1 : vector<1x1024xf32> to vector<8x1024xf32>
    %43 = arith.mulf %41, %42 : vector<8x1024xf32>
    %44 = math.sin %43 : vector<8x1024xf32>
    %cst_5 = arith.constant 5.000000e-01 : f32
    %45 = vector.broadcast %cst_5 : f32 to vector<8x1024xf32>
    %46 = arith.mulf %45, %44 : vector<8x1024xf32>
    %47 = arith.addf %39, %46 : vector<8x1024xf32>
    %48 = vector.extract_strided_slice %9 {offsets = [0, 4], sizes = [8, 1], strides = [1, 1]} : vector<8x19xf32> to vector<8x1xf32>
    %49 = vector.broadcast %48 : vector<8x1xf32> to vector<8x1024xf32>
    %50 = vector.broadcast %2 : vector<1x1024xf32> to vector<8x1024xf32>
    %51 = arith.mulf %49, %50 : vector<8x1024xf32>
    %52 = math.sin %51 : vector<8x1024xf32>
    %cst_6 = arith.constant 5.000000e-01 : f32
    %53 = vector.broadcast %cst_6 : f32 to vector<8x1024xf32>
    %54 = arith.mulf %53, %52 : vector<8x1024xf32>
    %55 = arith.addf %47, %54 : vector<8x1024xf32>
    %56 = vector.extract_strided_slice %9 {offsets = [0, 5], sizes = [8, 1], strides = [1, 1]} : vector<8x19xf32> to vector<8x1xf32>
    %57 = vector.broadcast %56 : vector<8x1xf32> to vector<8x1024xf32>
    %58 = vector.broadcast %8 : vector<1x1024xf32> to vector<8x1024xf32>
    %59 = arith.mulf %57, %58 : vector<8x1024xf32>
    %60 = math.sin %59 : vector<8x1024xf32>
    %cst_7 = arith.constant 5.000000e-01 : f32
    %61 = vector.broadcast %cst_7 : f32 to vector<8x1024xf32>
    %62 = arith.mulf %61, %60 : vector<8x1024xf32>
    %63 = arith.addf %55, %62 : vector<8x1024xf32>
    %64 = vector.extract_strided_slice %9 {offsets = [0, 6], sizes = [8, 1], strides = [1, 1]} : vector<8x19xf32> to vector<8x1xf32>
    %65 = vector.broadcast %5 : vector<1x1024xf32> to vector<8x1024xf32>
    %66 = vector.broadcast %64 : vector<8x1xf32> to vector<8x1024xf32>
    %67 = arith.addf %65, %66 : vector<8x1024xf32>
    %68 = math.sin %67 : vector<8x1024xf32>
    %cst_8 = arith.constant 5.000000e-01 : f32
    %69 = vector.broadcast %cst_8 : f32 to vector<8x1024xf32>
    %70 = arith.mulf %69, %68 : vector<8x1024xf32>
    %71 = arith.addf %63, %70 : vector<8x1024xf32>
    %72 = vector.extract_strided_slice %9 {offsets = [0, 7], sizes = [8, 1], strides = [1, 1]} : vector<8x19xf32> to vector<8x1xf32>
    %73 = vector.broadcast %72 : vector<8x1xf32> to vector<8x1024xf32>
    %74 = arith.addf %71, %73 : vector<8x1024xf32>
    %75 = vector.extract_strided_slice %9 {offsets = [0, 8], sizes = [8, 1], strides = [1, 1]} : vector<8x19xf32> to vector<8x1xf32>
    %76 = vector.broadcast %1 : vector<1x1024xf32> to vector<8x1024xf32>
    %77 = vector.broadcast %75 : vector<8x1xf32> to vector<8x1024xf32>
    %78 = arith.subf %76, %77 : vector<8x1024xf32>
    %79 = vector.extract_strided_slice %9 {offsets = [0, 8], sizes = [8, 1], strides = [1, 1]} : vector<8x19xf32> to vector<8x1xf32>
    %80 = vector.broadcast %2 : vector<1x1024xf32> to vector<8x1024xf32>
    %81 = vector.broadcast %79 : vector<8x1xf32> to vector<8x1024xf32>
    %82 = arith.subf %80, %81 : vector<8x1024xf32>
    %83 = arith.mulf %78, %78 : vector<8x1024xf32>
    %84 = arith.mulf %82, %82 : vector<8x1024xf32>
    %85 = arith.addf %83, %84 : vector<8x1024xf32>
    %86 = vector.extract_strided_slice %9 {offsets = [0, 9], sizes = [8, 1], strides = [1, 1]} : vector<8x19xf32> to vector<8x1xf32>
    %87 = vector.broadcast %86 : vector<8x1xf32> to vector<8x1024xf32>
    %88 = arith.mulf %85, %87 : vector<8x1024xf32>
    %89 = math.exp %88 : vector<8x1024xf32>
    %90 = arith.addf %74, %89 : vector<8x1024xf32>
    %91 = vector.extract_strided_slice %9 {offsets = [0, 10], sizes = [8, 1], strides = [1, 1]} : vector<8x19xf32> to vector<8x1xf32>
    %92 = vector.broadcast %3 : vector<1x1024xf32> to vector<8x1024xf32>
    %93 = vector.broadcast %91 : vector<8x1xf32> to vector<8x1024xf32>
    %94 = arith.subf %92, %93 : vector<8x1024xf32>
    %95 = arith.mulf %94, %94 : vector<8x1024xf32>
    %cst_9 = arith.constant 1.000000e+01 : f32
    %96 = vector.broadcast %cst_9 : f32 to vector<8x1024xf32>
    %97 = arith.cmpf olt, %95, %96 : vector<8x1024xf32>
    %98 = arith.extui %97 : vector<8x1024xi1> to vector<8x1024xi32>
    %99 = arith.sitofp %98 : vector<8x1024xi32> to vector<8x1024xf32>
    %100 = arith.addf %90, %99 : vector<8x1024xf32>
    %101 = vector.extract_strided_slice %9 {offsets = [0, 11], sizes = [8, 1], strides = [1, 1]} : vector<8x19xf32> to vector<8x1xf32>
    %102 = vector.broadcast %1 : vector<1x1024xf32> to vector<8x1024xf32>
    %103 = vector.broadcast %101 : vector<8x1xf32> to vector<8x1024xf32>
    %104 = arith.mulf %102, %103 : vector<8x1024xf32>
    %cst_10 = arith.constant 9.99999974E-5 : f32
    %105 = vector.broadcast %cst_10 : f32 to vector<8x1024xf32>
    %106 = arith.addf %104, %105 : vector<8x1024xf32>
    %107 = math.floor %106 : vector<8x1024xf32>
    %108 = vector.broadcast %2 : vector<1x1024xf32> to vector<8x1024xf32>
    %109 = vector.broadcast %101 : vector<8x1xf32> to vector<8x1024xf32>
    %110 = arith.mulf %108, %109 : vector<8x1024xf32>
    %cst_11 = arith.constant 9.99999974E-5 : f32
    %111 = vector.broadcast %cst_11 : f32 to vector<8x1024xf32>
    %112 = arith.addf %110, %111 : vector<8x1024xf32>
    %113 = math.floor %112 : vector<8x1024xf32>
    %114 = arith.addf %107, %113 : vector<8x1024xf32>
    %cst_12 = arith.constant 5.000000e-01 : f32
    %115 = vector.broadcast %cst_12 : f32 to vector<8x1024xf32>
    %116 = arith.mulf %114, %115 : vector<8x1024xf32>
    %117 = math.floor %116 : vector<8x1024xf32>
    %cst_13 = arith.constant 2.000000e+00 : f32
    %118 = vector.broadcast %cst_13 : f32 to vector<8x1024xf32>
    %119 = arith.mulf %118, %117 : vector<8x1024xf32>
    %120 = arith.subf %114, %119 : vector<8x1024xf32>
    %cst_14 = arith.constant 3.000000e-01 : f32
    %121 = vector.broadcast %cst_14 : f32 to vector<8x1024xf32>
    %122 = arith.mulf %120, %121 : vector<8x1024xf32>
    %123 = arith.addf %100, %122 : vector<8x1024xf32>
    %124 = vector.extract_strided_slice %9 {offsets = [0, 12], sizes = [8, 1], strides = [1, 1]} : vector<8x19xf32> to vector<8x1xf32>
    %125 = vector.broadcast %124 : vector<8x1xf32> to vector<8x1024xf32>
    %126 = vector.broadcast %6 : vector<1x1024xf32> to vector<8x1024xf32>
    %127 = arith.mulf %125, %126 : vector<8x1024xf32>
    %128 = vector.extract_strided_slice %9 {offsets = [0, 13], sizes = [8, 1], strides = [1, 1]} : vector<8x19xf32> to vector<8x1xf32>
    %129 = vector.broadcast %128 : vector<8x1xf32> to vector<8x1024xf32>
    %130 = vector.broadcast %7 : vector<1x1024xf32> to vector<8x1024xf32>
    %131 = arith.mulf %129, %130 : vector<8x1024xf32>
    %132 = arith.addf %127, %131 : vector<8x1024xf32>
    %133 = math.absf %132 : vector<8x1024xf32>
    %cst_15 = arith.constant 3.000000e+00 : f32
    %134 = vector.broadcast %cst_15 : f32 to vector<8x1024xf32>
    %135 = arith.cmpf olt, %133, %134 : vector<8x1024xf32>
    %136 = arith.extui %135 : vector<8x1024xi1> to vector<8x1024xi32>
    %137 = arith.sitofp %136 : vector<8x1024xi32> to vector<8x1024xf32>
    %cst_16 = arith.constant 6.000000e-01 : f32
    %138 = vector.broadcast %cst_16 : f32 to vector<8x1024xf32>
    %139 = arith.mulf %137, %138 : vector<8x1024xf32>
    %140 = arith.addf %123, %139 : vector<8x1024xf32>
    %141 = vector.extract_strided_slice %9 {offsets = [0, 14], sizes = [8, 1], strides = [1, 1]} : vector<8x19xf32> to vector<8x1xf32>
    %142 = vector.broadcast %4 : vector<1x1024xf32> to vector<8x1024xf32>
    %143 = vector.broadcast %141 : vector<8x1xf32> to vector<8x1024xf32>
    %144 = arith.mulf %142, %143 : vector<8x1024xf32>
    %145 = math.sin %144 : vector<8x1024xf32>
    %cst_17 = arith.constant 5.000000e-01 : f32
    %146 = vector.broadcast %cst_17 : f32 to vector<8x1024xf32>
    %147 = arith.mulf %146, %145 : vector<8x1024xf32>
    %148 = arith.addf %140, %147 : vector<8x1024xf32>
    %c0_18 = arith.constant 0 : index
    %c0_19 = arith.constant 0 : index
    %149 = vector.load %arg3[%c0_18, %c0_19] : memref<8x1024xf32, #tpu.memory_space<vmem>>, vector<8x1024xf32>
    %150 = vector.extract_strided_slice %9 {offsets = [0, 15], sizes = [8, 1], strides = [1, 1]} : vector<8x19xf32> to vector<8x1xf32>
    %151 = vector.broadcast %150 : vector<8x1xf32> to vector<8x1024xf32>
    %152 = arith.mulf %149, %151 : vector<8x1024xf32>
    %153 = arith.addf %148, %152 : vector<8x1024xf32>
    %c0_20 = arith.constant 0 : index
    %c0_21 = arith.constant 0 : index
    %154 = vector.load %arg4[%c0_20, %c0_21] : memref<8x1024xf32, #tpu.memory_space<vmem>>, vector<8x1024xf32>
    %cst_22 = arith.constant 5.000000e-01 : f32
    %155 = vector.broadcast %cst_22 : f32 to vector<8x1024xf32>
    %156 = arith.subf %154, %155 : vector<8x1024xf32>
    %157 = vector.extract_strided_slice %9 {offsets = [0, 16], sizes = [8, 1], strides = [1, 1]} : vector<8x19xf32> to vector<8x1xf32>
    %158 = vector.broadcast %157 : vector<8x1xf32> to vector<8x1024xf32>
    %159 = arith.mulf %156, %158 : vector<8x1024xf32>
    %160 = arith.addf %153, %159 : vector<8x1024xf32>
    %161 = vector.extract_strided_slice %9 {offsets = [0, 17], sizes = [8, 1], strides = [1, 1]} : vector<8x19xf32> to vector<8x1xf32>
    %162 = vector.broadcast %161 : vector<8x1xf32> to vector<8x1024xf32>
    %163 = arith.mulf %160, %162 : vector<8x1024xf32>
    %164 = vector.extract_strided_slice %9 {offsets = [0, 18], sizes = [8, 1], strides = [1, 1]} : vector<8x19xf32> to vector<8x1xf32>
    %165 = vector.broadcast %164 : vector<8x1xf32> to vector<8x1024xf32>
    %166 = arith.addf %163, %165 : vector<8x1024xf32>
    %cst_23 = arith.constant dense<0x7F800000> : vector<8xf32>
    %167 = vector.multi_reduction <minimumf>, %166, %cst_23 [1] : vector<8x1024xf32> to vector<8xf32>
    %168 = vector.shape_cast %167 : vector<8xf32> to vector<8x1xf32>
    %cst_24 = arith.constant dense<0xFF800000> : vector<8xf32>
    %169 = vector.multi_reduction <maximumf>, %166, %cst_24 [1] : vector<8x1024xf32> to vector<8xf32>
    %170 = vector.shape_cast %169 : vector<8xf32> to vector<8x1xf32>
    %171 = arith.subf %170, %168 : vector<8x1xf32>
    %cst_25 = arith.constant 9.99999993E-9 : f32
    %172 = vector.broadcast %cst_25 : f32 to vector<8x1xf32>
    %173 = arith.addf %171, %172 : vector<8x1xf32>
    %cst_26 = arith.constant 1.000000e+00 : f32
    %174 = vector.broadcast %cst_26 : f32 to vector<8x1xf32>
    %175 = arith.divf %174, %173 : vector<8x1xf32>
    %176 = vector.broadcast %168 : vector<8x1xf32> to vector<8x1024xf32>
    %177 = arith.subf %166, %176 : vector<8x1024xf32>
    %178 = vector.broadcast %175 : vector<8x1xf32> to vector<8x1024xf32>
    %179 = arith.mulf %177, %178 : vector<8x1024xf32>
    %c0_27 = arith.constant 0 : index
    %c0_28 = arith.constant 0 : index
    %180 = vector.load %arg5[%c0_27, %c0_28] : memref<8x1024xf32, #tpu.memory_space<vmem>>, vector<8x1024xf32>
    tpu.vector_store %arg5[%c0_27, %c0_28], %179 {strides = array<i32>} : memref<8x1024xf32, #tpu.memory_space<vmem>>, vector<8x1024xf32>,
    return
  }
  func.func @transform_0(%arg0: i32) -> (i32, i32) {
    %c0_i32 = arith.constant 0 : i32
    %c0_i32_0 = arith.constant 0 : i32
    return %arg0, %c0_i32 : i32, i32
  }
  func.func @transform_1(%arg0: i32) -> (i32, i32) {
    %c0_i32 = arith.constant 0 : i32
    %c0_i32_0 = arith.constant 0 : i32
    %c0_i32_1 = arith.constant 0 : i32
    return %c0_i32, %c0_i32_0 : i32, i32
  }
  func.func @transform_2(%arg0: i32) -> (i32, i32) {
    %c0_i32 = arith.constant 0 : i32
    %c0_i32_0 = arith.constant 0 : i32
    return %arg0, %c0_i32 : i32, i32
  }
  func.func @transform_3(%arg0: i32) -> (i32, i32) {
    %c0_i32 = arith.constant 0 : i32
    %c0_i32_0 = arith.constant 0 : i32
    return %arg0, %c0_i32 : i32, i32
  }
  func.func @transform_4(%arg0: i32) -> (i32, i32) {
    %c0_i32 = arith.constant 0 : i32
    %c0_i32_0 = arith.constant 0 : i32
    return %arg0, %c0_i32 : i32, i32
  }
}

</mosaic_0001>

<llo_original>
// kernel: tpu_custom_call.1
$region0: #{tpu_custom_call.1}
  #allocation0 [shape = 'u32[]', space=smem, size = 0x4, offset = 0x4, fixed_abs, tag = 'smem constant byte address 0x4 - core index']
  #allocation1 [shape = 'u32[72,128]{1,0:T(1,128)}', space=vmem, size = 0x9000, scoped, tag = 'internal scratch']
  %s0 = inlined_call_operand.hbm [shape: f32[8,19], index: 0, kind: input, shape index: {}]
  %s1 = inlined_call_operand.hbm [shape: f32[8,1024], index: 1, kind: input, shape index: {}]
  %s2 = inlined_call_operand.hbm [shape: f32[8,1024], index: 2, kind: input, shape index: {}]
  %s3 = inlined_call_operand.hbm [shape: f32[8,1024], index: 3, kind: input, shape index: {}]
  %s4 = inlined_call_operand.hbm [shape: f32[8,1024], index: 4, kind: output, shape index: {}]
  %s5 = sld [smem:[#allocation0]]
  $region42: #{tpu_custom_call.1} parent=0
    _
  %s7 = ssub.s32 1, %s5
  %s8 = scalar_select 0, %s7, %s5
  $region1: #{tpu_custom_call.1} parent=0
    #allocation2 [shape = 'u8[4096]{0}', space=vmem, size = 0x1000, scoped, tag = 'input window, operand 0, single buffered']
    #allocation3 [shape = 's32[1]{0}', space=sflag, size = 0x4, scoped, tag = 'scoped memory for tpu_custom_call.1']
    #allocation4 [shape = 's32[1]{0}', space=sflag, size = 0x4, scoped, tag = 'scoped memory for tpu_custom_call.1']
    #allocation5 [shape = 'u8[32768]{0}', space=vmem, size = 0x8000, scoped, tag = 'input window, operand 1, single buffered']
    #allocation6 [shape = 's32[1]{0}', space=sflag, size = 0x4, scoped, tag = 'scoped memory for tpu_custom_call.1']
    #allocation7 [shape = 'u8[32768]{0}', space=vmem, size = 0x8000, scoped, tag = 'input window, operand 2, single buffered']
    #allocation8 [shape = 'u8[32768]{0}', space=vmem, size = 0x8000, scoped, tag = 'input window, operand 3, single buffered']
    #allocation9 [shape = 's32[1]{0}', space=sflag, size = 0x4, scoped, tag = 'scoped memory for tpu_custom_call.1']
    #allocation10 [shape = 'u8[32768]{0}', space=vmem, size = 0x8000, scoped, tag = 'output window, operand 0, single buffered']
    %9 = vsyncpa [#allocation3], 0
    %10 = vsyncpa [#allocation6], 0
    %11 = vsyncpa [#allocation9], 0
    %12 = vsyncpa [#allocation4], 0
    // Predicated region
    $region2: #{tpu_custom_call.1} parent=1 // pred_check
      _
    $region3: #{tpu_custom_call.1} parent=1 // pred_check_branch
      %14 = sbr.rel (0) target = $region5
    $region4: #{tpu_custom_call.1} parent=1 // pred_region
      %16 = vsyncadd [#allocation3], 0
      %s18 = sshll.u32 %s0, 4
      %s19 = int_to_ptr.hbm [resolvable:$true] %s18
      %s20 = sshll.u32 [#allocation2], 4
      %s21 = int_to_ptr.vmem [resolvable:$true] %s20
      %23 = dma.hbm_to_vmem [thread:$0]  %s19, 128, %s21, [#allocation3]
    $region5: #{tpu_custom_call.1} parent=1 // pred_fallthru
      _
    // Predicated region
    $region6: #{tpu_custom_call.1} parent=1 // pred_check
      _
    $region7: #{tpu_custom_call.1} parent=1 // pred_check_branch
      %25 = sbr.rel (0) target = $region9
    $region8: #{tpu_custom_call.1} parent=1 // pred_region
      %27 = vsyncadd [#allocation6], 0
      %s29 = sshll.u32 %s1, 4
      %s30 = int_to_ptr.hbm [resolvable:$true] %s29
      %s31 = sshll.u32 [#allocation5], 4
      %s32 = int_to_ptr.vmem [resolvable:$true] %s31
      %34 = dma.hbm_to_vmem [thread:$0]  %s30, 1024, %s32, [#allocation6]
    $region9: #{tpu_custom_call.1} parent=1 // pred_fallthru
      _
    // Predicated region
    $region10: #{tpu_custom_call.1} parent=1 // pred_check
      _
    $region11: #{tpu_custom_call.1} parent=1 // pred_check_branch
      %36 = sbr.rel (0) target = $region13
    $region12: #{tpu_custom_call.1} parent=1 // pred_region
      %38 = vsyncadd [#allocation6], 0
      %s40 = sshll.u32 %s2, 4
      %s41 = int_to_ptr.hbm [resolvable:$true] %s40
      %s42 = sshll.u32 [#allocation7], 4
      %s43 = int_to_ptr.vmem [resolvable:$true] %s42
      %45 = dma.hbm_to_vmem [thread:$0]  %s41, 1024, %s43, [#allocation6]
    $region13: #{tpu_custom_call.1} parent=1 // pred_fallthru
      _
    // Predicated region
    $region14: #{tpu_custom_call.1} parent=1 // pred_check
      _
    $region15: #{tpu_custom_call.1} parent=1 // pred_check_branch
      %47 = sbr.rel (0) target = $region17
    $region16: #{tpu_custom_call.1} parent=1 // pred_region
      %49 = vsyncadd [#allocation9], 0
      %s51 = sshll.u32 %s3, 4
      %s52 = int_to_ptr.hbm [resolvable:$true] %s51
      %s53 = sshll.u32 [#allocation8], 4
      %s54 = int_to_ptr.vmem [resolvable:$true] %s53
      %56 = dma.hbm_to_vmem [thread:$0]  %s52, 1024, %s54, [#allocation9]
    $region17: #{tpu_custom_call.1} parent=1 // pred_fallthru
      _
    // Predicated region
    $region18: #{tpu_custom_call.1} parent=1 // pred_check
      _
    $region19: #{tpu_custom_call.1} parent=1 // pred_check_branch
      %58 = sbr.rel (0) target = $region21
    $region20: #{tpu_custom_call.1} parent=1 // pred_region
      %60 = dma.done [#allocation3], 128
    $region21: #{tpu_custom_call.1} parent=1 // pred_fallthru
      _
    // Predicated region
    $region22: #{tpu_custom_call.1} parent=1 // pred_check
      _
    $region23: #{tpu_custom_call.1} parent=1 // pred_check_branch
      %62 = sbr.rel (0) target = $region25
    $region24: #{tpu_custom_call.1} parent=1 // pred_region
      %64 = dma.done [#allocation6], 1024
    $region25: #{tpu_custom_call.1} parent=1 // pred_fallthru
      _
    // Predicated region
    $region26: #{tpu_custom_call.1} parent=1 // pred_check
      _
    $region27: #{tpu_custom_call.1} parent=1 // pred_check_branch
      %66 = sbr.rel (0) target = $region29
    $region28: #{tpu_custom_call.1} parent=1 // pred_region
      %68 = dma.done [#allocation6], 1024
    $region29: #{tpu_custom_call.1} parent=1 // pred_fallthru
      _
    // Predicated region
    $region30: #{tpu_custom_call.1} parent=1 // pred_check
      _
    $region31: #{tpu_custom_call.1} parent=1 // pred_check_branch
      %70 = sbr.rel (0) target = $region33
    $region32: #{tpu_custom_call.1} parent=1 // pred_region
      %72 = dma.done [#allocation9], 1024
    $region33: #{tpu_custom_call.1} parent=1 // pred_fallthru
      _
    %v73 = vld [vmem:[#allocation5] sm:$0xff]
    %v74 = vld [vmem:[#allocation5 + $0x8] sm:$0xff]
    %v75 = vld [vmem:[#allocation5 + $0x10] sm:$0xff]
    %v76 = vld [vmem:[#allocation5 + $0x18] sm:$0xff]
    %v77 = vld [vmem:[#allocation5 + $0x20] sm:$0xff]
    %v78 = vld [vmem:[#allocation5 + $0x28] sm:$0xff]
    %v79 = vld [vmem:[#allocation5 + $0x30] sm:$0xff]
    %v80 = vld [vmem:[#allocation5 + $0x38] sm:$0xff]
    %v81 = vld [vmem:[#allocation2] sm:$0xff]
    %83 = vset.pattern.permute.xlu0 0
    %84 = vperm.xlu0 %83, %v81
    %v85 = vpop.permute.xlu0 %84
    %v87 = vperm.slane %v73, 2
    %v88 = vperm.slane %v74, 2
    %v89 = vperm.slane %v75, 2
    %v90 = vperm.slane %v76, 2
    %v91 = vperm.slane %v77, 2
    %v92 = vperm.slane %v78, 2
    %v93 = vperm.slane %v79, 2
    %v94 = vperm.slane %v80, 2
    %v95 = vsub.f32 %v85, %v87
    %v96 = vsub.f32 %v85, %v88
    %v97 = vsub.f32 %v85, %v89
    %v98 = vsub.f32 %v85, %v90
    %v99 = vsub.f32 %v85, %v91
    %v100 = vsub.f32 %v85, %v92
    %v101 = vsub.f32 %v85, %v93
    %v102 = vsub.f32 %v85, %v94
    %v103 = vmax.f32 %v95, 0.0
    %v104 = vmax.f32 %v96, 0.0
    %v105 = vmax.f32 %v97, 0.0
    %v106 = vmax.f32 %v98, 0.0
    %v107 = vmax.f32 %v99, 0.0
    %v108 = vmax.f32 %v100, 0.0
    %v109 = vmax.f32 %v101, 0.0
    %v110 = vmax.f32 %v102, 0.0
    %v111 = vmin.f32 %v103, 1.0
    %v112 = vmin.f32 %v104, 1.0
    %v113 = vmin.f32 %v105, 1.0
    %v114 = vmin.f32 %v106, 1.0
    %v115 = vmin.f32 %v107, 1.0
    %v116 = vmin.f32 %v108, 1.0
    %v117 = vmin.f32 %v109, 1.0
    %v118 = vmin.f32 %v110, 1.0
    %v119 = vperm.slane %v73, 0
    %v120 = vperm.slane %v74, 0
    %v121 = vperm.slane %v75, 0
    %v122 = vperm.slane %v76, 0
    %v123 = vperm.slane %v77, 0
    %v124 = vperm.slane %v78, 0
    %v125 = vperm.slane %v79, 0
    %v126 = vperm.slane %v80, 0
    %127 = vset.pattern.permute.xlu0 1
    %128 = vperm.xlu0 %127, %v81
    %v129 = vpop.permute.xlu0 %128
    %vm131 = vcmp.ge.f32.partialorder %v119, %v129
    %vm132 = vcmp.ge.f32.partialorder %v120, %v129
    %vm133 = vcmp.ge.f32.partialorder %v121, %v129
    %vm134 = vcmp.ge.f32.partialorder %v122, %v129
    %vm135 = vcmp.ge.f32.partialorder %v123, %v129
    %vm136 = vcmp.ge.f32.partialorder %v124, %v129
    %vm137 = vcmp.ge.f32.partialorder %v125, %v129
    %vm138 = vcmp.ge.f32.partialorder %v126, %v129
    %139 = vset.pattern.permute.xlu0 2
    %140 = vperm.xlu0 %139, %v81
    %v141 = vpop.permute.xlu0 %140
    %vm143 = vcmp.lt.f32.partialorder %v119, %v141
    %vm144 = vcmp.lt.f32.partialorder %v120, %v141
    %vm145 = vcmp.lt.f32.partialorder %v121, %v141
    %vm146 = vcmp.lt.f32.partialorder %v122, %v141
    %vm147 = vcmp.lt.f32.partialorder %v123, %v141
    %vm148 = vcmp.lt.f32.partialorder %v124, %v141
    %vm149 = vcmp.lt.f32.partialorder %v125, %v141
    %vm150 = vcmp.lt.f32.partialorder %v126, %v141
    %vm151 = vmand %vm131, %vm143
    %vm152 = vmand %vm132, %vm144
    %vm153 = vmand %vm133, %vm145
    %vm154 = vmand %vm134, %vm146
    %vm155 = vmand %vm135, %vm147
    %vm156 = vmand %vm136, %vm148
    %vm157 = vmand %vm137, %vm149
    %vm158 = vmand %vm138, %vm150
    %v159 = vperm.slane %v73, 1
    %v160 = vperm.slane %v74, 1
    %v161 = vperm.slane %v75, 1
    %v162 = vperm.slane %v76, 1
    %v163 = vperm.slane %v77, 1
    %v164 = vperm.slane %v78, 1
    %v165 = vperm.slane %v79, 1
    %v166 = vperm.slane %v80, 1
    %vm167 = vcmp.ge.f32.partialorder %v159, %v129
    %vm168 = vcmp.ge.f32.partialorder %v160, %v129
    %vm169 = vcmp.ge.f32.partialorder %v161, %v129
    %vm170 = vcmp.ge.f32.partialorder %v162, %v129
    %vm171 = vcmp.ge.f32.partialorder %v163, %v129
    %vm172 = vcmp.ge.f32.partialorder %v164, %v129
    %vm173 = vcmp.ge.f32.partialorder %v165, %v129
    %vm174 = vcmp.ge.f32.partialorder %v166, %v129
    %vm175 = vmand %vm151, %vm167
    %vm176 = vmand %vm152, %vm168
    %vm177 = vmand %vm153, %vm169
    %vm178 = vmand %vm154, %vm170
    %vm179 = vmand %vm155, %vm171
    %vm180 = vmand %vm156, %vm172
    %vm181 = vmand %vm157, %vm173
    %vm182 = vmand %vm158, %vm174
    %vm183 = vcmp.lt.f32.partialorder %v159, %v141
    %vm184 = vcmp.lt.f32.partialorder %v160, %v141
    %vm185 = vcmp.lt.f32.partialorder %v161, %v141
    %vm186 = vcmp.lt.f32.partialorder %v162, %v141
    %vm187 = vcmp.lt.f32.partialorder %v163, %v141
    %vm188 = vcmp.lt.f32.partialorder %v164, %v141
    %vm189 = vcmp.lt.f32.partialorder %v165, %v141
    %vm190 = vcmp.lt.f32.partialorder %v166, %v141
    %vm191 = vmand %vm175, %vm183
    %vm192 = vmand %vm176, %vm184
    %vm193 = vmand %vm177, %vm185
    %vm194 = vmand %vm178, %vm186
    %vm195 = vmand %vm179, %vm187
    %vm196 = vmand %vm180, %vm188
    %vm197 = vmand %vm181, %vm189
    %vm198 = vmand %vm182, %vm190
    %v199 = vsel %vm191, 1, 0
    %v200 = vsel %vm192, 1, 0
    %v201 = vsel %vm193, 1, 0
    %v202 = vsel %vm194, 1, 0
    %v203 = vsel %vm195, 1, 0
    %v204 = vsel %vm196, 1, 0
    %v205 = vsel %vm197, 1, 0
    %v206 = vsel %vm198, 1, 0
    %v207 = vcvt.s32.f32 %v199
    %v208 = vcvt.s32.f32 %v200
    %v209 = vcvt.s32.f32 %v201
    %v210 = vcvt.s32.f32 %v202
    %v211 = vcvt.s32.f32 %v203
    %v212 = vcvt.s32.f32 %v204
    %v213 = vcvt.s32.f32 %v205
    %v214 = vcvt.s32.f32 %v206
    %v215 = vmul.f32 %v207, 0.5
    %v216 = vmul.f32 %v208, 0.5
    %v217 = vmul.f32 %v209, 0.5
    %v218 = vmul.f32 %v210, 0.5
    %v219 = vmul.f32 %v211, 0.5
    %v220 = vmul.f32 %v212, 0.5
    %v221 = vmul.f32 %v213, 0.5
    %v222 = vmul.f32 %v214, 0.5
    %v223 = vadd.f32 %v111, %v215
    %v224 = vadd.f32 %v112, %v216
    %v225 = vadd.f32 %v113, %v217
    %v226 = vadd.f32 %v114, %v218
    %v227 = vadd.f32 %v115, %v219
    %v228 = vadd.f32 %v116, %v220
    %v229 = vadd.f32 %v117, %v221
    %v230 = vadd.f32 %v118, %v222
    %231 = vset.pattern.permute.xlu0 3
    %232 = vperm.xlu0 %231, %v81
    %v233 = vpop.permute.xlu0 %232
    %v235 = vmul.f32 %v233, %v119
    %v236 = vmul.f32 %v233, %v120
    %v237 = vmul.f32 %v233, %v121
    %v238 = vmul.f32 %v233, %v122
    %v239 = vmul.f32 %v233, %v123
    %v240 = vmul.f32 %v233, %v124
    %v241 = vmul.f32 %v233, %v125
    %v242 = vmul.f32 %v233, %v126
    %v243 = vand.u32 2147483647, %v235
    %vm244 = vcmp.le.f32.partialorder %v243, 0.7853982
    %vm245 = vcmp.lt.s32.totalorder %v235, 0
    %v246 = vand.u32 %v235, 2139095040
    %v247 = vshrl.u32 %v246, 23
    %v248 = vsub.s32 %v247, 127
    %v249 = vand.u32 2147483647, %v235
    %v250 = vand.u32 %v249, 8388607
    %v251 = vor.u32 %v250, 8388608
    %v252 = vsub.s32 0, %v251
    %v253 = vadd.s32 %v248, 1
    %vm254 = vcmp.gt.s32.totalorder %v253, 0
    %v255 = vsel %vm254, %v253, 0
    %v256 = vshrl.u32 %v255, 5
    %v257 = vand.u32 %v255, 31
    %v258 = vsub.s32 32, %v257
    %v259 = vshrl.u32 683565275, %v258
    %v260 = vshll.u32 683565275, %v257
    %v261 = vshrl.u32 2475754826, %v258
    %v262 = vor.u32 %v260, %v261
    %v263 = vshll.u32 2475754826, %v257
    %v264 = vshrl.u32 2131351028, %v258
    %v265 = vor.u32 %v263, %v264
    %v266 = vshll.u32 2131351028, %v257
    %v267 = vshrl.u32 2102212464, %v258
    %v268 = vor.u32 %v266, %v267
    %v269 = vshll.u32 2102212464, %v257
    %v270 = vshrl.u32 920167782, %v258
    %v271 = vor.u32 %v269, %v270
    %v272 = vshll.u32 920167782, %v257
    %v273 = vshrl.u32 1326507024, %v258
    %v274 = vor.u32 %v272, %v273
    %vm275 = vcmp.lt.s32.totalorder %v256, 1
    %vm276 = vcmp.lt.s32.totalorder %v256, 2
    %vm277 = vcmp.lt.s32.totalorder %v256, 3
    %vm278 = vcmp.lt.s32.totalorder %v256, 4
    %v279 = vsel %vm275, %v259, %v262
    %v280 = vsel %vm278, %v268, 2102212464
    %v281 = vsel %vm277, %v265, %v280
    %v282 = vsel %vm276, %v279, %v281
    %v283 = vsel %vm275, %v262, %v265
    %v284 = vsel %vm278, %v271, 920167782
    %v285 = vsel %vm277, %v268, %v284
    %v286 = vsel %vm276, %v283, %v285
    %v287 = vsel %vm275, %v265, %v268
    %v288 = vsel %vm278, %v274, 1326507024
    %v289 = vsel %vm277, %v271, %v288
    %v290 = vsel %vm276, %v287, %v289
    %v291 = vshll.u32 %v251, 8
    %v292 = vand.u32 %v291, 65535
    %v293 = vshrl.u32 %v291, 16
    %v294 = vand.u32 %v290, 65535
    %v295 = vshrl.u32 %v290, 16
    %v296 = vmul.u32 %v292, %v294
    %v297 = vmul.u32 %v292, %v295
    %v298 = vmul.u32 %v293, %v294
    %v299 = vmul.u32 %v293, %v295
    %v300 = vshll.u32 %v297, 16
    %v301 = vshrl.u32 %v297, 16
    %v302 = vshll.u32 %v298, 16
    %v303 = vshrl.u32 %v298, 16
    %vm304 = vc.u32 %v296, %v300
    %v305 = vsel %vm304, 1, 0
    %v306 = vadd.s32 %v296, %v300
    %v307 = vadd.s32 %v299, %v305
    %vm308 = vc.u32 %v306, %v302
    %v309 = vsel %vm308, 1, 0
    %v310 = vadd.s32 %v306, %v302
    %v311 = vadd.s32 %v307, %v309
    %v312 = vadd.s32 %v311, %v301
    %v313 = vadd.s32 %v312, %v303
    %v314 = vand.u32 %v291, 65535
    %v315 = vshrl.u32 %v291, 16
    %v316 = vand.u32 %v286, 65535
    %v317 = vshrl.u32 %v286, 16
    %v318 = vmul.u32 %v314, %v316
    %v319 = vmul.u32 %v314, %v317
    %v320 = vmul.u32 %v315, %v316
    %v321 = vmul.u32 %v315, %v317
    %v322 = vshll.u32 %v319, 16
    %v323 = vshrl.u32 %v319, 16
    %v324 = vshll.u32 %v320, 16
    %v325 = vshrl.u32 %v320, 16
    %vm326 = vc.u32 %v318, %v322
    %v327 = vsel %vm326, 1, 0
    %v328 = vadd.s32 %v318, %v322
    %v329 = vadd.s32 %v321, %v327
    %vm330 = vc.u32 %v328, %v324
    %v331 = vsel %vm330, 1, 0
    %v332 = vadd.s32 %v328, %v324
    %v333 = vadd.s32 %v329, %v331
    %v334 = vadd.s32 %v333, %v323
    %v335 = vadd.s32 %v334, %v325
    %v336 = vmul.u32 %v291, %v282
    %v337 = vadd.s32 %v313, %v332
    %vm338 = vc.u32 %v313, %v332
    %v339 = vadd.s32 %v335, 1
    %v340 = vsel %vm338, %v339, %v335
    %v341 = vadd.s32 %v336, %v340
    %v342 = vadd.s32 %v341, 536870912
    %v343 = vshrl.u32 %v342, 30
    %v344 = vshll.u32 %v343, 30
    %v345 = vsub.s32 %v341, %v344
    %vm346 = vcmp.lt.s32.totalorder %v345, 0
    %v347 = vsub.s32 0, %v345
    %v348 = vsel %vm346, %v347, %v345
    %v349 = vclz %v348
    %v350 = vsub.s32 %v349, 2
    %vm351 = vcmp.gt.s32.totalorder 0, %v350
    %v352 = vsel %vm351, 0, %v350
    %v353 = vsub.s32 32, %v352
    %v354 = vshll.u32 %v345, %v352
    %v355 = vshrl.u32 %v337, %v353
    %v356 = vor.u32 %v354, %v355
    %v357 = vsub.s32 4294967266, %v352
    %v358 = vadd.s32 %v357, 127
    %v359 = vshll.u32 %v358, 23
    %v360 = vor.u32 4788187, %v359
    %v361 = vand.u32 2147483647, %v360
    %v363 = vcvt.s32.f32 %v356
    %v364 = vmul.f32 %v363, %v361
    %v365 = vxor.u32 %v364, 2147483648
    %v366 = vsel %vm245, %v365, %v364
    %v367 = vsub.s32 4, %v343
    %v368 = vsel %vm245, %v367, %v343
    %v369 = vsel %vm244, %v235, %v366
    %v370 = vsel %vm244, 0, %v368
    %v371 = vmul.f32 %v369, %v369
    %v372 = vmul.f32 %v371, -0.001358992
    %v373 = vadd.f32 %v372, 0.041655596
    %v374 = vmul.f32 %v371, %v373
    %v375 = vadd.f32 %v374, -0.4999988
    %v376 = vmul.f32 %v371, %v375
    %v377 = vadd.f32 1.0, %v376
    %v378 = vmul.f32 %v369, %v369
    %v379 = vmul.f32 %v378, -0.00019511016
    %v380 = vadd.f32 %v379, 0.008332121
    %v381 = vmul.f32 %v378, %v380
    %v382 = vadd.f32 %v381, -0.16666654
    %v383 = vmul.f32 %v378, %v382
    %v384 = vadd.f32 %v383, 1.0
    %v385 = vmul.f32 %v384, %v369
    %vm386 = vweird.f32 %v235
    %v387 = vadd.s32 %v370, 3
    %v388 = vand.u32 %v387, 3
    %vm389 = vcmp.lt.s32.totalorder %v388, 2
    %vm390 = vcmp.eq.s32.totalorder %v388, 0
    %v391 = vxor.u32 %v385, 2147483648
    %v392 = vsel %vm390, %v377, %v391
    %vm393 = vcmp.eq.s32.totalorder %v388, 2
    %v394 = vxor.u32 %v377, 2147483648
    %v395 = vsel %vm393, %v394, %v385
    %v396 = vsel %vm389, %v392, %v395
    %v397 = vsel %vm386, nan, %v396
    %v398 = vand.u32 2147483647, %v236
    %vm399 = vcmp.le.f32.partialorder %v398, 0.7853982
    %vm400 = vcmp.lt.s32.totalorder %v236, 0
    %v401 = vand.u32 %v236, 2139095040
    %v402 = vshrl.u32 %v401, 23
    %v403 = vsub.s32 %v402, 127
    %v404 = vand.u32 2147483647, %v236
    %v405 = vand.u32 %v404, 8388607
    %v406 = vor.u32 %v405, 8388608
    %v407 = vsub.s32 0, %v406
    %v408 = vadd.s32 %v403, 1
    %vm409 = vcmp.gt.s32.totalorder %v408, 0
    %v410 = vsel %vm409, %v408, 0
    %v411 = vshrl.u32 %v410, 5
    %v412 = vand.u32 %v410, 31
    %v413 = vsub.s32 32, %v412
    %v414 = vshrl.u32 683565275, %v413
    %v415 = vshll.u32 683565275, %v412
    %v416 = vshrl.u32 2475754826, %v413
    %v417 = vor.u32 %v415, %v416
    %v418 = vshll.u32 2475754826, %v412
    %v419 = vshrl.u32 2131351028, %v413
    %v420 = vor.u32 %v418, %v419
    %v421 = vshll.u32 2131351028, %v412
    %v422 = vshrl.u32 2102212464, %v413
    %v423 = vor.u32 %v421, %v422
    %v424 = vshll.u32 2102212464, %v412
    %v425 = vshrl.u32 920167782, %v413
    %v426 = vor.u32 %v424, %v425
    %v427 = vshll.u32 920167782, %v412
    %v428 = vshrl.u32 1326507024, %v413
    %v429 = vor.u32 %v427, %v428
    %vm430 = vcmp.lt.s32.totalorder %v411, 1
    %vm431 = vcmp.lt.s32.totalorder %v411, 2
    %vm432 = vcmp.lt.s32.totalorder %v411, 3
    %vm433 = vcmp.lt.s32.totalorder %v411, 4
    %v434 = vsel %vm430, %v414, %v417
    %v435 = vsel %vm433, %v423, 2102212464
    %v436 = vsel %vm432, %v420, %v435
    %v437 = vsel %vm431, %v434, %v436
    %v438 = vsel %vm430, %v417, %v420
    %v439 = vsel %vm433, %v426, 920167782
    %v440 = vsel %vm432, %v423, %v439
    %v441 = vsel %vm431, %v438, %v440
    %v442 = vsel %vm430, %v420, %v423
    %v443 = vsel %vm433, %v429, 1326507024
    %v444 = vsel %vm432, %v426, %v443
    %v445 = vsel %vm431, %v442, %v444
    %v446 = vshll.u32 %v406, 8
    %v447 = vand.u32 %v446, 65535
    %v448 = vshrl.u32 %v446, 16
    %v449 = vand.u32 %v445, 65535
    %v450 = vshrl.u32 %v445, 16
    %v451 = vmul.u32 %v447, %v449
    %v452 = vmul.u32 %v447, %v450
    %v453 = vmul.u32 %v448, %v449
    %v454 = vmul.u32 %v448, %v450
    %v455 = vshll.u32 %v452, 16
    %v456 = vshrl.u32 %v452, 16
    %v457 = vshll.u32 %v453, 16
    %v458 = vshrl.u32 %v453, 16
    %vm459 = vc.u32 %v451, %v455
    %v460 = vsel %vm459, 1, 0
    %v461 = vadd.s32 %v451, %v455
    %v462 = vadd.s32 %v454, %v460
    %vm463 = vc.u32 %v461, %v457
    %v464 = vsel %vm463, 1, 0
    %v465 = vadd.s32 %v461, %v457
    %v466 = vadd.s32 %v462, %v464
    %v467 = vadd.s32 %v466, %v456
    %v468 = vadd.s32 %v467, %v458
    %v469 = vand.u32 %v446, 65535
    %v470 = vshrl.u32 %v446, 16
    %v471 = vand.u32 %v441, 65535
    %v472 = vshrl.u32 %v441, 16
    %v473 = vmul.u32 %v469, %v471
    %v474 = vmul.u32 %v469, %v472
    %v475 = vmul.u32 %v470, %v471
    %v476 = vmul.u32 %v470, %v472
    %v477 = vshll.u32 %v474, 16
    %v478 = vshrl.u32 %v474, 16
    %v479 = vshll.u32 %v475, 16
    %v480 = vshrl.u32 %v475, 16
    %vm481 = vc.u32 %v473, %v477
    %v482 = vsel %vm481, 1, 0
    %v483 = vadd.s32 %v473, %v477
    %v484 = vadd.s32 %v476, %v482
    %vm485 = vc.u32 %v483, %v479
    %v486 = vsel %vm485, 1, 0
    %v487 = vadd.s32 %v483, %v479
    %v488 = vadd.s32 %v484, %v486
    %v489 = vadd.s32 %v488, %v478
    %v490 = vadd.s32 %v489, %v480
    %v491 = vmul.u32 %v446, %v437
    %v492 = vadd.s32 %v468, %v487
    %vm493 = vc.u32 %v468, %v487
    %v494 = vadd.s32 %v490, 1
    %v495 = vsel %vm493, %v494, %v490
    %v496 = vadd.s32 %v491, %v495
    %v497 = vadd.s32 %v496, 536870912
    %v498 = vshrl.u32 %v497, 30
    %v499 = vshll.u32 %v498, 30
    %v500 = vsub.s32 %v496, %v499
    %vm501 = vcmp.lt.s32.totalorder %v500, 0
    %v502 = vsub.s32 0, %v500
    %v503 = vsel %vm501, %v502, %v500
    %v504 = vclz %v503
    %v505 = vsub.s32 %v504, 2
    %vm506 = vcmp.gt.s32.totalorder 0, %v505
    %v507 = vsel %vm506, 0, %v505
    %v508 = vsub.s32 32, %v507
    %v509 = vshll.u32 %v500, %v507
    %v510 = vshrl.u32 %v492, %v508
    %v511 = vor.u32 %v509, %v510
    %v512 = vsub.s32 4294967266, %v507
    %v513 = vadd.s32 %v512, 127
    %v514 = vshll.u32 %v513, 23
    %v515 = vor.u32 4788187, %v514
    %v516 = vand.u32 2147483647, %v515
    %v518 = vcvt.s32.f32 %v511
    %v519 = vmul.f32 %v518, %v516
    %v520 = vxor.u32 %v519, 2147483648
    %v521 = vsel %vm400, %v520, %v519
    %v522 = vsub.s32 4, %v498
    %v523 = vsel %vm400, %v522, %v498
    %v524 = vsel %vm399, %v236, %v521
    %v525 = vsel %vm399, 0, %v523
    %v526 = vmul.f32 %v524, %v524
    %v527 = vmul.f32 %v526, -0.001358992
    %v528 = vadd.f32 %v527, 0.041655596
    %v529 = vmul.f32 %v526, %v528
    %v530 = vadd.f32 %v529, -0.4999988
    %v531 = vmul.f32 %v526, %v530
    %v532 = vadd.f32 1.0, %v531
    %v533 = vmul.f32 %v524, %v524
    %v534 = vmul.f32 %v533, -0.00019511016
    %v535 = vadd.f32 %v534, 0.008332121
    %v536 = vmul.f32 %v533, %v535
    %v537 = vadd.f32 %v536, -0.16666654
    %v538 = vmul.f32 %v533, %v537
    %v539 = vadd.f32 %v538, 1.0
    %v540 = vmul.f32 %v539, %v524
    %vm541 = vweird.f32 %v236
    %v542 = vadd.s32 %v525, 3
    %v543 = vand.u32 %v542, 3
    %vm544 = vcmp.lt.s32.totalorder %v543, 2
    %vm545 = vcmp.eq.s32.totalorder %v543, 0
    %v546 = vxor.u32 %v540, 2147483648
    %v547 = vsel %vm545, %v532, %v546
    %vm548 = vcmp.eq.s32.totalorder %v543, 2
    %v549 = vxor.u32 %v532, 2147483648
    %v550 = vsel %vm548, %v549, %v540
    %v551 = vsel %vm544, %v547, %v550
    %v552 = vsel %vm541, nan, %v551
    %v553 = vand.u32 2147483647, %v237
    %vm554 = vcmp.le.f32.partialorder %v553, 0.7853982
    %vm555 = vcmp.lt.s32.totalorder %v237, 0
    %v556 = vand.u32 %v237, 2139095040
    %v557 = vshrl.u32 %v556, 23
    %v558 = vsub.s32 %v557, 127
    %v559 = vand.u32 2147483647, %v237
    %v560 = vand.u32 %v559, 8388607
    %v561 = vor.u32 %v560, 8388608
    %v562 = vsub.s32 0, %v561
    %v563 = vadd.s32 %v558, 1
    %vm564 = vcmp.gt.s32.totalorder %v563, 0
    %v565 = vsel %vm564, %v563, 0
    %v566 = vshrl.u32 %v565, 5
    %v567 = vand.u32 %v565, 31
    %v568 = vsub.s32 32, %v567
    %v569 = vshrl.u32 683565275, %v568
    %v570 = vshll.u32 683565275, %v567
    %v571 = vshrl.u32 2475754826, %v568
    %v572 = vor.u32 %v570, %v571
    %v573 = vshll.u32 2475754826, %v567
    %v574 = vshrl.u32 2131351028, %v568
    %v575 = vor.u32 %v573, %v574
    %v576 = vshll.u32 2131351028, %v567
    %v577 = vshrl.u32 2102212464, %v568
    %v578 = vor.u32 %v576, %v577
    %v579 = vshll.u32 2102212464, %v567
    %v580 = vshrl.u32 920167782, %v568
    %v581 = vor.u32 %v579, %v580
    %v582 = vshll.u32 920167782, %v567
    %v583 = vshrl.u32 1326507024, %v568
    %v584 = vor.u32 %v582, %v583
    %vm585 = vcmp.lt.s32.totalorder %v566, 1
    %vm586 = vcmp.lt.s32.totalorder %v566, 2
    %vm587 = vcmp.lt.s32.totalorder %v566, 3
    %vm588 = vcmp.lt.s32.totalorder %v566, 4
    %v589 = vsel %vm585, %v569, %v572
    %v590 = vsel %vm588, %v578, 2102212464
    %v591 = vsel %vm587, %v575, %v590
    %v592 = vsel %vm586, %v589, %v591
    %v593 = vsel %vm585, %v572, %v575
    %v594 = vsel %vm588, %v581, 920167782
    %v595 = vsel %vm587, %v578, %v594
    %v596 = vsel %vm586, %v593, %v595
    %v597 = vsel %vm585, %v575, %v578
    %v598 = vsel %vm588, %v584, 1326507024
    %v599 = vsel %vm587, %v581, %v598
    %v600 = vsel %vm586, %v597, %v599
    %v601 = vshll.u32 %v561, 8
    %v602 = vand.u32 %v601, 65535
    %v603 = vshrl.u32 %v601, 16
    %v604 = vand.u32 %v600, 65535
    %v605 = vshrl.u32 %v600, 16
    %v606 = vmul.u32 %v602, %v604
    %v607 = vmul.u32 %v602, %v605
    %v608 = vmul.u32 %v603, %v604
    %v609 = vmul.u32 %v603, %v605
    %v610 = vshll.u32 %v607, 16
    %v611 = vshrl.u32 %v607, 16
    %v612 = vshll.u32 %v608, 16
    %v613 = vshrl.u32 %v608, 16
    %vm614 = vc.u32 %v606, %v610
    %v615 = vsel %vm614, 1, 0
    %v616 = vadd.s32 %v606, %v610
    %v617 = vadd.s32 %v609, %v615
    %vm618 = vc.u32 %v616, %v612
    %v619 = vsel %vm618, 1, 0
    %v620 = vadd.s32 %v616, %v612
    %v621 = vadd.s32 %v617, %v619
    %v622 = vadd.s32 %v621, %v611
    %v623 = vadd.s32 %v622, %v613
    %v624 = vand.u32 %v601, 65535
    %v625 = vshrl.u32 %v601, 16
    %v626 = vand.u32 %v596, 65535
    %v627 = vshrl.u32 %v596, 16
    %v628 = vmul.u32 %v624, %v626
    %v629 = vmul.u32 %v624, %v627
    %v630 = vmul.u32 %v625, %v626
    %v631 = vmul.u32 %v625, %v627
    %v632 = vshll.u32 %v629, 16
    %v633 = vshrl.u32 %v629, 16
    %v634 = vshll.u32 %v630, 16
    %v635 = vshrl.u32 %v630, 16
    %vm636 = vc.u32 %v628, %v632
    %v637 = vsel %vm636, 1, 0
    %v638 = vadd.s32 %v628, %v632
    %v639 = vadd.s32 %v631, %v637
    %vm640 = vc.u32 %v638, %v634
    %v641 = vsel %vm640, 1, 0
    %v642 = vadd.s32 %v638, %v634
    %v643 = vadd.s32 %v639, %v641
    %v644 = vadd.s32 %v643, %v633
    %v645 = vadd.s32 %v644, %v635
    %v646 = vmul.u32 %v601, %v592
    %v647 = vadd.s32 %v623, %v642
    %vm648 = vc.u32 %v623, %v642
    %v649 = vadd.s32 %v645, 1
    %v650 = vsel %vm648, %v649, %v645
    %v651 = vadd.s32 %v646, %v650
    %v652 = vadd.s32 %v651, 536870912
    %v653 = vshrl.u32 %v652, 30
    %v654 = vshll.u32 %v653, 30
    %v655 = vsub.s32 %v651, %v654
    %vm656 = vcmp.lt.s32.totalorder %v655, 0
    %v657 = vsub.s32 0, %v655
    %v658 = vsel %vm656, %v657, %v655
    %v659 = vclz %v658
    %v660 = vsub.s32 %v659, 2
    %vm661 = vcmp.gt.s32.totalorder 0, %v660
    %v662 = vsel %vm661, 0, %v660
    %v663 = vsub.s32 32, %v662
    %v664 = vshll.u32 %v655, %v662
    %v665 = vshrl.u32 %v647, %v663
    %v666 = vor.u32 %v664, %v665
    %v667 = vsub.s32 4294967266, %v662
    %v668 = vadd.s32 %v667, 127
    %v669 = vshll.u32 %v668, 23
    %v670 = vor.u32 4788187, %v669
    %v671 = vand.u32 2147483647, %v670
    %v673 = vcvt.s32.f32 %v666
    %v674 = vmul.f32 %v673, %v671
    %v675 = vxor.u32 %v674, 2147483648
    %v676 = vsel %vm555, %v675, %v674
    %v677 = vsub.s32 4, %v653
    %v678 = vsel %vm555, %v677, %v653
    %v679 = vsel %vm554, %v237, %v676
    %v680 = vsel %vm554, 0, %v678
    %v681 = vmul.f32 %v679, %v679
    %v682 = vmul.f32 %v681, -0.001358992
    %v683 = vadd.f32 %v682, 0.041655596
    %v684 = vmul.f32 %v681, %v683
    %v685 = vadd.f32 %v684, -0.4999988
    %v686 = vmul.f32 %v681, %v685
    %v687 = vadd.f32 1.0, %v686
    %v688 = vmul.f32 %v679, %v679
    %v689 = vmul.f32 %v688, -0.00019511016
    %v690 = vadd.f32 %v689, 0.008332121
    %v691 = vmul.f32 %v688, %v690
    %v692 = vadd.f32 %v691, -0.16666654
    %v693 = vmul.f32 %v688, %v692
    %v694 = vadd.f32 %v693, 1.0
    %v695 = vmul.f32 %v694, %v679
    %vm696 = vweird.f32 %v237
    %v697 = vadd.s32 %v680, 3
    %v698 = vand.u32 %v697, 3
    %vm699 = vcmp.lt.s32.totalorder %v698, 2
    %vm700 = vcmp.eq.s32.totalorder %v698, 0
    %v701 = vxor.u32 %v695, 2147483648
    %v702 = vsel %vm700, %v687, %v701
    %vm703 = vcmp.eq.s32.totalorder %v698, 2
    %v704 = vxor.u32 %v687, 2147483648
    %v705 = vsel %vm703, %v704, %v695
    %v706 = vsel %vm699, %v702, %v705
    %v707 = vsel %vm696, nan, %v706
    %v708 = vand.u32 2147483647, %v238
    %vm709 = vcmp.le.f32.partialorder %v708, 0.7853982
    %vm710 = vcmp.lt.s32.totalorder %v238, 0
    %v711 = vand.u32 %v238, 2139095040
    %v712 = vshrl.u32 %v711, 23
    %v713 = vsub.s32 %v712, 127
    %v714 = vand.u32 2147483647, %v238
    %v715 = vand.u32 %v714, 8388607
    %v716 = vor.u32 %v715, 8388608
    %v717 = vsub.s32 0, %v716
    %v718 = vadd.s32 %v713, 1
    %vm719 = vcmp.gt.s32.totalorder %v718, 0
    %v720 = vsel %vm719, %v718, 0
    %v721 = vshrl.u32 %v720, 5
    %v722 = vand.u32 %v720, 31
    %v723 = vsub.s32 32, %v722
    %v724 = vshrl.u32 683565275, %v723
    %v725 = vshll.u32 683565275, %v722
    %v726 = vshrl.u32 2475754826, %v723
    %v727 = vor.u32 %v725, %v726
    %v728 = vshll.u32 2475754826, %v722
    %v729 = vshrl.u32 2131351028, %v723
    %v730 = vor.u32 %v728, %v729
    %v731 = vshll.u32 2131351028, %v722
    %v732 = vshrl.u32 2102212464, %v723
    %v733 = vor.u32 %v731, %v732
    %v734 = vshll.u32 2102212464, %v722
    %v735 = vshrl.u32 920167782, %v723
    %v736 = vor.u32 %v734, %v735
    %v737 = vshll.u32 920167782, %v722
    %v738 = vshrl.u32 1326507024, %v723
    %v739 = vor.u32 %v737, %v738
    %vm740 = vcmp.lt.s32.totalorder %v721, 1
    %vm741 = vcmp.lt.s32.totalorder %v721, 2
    %vm742 = vcmp.lt.s32.totalorder %v721, 3
    %vm743 = vcmp.lt.s32.totalorder %v721, 4
    %v744 = vsel %vm740, %v724, %v727
    %v745 = vsel %vm743, %v733, 2102212464
    %v746 = vsel %vm742, %v730, %v745
    %v747 = vsel %vm741, %v744, %v746
    %v748 = vsel %vm740, %v727, %v730
    %v749 = vsel %vm743, %v736, 920167782
    %v750 = vsel %vm742, %v733, %v749
    %v751 = vsel %vm741, %v748, %v750
    %v752 = vsel %vm740, %v730, %v733
    %v753 = vsel %vm743, %v739, 1326507024
    %v754 = vsel %vm742, %v736, %v753
    %v755 = vsel %vm741, %v752, %v754
    %v756 = vshll.u32 %v716, 8
    %v757 = vand.u32 %v756, 65535
    %v758 = vshrl.u32 %v756, 16
    %v759 = vand.u32 %v755, 65535
    %v760 = vshrl.u32 %v755, 16
    %v761 = vmul.u32 %v757, %v759
    %v762 = vmul.u32 %v757, %v760
    %v763 = vmul.u32 %v758, %v759
    %v764 = vmul.u32 %v758, %v760
    %v765 = vshll.u32 %v762, 16
    %v766 = vshrl.u32 %v762, 16
    %v767 = vshll.u32 %v763, 16
    %v768 = vshrl.u32 %v763, 16
    %vm769 = vc.u32 %v761, %v765
    %v770 = vsel %vm769, 1, 0
    %v771 = vadd.s32 %v761, %v765
    %v772 = vadd.s32 %v764, %v770
    %vm773 = vc.u32 %v771, %v767
    %v774 = vsel %vm773, 1, 0
    %v775 = vadd.s32 %v771, %v767
    %v776 = vadd.s32 %v772, %v774
    %v777 = vadd.s32 %v776, %v766
    %v778 = vadd.s32 %v777, %v768
    %v779 = vand.u32 %v756, 65535
    %v780 = vshrl.u32 %v756, 16
    %v781 = vand.u32 %v751, 65535
    %v782 = vshrl.u32 %v751, 16
    %v783 = vmul.u32 %v779, %v781
    %v784 = vmul.u32 %v779, %v782
    %v785 = vmul.u32 %v780, %v781
    %v786 = vmul.u32 %v780, %v782
    %v787 = vshll.u32 %v784, 16
    %v788 = vshrl.u32 %v784, 16
    %v789 = vshll.u32 %v785, 16
    %v790 = vshrl.u32 %v785, 16
    %vm791 = vc.u32 %v783, %v787
    %v792 = vsel %vm791, 1, 0
    %v793 = vadd.s32 %v783, %v787
    %v794 = vadd.s32 %v786, %v792
    %vm795 = vc.u32 %v793, %v789
    %v796 = vsel %vm795, 1, 0
    %v797 = vadd.s32 %v793, %v789
    %v798 = vadd.s32 %v794, %v796
    %v799 = vadd.s32 %v798, %v788
    %v800 = vadd.s32 %v799, %v790
    %v801 = vmul.u32 %v756, %v747
    %v802 = vadd.s32 %v778, %v797
    %vm803 = vc.u32 %v778, %v797
    %v804 = vadd.s32 %v800, 1
    %v805 = vsel %vm803, %v804, %v800
    %v806 = vadd.s32 %v801, %v805
    %v807 = vadd.s32 %v806, 536870912
    %v808 = vshrl.u32 %v807, 30
    %v809 = vshll.u32 %v808, 30
    %v810 = vsub.s32 %v806, %v809
    %vm811 = vcmp.lt.s32.totalorder %v810, 0
    %v812 = vsub.s32 0, %v810
    %v813 = vsel %vm811, %v812, %v810
    %v814 = vclz %v813
    %v815 = vsub.s32 %v814, 2
    %vm816 = vcmp.gt.s32.totalorder 0, %v815
    %v817 = vsel %vm816, 0, %v815
    %v818 = vsub.s32 32, %v817
    %v819 = vshll.u32 %v810, %v817
    %v820 = vshrl.u32 %v802, %v818
    %v821 = vor.u32 %v819, %v820
    %v822 = vsub.s32 4294967266, %v817
    %v823 = vadd.s32 %v822, 127
    %v824 = vshll.u32 %v823, 23
    %v825 = vor.u32 4788187, %v824
    %v826 = vand.u32 2147483647, %v825
    %v828 = vcvt.s32.f32 %v821
    %v829 = vmul.f32 %v828, %v826
    %v830 = vxor.u32 %v829, 2147483648
    %v831 = vsel %vm710, %v830, %v829
    %v832 = vsub.s32 4, %v808
    %v833 = vsel %vm710, %v832, %v808
    %v834 = vsel %vm709, %v238, %v831
    %v835 = vsel %vm709, 0, %v833
    %v836 = vmul.f32 %v834, %v834
    %v837 = vmul.f32 %v836, -0.001358992
    %v838 = vadd.f32 %v837, 0.041655596
    %v839 = vmul.f32 %v836, %v838
    %v840 = vadd.f32 %v839, -0.4999988
    %v841 = vmul.f32 %v836, %v840
    %v842 = vadd.f32 1.0, %v841
    %v843 = vmul.f32 %v834, %v834
    %v844 = vmul.f32 %v843, -0.00019511016
    %v845 = vadd.f32 %v844, 0.008332121
    %v846 = vmul.f32 %v843, %v845
    %v847 = vadd.f32 %v846, -0.16666654
    %v848 = vmul.f32 %v843, %v847
    %v849 = vadd.f32 %v848, 1.0
    %v850 = vmul.f32 %v849, %v834
    %vm851 = vweird.f32 %v238
    %v852 = vadd.s32 %v835, 3
    %v853 = vand.u32 %v852, 3
    %vm854 = vcmp.lt.s32.totalorder %v853, 2
    %vm855 = vcmp.eq.s32.totalorder %v853, 0
    %v856 = vxor.u32 %v850, 2147483648
    %v857 = vsel %vm855, %v842, %v856
    %vm858 = vcmp.eq.s32.totalorder %v853, 2
    %v859 = vxor.u32 %v842, 2147483648
    %v860 = vsel %vm858, %v859, %v850
    %v861 = vsel %vm854, %v857, %v860
    %v862 = vsel %vm851, nan, %v861
    %v863 = vand.u32 2147483647, %v239
    %vm864 = vcmp.le.f32.partialorder %v863, 0.7853982
    %vm865 = vcmp.lt.s32.totalorder %v239, 0
    %v866 = vand.u32 %v239, 2139095040
    %v867 = vshrl.u32 %v866, 23
    %v868 = vsub.s32 %v867, 127
    %v869 = vand.u32 2147483647, %v239
    %v870 = vand.u32 %v869, 8388607
    %v871 = vor.u32 %v870, 8388608
    %v872 = vsub.s32 0, %v871
    %v873 = vadd.s32 %v868, 1
    %vm874 = vcmp.gt.s32.totalorder %v873, 0
    %v875 = vsel %vm874, %v873, 0
    %v876 = vshrl.u32 %v875, 5
    %v877 = vand.u32 %v875, 31
    %v878 = vsub.s32 32, %v877
    %v879 = vshrl.u32 683565275, %v878
    %v880 = vshll.u32 683565275, %v877
    %v881 = vshrl.u32 2475754826, %v878
    %v882 = vor.u32 %v880, %v881
    %v883 = vshll.u32 2475754826, %v877
    %v884 = vshrl.u32 2131351028, %v878
    %v885 = vor.u32 %v883, %v884
    %v886 = vshll.u32 2131351028, %v877
    %v887 = vshrl.u32 2102212464, %v878
    %v888 = vor.u32 %v886, %v887
    %v889 = vshll.u32 2102212464, %v877
    %v890 = vshrl.u32 920167782, %v878
    %v891 = vor.u32 %v889, %v890
    %v892 = vshll.u32 920167782, %v877
    %v893 = vshrl.u32 1326507024, %v878
    %v894 = vor.u32 %v892, %v893
    %vm895 = vcmp.lt.s32.totalorder %v876, 1
    %vm896 = vcmp.lt.s32.totalorder %v876, 2
    %vm897 = vcmp.lt.s32.totalorder %v876, 3
    %vm898 = vcmp.lt.s32.totalorder %v876, 4
    %v899 = vsel %vm895, %v879, %v882
    %v900 = vsel %vm898, %v888, 2102212464
    %v901 = vsel %vm897, %v885, %v900
    %v902 = vsel %vm896, %v899, %v901
    %v903 = vsel %vm895, %v882, %v885
    %v904 = vsel %vm898, %v891, 920167782
    %v905 = vsel %vm897, %v888, %v904
    %v906 = vsel %vm896, %v903, %v905
    %v907 = vsel %vm895, %v885, %v888
    %v908 = vsel %vm898, %v894, 1326507024
    %v909 = vsel %vm897, %v891, %v908
    %v910 = vsel %vm896, %v907, %v909
    %v911 = vshll.u32 %v871, 8
    %v912 = vand.u32 %v911, 65535
    %v913 = vshrl.u32 %v911, 16
    %v914 = vand.u32 %v910, 65535
    %v915 = vshrl.u32 %v910, 16
    %v916 = vmul.u32 %v912, %v914
    %v917 = vmul.u32 %v912, %v915
    %v918 = vmul.u32 %v913, %v914
    %v919 = vmul.u32 %v913, %v915
    %v920 = vshll.u32 %v917, 16
    %v921 = vshrl.u32 %v917, 16
    %v922 = vshll.u32 %v918, 16
    %v923 = vshrl.u32 %v918, 16
    %vm924 = vc.u32 %v916, %v920
    %v925 = vsel %vm924, 1, 0
    %v926 = vadd.s32 %v916, %v920
    %v927 = vadd.s32 %v919, %v925
    %vm928 = vc.u32 %v926, %v922
    %v929 = vsel %vm928, 1, 0
    %v930 = vadd.s32 %v926, %v922
    %v931 = vadd.s32 %v927, %v929
    %v932 = vadd.s32 %v931, %v921
    %v933 = vadd.s32 %v932, %v923
    %v934 = vand.u32 %v911, 65535
    %v935 = vshrl.u32 %v911, 16
    %v936 = vand.u32 %v906, 65535
    %v937 = vshrl.u32 %v906, 16
    %v938 = vmul.u32 %v934, %v936
    %v939 = vmul.u32 %v934, %v937
    %v940 = vmul.u32 %v935, %v936
    %v941 = vmul.u32 %v935, %v937
    %v942 = vshll.u32 %v939, 16
    %v943 = vshrl.u32 %v939, 16
    %v944 = vshll.u32 %v940, 16
    %v945 = vshrl.u32 %v940, 16
    %vm946 = vc.u32 %v938, %v942
    %v947 = vsel %vm946, 1, 0
    %v948 = vadd.s32 %v938, %v942
    %v949 = vadd.s32 %v941, %v947
    %vm950 = vc.u32 %v948, %v944
    %v951 = vsel %vm950, 1, 0
    %v952 = vadd.s32 %v948, %v944
    %v953 = vadd.s32 %v949, %v951
    %v954 = vadd.s32 %v953, %v943
    %v955 = vadd.s32 %v954, %v945
    %v956 = vmul.u32 %v911, %v902
    %v957 = vadd.s32 %v933, %v952
    %vm958 = vc.u32 %v933, %v952
    %v959 = vadd.s32 %v955, 1
    %v960 = vsel %vm958, %v959, %v955
    %v961 = vadd.s32 %v956, %v960
    %v962 = vadd.s32 %v961, 536870912
    %v963 = vshrl.u32 %v962, 30
    %v964 = vshll.u32 %v963, 30
    %v965 = vsub.s32 %v961, %v964
    %vm966 = vcmp.lt.s32.totalorder %v965, 0
    %v967 = vsub.s32 0, %v965
    %v968 = vsel %vm966, %v967, %v965
    %v969 = vclz %v968
    %v970 = vsub.s32 %v969, 2
    %vm971 = vcmp.gt.s32.totalorder 0, %v970
    %v972 = vsel %vm971, 0, %v970
    %v973 = vsub.s32 32, %v972
    %v974 = vshll.u32 %v965, %v972
    %v975 = vshrl.u32 %v957, %v973
    %v976 = vor.u32 %v974, %v975
    %v977 = vsub.s32 4294967266, %v972
    %v978 = vadd.s32 %v977, 127
    %v979 = vshll.u32 %v978, 23
    %v980 = vor.u32 4788187, %v979
    %v981 = vand.u32 2147483647, %v980
    %v983 = vcvt.s32.f32 %v976
    %v984 = vmul.f32 %v983, %v981
    %v985 = vxor.u32 %v984, 2147483648
    %v986 = vsel %vm865, %v985, %v984
    %v987 = vsub.s32 4, %v963
    %v988 = vsel %vm865, %v987, %v963
    %v989 = vsel %vm864, %v239, %v986
    %v990 = vsel %vm864, 0, %v988
    %v991 = vmul.f32 %v989, %v989
    %v992 = vmul.f32 %v991, -0.001358992
    %v993 = vadd.f32 %v992, 0.041655596
    %v994 = vmul.f32 %v991, %v993
    %v995 = vadd.f32 %v994, -0.4999988
    %v996 = vmul.f32 %v991, %v995
    %v997 = vadd.f32 1.0, %v996
    %v998 = vmul.f32 %v989, %v989
    %v999 = vmul.f32 %v998, -0.00019511016
    %v1000 = vadd.f32 %v999, 0.008332121
    %v1001 = vmul.f32 %v998, %v1000
    %v1002 = vadd.f32 %v1001, -0.16666654
    %v1003 = vmul.f32 %v998, %v1002
    %v1004 = vadd.f32 %v1003, 1.0
    %v1005 = vmul.f32 %v1004, %v989
    %vm1006 = vweird.f32 %v239
    %v1007 = vadd.s32 %v990, 3
    %v1008 = vand.u32 %v1007, 3
    %vm1009 = vcmp.lt.s32.totalorder %v1008, 2
    %vm1010 = vcmp.eq.s32.totalorder %v1008, 0
    %v1011 = vxor.u32 %v1005, 2147483648
    %v1012 = vsel %vm1010, %v997, %v1011
    %vm1013 = vcmp.eq.s32.totalorder %v1008, 2
    %v1014 = vxor.u32 %v997, 2147483648
    %v1015 = vsel %vm1013, %v1014, %v1005
    %v1016 = vsel %vm1009, %v1012, %v1015
    %v1017 = vsel %vm1006, nan, %v1016
    %v1018 = vand.u32 2147483647, %v240
    %vm1019 = vcmp.le.f32.partialorder %v1018, 0.7853982
    %vm1020 = vcmp.lt.s32.totalorder %v240, 0
    %v1021 = vand.u32 %v240, 2139095040
    %v1022 = vshrl.u32 %v1021, 23
    %v1023 = vsub.s32 %v1022, 127
    %v1024 = vand.u32 2147483647, %v240
    %v1025 = vand.u32 %v1024, 8388607
    %v1026 = vor.u32 %v1025, 8388608
    %v1027 = vsub.s32 0, %v1026
    %v1028 = vadd.s32 %v1023, 1
    %vm1029 = vcmp.gt.s32.totalorder %v1028, 0
    %v1030 = vsel %vm1029, %v1028, 0
    %v1031 = vshrl.u32 %v1030, 5
    %v1032 = vand.u32 %v1030, 31
    %v1033 = vsub.s32 32, %v1032
    %v1034 = vshrl.u32 683565275, %v1033
    %v1035 = vshll.u32 683565275, %v1032
    %v1036 = vshrl.u32 2475754826, %v1033
    %v1037 = vor.u32 %v1035, %v1036
    %v1038 = vshll.u32 2475754826, %v1032
    %v1039 = vshrl.u32 2131351028, %v1033
    %v1040 = vor.u32 %v1038, %v1039
    %v1041 = vshll.u32 2131351028, %v1032
    %v1042 = vshrl.u32 2102212464, %v1033
    %v1043 = vor.u32 %v1041, %v1042
    %v1044 = vshll.u32 2102212464, %v1032
    %v1045 = vshrl.u32 920167782, %v1033
    %v1046 = vor.u32 %v1044, %v1045
    %v1047 = vshll.u32 920167782, %v1032
    %v1048 = vshrl.u32 1326507024, %v1033
    %v1049 = vor.u32 %v1047, %v1048
    %vm1050 = vcmp.lt.s32.totalorder %v1031, 1
    %vm1051 = vcmp.lt.s32.totalorder %v1031, 2
    %vm1052 = vcmp.lt.s32.totalorder %v1031, 3
    %vm1053 = vcmp.lt.s32.totalorder %v1031, 4
    %v1054 = vsel %vm1050, %v1034, %v1037
    %v1055 = vsel %vm1053, %v1043, 2102212464
    %v1056 = vsel %vm1052, %v1040, %v1055
    %v1057 = vsel %vm1051, %v1054, %v1056
    %v1058 = vsel %vm1050, %v1037, %v1040
    %v1059 = vsel %vm1053, %v1046, 920167782
    %v1060 = vsel %vm1052, %v1043, %v1059
    %v1061 = vsel %vm1051, %v1058, %v1060
    %v1062 = vsel %vm1050, %v1040, %v1043
    %v1063 = vsel %vm1053, %v1049, 1326507024
    %v1064 = vsel %vm1052, %v1046, %v1063
    %v1065 = vsel %vm1051, %v1062, %v1064
    %v1066 = vshll.u32 %v1026, 8
    %v1067 = vand.u32 %v1066, 65535
    %v1068 = vshrl.u32 %v1066, 16
    %v1069 = vand.u32 %v1065, 65535
    %v1070 = vshrl.u32 %v1065, 16
    %v1071 = vmul.u32 %v1067, %v1069
    %v1072 = vmul.u32 %v1067, %v1070
    %v1073 = vmul.u32 %v1068, %v1069
    %v1074 = vmul.u32 %v1068, %v1070
    %v1075 = vshll.u32 %v1072, 16
    %v1076 = vshrl.u32 %v1072, 16
    %v1077 = vshll.u32 %v1073, 16
    %v1078 = vshrl.u32 %v1073, 16
    %vm1079 = vc.u32 %v1071, %v1075
    %v1080 = vsel %vm1079, 1, 0
    %v1081 = vadd.s32 %v1071, %v1075
    %v1082 = vadd.s32 %v1074, %v1080
    %vm1083 = vc.u32 %v1081, %v1077
    %v1084 = vsel %vm1083, 1, 0
    %v1085 = vadd.s32 %v1081, %v1077
    %v1086 = vadd.s32 %v1082, %v1084
    %v1087 = vadd.s32 %v1086, %v1076
    %v1088 = vadd.s32 %v1087, %v1078
    %v1089 = vand.u32 %v1066, 65535
    %v1090 = vshrl.u32 %v1066, 16
    %v1091 = vand.u32 %v1061, 65535
    %v1092 = vshrl.u32 %v1061, 16
    %v1093 = vmul.u32 %v1089, %v1091
    %v1094 = vmul.u32 %v1089, %v1092
    %v1095 = vmul.u32 %v1090, %v1091
    %v1096 = vmul.u32 %v1090, %v1092
    %v1097 = vshll.u32 %v1094, 16
    %v1098 = vshrl.u32 %v1094, 16
    %v1099 = vshll.u32 %v1095, 16
    %v1100 = vshrl.u32 %v1095, 16
    %vm1101 = vc.u32 %v1093, %v1097
    %v1102 = vsel %vm1101, 1, 0
    %v1103 = vadd.s32 %v1093, %v1097
    %v1104 = vadd.s32 %v1096, %v1102
    %vm1105 = vc.u32 %v1103, %v1099
    %v1106 = vsel %vm1105, 1, 0
    %v1107 = vadd.s32 %v1103, %v1099
    %v1108 = vadd.s32 %v1104, %v1106
    %v1109 = vadd.s32 %v1108, %v1098
    %v1110 = vadd.s32 %v1109, %v1100
    %v1111 = vmul.u32 %v1066, %v1057
    %v1112 = vadd.s32 %v1088, %v1107
    %vm1113 = vc.u32 %v1088, %v1107
    %v1114 = vadd.s32 %v1110, 1
    %v1115 = vsel %vm1113, %v1114, %v1110
    %v1116 = vadd.s32 %v1111, %v1115
    %v1117 = vadd.s32 %v1116, 536870912
    %v1118 = vshrl.u32 %v1117, 30
    %v1119 = vshll.u32 %v1118, 30
    %v1120 = vsub.s32 %v1116, %v1119
    %vm1121 = vcmp.lt.s32.totalorder %v1120, 0
    %v1122 = vsub.s32 0, %v1120
    %v1123 = vsel %vm1121, %v1122, %v1120
    %v1124 = vclz %v1123
    %v1125 = vsub.s32 %v1124, 2
    %vm1126 = vcmp.gt.s32.totalorder 0, %v1125
    %v1127 = vsel %vm1126, 0, %v1125
    %v1128 = vsub.s32 32, %v1127
    %v1129 = vshll.u32 %v1120, %v1127
    %v1130 = vshrl.u32 %v1112, %v1128
    %v1131 = vor.u32 %v1129, %v1130
    %v1132 = vsub.s32 4294967266, %v1127
    %v1133 = vadd.s32 %v1132, 127
    %v1134 = vshll.u32 %v1133, 23
    %v1135 = vor.u32 4788187, %v1134
    %v1136 = vand.u32 2147483647, %v1135
    %v1138 = vcvt.s32.f32 %v1131
    %v1139 = vmul.f32 %v1138, %v1136
    %v1140 = vxor.u32 %v1139, 2147483648
    %v1141 = vsel %vm1020, %v1140, %v1139
    %v1142 = vsub.s32 4, %v1118
    %v1143 = vsel %vm1020, %v1142, %v1118
    %v1144 = vsel %vm1019, %v240, %v1141
    %v1145 = vsel %vm1019, 0, %v1143
    %v1146 = vmul.f32 %v1144, %v1144
    %v1147 = vmul.f32 %v1146, -0.001358992
    %v1148 = vadd.f32 %v1147, 0.041655596
    %v1149 = vmul.f32 %v1146, %v1148
    %v1150 = vadd.f32 %v1149, -0.4999988
    %v1151 = vmul.f32 %v1146, %v1150
    %v1152 = vadd.f32 1.0, %v1151
    %v1153 = vmul.f32 %v1144, %v1144
    %v1154 = vmul.f32 %v1153, -0.00019511016
    %v1155 = vadd.f32 %v1154, 0.008332121
    %v1156 = vmul.f32 %v1153, %v1155
    %v1157 = vadd.f32 %v1156, -0.16666654
    %v1158 = vmul.f32 %v1153, %v1157
    %v1159 = vadd.f32 %v1158, 1.0
    %v1160 = vmul.f32 %v1159, %v1144
    %vm1161 = vweird.f32 %v240
    %v1162 = vadd.s32 %v1145, 3
    %v1163 = vand.u32 %v1162, 3
    %vm1164 = vcmp.lt.s32.totalorder %v1163, 2
    %vm1165 = vcmp.eq.s32.totalorder %v1163, 0
    %v1166 = vxor.u32 %v1160, 2147483648
    %v1167 = vsel %vm1165, %v1152, %v1166
    %vm1168 = vcmp.eq.s32.totalorder %v1163, 2
    %v1169 = vxor.u32 %v1152, 2147483648
    %v1170 = vsel %vm1168, %v1169, %v1160
    %v1171 = vsel %vm1164, %v1167, %v1170
    %v1172 = vsel %vm1161, nan, %v1171
    %v1173 = vand.u32 2147483647, %v241
    %vm1174 = vcmp.le.f32.partialorder %v1173, 0.7853982
    %vm1175 = vcmp.lt.s32.totalorder %v241, 0
    %v1176 = vand.u32 %v241, 2139095040
    %v1177 = vshrl.u32 %v1176, 23
    %v1178 = vsub.s32 %v1177, 127
    %v1179 = vand.u32 2147483647, %v241
    %v1180 = vand.u32 %v1179, 8388607
    %v1181 = vor.u32 %v1180, 8388608
    %v1182 = vsub.s32 0, %v1181
    %v1183 = vadd.s32 %v1178, 1
    %vm1184 = vcmp.gt.s32.totalorder %v1183, 0
    %v1185 = vsel %vm1184, %v1183, 0
    %v1186 = vshrl.u32 %v1185, 5
    %v1187 = vand.u32 %v1185, 31
    %v1188 = vsub.s32 32, %v1187
    %v1189 = vshrl.u32 683565275, %v1188
    %v1190 = vshll.u32 683565275, %v1187
    %v1191 = vshrl.u32 2475754826, %v1188
    %v1192 = vor.u32 %v1190, %v1191
    %v1193 = vshll.u32 2475754826, %v1187
    %v1194 = vshrl.u32 2131351028, %v1188
    %v1195 = vor.u32 %v1193, %v1194
    %v1196 = vshll.u32 2131351028, %v1187
    %v1197 = vshrl.u32 2102212464, %v1188
    %v1198 = vor.u32 %v1196, %v1197
    %v1199 = vshll.u32 2102212464, %v1187
    %v1200 = vshrl.u32 920167782, %v1188
    %v1201 = vor.u32 %v1199, %v1200
    %v1202 = vshll.u32 920167782, %v1187
    %v1203 = vshrl.u32 1326507024, %v1188
    %v1204 = vor.u32 %v1202, %v1203
    %vm1205 = vcmp.lt.s32.totalorder %v1186, 1
    %vm1206 = vcmp.lt.s32.totalorder %v1186, 2
    %vm1207 = vcmp.lt.s32.totalorder %v1186, 3
    %vm1208 = vcmp.lt.s32.totalorder %v1186, 4
    %v1209 = vsel %vm1205, %v1189, %v1192
    %v1210 = vsel %vm1208, %v1198, 2102212464
    %v1211 = vsel %vm1207, %v1195, %v1210
    %v1212 = vsel %vm1206, %v1209, %v1211
    %v1213 = vsel %vm1205, %v1192, %v1195
    %v1214 = vsel %vm1208, %v1201, 920167782
    %v1215 = vsel %vm1207, %v1198, %v1214
    %v1216 = vsel %vm1206, %v1213, %v1215
    %v1217 = vsel %vm1205, %v1195, %v1198
    %v1218 = vsel %vm1208, %v1204, 1326507024
    %v1219 = vsel %vm1207, %v1201, %v1218
    %v1220 = vsel %vm1206, %v1217, %v1219
    %v1221 = vshll.u32 %v1181, 8
    %v1222 = vand.u32 %v1221, 65535
    %v1223 = vshrl.u32 %v1221, 16
    %v1224 = vand.u32 %v1220, 65535
    %v1225 = vshrl.u32 %v1220, 16
    %v1226 = vmul.u32 %v1222, %v1224
    %v1227 = vmul.u32 %v1222, %v1225
    %v1228 = vmul.u32 %v1223, %v1224
    %v1229 = vmul.u32 %v1223, %v1225
    %v1230 = vshll.u32 %v1227, 16
    %v1231 = vshrl.u32 %v1227, 16
    %v1232 = vshll.u32 %v1228, 16
    %v1233 = vshrl.u32 %v1228, 16
    %vm1234 = vc.u32 %v1226, %v1230
    %v1235 = vsel %vm1234, 1, 0
    %v1236 = vadd.s32 %v1226, %v1230
    %v1237 = vadd.s32 %v1229, %v1235
    %vm1238 = vc.u32 %v1236, %v1232
    %v1239 = vsel %vm1238, 1, 0
    %v1240 = vadd.s32 %v1236, %v1232
    %v1241 = vadd.s32 %v1237, %v1239
    %v1242 = vadd.s32 %v1241, %v1231
    %v1243 = vadd.s32 %v1242, %v1233
    %v1244 = vand.u32 %v1221, 65535
    %v1245 = vshrl.u32 %v1221, 16
    %v1246 = vand.u32 %v1216, 65535
    %v1247 = vshrl.u32 %v1216, 16
    %v1248 = vmul.u32 %v1244, %v1246
    %v1249 = vmul.u32 %v1244, %v1247
    %v1250 = vmul.u32 %v1245, %v1246
    %v1251 = vmul.u32 %v1245, %v1247
    %v1252 = vshll.u32 %v1249, 16
    %v1253 = vshrl.u32 %v1249, 16
    %v1254 = vshll.u32 %v1250, 16
    %v1255 = vshrl.u32 %v1250, 16
    %vm1256 = vc.u32 %v1248, %v1252
    %v1257 = vsel %vm1256, 1, 0
    %v1258 = vadd.s32 %v1248, %v1252
    %v1259 = vadd.s32 %v1251, %v1257
    %vm1260 = vc.u32 %v1258, %v1254
    %v1261 = vsel %vm1260, 1, 0
    %v1262 = vadd.s32 %v1258, %v1254
    %v1263 = vadd.s32 %v1259, %v1261
    %v1264 = vadd.s32 %v1263, %v1253
    %v1265 = vadd.s32 %v1264, %v1255
    %v1266 = vmul.u32 %v1221, %v1212
    %v1267 = vadd.s32 %v1243, %v1262
    %vm1268 = vc.u32 %v1243, %v1262
    %v1269 = vadd.s32 %v1265, 1
    %v1270 = vsel %vm1268, %v1269, %v1265
    %v1271 = vadd.s32 %v1266, %v1270
    %v1272 = vadd.s32 %v1271, 536870912
    %v1273 = vshrl.u32 %v1272, 30
    %v1274 = vshll.u32 %v1273, 30
    %v1275 = vsub.s32 %v1271, %v1274
    %vm1276 = vcmp.lt.s32.totalorder %v1275, 0
    %v1277 = vsub.s32 0, %v1275
    %v1278 = vsel %vm1276, %v1277, %v1275
    %v1279 = vclz %v1278
    %v1280 = vsub.s32 %v1279, 2
    %vm1281 = vcmp.gt.s32.totalorder 0, %v1280
    %v1282 = vsel %vm1281, 0, %v1280
    %v1283 = vsub.s32 32, %v1282
    %v1284 = vshll.u32 %v1275, %v1282
    %v1285 = vshrl.u32 %v1267, %v1283
    %v1286 = vor.u32 %v1284, %v1285
    %v1287 = vsub.s32 4294967266, %v1282
    %v1288 = vadd.s32 %v1287, 127
    %v1289 = vshll.u32 %v1288, 23
    %v1290 = vor.u32 4788187, %v1289
    %v1291 = vand.u32 2147483647, %v1290
    %v1293 = vcvt.s32.f32 %v1286
    %v1294 = vmul.f32 %v1293, %v1291
    %v1295 = vxor.u32 %v1294, 2147483648
    %v1296 = vsel %vm1175, %v1295, %v1294
    %v1297 = vsub.s32 4, %v1273
    %v1298 = vsel %vm1175, %v1297, %v1273
    %v1299 = vsel %vm1174, %v241, %v1296
    %v1300 = vsel %vm1174, 0, %v1298
    %v1301 = vmul.f32 %v1299, %v1299
    %v1302 = vmul.f32 %v1301, -0.001358992
    %v1303 = vadd.f32 %v1302, 0.041655596
    %v1304 = vmul.f32 %v1301, %v1303
    %v1305 = vadd.f32 %v1304, -0.4999988
    %v1306 = vmul.f32 %v1301, %v1305
    %v1307 = vadd.f32 1.0, %v1306
    %v1308 = vmul.f32 %v1299, %v1299
    %v1309 = vmul.f32 %v1308, -0.00019511016
    %v1310 = vadd.f32 %v1309, 0.008332121
    %v1311 = vmul.f32 %v1308, %v1310
    %v1312 = vadd.f32 %v1311, -0.16666654
    %v1313 = vmul.f32 %v1308, %v1312
    %v1314 = vadd.f32 %v1313, 1.0
    %v1315 = vmul.f32 %v1314, %v1299
    %vm1316 = vweird.f32 %v241
    %v1317 = vadd.s32 %v1300, 3
    %v1318 = vand.u32 %v1317, 3
    %vm1319 = vcmp.lt.s32.totalorder %v1318, 2
    %vm1320 = vcmp.eq.s32.totalorder %v1318, 0
    %v1321 = vxor.u32 %v1315, 2147483648
    %v1322 = vsel %vm1320, %v1307, %v1321
    %vm1323 = vcmp.eq.s32.totalorder %v1318, 2
    %v1324 = vxor.u32 %v1307, 2147483648
    %v1325 = vsel %vm1323, %v1324, %v1315
    %v1326 = vsel %vm1319, %v1322, %v1325
    %v1327 = vsel %vm1316, nan, %v1326
    %v1328 = vand.u32 2147483647, %v242
    %vm1329 = vcmp.le.f32.partialorder %v1328, 0.7853982
    %vm1330 = vcmp.lt.s32.totalorder %v242, 0
    %v1331 = vand.u32 %v242, 2139095040
    %v1332 = vshrl.u32 %v1331, 23
    %v1333 = vsub.s32 %v1332, 127
    %v1334 = vand.u32 2147483647, %v242
    %v1335 = vand.u32 %v1334, 8388607
    %v1336 = vor.u32 %v1335, 8388608
    %v1337 = vsub.s32 0, %v1336
    %v1338 = vadd.s32 %v1333, 1
    %vm1339 = vcmp.gt.s32.totalorder %v1338, 0
    %v1340 = vsel %vm1339, %v1338, 0
    %v1341 = vshrl.u32 %v1340, 5
    %v1342 = vand.u32 %v1340, 31
    %v1343 = vsub.s32 32, %v1342
    %v1344 = vshrl.u32 683565275, %v1343
    %v1345 = vshll.u32 683565275, %v1342
    %v1346 = vshrl.u32 2475754826, %v1343
    %v1347 = vor.u32 %v1345, %v1346
    %v1348 = vshll.u32 2475754826, %v1342
    %v1349 = vshrl.u32 2131351028, %v1343
    %v1350 = vor.u32 %v1348, %v1349
    %v1351 = vshll.u32 2131351028, %v1342
    %v1352 = vshrl.u32 2102212464, %v1343
    %v1353 = vor.u32 %v1351, %v1352
    %v1354 = vshll.u32 2102212464, %v1342
    %v1355 = vshrl.u32 920167782, %v1343
    %v1356 = vor.u32 %v1354, %v1355
    %v1357 = vshll.u32 920167782, %v1342
    %v1358 = vshrl.u32 1326507024, %v1343
    %v1359 = vor.u32 %v1357, %v1358
    %vm1360 = vcmp.lt.s32.totalorder %v1341, 1
    %vm1361 = vcmp.lt.s32.totalorder %v1341, 2
    %vm1362 = vcmp.lt.s32.totalorder %v1341, 3
    %vm1363 = vcmp.lt.s32.totalorder %v1341, 4
    %v1364 = vsel %vm1360, %v1344, %v1347
    %v1365 = vsel %vm1363, %v1353, 2102212464
    %v1366 = vsel %vm1362, %v1350, %v1365
    %v1367 = vsel %vm1361, %v1364, %v1366
    %v1368 = vsel %vm1360, %v1347, %v1350
    %v1369 = vsel %vm1363, %v1356, 920167782
    %v1370 = vsel %vm1362, %v1353, %v1369
    %v1371 = vsel %vm1361, %v1368, %v1370
    %v1372 = vsel %vm1360, %v1350, %v1353
    %v1373 = vsel %vm1363, %v1359, 1326507024
    %v1374 = vsel %vm1362, %v1356, %v1373
    %v1375 = vsel %vm1361, %v1372, %v1374
    %v1376 = vshll.u32 %v1336, 8
    %v1377 = vand.u32 %v1376, 65535
    %v1378 = vshrl.u32 %v1376, 16
    %v1379 = vand.u32 %v1375, 65535
    %v1380 = vshrl.u32 %v1375, 16
    %v1381 = vmul.u32 %v1377, %v1379
    %v1382 = vmul.u32 %v1377, %v1380
    %v1383 = vmul.u32 %v1378, %v1379
    %v1384 = vmul.u32 %v1378, %v1380
    %v1385 = vshll.u32 %v1382, 16
    %v1386 = vshrl.u32 %v1382, 16
    %v1387 = vshll.u32 %v1383, 16
    %v1388 = vshrl.u32 %v1383, 16
    %vm1389 = vc.u32 %v1381, %v1385
    %v1390 = vsel %vm1389, 1, 0
    %v1391 = vadd.s32 %v1381, %v1385
    %v1392 = vadd.s32 %v1384, %v1390
    %vm1393 = vc.u32 %v1391, %v1387
    %v1394 = vsel %vm1393, 1, 0
    %v1395 = vadd.s32 %v1391, %v1387
    %v1396 = vadd.s32 %v1392, %v1394
    %v1397 = vadd.s32 %v1396, %v1386
    %v1398 = vadd.s32 %v1397, %v1388
    %v1399 = vand.u32 %v1376, 65535
    %v1400 = vshrl.u32 %v1376, 16
    %v1401 = vand.u32 %v1371, 65535
    %v1402 = vshrl.u32 %v1371, 16
    %v1403 = vmul.u32 %v1399, %v1401
    %v1404 = vmul.u32 %v1399, %v1402
    %v1405 = vmul.u32 %v1400, %v1401
    %v1406 = vmul.u32 %v1400, %v1402
    %v1407 = vshll.u32 %v1404, 16
    %v1408 = vshrl.u32 %v1404, 16
    %v1409 = vshll.u32 %v1405, 16
    %v1410 = vshrl.u32 %v1405, 16
    %vm1411 = vc.u32 %v1403, %v1407
    %v1412 = vsel %vm1411, 1, 0
    %v1413 = vadd.s32 %v1403, %v1407
    %v1414 = vadd.s32 %v1406, %v1412
    %vm1415 = vc.u32 %v1413, %v1409
    %v1416 = vsel %vm1415, 1, 0
    %v1417 = vadd.s32 %v1413, %v1409
    %v1418 = vadd.s32 %v1414, %v1416
    %v1419 = vadd.s32 %v1418, %v1408
    %v1420 = vadd.s32 %v1419, %v1410
    %v1421 = vmul.u32 %v1376, %v1367
    %v1422 = vadd.s32 %v1398, %v1417
    %vm1423 = vc.u32 %v1398, %v1417
    %v1424 = vadd.s32 %v1420, 1
    %v1425 = vsel %vm1423, %v1424, %v1420
    %v1426 = vadd.s32 %v1421, %v1425
    %v1427 = vadd.s32 %v1426, 536870912
    %v1428 = vshrl.u32 %v1427, 30
    %v1429 = vshll.u32 %v1428, 30
    %v1430 = vsub.s32 %v1426, %v1429
    %vm1431 = vcmp.lt.s32.totalorder %v1430, 0
    %v1432 = vsub.s32 0, %v1430
    %v1433 = vsel %vm1431, %v1432, %v1430
    %v1434 = vclz %v1433
    %v1435 = vsub.s32 %v1434, 2
    %vm1436 = vcmp.gt.s32.totalorder 0, %v1435
    %v1437 = vsel %vm1436, 0, %v1435
    %v1438 = vsub.s32 32, %v1437
    %v1439 = vshll.u32 %v1430, %v1437
    %v1440 = vshrl.u32 %v1422, %v1438
    %v1441 = vor.u32 %v1439, %v1440
    %v1442 = vsub.s32 4294967266, %v1437
    %v1443 = vadd.s32 %v1442, 127
    %v1444 = vshll.u32 %v1443, 23
    %v1445 = vor.u32 4788187, %v1444
    %v1446 = vand.u32 2147483647, %v1445
    %v1448 = vcvt.s32.f32 %v1441
    %v1449 = vmul.f32 %v1448, %v1446
    %v1450 = vxor.u32 %v1449, 2147483648
    %v1451 = vsel %vm1330, %v1450, %v1449
    %v1452 = vsub.s32 4, %v1428
    %v1453 = vsel %vm1330, %v1452, %v1428
    %v1454 = vsel %vm1329, %v242, %v1451
    %v1455 = vsel %vm1329, 0, %v1453
    %v1456 = vmul.f32 %v1454, %v1454
    %v1457 = vmul.f32 %v1456, -0.001358992
    %v1458 = vadd.f32 %v1457, 0.041655596
    %v1459 = vmul.f32 %v1456, %v1458
    %v1460 = vadd.f32 %v1459, -0.4999988
    %v1461 = vmul.f32 %v1456, %v1460
    %v1462 = vadd.f32 1.0, %v1461
    %v1463 = vmul.f32 %v1454, %v1454
    %v1464 = vmul.f32 %v1463, -0.00019511016
    %v1465 = vadd.f32 %v1464, 0.008332121
    %v1466 = vmul.f32 %v1463, %v1465
    %v1467 = vadd.f32 %v1466, -0.16666654
    %v1468 = vmul.f32 %v1463, %v1467
    %v1469 = vadd.f32 %v1468, 1.0
    %v1470 = vmul.f32 %v1469, %v1454
    %vm1471 = vweird.f32 %v242
    %v1472 = vadd.s32 %v1455, 3
    %v1473 = vand.u32 %v1472, 3
    %vm1474 = vcmp.lt.s32.totalorder %v1473, 2
    %vm1475 = vcmp.eq.s32.totalorder %v1473, 0
    %v1476 = vxor.u32 %v1470, 2147483648
    %v1477 = vsel %vm1475, %v1462, %v1476
    %vm1478 = vcmp.eq.s32.totalorder %v1473, 2
    %v1479 = vxor.u32 %v1462, 2147483648
    %v1480 = vsel %vm1478, %v1479, %v1470
    %v1481 = vsel %vm1474, %v1477, %v1480
    %v1482 = vsel %vm1471, nan, %v1481
    %v1483 = vmul.f32 %v397, 0.5
    %v1484 = vmul.f32 %v552, 0.5
    %v1485 = vmul.f32 %v707, 0.5
    %v1486 = vmul.f32 %v862, 0.5
    %v1487 = vmul.f32 %v1017, 0.5
    %v1488 = vmul.f32 %v1172, 0.5
    %v1489 = vmul.f32 %v1327, 0.5
    %v1490 = vmul.f32 %v1482, 0.5
    %v1491 = vadd.f32 %v223, %v1483
    %v1492 = vadd.f32 %v224, %v1484
    %v1493 = vadd.f32 %v225, %v1485
    %v1494 = vadd.f32 %v226, %v1486
    %v1495 = vadd.f32 %v227, %v1487
    %v1496 = vadd.f32 %v228, %v1488
    %v1497 = vadd.f32 %v229, %v1489
    %v1498 = vadd.f32 %v230, %v1490
    %1499 = vset.pattern.permute.xlu0 4
    %1500 = vperm.xlu0 %1499, %v81
    %v1501 = vpop.permute.xlu0 %1500
    %v1503 = vmul.f32 %v1501, %v159
    %v1504 = vmul.f32 %v1501, %v160
    %v1505 = vmul.f32 %v1501, %v161
    %v1506 = vmul.f32 %v1501, %v162
    %v1507 = vmul.f32 %v1501, %v163
    %v1508 = vmul.f32 %v1501, %v164
    %v1509 = vmul.f32 %v1501, %v165
    %v1510 = vmul.f32 %v1501, %v166
    %v1511 = vand.u32 2147483647, %v1503
    %vm1512 = vcmp.le.f32.partialorder %v1511, 0.7853982
    %vm1513 = vcmp.lt.s32.totalorder %v1503, 0
    %v1514 = vand.u32 %v1503, 2139095040
    %v1515 = vshrl.u32 %v1514, 23
    %v1516 = vsub.s32 %v1515, 127
    %v1517 = vand.u32 2147483647, %v1503
    %v1518 = vand.u32 %v1517, 8388607
    %v1519 = vor.u32 %v1518, 8388608
    %v1520 = vsub.s32 0, %v1519
    %v1521 = vadd.s32 %v1516, 1
    %vm1522 = vcmp.gt.s32.totalorder %v1521, 0
    %v1523 = vsel %vm1522, %v1521, 0
    %v1524 = vshrl.u32 %v1523, 5
    %v1525 = vand.u32 %v1523, 31
    %v1526 = vsub.s32 32, %v1525
    %v1527 = vshrl.u32 683565275, %v1526
    %v1528 = vshll.u32 683565275, %v1525
    %v1529 = vshrl.u32 2475754826, %v1526
    %v1530 = vor.u32 %v1528, %v1529
    %v1531 = vshll.u32 2475754826, %v1525
    %v1532 = vshrl.u32 2131351028, %v1526
    %v1533 = vor.u32 %v1531, %v1532
    %v1534 = vshll.u32 2131351028, %v1525
    %v1535 = vshrl.u32 2102212464, %v1526
    %v1536 = vor.u32 %v1534, %v1535
    %v1537 = vshll.u32 2102212464, %v1525
    %v1538 = vshrl.u32 920167782, %v1526
    %v1539 = vor.u32 %v1537, %v1538
    %v1540 = vshll.u32 920167782, %v1525
    %v1541 = vshrl.u32 1326507024, %v1526
    %v1542 = vor.u32 %v1540, %v1541
    %vm1543 = vcmp.lt.s32.totalorder %v1524, 1
    %vm1544 = vcmp.lt.s32.totalorder %v1524, 2
    %vm1545 = vcmp.lt.s32.totalorder %v1524, 3
    %vm1546 = vcmp.lt.s32.totalorder %v1524, 4
    %v1547 = vsel %vm1543, %v1527, %v1530
    %v1548 = vsel %vm1546, %v1536, 2102212464
    %v1549 = vsel %vm1545, %v1533, %v1548
    %v1550 = vsel %vm1544, %v1547, %v1549
    %v1551 = vsel %vm1543, %v1530, %v1533
    %v1552 = vsel %vm1546, %v1539, 920167782
    %v1553 = vsel %vm1545, %v1536, %v1552
    %v1554 = vsel %vm1544, %v1551, %v1553
    %v1555 = vsel %vm1543, %v1533, %v1536
    %v1556 = vsel %vm1546, %v1542, 1326507024
    %v1557 = vsel %vm1545, %v1539, %v1556
    %v1558 = vsel %vm1544, %v1555, %v1557
    %v1559 = vshll.u32 %v1519, 8
    %v1560 = vand.u32 %v1559, 65535
    %v1561 = vshrl.u32 %v1559, 16
    %v1562 = vand.u32 %v1558, 65535
    %v1563 = vshrl.u32 %v1558, 16
    %v1564 = vmul.u32 %v1560, %v1562
    %v1565 = vmul.u32 %v1560, %v1563
    %v1566 = vmul.u32 %v1561, %v1562
    %v1567 = vmul.u32 %v1561, %v1563
    %v1568 = vshll.u32 %v1565, 16
    %v1569 = vshrl.u32 %v1565, 16
    %v1570 = vshll.u32 %v1566, 16
    %v1571 = vshrl.u32 %v1566, 16
    %vm1572 = vc.u32 %v1564, %v1568
    %v1573 = vsel %vm1572, 1, 0
    %v1574 = vadd.s32 %v1564, %v1568
    %v1575 = vadd.s32 %v1567, %v1573
    %vm1576 = vc.u32 %v1574, %v1570
    %v1577 = vsel %vm1576, 1, 0
    %v1578 = vadd.s32 %v1574, %v1570
    %v1579 = vadd.s32 %v1575, %v1577
    %v1580 = vadd.s32 %v1579, %v1569
    %v1581 = vadd.s32 %v1580, %v1571
    %v1582 = vand.u32 %v1559, 65535
    %v1583 = vshrl.u32 %v1559, 16
    %v1584 = vand.u32 %v1554, 65535
    %v1585 = vshrl.u32 %v1554, 16
    %v1586 = vmul.u32 %v1582, %v1584
    %v1587 = vmul.u32 %v1582, %v1585
    %v1588 = vmul.u32 %v1583, %v1584
    %v1589 = vmul.u32 %v1583, %v1585
    %v1590 = vshll.u32 %v1587, 16
    %v1591 = vshrl.u32 %v1587, 16
    %v1592 = vshll.u32 %v1588, 16
    %v1593 = vshrl.u32 %v1588, 16
    %vm1594 = vc.u32 %v1586, %v1590
    %v1595 = vsel %vm1594, 1, 0
    %v1596 = vadd.s32 %v1586, %v1590
    %v1597 = vadd.s32 %v1589, %v1595
    %vm1598 = vc.u32 %v1596, %v1592
    %v1599 = vsel %vm1598, 1, 0
    %v1600 = vadd.s32 %v1596, %v1592
    %v1601 = vadd.s32 %v1597, %v1599
    %v1602 = vadd.s32 %v1601, %v1591
    %v1603 = vadd.s32 %v1602, %v1593
    %v1604 = vmul.u32 %v1559, %v1550
    %v1605 = vadd.s32 %v1581, %v1600
    %vm1606 = vc.u32 %v1581, %v1600
    %v1607 = vadd.s32 %v1603, 1
    %v1608 = vsel %vm1606, %v1607, %v1603
    %v1609 = vadd.s32 %v1604, %v1608
    %v1610 = vadd.s32 %v1609, 536870912
    %v1611 = vshrl.u32 %v1610, 30
    %v1612 = vshll.u32 %v1611, 30
    %v1613 = vsub.s32 %v1609, %v1612
    %vm1614 = vcmp.lt.s32.totalorder %v1613, 0
    %v1615 = vsub.s32 0, %v1613
    %v1616 = vsel %vm1614, %v1615, %v1613
    %v1617 = vclz %v1616
    %v1618 = vsub.s32 %v1617, 2
    %vm1619 = vcmp.gt.s32.totalorder 0, %v1618
    %v1620 = vsel %vm1619, 0, %v1618
    %v1621 = vsub.s32 32, %v1620
    %v1622 = vshll.u32 %v1613, %v1620
    %v1623 = vshrl.u32 %v1605, %v1621
    %v1624 = vor.u32 %v1622, %v1623
    %v1625 = vsub.s32 4294967266, %v1620
    %v1626 = vadd.s32 %v1625, 127
    %v1627 = vshll.u32 %v1626, 23
    %v1628 = vor.u32 4788187, %v1627
    %v1629 = vand.u32 2147483647, %v1628
    %v1631 = vcvt.s32.f32 %v1624
    %v1632 = vmul.f32 %v1631, %v1629
    %v1633 = vxor.u32 %v1632, 2147483648
    %v1634 = vsel %vm1513, %v1633, %v1632
    %v1635 = vsub.s32 4, %v1611
    %v1636 = vsel %vm1513, %v1635, %v1611
    %v1637 = vsel %vm1512, %v1503, %v1634
    %v1638 = vsel %vm1512, 0, %v1636
    %v1639 = vmul.f32 %v1637, %v1637
    %v1640 = vmul.f32 %v1639, -0.001358992
    %v1641 = vadd.f32 %v1640, 0.041655596
    %v1642 = vmul.f32 %v1639, %v1641
    %v1643 = vadd.f32 %v1642, -0.4999988
    %v1644 = vmul.f32 %v1639, %v1643
    %v1645 = vadd.f32 1.0, %v1644
    %v1646 = vmul.f32 %v1637, %v1637
    %v1647 = vmul.f32 %v1646, -0.00019511016
    %v1648 = vadd.f32 %v1647, 0.008332121
    %v1649 = vmul.f32 %v1646, %v1648
    %v1650 = vadd.f32 %v1649, -0.16666654
    %v1651 = vmul.f32 %v1646, %v1650
    %v1652 = vadd.f32 %v1651, 1.0
    %v1653 = vmul.f32 %v1652, %v1637
    %vm1654 = vweird.f32 %v1503
    %v1655 = vadd.s32 %v1638, 3
    %v1656 = vand.u32 %v1655, 3
    %vm1657 = vcmp.lt.s32.totalorder %v1656, 2
    %vm1658 = vcmp.eq.s32.totalorder %v1656, 0
    %v1659 = vxor.u32 %v1653, 2147483648
    %v1660 = vsel %vm1658, %v1645, %v1659
    %vm1661 = vcmp.eq.s32.totalorder %v1656, 2
    %v1662 = vxor.u32 %v1645, 2147483648
    %v1663 = vsel %vm1661, %v1662, %v1653
    %v1664 = vsel %vm1657, %v1660, %v1663
    %v1665 = vsel %vm1654, nan, %v1664
    %v1666 = vand.u32 2147483647, %v1504
    %vm1667 = vcmp.le.f32.partialorder %v1666, 0.7853982
    %vm1668 = vcmp.lt.s32.totalorder %v1504, 0
    %v1669 = vand.u32 %v1504, 2139095040
    %v1670 = vshrl.u32 %v1669, 23
    %v1671 = vsub.s32 %v1670, 127
    %v1672 = vand.u32 2147483647, %v1504
    %v1673 = vand.u32 %v1672, 8388607
    %v1674 = vor.u32 %v1673, 8388608
    %v1675 = vsub.s32 0, %v1674
    %v1676 = vadd.s32 %v1671, 1
    %vm1677 = vcmp.gt.s32.totalorder %v1676, 0
    %v1678 = vsel %vm1677, %v1676, 0
    %v1679 = vshrl.u32 %v1678, 5
    %v1680 = vand.u32 %v1678, 31
    %v1681 = vsub.s32 32, %v1680
    %v1682 = vshrl.u32 683565275, %v1681
    %v1683 = vshll.u32 683565275, %v1680
    %v1684 = vshrl.u32 2475754826, %v1681
    %v1685 = vor.u32 %v1683, %v1684
    %v1686 = vshll.u32 2475754826, %v1680
    %v1687 = vshrl.u32 2131351028, %v1681
    %v1688 = vor.u32 %v1686, %v1687
    %v1689 = vshll.u32 2131351028, %v1680
    %v1690 = vshrl.u32 2102212464, %v1681
    %v1691 = vor.u32 %v1689, %v1690
    %v1692 = vshll.u32 2102212464, %v1680
    %v1693 = vshrl.u32 920167782, %v1681
    %v1694 = vor.u32 %v1692, %v1693
    %v1695 = vshll.u32 920167782, %v1680
    %v1696 = vshrl.u32 1326507024, %v1681
    %v1697 = vor.u32 %v1695, %v1696
    %vm1698 = vcmp.lt.s32.totalorder %v1679, 1
    %vm1699 = vcmp.lt.s32.totalorder %v1679, 2
    %vm1700 = vcmp.lt.s32.totalorder %v1679, 3
    %vm1701 = vcmp.lt.s32.totalorder %v1679, 4
    %v1702 = vsel %vm1698, %v1682, %v1685
    %v1703 = vsel %vm1701, %v1691, 2102212464
    %v1704 = vsel %vm1700, %v1688, %v1703
    %v1705 = vsel %vm1699, %v1702, %v1704
    %v1706 = vsel %vm1698, %v1685, %v1688
    %v1707 = vsel %vm1701, %v1694, 920167782
    %v1708 = vsel %vm1700, %v1691, %v1707
    %v1709 = vsel %vm1699, %v1706, %v1708
    %v1710 = vsel %vm1698, %v1688, %v1691
    %v1711 = vsel %vm1701, %v1697, 1326507024
    %v1712 = vsel %vm1700, %v1694, %v1711
    %v1713 = vsel %vm1699, %v1710, %v1712
    %v1714 = vshll.u32 %v1674, 8
    %v1715 = vand.u32 %v1714, 65535
    %v1716 = vshrl.u32 %v1714, 16
    %v1717 = vand.u32 %v1713, 65535
    %v1718 = vshrl.u32 %v1713, 16
    %v1719 = vmul.u32 %v1715, %v1717
    %v1720 = vmul.u32 %v1715, %v1718
    %v1721 = vmul.u32 %v1716, %v1717
    %v1722 = vmul.u32 %v1716, %v1718
    %v1723 = vshll.u32 %v1720, 16
    %v1724 = vshrl.u32 %v1720, 16
    %v1725 = vshll.u32 %v1721, 16
    %v1726 = vshrl.u32 %v1721, 16
    %vm1727 = vc.u32 %v1719, %v1723
    %v1728 = vsel %vm1727, 1, 0
    %v1729 = vadd.s32 %v1719, %v1723
    %v1730 = vadd.s32 %v1722, %v1728
    %vm1731 = vc.u32 %v1729, %v1725
    %v1732 = vsel %vm1731, 1, 0
    %v1733 = vadd.s32 %v1729, %v1725
    %v1734 = vadd.s32 %v1730, %v1732
    %v1735 = vadd.s32 %v1734, %v1724
    %v1736 = vadd.s32 %v1735, %v1726
    %v1737 = vand.u32 %v1714, 65535
    %v1738 = vshrl.u32 %v1714, 16
    %v1739 = vand.u32 %v1709, 65535
    %v1740 = vshrl.u32 %v1709, 16
    %v1741 = vmul.u32 %v1737, %v1739
    %v1742 = vmul.u32 %v1737, %v1740
    %v1743 = vmul.u32 %v1738, %v1739
    %v1744 = vmul.u32 %v1738, %v1740
    %v1745 = vshll.u32 %v1742, 16
    %v1746 = vshrl.u32 %v1742, 16
    %v1747 = vshll.u32 %v1743, 16
    %v1748 = vshrl.u32 %v1743, 16
    %vm1749 = vc.u32 %v1741, %v1745
    %v1750 = vsel %vm1749, 1, 0
    %v1751 = vadd.s32 %v1741, %v1745
    %v1752 = vadd.s32 %v1744, %v1750
    %vm1753 = vc.u32 %v1751, %v1747
    %v1754 = vsel %vm1753, 1, 0
    %v1755 = vadd.s32 %v1751, %v1747
    %v1756 = vadd.s32 %v1752, %v1754
    %v1757 = vadd.s32 %v1756, %v1746
    %v1758 = vadd.s32 %v1757, %v1748
    %v1759 = vmul.u32 %v1714, %v1705
    %v1760 = vadd.s32 %v1736, %v1755
    %vm1761 = vc.u32 %v1736, %v1755
    %v1762 = vadd.s32 %v1758, 1
    %v1763 = vsel %vm1761, %v1762, %v1758
    %v1764 = vadd.s32 %v1759, %v1763
    %v1765 = vadd.s32 %v1764, 536870912
    %v1766 = vshrl.u32 %v1765, 30
    %v1767 = vshll.u32 %v1766, 30
    %v1768 = vsub.s32 %v1764, %v1767
    %vm1769 = vcmp.lt.s32.totalorder %v1768, 0
    %v1770 = vsub.s32 0, %v1768
    %v1771 = vsel %vm1769, %v1770, %v1768
    %v1772 = vclz %v1771
    %v1773 = vsub.s32 %v1772, 2
    %vm1774 = vcmp.gt.s32.totalorder 0, %v1773
    %v1775 = vsel %vm1774, 0, %v1773
    %v1776 = vsub.s32 32, %v1775
    %v1777 = vshll.u32 %v1768, %v1775
    %v1778 = vshrl.u32 %v1760, %v1776
    %v1779 = vor.u32 %v1777, %v1778
    %v1780 = vsub.s32 4294967266, %v1775
    %v1781 = vadd.s32 %v1780, 127
    %v1782 = vshll.u32 %v1781, 23
    %v1783 = vor.u32 4788187, %v1782
    %v1784 = vand.u32 2147483647, %v1783
    %v1786 = vcvt.s32.f32 %v1779
    %v1787 = vmul.f32 %v1786, %v1784
    %v1788 = vxor.u32 %v1787, 2147483648
    %v1789 = vsel %vm1668, %v1788, %v1787
    %v1790 = vsub.s32 4, %v1766
    %v1791 = vsel %vm1668, %v1790, %v1766
    %v1792 = vsel %vm1667, %v1504, %v1789
    %v1793 = vsel %vm1667, 0, %v1791
    %v1794 = vmul.f32 %v1792, %v1792
    %v1795 = vmul.f32 %v1794, -0.001358992
    %v1796 = vadd.f32 %v1795, 0.041655596
    %v1797 = vmul.f32 %v1794, %v1796
    %v1798 = vadd.f32 %v1797, -0.4999988
    %v1799 = vmul.f32 %v1794, %v1798
    %v1800 = vadd.f32 1.0, %v1799
    %v1801 = vmul.f32 %v1792, %v1792
    %v1802 = vmul.f32 %v1801, -0.00019511016
    %v1803 = vadd.f32 %v1802, 0.008332121
    %v1804 = vmul.f32 %v1801, %v1803
    %v1805 = vadd.f32 %v1804, -0.16666654
    %v1806 = vmul.f32 %v1801, %v1805
    %v1807 = vadd.f32 %v1806, 1.0
    %v1808 = vmul.f32 %v1807, %v1792
    %vm1809 = vweird.f32 %v1504
    %v1810 = vadd.s32 %v1793, 3
    %v1811 = vand.u32 %v1810, 3
    %vm1812 = vcmp.lt.s32.totalorder %v1811, 2
    %vm1813 = vcmp.eq.s32.totalorder %v1811, 0
    %v1814 = vxor.u32 %v1808, 2147483648
    %v1815 = vsel %vm1813, %v1800, %v1814
    %vm1816 = vcmp.eq.s32.totalorder %v1811, 2
    %v1817 = vxor.u32 %v1800, 2147483648
    %v1818 = vsel %vm1816, %v1817, %v1808
    %v1819 = vsel %vm1812, %v1815, %v1818
    %v1820 = vsel %vm1809, nan, %v1819
    %v1821 = vand.u32 2147483647, %v1505
    %vm1822 = vcmp.le.f32.partialorder %v1821, 0.7853982
    %vm1823 = vcmp.lt.s32.totalorder %v1505, 0
    %v1824 = vand.u32 %v1505, 2139095040
    %v1825 = vshrl.u32 %v1824, 23
    %v1826 = vsub.s32 %v1825, 127
    %v1827 = vand.u32 2147483647, %v1505
    %v1828 = vand.u32 %v1827, 8388607
    %v1829 = vor.u32 %v1828, 8388608
    %v1830 = vsub.s32 0, %v1829
    %v1831 = vadd.s32 %v1826, 1
    %vm1832 = vcmp.gt.s32.totalorder %v1831, 0
    %v1833 = vsel %vm1832, %v1831, 0
    %v1834 = vshrl.u32 %v1833, 5
    %v1835 = vand.u32 %v1833, 31
    %v1836 = vsub.s32 32, %v1835
    %v1837 = vshrl.u32 683565275, %v1836
    %v1838 = vshll.u32 683565275, %v1835
    %v1839 = vshrl.u32 2475754826, %v1836
    %v1840 = vor.u32 %v1838, %v1839
    %v1841 = vshll.u32 2475754826, %v1835
    %v1842 = vshrl.u32 2131351028, %v1836
    %v1843 = vor.u32 %v1841, %v1842
    %v1844 = vshll.u32 2131351028, %v1835
    %v1845 = vshrl.u32 2102212464, %v1836
    %v1846 = vor.u32 %v1844, %v1845
    %v1847 = vshll.u32 2102212464, %v1835
    %v1848 = vshrl.u32 920167782, %v1836
    %v1849 = vor.u32 %v1847, %v1848
    %v1850 = vshll.u32 920167782, %v1835
    %v1851 = vshrl.u32 1326507024, %v1836
    %v1852 = vor.u32 %v1850, %v1851
    %vm1853 = vcmp.lt.s32.totalorder %v1834, 1
    %vm1854 = vcmp.lt.s32.totalorder %v1834, 2
    %vm1855 = vcmp.lt.s32.totalorder %v1834, 3
    %vm1856 = vcmp.lt.s32.totalorder %v1834, 4
    %v1857 = vsel %vm1853, %v1837, %v1840
    %v1858 = vsel %vm1856, %v1846, 2102212464
    %v1859 = vsel %vm1855, %v1843, %v1858
    %v1860 = vsel %vm1854, %v1857, %v1859
    %v1861 = vsel %vm1853, %v1840, %v1843
    %v1862 = vsel %vm1856, %v1849, 920167782
    %v1863 = vsel %vm1855, %v1846, %v1862
    %v1864 = vsel %vm1854, %v1861, %v1863
    %v1865 = vsel %vm1853, %v1843, %v1846
    %v1866 = vsel %vm1856, %v1852, 1326507024
    %v1867 = vsel %vm1855, %v1849, %v1866
    %v1868 = vsel %vm1854, %v1865, %v1867
    %v1869 = vshll.u32 %v1829, 8
    %v1870 = vand.u32 %v1869, 65535
    %v1871 = vshrl.u32 %v1869, 16
    %v1872 = vand.u32 %v1868, 65535
    %v1873 = vshrl.u32 %v1868, 16
    %v1874 = vmul.u32 %v1870, %v1872
    %v1875 = vmul.u32 %v1870, %v1873
    %v1876 = vmul.u32 %v1871, %v1872
    %v1877 = vmul.u32 %v1871, %v1873
    %v1878 = vshll.u32 %v1875, 16
    %v1879 = vshrl.u32 %v1875, 16
    %v1880 = vshll.u32 %v1876, 16
    %v1881 = vshrl.u32 %v1876, 16
    %vm1882 = vc.u32 %v1874, %v1878
    %v1883 = vsel %vm1882, 1, 0
    %v1884 = vadd.s32 %v1874, %v1878
    %v1885 = vadd.s32 %v1877, %v1883
    %vm1886 = vc.u32 %v1884, %v1880
    %v1887 = vsel %vm1886, 1, 0
    %v1888 = vadd.s32 %v1884, %v1880
    %v1889 = vadd.s32 %v1885, %v1887
    %v1890 = vadd.s32 %v1889, %v1879
    %v1891 = vadd.s32 %v1890, %v1881
    %v1892 = vand.u32 %v1869, 65535
    %v1893 = vshrl.u32 %v1869, 16
    %v1894 = vand.u32 %v1864, 65535
    %v1895 = vshrl.u32 %v1864, 16
    %v1896 = vmul.u32 %v1892, %v1894
    %v1897 = vmul.u32 %v1892, %v1895
    %v1898 = vmul.u32 %v1893, %v1894
    %v1899 = vmul.u32 %v1893, %v1895
    %v1900 = vshll.u32 %v1897, 16
    %v1901 = vshrl.u32 %v1897, 16
    %v1902 = vshll.u32 %v1898, 16
    %v1903 = vshrl.u32 %v1898, 16
    %vm1904 = vc.u32 %v1896, %v1900
    %v1905 = vsel %vm1904, 1, 0
    %v1906 = vadd.s32 %v1896, %v1900
    %v1907 = vadd.s32 %v1899, %v1905
    %vm1908 = vc.u32 %v1906, %v1902
    %v1909 = vsel %vm1908, 1, 0
    %v1910 = vadd.s32 %v1906, %v1902
    %v1911 = vadd.s32 %v1907, %v1909
    %v1912 = vadd.s32 %v1911, %v1901
    %v1913 = vadd.s32 %v1912, %v1903
    %v1914 = vmul.u32 %v1869, %v1860
    %v1915 = vadd.s32 %v1891, %v1910
    %vm1916 = vc.u32 %v1891, %v1910
    %v1917 = vadd.s32 %v1913, 1
    %v1918 = vsel %vm1916, %v1917, %v1913
    %v1919 = vadd.s32 %v1914, %v1918
    %v1920 = vadd.s32 %v1919, 536870912
    %v1921 = vshrl.u32 %v1920, 30
    %v1922 = vshll.u32 %v1921, 30
    %v1923 = vsub.s32 %v1919, %v1922
    %vm1924 = vcmp.lt.s32.totalorder %v1923, 0
    %v1925 = vsub.s32 0, %v1923
    %v1926 = vsel %vm1924, %v1925, %v1923
    %v1927 = vclz %v1926
    %v1928 = vsub.s32 %v1927, 2
    %vm1929 = vcmp.gt.s32.totalorder 0, %v1928
    %v1930 = vsel %vm1929, 0, %v1928
    %v1931 = vsub.s32 32, %v1930
    %v1932 = vshll.u32 %v1923, %v1930
    %v1933 = vshrl.u32 %v1915, %v1931
    %v1934 = vor.u32 %v1932, %v1933
    %v1935 = vsub.s32 4294967266, %v1930
    %v1936 = vadd.s32 %v1935, 127
    %v1937 = vshll.u32 %v1936, 23
    %v1938 = vor.u32 4788187, %v1937
    %v1939 = vand.u32 2147483647, %v1938
    %v1941 = vcvt.s32.f32 %v1934
    %v1942 = vmul.f32 %v1941, %v1939
    %v1943 = vxor.u32 %v1942, 2147483648
    %v1944 = vsel %vm1823, %v1943, %v1942
    %v1945 = vsub.s32 4, %v1921
    %v1946 = vsel %vm1823, %v1945, %v1921
    %v1947 = vsel %vm1822, %v1505, %v1944
    %v1948 = vsel %vm1822, 0, %v1946
    %v1949 = vmul.f32 %v1947, %v1947
    %v1950 = vmul.f32 %v1949, -0.001358992
    %v1951 = vadd.f32 %v1950, 0.041655596
    %v1952 = vmul.f32 %v1949, %v1951
    %v1953 = vadd.f32 %v1952, -0.4999988
    %v1954 = vmul.f32 %v1949, %v1953
    %v1955 = vadd.f32 1.0, %v1954
    %v1956 = vmul.f32 %v1947, %v1947
    %v1957 = vmul.f32 %v1956, -0.00019511016
    %v1958 = vadd.f32 %v1957, 0.008332121
    %v1959 = vmul.f32 %v1956, %v1958
    %v1960 = vadd.f32 %v1959, -0.16666654
    %v1961 = vmul.f32 %v1956, %v1960
    %v1962 = vadd.f32 %v1961, 1.0
    %v1963 = vmul.f32 %v1962, %v1947
    %vm1964 = vweird.f32 %v1505
    %v1965 = vadd.s32 %v1948, 3
    %v1966 = vand.u32 %v1965, 3
    %vm1967 = vcmp.lt.s32.totalorder %v1966, 2
    %vm1968 = vcmp.eq.s32.totalorder %v1966, 0
    %v1969 = vxor.u32 %v1963, 2147483648
    %v1970 = vsel %vm1968, %v1955, %v1969
    %vm1971 = vcmp.eq.s32.totalorder %v1966, 2
    %v1972 = vxor.u32 %v1955, 2147483648
    %v1973 = vsel %vm1971, %v1972, %v1963
    %v1974 = vsel %vm1967, %v1970, %v1973
    %v1975 = vsel %vm1964, nan, %v1974
    %v1976 = vand.u32 2147483647, %v1506
    %vm1977 = vcmp.le.f32.partialorder %v1976, 0.7853982
    %vm1978 = vcmp.lt.s32.totalorder %v1506, 0
    %v1979 = vand.u32 %v1506, 2139095040
    %v1980 = vshrl.u32 %v1979, 23
    %v1981 = vsub.s32 %v1980, 127
    %v1982 = vand.u32 2147483647, %v1506
    %v1983 = vand.u32 %v1982, 8388607
    %v1984 = vor.u32 %v1983, 8388608
    %v1985 = vsub.s32 0, %v1984
    %v1986 = vadd.s32 %v1981, 1
    %vm1987 = vcmp.gt.s32.totalorder %v1986, 0
    %v1988 = vsel %vm1987, %v1986, 0
    %v1989 = vshrl.u32 %v1988, 5
    %v1990 = vand.u32 %v1988, 31
    %v1991 = vsub.s32 32, %v1990
    %v1992 = vshrl.u32 683565275, %v1991
    %v1993 = vshll.u32 683565275, %v1990
    %v1994 = vshrl.u32 2475754826, %v1991
    %v1995 = vor.u32 %v1993, %v1994
    %v1996 = vshll.u32 2475754826, %v1990
    %v1997 = vshrl.u32 2131351028, %v1991
    %v1998 = vor.u32 %v1996, %v1997
    %v1999 = vshll.u32 2131351028, %v1990
    %v2000 = vshrl.u32 2102212464, %v1991
    %v2001 = vor.u32 %v1999, %v2000
    %v2002 = vshll.u32 2102212464, %v1990
    %v2003 = vshrl.u32 920167782, %v1991
    %v2004 = vor.u32 %v2002, %v2003
    %v2005 = vshll.u32 920167782, %v1990
    %v2006 = vshrl.u32 1326507024, %v1991
    %v2007 = vor.u32 %v2005, %v2006
    %vm2008 = vcmp.lt.s32.totalorder %v1989, 1
    %vm2009 = vcmp.lt.s32.totalorder %v1989, 2
    %vm2010 = vcmp.lt.s32.totalorder %v1989, 3
    %vm2011 = vcmp.lt.s32.totalorder %v1989, 4
    %v2012 = vsel %vm2008, %v1992, %v1995
    %v2013 = vsel %vm2011, %v2001, 2102212464
    %v2014 = vsel %vm2010, %v1998, %v2013
    %v2015 = vsel %vm2009, %v2012, %v2014
    %v2016 = vsel %vm2008, %v1995, %v1998
    %v2017 = vsel %vm2011, %v2004, 920167782
    %v2018 = vsel %vm2010, %v2001, %v2017
    %v2019 = vsel %vm2009, %v2016, %v2018
    %v2020 = vsel %vm2008, %v1998, %v2001
    %v2021 = vsel %vm2011, %v2007, 1326507024
    %v2022 = vsel %vm2010, %v2004, %v2021
    %v2023 = vsel %vm2009, %v2020, %v2022
    %v2024 = vshll.u32 %v1984, 8
    %v2025 = vand.u32 %v2024, 65535
    %v2026 = vshrl.u32 %v2024, 16
    %v2027 = vand.u32 %v2023, 65535
    %v2028 = vshrl.u32 %v2023, 16
    %v2029 = vmul.u32 %v2025, %v2027
    %v2030 = vmul.u32 %v2025, %v2028
    %v2031 = vmul.u32 %v2026, %v2027
    %v2032 = vmul.u32 %v2026, %v2028
    %v2033 = vshll.u32 %v2030, 16
    %v2034 = vshrl.u32 %v2030, 16
    %v2035 = vshll.u32 %v2031, 16
    %v2036 = vshrl.u32 %v2031, 16
    %vm2037 = vc.u32 %v2029, %v2033
    %v2038 = vsel %vm2037, 1, 0
    %v2039 = vadd.s32 %v2029, %v2033
    %v2040 = vadd.s32 %v2032, %v2038
    %vm2041 = vc.u32 %v2039, %v2035
    %v2042 = vsel %vm2041, 1, 0
    %v2043 = vadd.s32 %v2039, %v2035
    %v2044 = vadd.s32 %v2040, %v2042
    %v2045 = vadd.s32 %v2044, %v2034
    %v2046 = vadd.s32 %v2045, %v2036
    %v2047 = vand.u32 %v2024, 65535
    %v2048 = vshrl.u32 %v2024, 16
    %v2049 = vand.u32 %v2019, 65535
    %v2050 = vshrl.u32 %v2019, 16
    %v2051 = vmul.u32 %v2047, %v2049
    %v2052 = vmul.u32 %v2047, %v2050
    %v2053 = vmul.u32 %v2048, %v2049
    %v2054 = vmul.u32 %v2048, %v2050
    %v2055 = vshll.u32 %v2052, 16
    %v2056 = vshrl.u32 %v2052, 16
    %v2057 = vshll.u32 %v2053, 16
    %v2058 = vshrl.u32 %v2053, 16
    %vm2059 = vc.u32 %v2051, %v2055
    %v2060 = vsel %vm2059, 1, 0
    %v2061 = vadd.s32 %v2051, %v2055
    %v2062 = vadd.s32 %v2054, %v2060
    %vm2063 = vc.u32 %v2061, %v2057
    %v2064 = vsel %vm2063, 1, 0
    %v2065 = vadd.s32 %v2061, %v2057
    %v2066 = vadd.s32 %v2062, %v2064
    %v2067 = vadd.s32 %v2066, %v2056
    %v2068 = vadd.s32 %v2067, %v2058
    %v2069 = vmul.u32 %v2024, %v2015
    %v2070 = vadd.s32 %v2046, %v2065
    %vm2071 = vc.u32 %v2046, %v2065
    %v2072 = vadd.s32 %v2068, 1
    %v2073 = vsel %vm2071, %v2072, %v2068
    %v2074 = vadd.s32 %v2069, %v2073
    %v2075 = vadd.s32 %v2074, 536870912
    %v2076 = vshrl.u32 %v2075, 30
    %v2077 = vshll.u32 %v2076, 30
    %v2078 = vsub.s32 %v2074, %v2077
    %vm2079 = vcmp.lt.s32.totalorder %v2078, 0
    %v2080 = vsub.s32 0, %v2078
    %v2081 = vsel %vm2079, %v2080, %v2078
    %v2082 = vclz %v2081
    %v2083 = vsub.s32 %v2082, 2
    %vm2084 = vcmp.gt.s32.totalorder 0, %v2083
    %v2085 = vsel %vm2084, 0, %v2083
    %v2086 = vsub.s32 32, %v2085
    %v2087 = vshll.u32 %v2078, %v2085
    %v2088 = vshrl.u32 %v2070, %v2086
    %v2089 = vor.u32 %v2087, %v2088
    %v2090 = vsub.s32 4294967266, %v2085
    %v2091 = vadd.s32 %v2090, 127
    %v2092 = vshll.u32 %v2091, 23
    %v2093 = vor.u32 4788187, %v2092
    %v2094 = vand.u32 2147483647, %v2093
    %v2096 = vcvt.s32.f32 %v2089
    %v2097 = vmul.f32 %v2096, %v2094
    %v2098 = vxor.u32 %v2097, 2147483648
    %v2099 = vsel %vm1978, %v2098, %v2097
    %v2100 = vsub.s32 4, %v2076
    %v2101 = vsel %vm1978, %v2100, %v2076
    %v2102 = vsel %vm1977, %v1506, %v2099
    %v2103 = vsel %vm1977, 0, %v2101
    %v2104 = vmul.f32 %v2102, %v2102
    %v2105 = vmul.f32 %v2104, -0.001358992
    %v2106 = vadd.f32 %v2105, 0.041655596
    %v2107 = vmul.f32 %v2104, %v2106
    %v2108 = vadd.f32 %v2107, -0.4999988
    %v2109 = vmul.f32 %v2104, %v2108
    %v2110 = vadd.f32 1.0, %v2109
    %v2111 = vmul.f32 %v2102, %v2102
    %v2112 = vmul.f32 %v2111, -0.00019511016
    %v2113 = vadd.f32 %v2112, 0.008332121
    %v2114 = vmul.f32 %v2111, %v2113
    %v2115 = vadd.f32 %v2114, -0.16666654
    %v2116 = vmul.f32 %v2111, %v2115
    %v2117 = vadd.f32 %v2116, 1.0
    %v2118 = vmul.f32 %v2117, %v2102
    %vm2119 = vweird.f32 %v1506
    %v2120 = vadd.s32 %v2103, 3
    %v2121 = vand.u32 %v2120, 3
    %vm2122 = vcmp.lt.s32.totalorder %v2121, 2
    %vm2123 = vcmp.eq.s32.totalorder %v2121, 0
    %v2124 = vxor.u32 %v2118, 2147483648
    %v2125 = vsel %vm2123, %v2110, %v2124
    %vm2126 = vcmp.eq.s32.totalorder %v2121, 2
    %v2127 = vxor.u32 %v2110, 2147483648
    %v2128 = vsel %vm2126, %v2127, %v2118
    %v2129 = vsel %vm2122, %v2125, %v2128
    %v2130 = vsel %vm2119, nan, %v2129
    %v2131 = vand.u32 2147483647, %v1507
    %vm2132 = vcmp.le.f32.partialorder %v2131, 0.7853982
    %vm2133 = vcmp.lt.s32.totalorder %v1507, 0
    %v2134 = vand.u32 %v1507, 2139095040
    %v2135 = vshrl.u32 %v2134, 23
    %v2136 = vsub.s32 %v2135, 127
    %v2137 = vand.u32 2147483647, %v1507
    %v2138 = vand.u32 %v2137, 8388607
    %v2139 = vor.u32 %v2138, 8388608
    %v2140 = vsub.s32 0, %v2139
    %v2141 = vadd.s32 %v2136, 1
    %vm2142 = vcmp.gt.s32.totalorder %v2141, 0
    %v2143 = vsel %vm2142, %v2141, 0
    %v2144 = vshrl.u32 %v2143, 5
    %v2145 = vand.u32 %v2143, 31
    %v2146 = vsub.s32 32, %v2145
    %v2147 = vshrl.u32 683565275, %v2146
    %v2148 = vshll.u32 683565275, %v2145
    %v2149 = vshrl.u32 2475754826, %v2146
    %v2150 = vor.u32 %v2148, %v2149
    %v2151 = vshll.u32 2475754826, %v2145
    %v2152 = vshrl.u32 2131351028, %v2146
    %v2153 = vor.u32 %v2151, %v2152
    %v2154 = vshll.u32 2131351028, %v2145
    %v2155 = vshrl.u32 2102212464, %v2146
    %v2156 = vor.u32 %v2154, %v2155
    %v2157 = vshll.u32 2102212464, %v2145
    %v2158 = vshrl.u32 920167782, %v2146
    %v2159 = vor.u32 %v2157, %v2158
    %v2160 = vshll.u32 920167782, %v2145
    %v2161 = vshrl.u32 1326507024, %v2146
    %v2162 = vor.u32 %v2160, %v2161
    %vm2163 = vcmp.lt.s32.totalorder %v2144, 1
    %vm2164 = vcmp.lt.s32.totalorder %v2144, 2
    %vm2165 = vcmp.lt.s32.totalorder %v2144, 3
    %vm2166 = vcmp.lt.s32.totalorder %v2144, 4
    %v2167 = vsel %vm2163, %v2147, %v2150
    %v2168 = vsel %vm2166, %v2156, 2102212464
    %v2169 = vsel %vm2165, %v2153, %v2168
    %v2170 = vsel %vm2164, %v2167, %v2169
    %v2171 = vsel %vm2163, %v2150, %v2153
    %v2172 = vsel %vm2166, %v2159, 920167782
    %v2173 = vsel %vm2165, %v2156, %v2172
    %v2174 = vsel %vm2164, %v2171, %v2173
    %v2175 = vsel %vm2163, %v2153, %v2156
    %v2176 = vsel %vm2166, %v2162, 1326507024
    %v2177 = vsel %vm2165, %v2159, %v2176
    %v2178 = vsel %vm2164, %v2175, %v2177
    %v2179 = vshll.u32 %v2139, 8
    %v2180 = vand.u32 %v2179, 65535
    %v2181 = vshrl.u32 %v2179, 16
    %v2182 = vand.u32 %v2178, 65535
    %v2183 = vshrl.u32 %v2178, 16
    %v2184 = vmul.u32 %v2180, %v2182
    %v2185 = vmul.u32 %v2180, %v2183
    %v2186 = vmul.u32 %v2181, %v2182
    %v2187 = vmul.u32 %v2181, %v2183
    %v2188 = vshll.u32 %v2185, 16
    %v2189 = vshrl.u32 %v2185, 16
    %v2190 = vshll.u32 %v2186, 16
    %v2191 = vshrl.u32 %v2186, 16
    %vm2192 = vc.u32 %v2184, %v2188
    %v2193 = vsel %vm2192, 1, 0
    %v2194 = vadd.s32 %v2184, %v2188
    %v2195 = vadd.s32 %v2187, %v2193
    %vm2196 = vc.u32 %v2194, %v2190
    %v2197 = vsel %vm2196, 1, 0
    %v2198 = vadd.s32 %v2194, %v2190
    %v2199 = vadd.s32 %v2195, %v2197
    %v2200 = vadd.s32 %v2199, %v2189
    %v2201 = vadd.s32 %v2200, %v2191
    %v2202 = vand.u32 %v2179, 65535
    %v2203 = vshrl.u32 %v2179, 16
    %v2204 = vand.u32 %v2174, 65535
    %v2205 = vshrl.u32 %v2174, 16
    %v2206 = vmul.u32 %v2202, %v2204
    %v2207 = vmul.u32 %v2202, %v2205
    %v2208 = vmul.u32 %v2203, %v2204
    %v2209 = vmul.u32 %v2203, %v2205
    %v2210 = vshll.u32 %v2207, 16
    %v2211 = vshrl.u32 %v2207, 16
    %v2212 = vshll.u32 %v2208, 16
    %v2213 = vshrl.u32 %v2208, 16
    %vm2214 = vc.u32 %v2206, %v2210
    %v2215 = vsel %vm2214, 1, 0
    %v2216 = vadd.s32 %v2206, %v2210
    %v2217 = vadd.s32 %v2209, %v2215
    %vm2218 = vc.u32 %v2216, %v2212
    %v2219 = vsel %vm2218, 1, 0
    %v2220 = vadd.s32 %v2216, %v2212
    %v2221 = vadd.s32 %v2217, %v2219
    %v2222 = vadd.s32 %v2221, %v2211
    %v2223 = vadd.s32 %v2222, %v2213
    %v2224 = vmul.u32 %v2179, %v2170
    %v2225 = vadd.s32 %v2201, %v2220
    %vm2226 = vc.u32 %v2201, %v2220
    %v2227 = vadd.s32 %v2223, 1
    %v2228 = vsel %vm2226, %v2227, %v2223
    %v2229 = vadd.s32 %v2224, %v2228
    %v2230 = vadd.s32 %v2229, 536870912
    %v2231 = vshrl.u32 %v2230, 30
    %v2232 = vshll.u32 %v2231, 30
    %v2233 = vsub.s32 %v2229, %v2232
    %vm2234 = vcmp.lt.s32.totalorder %v2233, 0
    %v2235 = vsub.s32 0, %v2233
    %v2236 = vsel %vm2234, %v2235, %v2233
    %v2237 = vclz %v2236
    %v2238 = vsub.s32 %v2237, 2
    %vm2239 = vcmp.gt.s32.totalorder 0, %v2238
    %v2240 = vsel %vm2239, 0, %v2238
    %v2241 = vsub.s32 32, %v2240
    %v2242 = vshll.u32 %v2233, %v2240
    %v2243 = vshrl.u32 %v2225, %v2241
    %v2244 = vor.u32 %v2242, %v2243
    %v2245 = vsub.s32 4294967266, %v2240
    %v2246 = vadd.s32 %v2245, 127
    %v2247 = vshll.u32 %v2246, 23
    %v2248 = vor.u32 4788187, %v2247
    %v2249 = vand.u32 2147483647, %v2248
    %v2251 = vcvt.s32.f32 %v2244
    %v2252 = vmul.f32 %v2251, %v2249
    %v2253 = vxor.u32 %v2252, 2147483648
    %v2254 = vsel %vm2133, %v2253, %v2252
    %v2255 = vsub.s32 4, %v2231
    %v2256 = vsel %vm2133, %v2255, %v2231
    %v2257 = vsel %vm2132, %v1507, %v2254
    %v2258 = vsel %vm2132, 0, %v2256
    %v2259 = vmul.f32 %v2257, %v2257
    %v2260 = vmul.f32 %v2259, -0.001358992
    %v2261 = vadd.f32 %v2260, 0.041655596
    %v2262 = vmul.f32 %v2259, %v2261
    %v2263 = vadd.f32 %v2262, -0.4999988
    %v2264 = vmul.f32 %v2259, %v2263
    %v2265 = vadd.f32 1.0, %v2264
    %v2266 = vmul.f32 %v2257, %v2257
    %v2267 = vmul.f32 %v2266, -0.00019511016
    %v2268 = vadd.f32 %v2267, 0.008332121
    %v2269 = vmul.f32 %v2266, %v2268
    %v2270 = vadd.f32 %v2269, -0.16666654
    %v2271 = vmul.f32 %v2266, %v2270
    %v2272 = vadd.f32 %v2271, 1.0
    %v2273 = vmul.f32 %v2272, %v2257
    %vm2274 = vweird.f32 %v1507
    %v2275 = vadd.s32 %v2258, 3
    %v2276 = vand.u32 %v2275, 3
    %vm2277 = vcmp.lt.s32.totalorder %v2276, 2
    %vm2278 = vcmp.eq.s32.totalorder %v2276, 0
    %v2279 = vxor.u32 %v2273, 2147483648
    %v2280 = vsel %vm2278, %v2265, %v2279
    %vm2281 = vcmp.eq.s32.totalorder %v2276, 2
    %v2282 = vxor.u32 %v2265, 2147483648
    %v2283 = vsel %vm2281, %v2282, %v2273
    %v2284 = vsel %vm2277, %v2280, %v2283
    %v2285 = vsel %vm2274, nan, %v2284
    %v2286 = vand.u32 2147483647, %v1508
    %vm2287 = vcmp.le.f32.partialorder %v2286, 0.7853982
    %vm2288 = vcmp.lt.s32.totalorder %v1508, 0
    %v2289 = vand.u32 %v1508, 2139095040
    %v2290 = vshrl.u32 %v2289, 23
    %v2291 = vsub.s32 %v2290, 127
    %v2292 = vand.u32 2147483647, %v1508
    %v2293 = vand.u32 %v2292, 8388607
    %v2294 = vor.u32 %v2293, 8388608
    %v2295 = vsub.s32 0, %v2294
    %v2296 = vadd.s32 %v2291, 1
    %vm2297 = vcmp.gt.s32.totalorder %v2296, 0
    %v2298 = vsel %vm2297, %v2296, 0
    %v2299 = vshrl.u32 %v2298, 5
    %v2300 = vand.u32 %v2298, 31
    %v2301 = vsub.s32 32, %v2300
    %v2302 = vshrl.u32 683565275, %v2301
    %v2303 = vshll.u32 683565275, %v2300
    %v2304 = vshrl.u32 2475754826, %v2301
    %v2305 = vor.u32 %v2303, %v2304
    %v2306 = vshll.u32 2475754826, %v2300
    %v2307 = vshrl.u32 2131351028, %v2301
    %v2308 = vor.u32 %v2306, %v2307
    %v2309 = vshll.u32 2131351028, %v2300
    %v2310 = vshrl.u32 2102212464, %v2301
    %v2311 = vor.u32 %v2309, %v2310
    %v2312 = vshll.u32 2102212464, %v2300
    %v2313 = vshrl.u32 920167782, %v2301
    %v2314 = vor.u32 %v2312, %v2313
    %v2315 = vshll.u32 920167782, %v2300
    %v2316 = vshrl.u32 1326507024, %v2301
    %v2317 = vor.u32 %v2315, %v2316
    %vm2318 = vcmp.lt.s32.totalorder %v2299, 1
    %vm2319 = vcmp.lt.s32.totalorder %v2299, 2
    %vm2320 = vcmp.lt.s32.totalorder %v2299, 3
    %vm2321 = vcmp.lt.s32.totalorder %v2299, 4
    %v2322 = vsel %vm2318, %v2302, %v2305
    %v2323 = vsel %vm2321, %v2311, 2102212464
    %v2324 = vsel %vm2320, %v2308, %v2323
    %v2325 = vsel %vm2319, %v2322, %v2324
    %v2326 = vsel %vm2318, %v2305, %v2308
    %v2327 = vsel %vm2321, %v2314, 920167782
    %v2328 = vsel %vm2320, %v2311, %v2327
    %v2329 = vsel %vm2319, %v2326, %v2328
    %v2330 = vsel %vm2318, %v2308, %v2311
    %v2331 = vsel %vm2321, %v2317, 1326507024
    %v2332 = vsel %vm2320, %v2314, %v2331
    %v2333 = vsel %vm2319, %v2330, %v2332
    %v2334 = vshll.u32 %v2294, 8
    %v2335 = vand.u32 %v2334, 65535
    %v2336 = vshrl.u32 %v2334, 16
    %v2337 = vand.u32 %v2333, 65535
    %v2338 = vshrl.u32 %v2333, 16
    %v2339 = vmul.u32 %v2335, %v2337
    %v2340 = vmul.u32 %v2335, %v2338
    %v2341 = vmul.u32 %v2336, %v2337
    %v2342 = vmul.u32 %v2336, %v2338
    %v2343 = vshll.u32 %v2340, 16
    %v2344 = vshrl.u32 %v2340, 16
    %v2345 = vshll.u32 %v2341, 16
    %v2346 = vshrl.u32 %v2341, 16
    %vm2347 = vc.u32 %v2339, %v2343
    %v2348 = vsel %vm2347, 1, 0
    %v2349 = vadd.s32 %v2339, %v2343
    %v2350 = vadd.s32 %v2342, %v2348
    %vm2351 = vc.u32 %v2349, %v2345
    %v2352 = vsel %vm2351, 1, 0
    %v2353 = vadd.s32 %v2349, %v2345
    %v2354 = vadd.s32 %v2350, %v2352
    %v2355 = vadd.s32 %v2354, %v2344
    %v2356 = vadd.s32 %v2355, %v2346
    %v2357 = vand.u32 %v2334, 65535
    %v2358 = vshrl.u32 %v2334, 16
    %v2359 = vand.u32 %v2329, 65535
    %v2360 = vshrl.u32 %v2329, 16
    %v2361 = vmul.u32 %v2357, %v2359
    %v2362 = vmul.u32 %v2357, %v2360
    %v2363 = vmul.u32 %v2358, %v2359
    %v2364 = vmul.u32 %v2358, %v2360
    %v2365 = vshll.u32 %v2362, 16
    %v2366 = vshrl.u32 %v2362, 16
    %v2367 = vshll.u32 %v2363, 16
    %v2368 = vshrl.u32 %v2363, 16
    %vm2369 = vc.u32 %v2361, %v2365
    %v2370 = vsel %vm2369, 1, 0
    %v2371 = vadd.s32 %v2361, %v2365
    %v2372 = vadd.s32 %v2364, %v2370
    %vm2373 = vc.u32 %v2371, %v2367
    %v2374 = vsel %vm2373, 1, 0
    %v2375 = vadd.s32 %v2371, %v2367
    %v2376 = vadd.s32 %v2372, %v2374
    %v2377 = vadd.s32 %v2376, %v2366
    %v2378 = vadd.s32 %v2377, %v2368
    %v2379 = vmul.u32 %v2334, %v2325
    %v2380 = vadd.s32 %v2356, %v2375
    %vm2381 = vc.u32 %v2356, %v2375
    %v2382 = vadd.s32 %v2378, 1
    %v2383 = vsel %vm2381, %v2382, %v2378
    %v2384 = vadd.s32 %v2379, %v2383
    %v2385 = vadd.s32 %v2384, 536870912
    %v2386 = vshrl.u32 %v2385, 30
    %v2387 = vshll.u32 %v2386, 30
    %v2388 = vsub.s32 %v2384, %v2387
    %vm2389 = vcmp.lt.s32.totalorder %v2388, 0
    %v2390 = vsub.s32 0, %v2388
    %v2391 = vsel %vm2389, %v2390, %v2388
    %v2392 = vclz %v2391
    %v2393 = vsub.s32 %v2392, 2
    %vm2394 = vcmp.gt.s32.totalorder 0, %v2393
    %v2395 = vsel %vm2394, 0, %v2393
    %v2396 = vsub.s32 32, %v2395
    %v2397 = vshll.u32 %v2388, %v2395
    %v2398 = vshrl.u32 %v2380, %v2396
    %v2399 = vor.u32 %v2397, %v2398
    %v2400 = vsub.s32 4294967266, %v2395
    %v2401 = vadd.s32 %v2400, 127
    %v2402 = vshll.u32 %v2401, 23
    %v2403 = vor.u32 4788187, %v2402
    %v2404 = vand.u32 2147483647, %v2403
    %v2406 = vcvt.s32.f32 %v2399
    %v2407 = vmul.f32 %v2406, %v2404
    %v2408 = vxor.u32 %v2407, 2147483648
    %v2409 = vsel %vm2288, %v2408, %v2407
    %v2410 = vsub.s32 4, %v2386
    %v2411 = vsel %vm2288, %v2410, %v2386
    %v2412 = vsel %vm2287, %v1508, %v2409
    %v2413 = vsel %vm2287, 0, %v2411
    %v2414 = vmul.f32 %v2412, %v2412
    %v2415 = vmul.f32 %v2414, -0.001358992
    %v2416 = vadd.f32 %v2415, 0.041655596
    %v2417 = vmul.f32 %v2414, %v2416
    %v2418 = vadd.f32 %v2417, -0.4999988
    %v2419 = vmul.f32 %v2414, %v2418
    %v2420 = vadd.f32 1.0, %v2419
    %v2421 = vmul.f32 %v2412, %v2412
    %v2422 = vmul.f32 %v2421, -0.00019511016
    %v2423 = vadd.f32 %v2422, 0.008332121
    %v2424 = vmul.f32 %v2421, %v2423
    %v2425 = vadd.f32 %v2424, -0.16666654
    %v2426 = vmul.f32 %v2421, %v2425
    %v2427 = vadd.f32 %v2426, 1.0
    %v2428 = vmul.f32 %v2427, %v2412
    %vm2429 = vweird.f32 %v1508
    %v2430 = vadd.s32 %v2413, 3
    %v2431 = vand.u32 %v2430, 3
    %vm2432 = vcmp.lt.s32.totalorder %v2431, 2
    %vm2433 = vcmp.eq.s32.totalorder %v2431, 0
    %v2434 = vxor.u32 %v2428, 2147483648
    %v2435 = vsel %vm2433, %v2420, %v2434
    %vm2436 = vcmp.eq.s32.totalorder %v2431, 2
    %v2437 = vxor.u32 %v2420, 2147483648
    %v2438 = vsel %vm2436, %v2437, %v2428
    %v2439 = vsel %vm2432, %v2435, %v2438
    %v2440 = vsel %vm2429, nan, %v2439
    %v2441 = vand.u32 2147483647, %v1509
    %vm2442 = vcmp.le.f32.partialorder %v2441, 0.7853982
    %vm2443 = vcmp.lt.s32.totalorder %v1509, 0
    %v2444 = vand.u32 %v1509, 2139095040
    %v2445 = vshrl.u32 %v2444, 23
    %v2446 = vsub.s32 %v2445, 127
    %v2447 = vand.u32 2147483647, %v1509
    %v2448 = vand.u32 %v2447, 8388607
    %v2449 = vor.u32 %v2448, 8388608
    %v2450 = vsub.s32 0, %v2449
    %v2451 = vadd.s32 %v2446, 1
    %vm2452 = vcmp.gt.s32.totalorder %v2451, 0
    %v2453 = vsel %vm2452, %v2451, 0
    %v2454 = vshrl.u32 %v2453, 5
    %v2455 = vand.u32 %v2453, 31
    %v2456 = vsub.s32 32, %v2455
    %v2457 = vshrl.u32 683565275, %v2456
    %v2458 = vshll.u32 683565275, %v2455
    %v2459 = vshrl.u32 2475754826, %v2456
    %v2460 = vor.u32 %v2458, %v2459
    %v2461 = vshll.u32 2475754826, %v2455
    %v2462 = vshrl.u32 2131351028, %v2456
    %v2463 = vor.u32 %v2461, %v2462
    %v2464 = vshll.u32 2131351028, %v2455
    %v2465 = vshrl.u32 2102212464, %v2456
    %v2466 = vor.u32 %v2464, %v2465
    %v2467 = vshll.u32 2102212464, %v2455
    %v2468 = vshrl.u32 920167782, %v2456
    %v2469 = vor.u32 %v2467, %v2468
    %v2470 = vshll.u32 920167782, %v2455
    %v2471 = vshrl.u32 1326507024, %v2456
    %v2472 = vor.u32 %v2470, %v2471
    %vm2473 = vcmp.lt.s32.totalorder %v2454, 1
    %vm2474 = vcmp.lt.s32.totalorder %v2454, 2
    %vm2475 = vcmp.lt.s32.totalorder %v2454, 3
    %vm2476 = vcmp.lt.s32.totalorder %v2454, 4
    %v2477 = vsel %vm2473, %v2457, %v2460
    %v2478 = vsel %vm2476, %v2466, 2102212464
    %v2479 = vsel %vm2475, %v2463, %v2478
    %v2480 = vsel %vm2474, %v2477, %v2479
    %v2481 = vsel %vm2473, %v2460, %v2463
    %v2482 = vsel %vm2476, %v2469, 920167782
    %v2483 = vsel %vm2475, %v2466, %v2482
    %v2484 = vsel %vm2474, %v2481, %v2483
    %v2485 = vsel %vm2473, %v2463, %v2466
    %v2486 = vsel %vm2476, %v2472, 1326507024
    %v2487 = vsel %vm2475, %v2469, %v2486
    %v2488 = vsel %vm2474, %v2485, %v2487
    %v2489 = vshll.u32 %v2449, 8
    %v2490 = vand.u32 %v2489, 65535
    %v2491 = vshrl.u32 %v2489, 16
    %v2492 = vand.u32 %v2488, 65535
    %v2493 = vshrl.u32 %v2488, 16
    %v2494 = vmul.u32 %v2490, %v2492
    %v2495 = vmul.u32 %v2490, %v2493
    %v2496 = vmul.u32 %v2491, %v2492
    %v2497 = vmul.u32 %v2491, %v2493
    %v2498 = vshll.u32 %v2495, 16
    %v2499 = vshrl.u32 %v2495, 16
    %v2500 = vshll.u32 %v2496, 16
    %v2501 = vshrl.u32 %v2496, 16
    %vm2502 = vc.u32 %v2494, %v2498
    %v2503 = vsel %vm2502, 1, 0
    %v2504 = vadd.s32 %v2494, %v2498
    %v2505 = vadd.s32 %v2497, %v2503
    %vm2506 = vc.u32 %v2504, %v2500
    %v2507 = vsel %vm2506, 1, 0
    %v2508 = vadd.s32 %v2504, %v2500
    %v2509 = vadd.s32 %v2505, %v2507
    %v2510 = vadd.s32 %v2509, %v2499
    %v2511 = vadd.s32 %v2510, %v2501
    %v2512 = vand.u32 %v2489, 65535
    %v2513 = vshrl.u32 %v2489, 16
    %v2514 = vand.u32 %v2484, 65535
    %v2515 = vshrl.u32 %v2484, 16
    %v2516 = vmul.u32 %v2512, %v2514
    %v2517 = vmul.u32 %v2512, %v2515
    %v2518 = vmul.u32 %v2513, %v2514
    %v2519 = vmul.u32 %v2513, %v2515
    %v2520 = vshll.u32 %v2517, 16
    %v2521 = vshrl.u32 %v2517, 16
    %v2522 = vshll.u32 %v2518, 16
    %v2523 = vshrl.u32 %v2518, 16
    %vm2524 = vc.u32 %v2516, %v2520
    %v2525 = vsel %vm2524, 1, 0
    %v2526 = vadd.s32 %v2516, %v2520
    %v2527 = vadd.s32 %v2519, %v2525
    %vm2528 = vc.u32 %v2526, %v2522
    %v2529 = vsel %vm2528, 1, 0
    %v2530 = vadd.s32 %v2526, %v2522
    %v2531 = vadd.s32 %v2527, %v2529
    %v2532 = vadd.s32 %v2531, %v2521
    %v2533 = vadd.s32 %v2532, %v2523
    %v2534 = vmul.u32 %v2489, %v2480
    %v2535 = vadd.s32 %v2511, %v2530
    %vm2536 = vc.u32 %v2511, %v2530
    %v2537 = vadd.s32 %v2533, 1
    %v2538 = vsel %vm2536, %v2537, %v2533
    %v2539 = vadd.s32 %v2534, %v2538
    %v2540 = vadd.s32 %v2539, 536870912
    %v2541 = vshrl.u32 %v2540, 30
    %v2542 = vshll.u32 %v2541, 30
    %v2543 = vsub.s32 %v2539, %v2542
    %vm2544 = vcmp.lt.s32.totalorder %v2543, 0
    %v2545 = vsub.s32 0, %v2543
    %v2546 = vsel %vm2544, %v2545, %v2543
    %v2547 = vclz %v2546
    %v2548 = vsub.s32 %v2547, 2
    %vm2549 = vcmp.gt.s32.totalorder 0, %v2548
    %v2550 = vsel %vm2549, 0, %v2548
    %v2551 = vsub.s32 32, %v2550
    %v2552 = vshll.u32 %v2543, %v2550
    %v2553 = vshrl.u32 %v2535, %v2551
    %v2554 = vor.u32 %v2552, %v2553
    %v2555 = vsub.s32 4294967266, %v2550
    %v2556 = vadd.s32 %v2555, 127
    %v2557 = vshll.u32 %v2556, 23
    %v2558 = vor.u32 4788187, %v2557
    %v2559 = vand.u32 2147483647, %v2558
    %v2561 = vcvt.s32.f32 %v2554
    %v2562 = vmul.f32 %v2561, %v2559
    %v2563 = vxor.u32 %v2562, 2147483648
    %v2564 = vsel %vm2443, %v2563, %v2562
    %v2565 = vsub.s32 4, %v2541
    %v2566 = vsel %vm2443, %v2565, %v2541
    %v2567 = vsel %vm2442, %v1509, %v2564
    %v2568 = vsel %vm2442, 0, %v2566
    %v2569 = vmul.f32 %v2567, %v2567
    %v2570 = vmul.f32 %v2569, -0.001358992
    %v2571 = vadd.f32 %v2570, 0.041655596
    %v2572 = vmul.f32 %v2569, %v2571
    %v2573 = vadd.f32 %v2572, -0.4999988
    %v2574 = vmul.f32 %v2569, %v2573
    %v2575 = vadd.f32 1.0, %v2574
    %v2576 = vmul.f32 %v2567, %v2567
    %v2577 = vmul.f32 %v2576, -0.00019511016
    %v2578 = vadd.f32 %v2577, 0.008332121
    %v2579 = vmul.f32 %v2576, %v2578
    %v2580 = vadd.f32 %v2579, -0.16666654
    %v2581 = vmul.f32 %v2576, %v2580
    %v2582 = vadd.f32 %v2581, 1.0
    %v2583 = vmul.f32 %v2582, %v2567
    %vm2584 = vweird.f32 %v1509
    %v2585 = vadd.s32 %v2568, 3
    %v2586 = vand.u32 %v2585, 3
    %vm2587 = vcmp.lt.s32.totalorder %v2586, 2
    %vm2588 = vcmp.eq.s32.totalorder %v2586, 0
    %v2589 = vxor.u32 %v2583, 2147483648
    %v2590 = vsel %vm2588, %v2575, %v2589
    %vm2591 = vcmp.eq.s32.totalorder %v2586, 2
    %v2592 = vxor.u32 %v2575, 2147483648
    %v2593 = vsel %vm2591, %v2592, %v2583
    %v2594 = vsel %vm2587, %v2590, %v2593
    %v2595 = vsel %vm2584, nan, %v2594
    %v2596 = vand.u32 2147483647, %v1510
    %vm2597 = vcmp.le.f32.partialorder %v2596, 0.7853982
    %vm2598 = vcmp.lt.s32.totalorder %v1510, 0
    %v2599 = vand.u32 %v1510, 2139095040
    %v2600 = vshrl.u32 %v2599, 23
    %v2601 = vsub.s32 %v2600, 127
    %v2602 = vand.u32 2147483647, %v1510
    %v2603 = vand.u32 %v2602, 8388607
    %v2604 = vor.u32 %v2603, 8388608
    %v2605 = vsub.s32 0, %v2604
    %v2606 = vadd.s32 %v2601, 1
    %vm2607 = vcmp.gt.s32.totalorder %v2606, 0
    %v2608 = vsel %vm2607, %v2606, 0
    %v2609 = vshrl.u32 %v2608, 5
    %v2610 = vand.u32 %v2608, 31
    %v2611 = vsub.s32 32, %v2610
    %v2612 = vshrl.u32 683565275, %v2611
    %v2613 = vshll.u32 683565275, %v2610
    %v2614 = vshrl.u32 2475754826, %v2611
    %v2615 = vor.u32 %v2613, %v2614
    %v2616 = vshll.u32 2475754826, %v2610
    %v2617 = vshrl.u32 2131351028, %v2611
    %v2618 = vor.u32 %v2616, %v2617
    %v2619 = vshll.u32 2131351028, %v2610
    %v2620 = vshrl.u32 2102212464, %v2611
    %v2621 = vor.u32 %v2619, %v2620
    %v2622 = vshll.u32 2102212464, %v2610
    %v2623 = vshrl.u32 920167782, %v2611
    %v2624 = vor.u32 %v2622, %v2623
    %v2625 = vshll.u32 920167782, %v2610
    %v2626 = vshrl.u32 1326507024, %v2611
    %v2627 = vor.u32 %v2625, %v2626
    %vm2628 = vcmp.lt.s32.totalorder %v2609, 1
    %vm2629 = vcmp.lt.s32.totalorder %v2609, 2
    %vm2630 = vcmp.lt.s32.totalorder %v2609, 3
    %vm2631 = vcmp.lt.s32.totalorder %v2609, 4
    %v2632 = vsel %vm2628, %v2612, %v2615
    %v2633 = vsel %vm2631, %v2621, 2102212464
    %v2634 = vsel %vm2630, %v2618, %v2633
    %v2635 = vsel %vm2629, %v2632, %v2634
    %v2636 = vsel %vm2628, %v2615, %v2618
    %v2637 = vsel %vm2631, %v2624, 920167782
    %v2638 = vsel %vm2630, %v2621, %v2637
    %v2639 = vsel %vm2629, %v2636, %v2638
    %v2640 = vsel %vm2628, %v2618, %v2621
    %v2641 = vsel %vm2631, %v2627, 1326507024
    %v2642 = vsel %vm2630, %v2624, %v2641
    %v2643 = vsel %vm2629, %v2640, %v2642
    %v2644 = vshll.u32 %v2604, 8
    %v2645 = vand.u32 %v2644, 65535
    %v2646 = vshrl.u32 %v2644, 16
    %v2647 = vand.u32 %v2643, 65535
    %v2648 = vshrl.u32 %v2643, 16
    %v2649 = vmul.u32 %v2645, %v2647
    %v2650 = vmul.u32 %v2645, %v2648
    %v2651 = vmul.u32 %v2646, %v2647
    %v2652 = vmul.u32 %v2646, %v2648
    %v2653 = vshll.u32 %v2650, 16
    %v2654 = vshrl.u32 %v2650, 16
    %v2655 = vshll.u32 %v2651, 16
    %v2656 = vshrl.u32 %v2651, 16
    %vm2657 = vc.u32 %v2649, %v2653
    %v2658 = vsel %vm2657, 1, 0
    %v2659 = vadd.s32 %v2649, %v2653
    %v2660 = vadd.s32 %v2652, %v2658
    %vm2661 = vc.u32 %v2659, %v2655
    %v2662 = vsel %vm2661, 1, 0
    %v2663 = vadd.s32 %v2659, %v2655
    %v2664 = vadd.s32 %v2660, %v2662
    %v2665 = vadd.s32 %v2664, %v2654
    %v2666 = vadd.s32 %v2665, %v2656
    %v2667 = vand.u32 %v2644, 65535
    %v2668 = vshrl.u32 %v2644, 16
    %v2669 = vand.u32 %v2639, 65535
    %v2670 = vshrl.u32 %v2639, 16
    %v2671 = vmul.u32 %v2667, %v2669
    %v2672 = vmul.u32 %v2667, %v2670
    %v2673 = vmul.u32 %v2668, %v2669
    %v2674 = vmul.u32 %v2668, %v2670
    %v2675 = vshll.u32 %v2672, 16
    %v2676 = vshrl.u32 %v2672, 16
    %v2677 = vshll.u32 %v2673, 16
    %v2678 = vshrl.u32 %v2673, 16
    %vm2679 = vc.u32 %v2671, %v2675
    %v2680 = vsel %vm2679, 1, 0
    %v2681 = vadd.s32 %v2671, %v2675
    %v2682 = vadd.s32 %v2674, %v2680
    %vm2683 = vc.u32 %v2681, %v2677
    %v2684 = vsel %vm2683, 1, 0
    %v2685 = vadd.s32 %v2681, %v2677
    %v2686 = vadd.s32 %v2682, %v2684
    %v2687 = vadd.s32 %v2686, %v2676
    %v2688 = vadd.s32 %v2687, %v2678
    %v2689 = vmul.u32 %v2644, %v2635
    %v2690 = vadd.s32 %v2666, %v2685
    %vm2691 = vc.u32 %v2666, %v2685
    %v2692 = vadd.s32 %v2688, 1
    %v2693 = vsel %vm2691, %v2692, %v2688
    %v2694 = vadd.s32 %v2689, %v2693
    %v2695 = vadd.s32 %v2694, 536870912
    %v2696 = vshrl.u32 %v2695, 30
    %v2697 = vshll.u32 %v2696, 30
    %v2698 = vsub.s32 %v2694, %v2697
    %vm2699 = vcmp.lt.s32.totalorder %v2698, 0
    %v2700 = vsub.s32 0, %v2698
    %v2701 = vsel %vm2699, %v2700, %v2698
    %v2702 = vclz %v2701
    %v2703 = vsub.s32 %v2702, 2
    %vm2704 = vcmp.gt.s32.totalorder 0, %v2703
    %v2705 = vsel %vm2704, 0, %v2703
    %v2706 = vsub.s32 32, %v2705
    %v2707 = vshll.u32 %v2698, %v2705
    %v2708 = vshrl.u32 %v2690, %v2706
    %v2709 = vor.u32 %v2707, %v2708
    %v2710 = vsub.s32 4294967266, %v2705
    %v2711 = vadd.s32 %v2710, 127
    %v2712 = vshll.u32 %v2711, 23
    %v2713 = vor.u32 4788187, %v2712
    %v2714 = vand.u32 2147483647, %v2713
    %v2716 = vcvt.s32.f32 %v2709
    %v2717 = vmul.f32 %v2716, %v2714
    %v2718 = vxor.u32 %v2717, 2147483648
    %v2719 = vsel %vm2598, %v2718, %v2717
    %v2720 = vsub.s32 4, %v2696
    %v2721 = vsel %vm2598, %v2720, %v2696
    %v2722 = vsel %vm2597, %v1510, %v2719
    %v2723 = vsel %vm2597, 0, %v2721
    %v2724 = vmul.f32 %v2722, %v2722
    %v2725 = vmul.f32 %v2724, -0.001358992
    %v2726 = vadd.f32 %v2725, 0.041655596
    %v2727 = vmul.f32 %v2724, %v2726
    %v2728 = vadd.f32 %v2727, -0.4999988
    %v2729 = vmul.f32 %v2724, %v2728
    %v2730 = vadd.f32 1.0, %v2729
    %v2731 = vmul.f32 %v2722, %v2722
    %v2732 = vmul.f32 %v2731, -0.00019511016
    %v2733 = vadd.f32 %v2732, 0.008332121
    %v2734 = vmul.f32 %v2731, %v2733
    %v2735 = vadd.f32 %v2734, -0.16666654
    %v2736 = vmul.f32 %v2731, %v2735
    %v2737 = vadd.f32 %v2736, 1.0
    %v2738 = vmul.f32 %v2737, %v2722
    %vm2739 = vweird.f32 %v1510
    %v2740 = vadd.s32 %v2723, 3
    %v2741 = vand.u32 %v2740, 3
    %vm2742 = vcmp.lt.s32.totalorder %v2741, 2
    %vm2743 = vcmp.eq.s32.totalorder %v2741, 0
    %v2744 = vxor.u32 %v2738, 2147483648
    %v2745 = vsel %vm2743, %v2730, %v2744
    %vm2746 = vcmp.eq.s32.totalorder %v2741, 2
    %v2747 = vxor.u32 %v2730, 2147483648
    %v2748 = vsel %vm2746, %v2747, %v2738
    %v2749 = vsel %vm2742, %v2745, %v2748
    %v2750 = vsel %vm2739, nan, %v2749
    %v2751 = vmul.f32 %v1665, 0.5
    %v2752 = vmul.f32 %v1820, 0.5
    %v2753 = vmul.f32 %v1975, 0.5
    %v2754 = vmul.f32 %v2130, 0.5
    %v2755 = vmul.f32 %v2285, 0.5
    %v2756 = vmul.f32 %v2440, 0.5
    %v2757 = vmul.f32 %v2595, 0.5
    %v2758 = vmul.f32 %v2750, 0.5
    %v2759 = vadd.f32 %v1491, %v2751
    %v2760 = vadd.f32 %v1492, %v2752
    %v2761 = vadd.f32 %v1493, %v2753
    %v2762 = vadd.f32 %v1494, %v2754
    %v2763 = vadd.f32 %v1495, %v2755
    %v2764 = vadd.f32 %v1496, %v2756
    %v2765 = vadd.f32 %v1497, %v2757
    %v2766 = vadd.f32 %v1498, %v2758
    %2767 = vset.pattern.permute.xlu0 5
    %2768 = vperm.xlu0 %2767, %v81
    %v2769 = vpop.permute.xlu0 %2768
    %v2771 = vperm.slane %v73, 7
    %v2772 = vperm.slane %v74, 7
    %v2773 = vperm.slane %v75, 7
    %v2774 = vperm.slane %v76, 7
    %v2775 = vperm.slane %v77, 7
    %v2776 = vperm.slane %v78, 7
    %v2777 = vperm.slane %v79, 7
    %v2778 = vperm.slane %v80, 7
    %v2779 = vmul.f32 %v2769, %v2771
    %v2780 = vmul.f32 %v2769, %v2772
    %v2781 = vmul.f32 %v2769, %v2773
    %v2782 = vmul.f32 %v2769, %v2774
    %v2783 = vmul.f32 %v2769, %v2775
    %v2784 = vmul.f32 %v2769, %v2776
    %v2785 = vmul.f32 %v2769, %v2777
    %v2786 = vmul.f32 %v2769, %v2778
    %v2787 = vand.u32 2147483647, %v2779
    %vm2788 = vcmp.le.f32.partialorder %v2787, 0.7853982
    %vm2789 = vcmp.lt.s32.totalorder %v2779, 0
    %v2790 = vand.u32 %v2779, 2139095040
    %v2791 = vshrl.u32 %v2790, 23
    %v2792 = vsub.s32 %v2791, 127
    %v2793 = vand.u32 2147483647, %v2779
    %v2794 = vand.u32 %v2793, 8388607
    %v2795 = vor.u32 %v2794, 8388608
    %v2796 = vsub.s32 0, %v2795
    %v2797 = vadd.s32 %v2792, 1
    %vm2798 = vcmp.gt.s32.totalorder %v2797, 0
    %v2799 = vsel %vm2798, %v2797, 0
    %v2800 = vshrl.u32 %v2799, 5
    %v2801 = vand.u32 %v2799, 31
    %v2802 = vsub.s32 32, %v2801
    %v2803 = vshrl.u32 683565275, %v2802
    %v2804 = vshll.u32 683565275, %v2801
    %v2805 = vshrl.u32 2475754826, %v2802
    %v2806 = vor.u32 %v2804, %v2805
    %v2807 = vshll.u32 2475754826, %v2801
    %v2808 = vshrl.u32 2131351028, %v2802
    %v2809 = vor.u32 %v2807, %v2808
    %v2810 = vshll.u32 2131351028, %v2801
    %v2811 = vshrl.u32 2102212464, %v2802
    %v2812 = vor.u32 %v2810, %v2811
    %v2813 = vshll.u32 2102212464, %v2801
    %v2814 = vshrl.u32 920167782, %v2802
    %v2815 = vor.u32 %v2813, %v2814
    %v2816 = vshll.u32 920167782, %v2801
    %v2817 = vshrl.u32 1326507024, %v2802
    %v2818 = vor.u32 %v2816, %v2817
    %vm2819 = vcmp.lt.s32.totalorder %v2800, 1
    %vm2820 = vcmp.lt.s32.totalorder %v2800, 2
    %vm2821 = vcmp.lt.s32.totalorder %v2800, 3
    %vm2822 = vcmp.lt.s32.totalorder %v2800, 4
    %v2823 = vsel %vm2819, %v2803, %v2806
    %v2824 = vsel %vm2822, %v2812, 2102212464
    %v2825 = vsel %vm2821, %v2809, %v2824
    %v2826 = vsel %vm2820, %v2823, %v2825
    %v2827 = vsel %vm2819, %v2806, %v2809
    %v2828 = vsel %vm2822, %v2815, 920167782
    %v2829 = vsel %vm2821, %v2812, %v2828
    %v2830 = vsel %vm2820, %v2827, %v2829
    %v2831 = vsel %vm2819, %v2809, %v2812
    %v2832 = vsel %vm2822, %v2818, 1326507024
    %v2833 = vsel %vm2821, %v2815, %v2832
    %v2834 = vsel %vm2820, %v2831, %v2833
    %v2835 = vshll.u32 %v2795, 8
    %v2836 = vand.u32 %v2835, 65535
    %v2837 = vshrl.u32 %v2835, 16
    %v2838 = vand.u32 %v2834, 65535
    %v2839 = vshrl.u32 %v2834, 16
    %v2840 = vmul.u32 %v2836, %v2838
    %v2841 = vmul.u32 %v2836, %v2839
    %v2842 = vmul.u32 %v2837, %v2838
    %v2843 = vmul.u32 %v2837, %v2839
    %v2844 = vshll.u32 %v2841, 16
    %v2845 = vshrl.u32 %v2841, 16
    %v2846 = vshll.u32 %v2842, 16
    %v2847 = vshrl.u32 %v2842, 16
    %vm2848 = vc.u32 %v2840, %v2844
    %v2849 = vsel %vm2848, 1, 0
    %v2850 = vadd.s32 %v2840, %v2844
    %v2851 = vadd.s32 %v2843, %v2849
    %vm2852 = vc.u32 %v2850, %v2846
    %v2853 = vsel %vm2852, 1, 0
    %v2854 = vadd.s32 %v2850, %v2846
    %v2855 = vadd.s32 %v2851, %v2853
    %v2856 = vadd.s32 %v2855, %v2845
    %v2857 = vadd.s32 %v2856, %v2847
    %v2858 = vand.u32 %v2835, 65535
    %v2859 = vshrl.u32 %v2835, 16
    %v2860 = vand.u32 %v2830, 65535
    %v2861 = vshrl.u32 %v2830, 16
    %v2862 = vmul.u32 %v2858, %v2860
    %v2863 = vmul.u32 %v2858, %v2861
    %v2864 = vmul.u32 %v2859, %v2860
    %v2865 = vmul.u32 %v2859, %v2861
    %v2866 = vshll.u32 %v2863, 16
    %v2867 = vshrl.u32 %v2863, 16
    %v2868 = vshll.u32 %v2864, 16
    %v2869 = vshrl.u32 %v2864, 16
    %vm2870 = vc.u32 %v2862, %v2866
    %v2871 = vsel %vm2870, 1, 0
    %v2872 = vadd.s32 %v2862, %v2866
    %v2873 = vadd.s32 %v2865, %v2871
    %vm2874 = vc.u32 %v2872, %v2868
    %v2875 = vsel %vm2874, 1, 0
    %v2876 = vadd.s32 %v2872, %v2868
    %v2877 = vadd.s32 %v2873, %v2875
    %v2878 = vadd.s32 %v2877, %v2867
    %v2879 = vadd.s32 %v2878, %v2869
    %v2880 = vmul.u32 %v2835, %v2826
    %v2881 = vadd.s32 %v2857, %v2876
    %vm2882 = vc.u32 %v2857, %v2876
    %v2883 = vadd.s32 %v2879, 1
    %v2884 = vsel %vm2882, %v2883, %v2879
    %v2885 = vadd.s32 %v2880, %v2884
    %v2886 = vadd.s32 %v2885, 536870912
    %v2887 = vshrl.u32 %v2886, 30
    %v2888 = vshll.u32 %v2887, 30
    %v2889 = vsub.s32 %v2885, %v2888
    %vm2890 = vcmp.lt.s32.totalorder %v2889, 0
    %v2891 = vsub.s32 0, %v2889
    %v2892 = vsel %vm2890, %v2891, %v2889
    %v2893 = vclz %v2892
    %v2894 = vsub.s32 %v2893, 2
    %vm2895 = vcmp.gt.s32.totalorder 0, %v2894
    %v2896 = vsel %vm2895, 0, %v2894
    %v2897 = vsub.s32 32, %v2896
    %v2898 = vshll.u32 %v2889, %v2896
    %v2899 = vshrl.u32 %v2881, %v2897
    %v2900 = vor.u32 %v2898, %v2899
    %v2901 = vsub.s32 4294967266, %v2896
    %v2902 = vadd.s32 %v2901, 127
    %v2903 = vshll.u32 %v2902, 23
    %v2904 = vor.u32 4788187, %v2903
    %v2905 = vand.u32 2147483647, %v2904
    %v2907 = vcvt.s32.f32 %v2900
    %v2908 = vmul.f32 %v2907, %v2905
    %v2909 = vxor.u32 %v2908, 2147483648
    %v2910 = vsel %vm2789, %v2909, %v2908
    %v2911 = vsub.s32 4, %v2887
    %v2912 = vsel %vm2789, %v2911, %v2887
    %v2913 = vsel %vm2788, %v2779, %v2910
    %v2914 = vsel %vm2788, 0, %v2912
    %v2915 = vmul.f32 %v2913, %v2913
    %v2916 = vmul.f32 %v2915, -0.001358992
    %v2917 = vadd.f32 %v2916, 0.041655596
    %v2918 = vmul.f32 %v2915, %v2917
    %v2919 = vadd.f32 %v2918, -0.4999988
    %v2920 = vmul.f32 %v2915, %v2919
    %v2921 = vadd.f32 1.0, %v2920
    %v2922 = vmul.f32 %v2913, %v2913
    %v2923 = vmul.f32 %v2922, -0.00019511016
    %v2924 = vadd.f32 %v2923, 0.008332121
    %v2925 = vmul.f32 %v2922, %v2924
    %v2926 = vadd.f32 %v2925, -0.16666654
    %v2927 = vmul.f32 %v2922, %v2926
    %v2928 = vadd.f32 %v2927, 1.0
    %v2929 = vmul.f32 %v2928, %v2913
    %vm2930 = vweird.f32 %v2779
    %v2931 = vadd.s32 %v2914, 3
    %v2932 = vand.u32 %v2931, 3
    %vm2933 = vcmp.lt.s32.totalorder %v2932, 2
    %vm2934 = vcmp.eq.s32.totalorder %v2932, 0
    %v2935 = vxor.u32 %v2929, 2147483648
    %v2936 = vsel %vm2934, %v2921, %v2935
    %vm2937 = vcmp.eq.s32.totalorder %v2932, 2
    %v2938 = vxor.u32 %v2921, 2147483648
    %v2939 = vsel %vm2937, %v2938, %v2929
    %v2940 = vsel %vm2933, %v2936, %v2939
    %v2941 = vsel %vm2930, nan, %v2940
    %v2942 = vand.u32 2147483647, %v2780
    %vm2943 = vcmp.le.f32.partialorder %v2942, 0.7853982
    %vm2944 = vcmp.lt.s32.totalorder %v2780, 0
    %v2945 = vand.u32 %v2780, 2139095040
    %v2946 = vshrl.u32 %v2945, 23
    %v2947 = vsub.s32 %v2946, 127
    %v2948 = vand.u32 2147483647, %v2780
    %v2949 = vand.u32 %v2948, 8388607
    %v2950 = vor.u32 %v2949, 8388608
    %v2951 = vsub.s32 0, %v2950
    %v2952 = vadd.s32 %v2947, 1
    %vm2953 = vcmp.gt.s32.totalorder %v2952, 0
    %v2954 = vsel %vm2953, %v2952, 0
    %v2955 = vshrl.u32 %v2954, 5
    %v2956 = vand.u32 %v2954, 31
    %v2957 = vsub.s32 32, %v2956
    %v2958 = vshrl.u32 683565275, %v2957
    %v2959 = vshll.u32 683565275, %v2956
    %v2960 = vshrl.u32 2475754826, %v2957
    %v2961 = vor.u32 %v2959, %v2960
    %v2962 = vshll.u32 2475754826, %v2956
    %v2963 = vshrl.u32 2131351028, %v2957
    %v2964 = vor.u32 %v2962, %v2963
    %v2965 = vshll.u32 2131351028, %v2956
    %v2966 = vshrl.u32 2102212464, %v2957
    %v2967 = vor.u32 %v2965, %v2966
    %v2968 = vshll.u32 2102212464, %v2956
    %v2969 = vshrl.u32 920167782, %v2957
    %v2970 = vor.u32 %v2968, %v2969
    %v2971 = vshll.u32 920167782, %v2956
    %v2972 = vshrl.u32 1326507024, %v2957
    %v2973 = vor.u32 %v2971, %v2972
    %vm2974 = vcmp.lt.s32.totalorder %v2955, 1
    %vm2975 = vcmp.lt.s32.totalorder %v2955, 2
    %vm2976 = vcmp.lt.s32.totalorder %v2955, 3
    %vm2977 = vcmp.lt.s32.totalorder %v2955, 4
    %v2978 = vsel %vm2974, %v2958, %v2961
    %v2979 = vsel %vm2977, %v2967, 2102212464
    %v2980 = vsel %vm2976, %v2964, %v2979
    %v2981 = vsel %vm2975, %v2978, %v2980
    %v2982 = vsel %vm2974, %v2961, %v2964
    %v2983 = vsel %vm2977, %v2970, 920167782
    %v2984 = vsel %vm2976, %v2967, %v2983
    %v2985 = vsel %vm2975, %v2982, %v2984
    %v2986 = vsel %vm2974, %v2964, %v2967
    %v2987 = vsel %vm2977, %v2973, 1326507024
    %v2988 = vsel %vm2976, %v2970, %v2987
    %v2989 = vsel %vm2975, %v2986, %v2988
    %v2990 = vshll.u32 %v2950, 8
    %v2991 = vand.u32 %v2990, 65535
    %v2992 = vshrl.u32 %v2990, 16
    %v2993 = vand.u32 %v2989, 65535
    %v2994 = vshrl.u32 %v2989, 16
    %v2995 = vmul.u32 %v2991, %v2993
    %v2996 = vmul.u32 %v2991, %v2994
    %v2997 = vmul.u32 %v2992, %v2993
    %v2998 = vmul.u32 %v2992, %v2994
    %v2999 = vshll.u32 %v2996, 16
    %v3000 = vshrl.u32 %v2996, 16
    %v3001 = vshll.u32 %v2997, 16
    %v3002 = vshrl.u32 %v2997, 16
    %vm3003 = vc.u32 %v2995, %v2999
    %v3004 = vsel %vm3003, 1, 0
    %v3005 = vadd.s32 %v2995, %v2999
    %v3006 = vadd.s32 %v2998, %v3004
    %vm3007 = vc.u32 %v3005, %v3001
    %v3008 = vsel %vm3007, 1, 0
    %v3009 = vadd.s32 %v3005, %v3001
    %v3010 = vadd.s32 %v3006, %v3008
    %v3011 = vadd.s32 %v3010, %v3000
    %v3012 = vadd.s32 %v3011, %v3002
    %v3013 = vand.u32 %v2990, 65535
    %v3014 = vshrl.u32 %v2990, 16
    %v3015 = vand.u32 %v2985, 65535
    %v3016 = vshrl.u32 %v2985, 16
    %v3017 = vmul.u32 %v3013, %v3015
    %v3018 = vmul.u32 %v3013, %v3016
    %v3019 = vmul.u32 %v3014, %v3015
    %v3020 = vmul.u32 %v3014, %v3016
    %v3021 = vshll.u32 %v3018, 16
    %v3022 = vshrl.u32 %v3018, 16
    %v3023 = vshll.u32 %v3019, 16
    %v3024 = vshrl.u32 %v3019, 16
    %vm3025 = vc.u32 %v3017, %v3021
    %v3026 = vsel %vm3025, 1, 0
    %v3027 = vadd.s32 %v3017, %v3021
    %v3028 = vadd.s32 %v3020, %v3026
    %vm3029 = vc.u32 %v3027, %v3023
    %v3030 = vsel %vm3029, 1, 0
    %v3031 = vadd.s32 %v3027, %v3023
    %v3032 = vadd.s32 %v3028, %v3030
    %v3033 = vadd.s32 %v3032, %v3022
    %v3034 = vadd.s32 %v3033, %v3024
    %v3035 = vmul.u32 %v2990, %v2981
    %v3036 = vadd.s32 %v3012, %v3031
    %vm3037 = vc.u32 %v3012, %v3031
    %v3038 = vadd.s32 %v3034, 1
    %v3039 = vsel %vm3037, %v3038, %v3034
    %v3040 = vadd.s32 %v3035, %v3039
    %v3041 = vadd.s32 %v3040, 536870912
    %v3042 = vshrl.u32 %v3041, 30
    %v3043 = vshll.u32 %v3042, 30
    %v3044 = vsub.s32 %v3040, %v3043
    %vm3045 = vcmp.lt.s32.totalorder %v3044, 0
    %v3046 = vsub.s32 0, %v3044
    %v3047 = vsel %vm3045, %v3046, %v3044
    %v3048 = vclz %v3047
    %v3049 = vsub.s32 %v3048, 2
    %vm3050 = vcmp.gt.s32.totalorder 0, %v3049
    %v3051 = vsel %vm3050, 0, %v3049
    %v3052 = vsub.s32 32, %v3051
    %v3053 = vshll.u32 %v3044, %v3051
    %v3054 = vshrl.u32 %v3036, %v3052
    %v3055 = vor.u32 %v3053, %v3054
    %v3056 = vsub.s32 4294967266, %v3051
    %v3057 = vadd.s32 %v3056, 127
    %v3058 = vshll.u32 %v3057, 23
    %v3059 = vor.u32 4788187, %v3058
    %v3060 = vand.u32 2147483647, %v3059
    %v3062 = vcvt.s32.f32 %v3055
    %v3063 = vmul.f32 %v3062, %v3060
    %v3064 = vxor.u32 %v3063, 2147483648
    %v3065 = vsel %vm2944, %v3064, %v3063
    %v3066 = vsub.s32 4, %v3042
    %v3067 = vsel %vm2944, %v3066, %v3042
    %v3068 = vsel %vm2943, %v2780, %v3065
    %v3069 = vsel %vm2943, 0, %v3067
    %v3070 = vmul.f32 %v3068, %v3068
    %v3071 = vmul.f32 %v3070, -0.001358992
    %v3072 = vadd.f32 %v3071, 0.041655596
    %v3073 = vmul.f32 %v3070, %v3072
    %v3074 = vadd.f32 %v3073, -0.4999988
    %v3075 = vmul.f32 %v3070, %v3074
    %v3076 = vadd.f32 1.0, %v3075
    %v3077 = vmul.f32 %v3068, %v3068
    %v3078 = vmul.f32 %v3077, -0.00019511016
    %v3079 = vadd.f32 %v3078, 0.008332121
    %v3080 = vmul.f32 %v3077, %v3079
    %v3081 = vadd.f32 %v3080, -0.16666654
    %v3082 = vmul.f32 %v3077, %v3081
    %v3083 = vadd.f32 %v3082, 1.0
    %v3084 = vmul.f32 %v3083, %v3068
    %vm3085 = vweird.f32 %v2780
    %v3086 = vadd.s32 %v3069, 3
    %v3087 = vand.u32 %v3086, 3
    %vm3088 = vcmp.lt.s32.totalorder %v3087, 2
    %vm3089 = vcmp.eq.s32.totalorder %v3087, 0
    %v3090 = vxor.u32 %v3084, 2147483648
    %v3091 = vsel %vm3089, %v3076, %v3090
    %vm3092 = vcmp.eq.s32.totalorder %v3087, 2
    %v3093 = vxor.u32 %v3076, 2147483648
    %v3094 = vsel %vm3092, %v3093, %v3084
    %v3095 = vsel %vm3088, %v3091, %v3094
    %v3096 = vsel %vm3085, nan, %v3095
    %v3097 = vand.u32 2147483647, %v2781
    %vm3098 = vcmp.le.f32.partialorder %v3097, 0.7853982
    %vm3099 = vcmp.lt.s32.totalorder %v2781, 0
    %v3100 = vand.u32 %v2781, 2139095040
    %v3101 = vshrl.u32 %v3100, 23
    %v3102 = vsub.s32 %v3101, 127
    %v3103 = vand.u32 2147483647, %v2781
    %v3104 = vand.u32 %v3103, 8388607
    %v3105 = vor.u32 %v3104, 8388608
    %v3106 = vsub.s32 0, %v3105
    %v3107 = vadd.s32 %v3102, 1
    %vm3108 = vcmp.gt.s32.totalorder %v3107, 0
    %v3109 = vsel %vm3108, %v3107, 0
    %v3110 = vshrl.u32 %v3109, 5
    %v3111 = vand.u32 %v3109, 31
    %v3112 = vsub.s32 32, %v3111
    %v3113 = vshrl.u32 683565275, %v3112
    %v3114 = vshll.u32 683565275, %v3111
    %v3115 = vshrl.u32 2475754826, %v3112
    %v3116 = vor.u32 %v3114, %v3115
    %v3117 = vshll.u32 2475754826, %v3111
    %v3118 = vshrl.u32 2131351028, %v3112
    %v3119 = vor.u32 %v3117, %v3118
    %v3120 = vshll.u32 2131351028, %v3111
    %v3121 = vshrl.u32 2102212464, %v3112
    %v3122 = vor.u32 %v3120, %v3121
    %v3123 = vshll.u32 2102212464, %v3111
    %v3124 = vshrl.u32 920167782, %v3112
    %v3125 = vor.u32 %v3123, %v3124
    %v3126 = vshll.u32 920167782, %v3111
    %v3127 = vshrl.u32 1326507024, %v3112
    %v3128 = vor.u32 %v3126, %v3127
    %vm3129 = vcmp.lt.s32.totalorder %v3110, 1
    %vm3130 = vcmp.lt.s32.totalorder %v3110, 2
    %vm3131 = vcmp.lt.s32.totalorder %v3110, 3
    %vm3132 = vcmp.lt.s32.totalorder %v3110, 4
    %v3133 = vsel %vm3129, %v3113, %v3116
    %v3134 = vsel %vm3132, %v3122, 2102212464
    %v3135 = vsel %vm3131, %v3119, %v3134
    %v3136 = vsel %vm3130, %v3133, %v3135
    %v3137 = vsel %vm3129, %v3116, %v3119
    %v3138 = vsel %vm3132, %v3125, 920167782
    %v3139 = vsel %vm3131, %v3122, %v3138
    %v3140 = vsel %vm3130, %v3137, %v3139
    %v3141 = vsel %vm3129, %v3119, %v3122
    %v3142 = vsel %vm3132, %v3128, 1326507024
    %v3143 = vsel %vm3131, %v3125, %v3142
    %v3144 = vsel %vm3130, %v3141, %v3143
    %v3145 = vshll.u32 %v3105, 8
    %v3146 = vand.u32 %v3145, 65535
    %v3147 = vshrl.u32 %v3145, 16
    %v3148 = vand.u32 %v3144, 65535
    %v3149 = vshrl.u32 %v3144, 16
    %v3150 = vmul.u32 %v3146, %v3148
    %v3151 = vmul.u32 %v3146, %v3149
    %v3152 = vmul.u32 %v3147, %v3148
    %v3153 = vmul.u32 %v3147, %v3149
    %v3154 = vshll.u32 %v3151, 16
    %v3155 = vshrl.u32 %v3151, 16
    %v3156 = vshll.u32 %v3152, 16
    %v3157 = vshrl.u32 %v3152, 16
    %vm3158 = vc.u32 %v3150, %v3154
    %v3159 = vsel %vm3158, 1, 0
    %v3160 = vadd.s32 %v3150, %v3154
    %v3161 = vadd.s32 %v3153, %v3159
    %vm3162 = vc.u32 %v3160, %v3156
    %v3163 = vsel %vm3162, 1, 0
    %v3164 = vadd.s32 %v3160, %v3156
    %v3165 = vadd.s32 %v3161, %v3163
    %v3166 = vadd.s32 %v3165, %v3155
    %v3167 = vadd.s32 %v3166, %v3157
    %v3168 = vand.u32 %v3145, 65535
    %v3169 = vshrl.u32 %v3145, 16
    %v3170 = vand.u32 %v3140, 65535
    %v3171 = vshrl.u32 %v3140, 16
    %v3172 = vmul.u32 %v3168, %v3170
    %v3173 = vmul.u32 %v3168, %v3171
    %v3174 = vmul.u32 %v3169, %v3170
    %v3175 = vmul.u32 %v3169, %v3171
    %v3176 = vshll.u32 %v3173, 16
    %v3177 = vshrl.u32 %v3173, 16
    %v3178 = vshll.u32 %v3174, 16
    %v3179 = vshrl.u32 %v3174, 16
    %vm3180 = vc.u32 %v3172, %v3176
    %v3181 = vsel %vm3180, 1, 0
    %v3182 = vadd.s32 %v3172, %v3176
    %v3183 = vadd.s32 %v3175, %v3181
    %vm3184 = vc.u32 %v3182, %v3178
    %v3185 = vsel %vm3184, 1, 0
    %v3186 = vadd.s32 %v3182, %v3178
    %v3187 = vadd.s32 %v3183, %v3185
    %v3188 = vadd.s32 %v3187, %v3177
    %v3189 = vadd.s32 %v3188, %v3179
    %v3190 = vmul.u32 %v3145, %v3136
    %v3191 = vadd.s32 %v3167, %v3186
    %vm3192 = vc.u32 %v3167, %v3186
    %v3193 = vadd.s32 %v3189, 1
    %v3194 = vsel %vm3192, %v3193, %v3189
    %v3195 = vadd.s32 %v3190, %v3194
    %v3196 = vadd.s32 %v3195, 536870912
    %v3197 = vshrl.u32 %v3196, 30
    %v3198 = vshll.u32 %v3197, 30
    %v3199 = vsub.s32 %v3195, %v3198
    %vm3200 = vcmp.lt.s32.totalorder %v3199, 0
    %v3201 = vsub.s32 0, %v3199
    %v3202 = vsel %vm3200, %v3201, %v3199
    %v3203 = vclz %v3202
    %v3204 = vsub.s32 %v3203, 2
    %vm3205 = vcmp.gt.s32.totalorder 0, %v3204
    %v3206 = vsel %vm3205, 0, %v3204
    %v3207 = vsub.s32 32, %v3206
    %v3208 = vshll.u32 %v3199, %v3206
    %v3209 = vshrl.u32 %v3191, %v3207
    %v3210 = vor.u32 %v3208, %v3209
    %v3211 = vsub.s32 4294967266, %v3206
    %v3212 = vadd.s32 %v3211, 127
    %v3213 = vshll.u32 %v3212, 23
    %v3214 = vor.u32 4788187, %v3213
    %v3215 = vand.u32 2147483647, %v3214
    %v3217 = vcvt.s32.f32 %v3210
    %v3218 = vmul.f32 %v3217, %v3215
    %v3219 = vxor.u32 %v3218, 2147483648
    %v3220 = vsel %vm3099, %v3219, %v3218
    %v3221 = vsub.s32 4, %v3197
    %v3222 = vsel %vm3099, %v3221, %v3197
    %v3223 = vsel %vm3098, %v2781, %v3220
    %v3224 = vsel %vm3098, 0, %v3222
    %v3225 = vmul.f32 %v3223, %v3223
    %v3226 = vmul.f32 %v3225, -0.001358992
    %v3227 = vadd.f32 %v3226, 0.041655596
    %v3228 = vmul.f32 %v3225, %v3227
    %v3229 = vadd.f32 %v3228, -0.4999988
    %v3230 = vmul.f32 %v3225, %v3229
    %v3231 = vadd.f32 1.0, %v3230
    %v3232 = vmul.f32 %v3223, %v3223
    %v3233 = vmul.f32 %v3232, -0.00019511016
    %v3234 = vadd.f32 %v3233, 0.008332121
    %v3235 = vmul.f32 %v3232, %v3234
    %v3236 = vadd.f32 %v3235, -0.16666654
    %v3237 = vmul.f32 %v3232, %v3236
    %v3238 = vadd.f32 %v3237, 1.0
    %v3239 = vmul.f32 %v3238, %v3223
    %vm3240 = vweird.f32 %v2781
    %v3241 = vadd.s32 %v3224, 3
    %v3242 = vand.u32 %v3241, 3
    %vm3243 = vcmp.lt.s32.totalorder %v3242, 2
    %vm3244 = vcmp.eq.s32.totalorder %v3242, 0
    %v3245 = vxor.u32 %v3239, 2147483648
    %v3246 = vsel %vm3244, %v3231, %v3245
    %vm3247 = vcmp.eq.s32.totalorder %v3242, 2
    %v3248 = vxor.u32 %v3231, 2147483648
    %v3249 = vsel %vm3247, %v3248, %v3239
    %v3250 = vsel %vm3243, %v3246, %v3249
    %v3251 = vsel %vm3240, nan, %v3250
    %v3252 = vand.u32 2147483647, %v2782
    %vm3253 = vcmp.le.f32.partialorder %v3252, 0.7853982
    %vm3254 = vcmp.lt.s32.totalorder %v2782, 0
    %v3255 = vand.u32 %v2782, 2139095040
    %v3256 = vshrl.u32 %v3255, 23
    %v3257 = vsub.s32 %v3256, 127
    %v3258 = vand.u32 2147483647, %v2782
    %v3259 = vand.u32 %v3258, 8388607
    %v3260 = vor.u32 %v3259, 8388608
    %v3261 = vsub.s32 0, %v3260
    %v3262 = vadd.s32 %v3257, 1
    %vm3263 = vcmp.gt.s32.totalorder %v3262, 0
    %v3264 = vsel %vm3263, %v3262, 0
    %v3265 = vshrl.u32 %v3264, 5
    %v3266 = vand.u32 %v3264, 31
    %v3267 = vsub.s32 32, %v3266
    %v3268 = vshrl.u32 683565275, %v3267
    %v3269 = vshll.u32 683565275, %v3266
    %v3270 = vshrl.u32 2475754826, %v3267
    %v3271 = vor.u32 %v3269, %v3270
    %v3272 = vshll.u32 2475754826, %v3266
    %v3273 = vshrl.u32 2131351028, %v3267
    %v3274 = vor.u32 %v3272, %v3273
    %v3275 = vshll.u32 2131351028, %v3266
    %v3276 = vshrl.u32 2102212464, %v3267
    %v3277 = vor.u32 %v3275, %v3276
    %v3278 = vshll.u32 2102212464, %v3266
    %v3279 = vshrl.u32 920167782, %v3267
    %v3280 = vor.u32 %v3278, %v3279
    %v3281 = vshll.u32 920167782, %v3266
    %v3282 = vshrl.u32 1326507024, %v3267
    %v3283 = vor.u32 %v3281, %v3282
    %vm3284 = vcmp.lt.s32.totalorder %v3265, 1
    %vm3285 = vcmp.lt.s32.totalorder %v3265, 2
    %vm3286 = vcmp.lt.s32.totalorder %v3265, 3
    %vm3287 = vcmp.lt.s32.totalorder %v3265, 4
    %v3288 = vsel %vm3284, %v3268, %v3271
    %v3289 = vsel %vm3287, %v3277, 2102212464
    %v3290 = vsel %vm3286, %v3274, %v3289
    %v3291 = vsel %vm3285, %v3288, %v3290
    %v3292 = vsel %vm3284, %v3271, %v3274
    %v3293 = vsel %vm3287, %v3280, 920167782
    %v3294 = vsel %vm3286, %v3277, %v3293
    %v3295 = vsel %vm3285, %v3292, %v3294
    %v3296 = vsel %vm3284, %v3274, %v3277
    %v3297 = vsel %vm3287, %v3283, 1326507024
    %v3298 = vsel %vm3286, %v3280, %v3297
    %v3299 = vsel %vm3285, %v3296, %v3298
    %v3300 = vshll.u32 %v3260, 8
    %v3301 = vand.u32 %v3300, 65535
    %v3302 = vshrl.u32 %v3300, 16
    %v3303 = vand.u32 %v3299, 65535
    %v3304 = vshrl.u32 %v3299, 16
    %v3305 = vmul.u32 %v3301, %v3303
    %v3306 = vmul.u32 %v3301, %v3304
    %v3307 = vmul.u32 %v3302, %v3303
    %v3308 = vmul.u32 %v3302, %v3304
    %v3309 = vshll.u32 %v3306, 16
    %v3310 = vshrl.u32 %v3306, 16
    %v3311 = vshll.u32 %v3307, 16
    %v3312 = vshrl.u32 %v3307, 16
    %vm3313 = vc.u32 %v3305, %v3309
    %v3314 = vsel %vm3313, 1, 0
    %v3315 = vadd.s32 %v3305, %v3309
    %v3316 = vadd.s32 %v3308, %v3314
    %vm3317 = vc.u32 %v3315, %v3311
    %v3318 = vsel %vm3317, 1, 0
    %v3319 = vadd.s32 %v3315, %v3311
    %v3320 = vadd.s32 %v3316, %v3318
    %v3321 = vadd.s32 %v3320, %v3310
    %v3322 = vadd.s32 %v3321, %v3312
    %v3323 = vand.u32 %v3300, 65535
    %v3324 = vshrl.u32 %v3300, 16
    %v3325 = vand.u32 %v3295, 65535
    %v3326 = vshrl.u32 %v3295, 16
    %v3327 = vmul.u32 %v3323, %v3325
    %v3328 = vmul.u32 %v3323, %v3326
    %v3329 = vmul.u32 %v3324, %v3325
    %v3330 = vmul.u32 %v3324, %v3326
    %v3331 = vshll.u32 %v3328, 16
    %v3332 = vshrl.u32 %v3328, 16
    %v3333 = vshll.u32 %v3329, 16
    %v3334 = vshrl.u32 %v3329, 16
    %vm3335 = vc.u32 %v3327, %v3331
    %v3336 = vsel %vm3335, 1, 0
    %v3337 = vadd.s32 %v3327, %v3331
    %v3338 = vadd.s32 %v3330, %v3336
    %vm3339 = vc.u32 %v3337, %v3333
    %v3340 = vsel %vm3339, 1, 0
    %v3341 = vadd.s32 %v3337, %v3333
    %v3342 = vadd.s32 %v3338, %v3340
    %v3343 = vadd.s32 %v3342, %v3332
    %v3344 = vadd.s32 %v3343, %v3334
    %v3345 = vmul.u32 %v3300, %v3291
    %v3346 = vadd.s32 %v3322, %v3341
    %vm3347 = vc.u32 %v3322, %v3341
    %v3348 = vadd.s32 %v3344, 1
    %v3349 = vsel %vm3347, %v3348, %v3344
    %v3350 = vadd.s32 %v3345, %v3349
    %v3351 = vadd.s32 %v3350, 536870912
    %v3352 = vshrl.u32 %v3351, 30
    %v3353 = vshll.u32 %v3352, 30
    %v3354 = vsub.s32 %v3350, %v3353
    %vm3355 = vcmp.lt.s32.totalorder %v3354, 0
    %v3356 = vsub.s32 0, %v3354
    %v3357 = vsel %vm3355, %v3356, %v3354
    %v3358 = vclz %v3357
    %v3359 = vsub.s32 %v3358, 2
    %vm3360 = vcmp.gt.s32.totalorder 0, %v3359
    %v3361 = vsel %vm3360, 0, %v3359
    %v3362 = vsub.s32 32, %v3361
    %v3363 = vshll.u32 %v3354, %v3361
    %v3364 = vshrl.u32 %v3346, %v3362
    %v3365 = vor.u32 %v3363, %v3364
    %v3366 = vsub.s32 4294967266, %v3361
    %v3367 = vadd.s32 %v3366, 127
    %v3368 = vshll.u32 %v3367, 23
    %v3369 = vor.u32 4788187, %v3368
    %v3370 = vand.u32 2147483647, %v3369
    %v3372 = vcvt.s32.f32 %v3365
    %v3373 = vmul.f32 %v3372, %v3370
    %v3374 = vxor.u32 %v3373, 2147483648
    %v3375 = vsel %vm3254, %v3374, %v3373
    %v3376 = vsub.s32 4, %v3352
    %v3377 = vsel %vm3254, %v3376, %v3352
    %v3378 = vsel %vm3253, %v2782, %v3375
    %v3379 = vsel %vm3253, 0, %v3377
    %v3380 = vmul.f32 %v3378, %v3378
    %v3381 = vmul.f32 %v3380, -0.001358992
    %v3382 = vadd.f32 %v3381, 0.041655596
    %v3383 = vmul.f32 %v3380, %v3382
    %v3384 = vadd.f32 %v3383, -0.4999988
    %v3385 = vmul.f32 %v3380, %v3384
    %v3386 = vadd.f32 1.0, %v3385
    %v3387 = vmul.f32 %v3378, %v3378
    %v3388 = vmul.f32 %v3387, -0.00019511016
    %v3389 = vadd.f32 %v3388, 0.008332121
    %v3390 = vmul.f32 %v3387, %v3389
    %v3391 = vadd.f32 %v3390, -0.16666654
    %v3392 = vmul.f32 %v3387, %v3391
    %v3393 = vadd.f32 %v3392, 1.0
    %v3394 = vmul.f32 %v3393, %v3378
    %vm3395 = vweird.f32 %v2782
    %v3396 = vadd.s32 %v3379, 3
    %v3397 = vand.u32 %v3396, 3
    %vm3398 = vcmp.lt.s32.totalorder %v3397, 2
    %vm3399 = vcmp.eq.s32.totalorder %v3397, 0
    %v3400 = vxor.u32 %v3394, 2147483648
    %v3401 = vsel %vm3399, %v3386, %v3400
    %vm3402 = vcmp.eq.s32.totalorder %v3397, 2
    %v3403 = vxor.u32 %v3386, 2147483648
    %v3404 = vsel %vm3402, %v3403, %v3394
    %v3405 = vsel %vm3398, %v3401, %v3404
    %v3406 = vsel %vm3395, nan, %v3405
    %v3407 = vand.u32 2147483647, %v2783
    %vm3408 = vcmp.le.f32.partialorder %v3407, 0.7853982
    %vm3409 = vcmp.lt.s32.totalorder %v2783, 0
    %v3410 = vand.u32 %v2783, 2139095040
    %v3411 = vshrl.u32 %v3410, 23
    %v3412 = vsub.s32 %v3411, 127
    %v3413 = vand.u32 2147483647, %v2783
    %v3414 = vand.u32 %v3413, 8388607
    %v3415 = vor.u32 %v3414, 8388608
    %v3416 = vsub.s32 0, %v3415
    %v3417 = vadd.s32 %v3412, 1
    %vm3418 = vcmp.gt.s32.totalorder %v3417, 0
    %v3419 = vsel %vm3418, %v3417, 0
    %v3420 = vshrl.u32 %v3419, 5
    %v3421 = vand.u32 %v3419, 31
    %v3422 = vsub.s32 32, %v3421
    %v3423 = vshrl.u32 683565275, %v3422
    %v3424 = vshll.u32 683565275, %v3421
    %v3425 = vshrl.u32 2475754826, %v3422
    %v3426 = vor.u32 %v3424, %v3425
    %v3427 = vshll.u32 2475754826, %v3421
    %v3428 = vshrl.u32 2131351028, %v3422
    %v3429 = vor.u32 %v3427, %v3428
    %v3430 = vshll.u32 2131351028, %v3421
    %v3431 = vshrl.u32 2102212464, %v3422
    %v3432 = vor.u32 %v3430, %v3431
    %v3433 = vshll.u32 2102212464, %v3421
    %v3434 = vshrl.u32 920167782, %v3422
    %v3435 = vor.u32 %v3433, %v3434
    %v3436 = vshll.u32 920167782, %v3421
    %v3437 = vshrl.u32 1326507024, %v3422
    %v3438 = vor.u32 %v3436, %v3437
    %vm3439 = vcmp.lt.s32.totalorder %v3420, 1
    %vm3440 = vcmp.lt.s32.totalorder %v3420, 2
    %vm3441 = vcmp.lt.s32.totalorder %v3420, 3
    %vm3442 = vcmp.lt.s32.totalorder %v3420, 4
    %v3443 = vsel %vm3439, %v3423, %v3426
    %v3444 = vsel %vm3442, %v3432, 2102212464
    %v3445 = vsel %vm3441, %v3429, %v3444
    %v3446 = vsel %vm3440, %v3443, %v3445
    %v3447 = vsel %vm3439, %v3426, %v3429
    %v3448 = vsel %vm3442, %v3435, 920167782
    %v3449 = vsel %vm3441, %v3432, %v3448
    %v3450 = vsel %vm3440, %v3447, %v3449
    %v3451 = vsel %vm3439, %v3429, %v3432
    %v3452 = vsel %vm3442, %v3438, 1326507024
    %v3453 = vsel %vm3441, %v3435, %v3452
    %v3454 = vsel %vm3440, %v3451, %v3453
    %v3455 = vshll.u32 %v3415, 8
    %v3456 = vand.u32 %v3455, 65535
    %v3457 = vshrl.u32 %v3455, 16
    %v3458 = vand.u32 %v3454, 65535
    %v3459 = vshrl.u32 %v3454, 16
    %v3460 = vmul.u32 %v3456, %v3458
    %v3461 = vmul.u32 %v3456, %v3459
    %v3462 = vmul.u32 %v3457, %v3458
    %v3463 = vmul.u32 %v3457, %v3459
    %v3464 = vshll.u32 %v3461, 16
    %v3465 = vshrl.u32 %v3461, 16
    %v3466 = vshll.u32 %v3462, 16
    %v3467 = vshrl.u32 %v3462, 16
    %vm3468 = vc.u32 %v3460, %v3464
    %v3469 = vsel %vm3468, 1, 0
    %v3470 = vadd.s32 %v3460, %v3464
    %v3471 = vadd.s32 %v3463, %v3469
    %vm3472 = vc.u32 %v3470, %v3466
    %v3473 = vsel %vm3472, 1, 0
    %v3474 = vadd.s32 %v3470, %v3466
    %v3475 = vadd.s32 %v3471, %v3473
    %v3476 = vadd.s32 %v3475, %v3465
    %v3477 = vadd.s32 %v3476, %v3467
    %v3478 = vand.u32 %v3455, 65535
    %v3479 = vshrl.u32 %v3455, 16
    %v3480 = vand.u32 %v3450, 65535
    %v3481 = vshrl.u32 %v3450, 16
    %v3482 = vmul.u32 %v3478, %v3480
    %v3483 = vmul.u32 %v3478, %v3481
    %v3484 = vmul.u32 %v3479, %v3480
    %v3485 = vmul.u32 %v3479, %v3481
    %v3486 = vshll.u32 %v3483, 16
    %v3487 = vshrl.u32 %v3483, 16
    %v3488 = vshll.u32 %v3484, 16
    %v3489 = vshrl.u32 %v3484, 16
    %vm3490 = vc.u32 %v3482, %v3486
    %v3491 = vsel %vm3490, 1, 0
    %v3492 = vadd.s32 %v3482, %v3486
    %v3493 = vadd.s32 %v3485, %v3491
    %vm3494 = vc.u32 %v3492, %v3488
    %v3495 = vsel %vm3494, 1, 0
    %v3496 = vadd.s32 %v3492, %v3488
    %v3497 = vadd.s32 %v3493, %v3495
    %v3498 = vadd.s32 %v3497, %v3487
    %v3499 = vadd.s32 %v3498, %v3489
    %v3500 = vmul.u32 %v3455, %v3446
    %v3501 = vadd.s32 %v3477, %v3496
    %vm3502 = vc.u32 %v3477, %v3496
    %v3503 = vadd.s32 %v3499, 1
    %v3504 = vsel %vm3502, %v3503, %v3499
    %v3505 = vadd.s32 %v3500, %v3504
    %v3506 = vadd.s32 %v3505, 536870912
    %v3507 = vshrl.u32 %v3506, 30
    %v3508 = vshll.u32 %v3507, 30
    %v3509 = vsub.s32 %v3505, %v3508
    %vm3510 = vcmp.lt.s32.totalorder %v3509, 0
    %v3511 = vsub.s32 0, %v3509
    %v3512 = vsel %vm3510, %v3511, %v3509
    %v3513 = vclz %v3512
    %v3514 = vsub.s32 %v3513, 2
    %vm3515 = vcmp.gt.s32.totalorder 0, %v3514
    %v3516 = vsel %vm3515, 0, %v3514
    %v3517 = vsub.s32 32, %v3516
    %v3518 = vshll.u32 %v3509, %v3516
    %v3519 = vshrl.u32 %v3501, %v3517
    %v3520 = vor.u32 %v3518, %v3519
    %v3521 = vsub.s32 4294967266, %v3516
    %v3522 = vadd.s32 %v3521, 127
    %v3523 = vshll.u32 %v3522, 23
    %v3524 = vor.u32 4788187, %v3523
    %v3525 = vand.u32 2147483647, %v3524
    %v3527 = vcvt.s32.f32 %v3520
    %v3528 = vmul.f32 %v3527, %v3525
    %v3529 = vxor.u32 %v3528, 2147483648
    %v3530 = vsel %vm3409, %v3529, %v3528
    %v3531 = vsub.s32 4, %v3507
    %v3532 = vsel %vm3409, %v3531, %v3507
    %v3533 = vsel %vm3408, %v2783, %v3530
    %v3534 = vsel %vm3408, 0, %v3532
    %v3535 = vmul.f32 %v3533, %v3533
    %v3536 = vmul.f32 %v3535, -0.001358992
    %v3537 = vadd.f32 %v3536, 0.041655596
    %v3538 = vmul.f32 %v3535, %v3537
    %v3539 = vadd.f32 %v3538, -0.4999988
    %v3540 = vmul.f32 %v3535, %v3539
    %v3541 = vadd.f32 1.0, %v3540
    %v3542 = vmul.f32 %v3533, %v3533
    %v3543 = vmul.f32 %v3542, -0.00019511016
    %v3544 = vadd.f32 %v3543, 0.008332121
    %v3545 = vmul.f32 %v3542, %v3544
    %v3546 = vadd.f32 %v3545, -0.16666654
    %v3547 = vmul.f32 %v3542, %v3546
    %v3548 = vadd.f32 %v3547, 1.0
    %v3549 = vmul.f32 %v3548, %v3533
    %vm3550 = vweird.f32 %v2783
    %v3551 = vadd.s32 %v3534, 3
    %v3552 = vand.u32 %v3551, 3
    %vm3553 = vcmp.lt.s32.totalorder %v3552, 2
    %vm3554 = vcmp.eq.s32.totalorder %v3552, 0
    %v3555 = vxor.u32 %v3549, 2147483648
    %v3556 = vsel %vm3554, %v3541, %v3555
    %vm3557 = vcmp.eq.s32.totalorder %v3552, 2
    %v3558 = vxor.u32 %v3541, 2147483648
    %v3559 = vsel %vm3557, %v3558, %v3549
    %v3560 = vsel %vm3553, %v3556, %v3559
    %v3561 = vsel %vm3550, nan, %v3560
    %v3562 = vand.u32 2147483647, %v2784
    %vm3563 = vcmp.le.f32.partialorder %v3562, 0.7853982
    %vm3564 = vcmp.lt.s32.totalorder %v2784, 0
    %v3565 = vand.u32 %v2784, 2139095040
    %v3566 = vshrl.u32 %v3565, 23
    %v3567 = vsub.s32 %v3566, 127
    %v3568 = vand.u32 2147483647, %v2784
    %v3569 = vand.u32 %v3568, 8388607
    %v3570 = vor.u32 %v3569, 8388608
    %v3571 = vsub.s32 0, %v3570
    %v3572 = vadd.s32 %v3567, 1
    %vm3573 = vcmp.gt.s32.totalorder %v3572, 0
    %v3574 = vsel %vm3573, %v3572, 0
    %v3575 = vshrl.u32 %v3574, 5
    %v3576 = vand.u32 %v3574, 31
    %v3577 = vsub.s32 32, %v3576
    %v3578 = vshrl.u32 683565275, %v3577
    %v3579 = vshll.u32 683565275, %v3576
    %v3580 = vshrl.u32 2475754826, %v3577
    %v3581 = vor.u32 %v3579, %v3580
    %v3582 = vshll.u32 2475754826, %v3576
    %v3583 = vshrl.u32 2131351028, %v3577
    %v3584 = vor.u32 %v3582, %v3583
    %v3585 = vshll.u32 2131351028, %v3576
    %v3586 = vshrl.u32 2102212464, %v3577
    %v3587 = vor.u32 %v3585, %v3586
    %v3588 = vshll.u32 2102212464, %v3576
    %v3589 = vshrl.u32 920167782, %v3577
    %v3590 = vor.u32 %v3588, %v3589
    %v3591 = vshll.u32 920167782, %v3576
    %v3592 = vshrl.u32 1326507024, %v3577
    %v3593 = vor.u32 %v3591, %v3592
    %vm3594 = vcmp.lt.s32.totalorder %v3575, 1
    %vm3595 = vcmp.lt.s32.totalorder %v3575, 2
    %vm3596 = vcmp.lt.s32.totalorder %v3575, 3
    %vm3597 = vcmp.lt.s32.totalorder %v3575, 4
    %v3598 = vsel %vm3594, %v3578, %v3581
    %v3599 = vsel %vm3597, %v3587, 2102212464
    %v3600 = vsel %vm3596, %v3584, %v3599
    %v3601 = vsel %vm3595, %v3598, %v3600
    %v3602 = vsel %vm3594, %v3581, %v3584
    %v3603 = vsel %vm3597, %v3590, 920167782
    %v3604 = vsel %vm3596, %v3587, %v3603
    %v3605 = vsel %vm3595, %v3602, %v3604
    %v3606 = vsel %vm3594, %v3584, %v3587
    %v3607 = vsel %vm3597, %v3593, 1326507024
    %v3608 = vsel %vm3596, %v3590, %v3607
    %v3609 = vsel %vm3595, %v3606, %v3608
    %v3610 = vshll.u32 %v3570, 8
    %v3611 = vand.u32 %v3610, 65535
    %v3612 = vshrl.u32 %v3610, 16
    %v3613 = vand.u32 %v3609, 65535
    %v3614 = vshrl.u32 %v3609, 16
    %v3615 = vmul.u32 %v3611, %v3613
    %v3616 = vmul.u32 %v3611, %v3614
    %v3617 = vmul.u32 %v3612, %v3613
    %v3618 = vmul.u32 %v3612, %v3614
    %v3619 = vshll.u32 %v3616, 16
    %v3620 = vshrl.u32 %v3616, 16
    %v3621 = vshll.u32 %v3617, 16
    %v3622 = vshrl.u32 %v3617, 16
    %vm3623 = vc.u32 %v3615, %v3619
    %v3624 = vsel %vm3623, 1, 0
    %v3625 = vadd.s32 %v3615, %v3619
    %v3626 = vadd.s32 %v3618, %v3624
    %vm3627 = vc.u32 %v3625, %v3621
    %v3628 = vsel %vm3627, 1, 0
    %v3629 = vadd.s32 %v3625, %v3621
    %v3630 = vadd.s32 %v3626, %v3628
    %v3631 = vadd.s32 %v3630, %v3620
    %v3632 = vadd.s32 %v3631, %v3622
    %v3633 = vand.u32 %v3610, 65535
    %v3634 = vshrl.u32 %v3610, 16
    %v3635 = vand.u32 %v3605, 65535
    %v3636 = vshrl.u32 %v3605, 16
    %v3637 = vmul.u32 %v3633, %v3635
    %v3638 = vmul.u32 %v3633, %v3636
    %v3639 = vmul.u32 %v3634, %v3635
    %v3640 = vmul.u32 %v3634, %v3636
    %v3641 = vshll.u32 %v3638, 16
    %v3642 = vshrl.u32 %v3638, 16
    %v3643 = vshll.u32 %v3639, 16
    %v3644 = vshrl.u32 %v3639, 16
    %vm3645 = vc.u32 %v3637, %v3641
    %v3646 = vsel %vm3645, 1, 0
    %v3647 = vadd.s32 %v3637, %v3641
    %v3648 = vadd.s32 %v3640, %v3646
    %vm3649 = vc.u32 %v3647, %v3643
    %v3650 = vsel %vm3649, 1, 0
    %v3651 = vadd.s32 %v3647, %v3643
    %v3652 = vadd.s32 %v3648, %v3650
    %v3653 = vadd.s32 %v3652, %v3642
    %v3654 = vadd.s32 %v3653, %v3644
    %v3655 = vmul.u32 %v3610, %v3601
    %v3656 = vadd.s32 %v3632, %v3651
    %vm3657 = vc.u32 %v3632, %v3651
    %v3658 = vadd.s32 %v3654, 1
    %v3659 = vsel %vm3657, %v3658, %v3654
    %v3660 = vadd.s32 %v3655, %v3659
    %v3661 = vadd.s32 %v3660, 536870912
    %v3662 = vshrl.u32 %v3661, 30
    %v3663 = vshll.u32 %v3662, 30
    %v3664 = vsub.s32 %v3660, %v3663
    %vm3665 = vcmp.lt.s32.totalorder %v3664, 0
    %v3666 = vsub.s32 0, %v3664
    %v3667 = vsel %vm3665, %v3666, %v3664
    %v3668 = vclz %v3667
    %v3669 = vsub.s32 %v3668, 2
    %vm3670 = vcmp.gt.s32.totalorder 0, %v3669
    %v3671 = vsel %vm3670, 0, %v3669
    %v3672 = vsub.s32 32, %v3671
    %v3673 = vshll.u32 %v3664, %v3671
    %v3674 = vshrl.u32 %v3656, %v3672
    %v3675 = vor.u32 %v3673, %v3674
    %v3676 = vsub.s32 4294967266, %v3671
    %v3677 = vadd.s32 %v3676, 127
    %v3678 = vshll.u32 %v3677, 23
    %v3679 = vor.u32 4788187, %v3678
    %v3680 = vand.u32 2147483647, %v3679
    %v3682 = vcvt.s32.f32 %v3675
    %v3683 = vmul.f32 %v3682, %v3680
    %v3684 = vxor.u32 %v3683, 2147483648
    %v3685 = vsel %vm3564, %v3684, %v3683
    %v3686 = vsub.s32 4, %v3662
    %v3687 = vsel %vm3564, %v3686, %v3662
    %v3688 = vsel %vm3563, %v2784, %v3685
    %v3689 = vsel %vm3563, 0, %v3687
    %v3690 = vmul.f32 %v3688, %v3688
    %v3691 = vmul.f32 %v3690, -0.001358992
    %v3692 = vadd.f32 %v3691, 0.041655596
    %v3693 = vmul.f32 %v3690, %v3692
    %v3694 = vadd.f32 %v3693, -0.4999988
    %v3695 = vmul.f32 %v3690, %v3694
    %v3696 = vadd.f32 1.0, %v3695
    %v3697 = vmul.f32 %v3688, %v3688
    %v3698 = vmul.f32 %v3697, -0.00019511016
    %v3699 = vadd.f32 %v3698, 0.008332121
    %v3700 = vmul.f32 %v3697, %v3699
    %v3701 = vadd.f32 %v3700, -0.16666654
    %v3702 = vmul.f32 %v3697, %v3701
    %v3703 = vadd.f32 %v3702, 1.0
    %v3704 = vmul.f32 %v3703, %v3688
    %vm3705 = vweird.f32 %v2784
    %v3706 = vadd.s32 %v3689, 3
    %v3707 = vand.u32 %v3706, 3
    %vm3708 = vcmp.lt.s32.totalorder %v3707, 2
    %vm3709 = vcmp.eq.s32.totalorder %v3707, 0
    %v3710 = vxor.u32 %v3704, 2147483648
    %v3711 = vsel %vm3709, %v3696, %v3710
    %vm3712 = vcmp.eq.s32.totalorder %v3707, 2
    %v3713 = vxor.u32 %v3696, 2147483648
    %v3714 = vsel %vm3712, %v3713, %v3704
    %v3715 = vsel %vm3708, %v3711, %v3714
    %v3716 = vsel %vm3705, nan, %v3715
    %v3717 = vand.u32 2147483647, %v2785
    %vm3718 = vcmp.le.f32.partialorder %v3717, 0.7853982
    %vm3719 = vcmp.lt.s32.totalorder %v2785, 0
    %v3720 = vand.u32 %v2785, 2139095040
    %v3721 = vshrl.u32 %v3720, 23
    %v3722 = vsub.s32 %v3721, 127
    %v3723 = vand.u32 2147483647, %v2785
    %v3724 = vand.u32 %v3723, 8388607
    %v3725 = vor.u32 %v3724, 8388608
    %v3726 = vsub.s32 0, %v3725
    %v3727 = vadd.s32 %v3722, 1
    %vm3728 = vcmp.gt.s32.totalorder %v3727, 0
    %v3729 = vsel %vm3728, %v3727, 0
    %v3730 = vshrl.u32 %v3729, 5
    %v3731 = vand.u32 %v3729, 31
    %v3732 = vsub.s32 32, %v3731
    %v3733 = vshrl.u32 683565275, %v3732
    %v3734 = vshll.u32 683565275, %v3731
    %v3735 = vshrl.u32 2475754826, %v3732
    %v3736 = vor.u32 %v3734, %v3735
    %v3737 = vshll.u32 2475754826, %v3731
    %v3738 = vshrl.u32 2131351028, %v3732
    %v3739 = vor.u32 %v3737, %v3738
    %v3740 = vshll.u32 2131351028, %v3731
    %v3741 = vshrl.u32 2102212464, %v3732
    %v3742 = vor.u32 %v3740, %v3741
    %v3743 = vshll.u32 2102212464, %v3731
    %v3744 = vshrl.u32 920167782, %v3732
    %v3745 = vor.u32 %v3743, %v3744
    %v3746 = vshll.u32 920167782, %v3731
    %v3747 = vshrl.u32 1326507024, %v3732
    %v3748 = vor.u32 %v3746, %v3747
    %vm3749 = vcmp.lt.s32.totalorder %v3730, 1
    %vm3750 = vcmp.lt.s32.totalorder %v3730, 2
    %vm3751 = vcmp.lt.s32.totalorder %v3730, 3
    %vm3752 = vcmp.lt.s32.totalorder %v3730, 4
    %v3753 = vsel %vm3749, %v3733, %v3736
    %v3754 = vsel %vm3752, %v3742, 2102212464
    %v3755 = vsel %vm3751, %v3739, %v3754
    %v3756 = vsel %vm3750, %v3753, %v3755
    %v3757 = vsel %vm3749, %v3736, %v3739
    %v3758 = vsel %vm3752, %v3745, 920167782
    %v3759 = vsel %vm3751, %v3742, %v3758
    %v3760 = vsel %vm3750, %v3757, %v3759
    %v3761 = vsel %vm3749, %v3739, %v3742
    %v3762 = vsel %vm3752, %v3748, 1326507024
    %v3763 = vsel %vm3751, %v3745, %v3762
    %v3764 = vsel %vm3750, %v3761, %v3763
    %v3765 = vshll.u32 %v3725, 8
    %v3766 = vand.u32 %v3765, 65535
    %v3767 = vshrl.u32 %v3765, 16
    %v3768 = vand.u32 %v3764, 65535
    %v3769 = vshrl.u32 %v3764, 16
    %v3770 = vmul.u32 %v3766, %v3768
    %v3771 = vmul.u32 %v3766, %v3769
    %v3772 = vmul.u32 %v3767, %v3768
    %v3773 = vmul.u32 %v3767, %v3769
    %v3774 = vshll.u32 %v3771, 16
    %v3775 = vshrl.u32 %v3771, 16
    %v3776 = vshll.u32 %v3772, 16
    %v3777 = vshrl.u32 %v3772, 16
    %vm3778 = vc.u32 %v3770, %v3774
    %v3779 = vsel %vm3778, 1, 0
    %v3780 = vadd.s32 %v3770, %v3774
    %v3781 = vadd.s32 %v3773, %v3779
    %vm3782 = vc.u32 %v3780, %v3776
    %v3783 = vsel %vm3782, 1, 0
    %v3784 = vadd.s32 %v3780, %v3776
    %v3785 = vadd.s32 %v3781, %v3783
    %v3786 = vadd.s32 %v3785, %v3775
    %v3787 = vadd.s32 %v3786, %v3777
    %v3788 = vand.u32 %v3765, 65535
    %v3789 = vshrl.u32 %v3765, 16
    %v3790 = vand.u32 %v3760, 65535
    %v3791 = vshrl.u32 %v3760, 16
    %v3792 = vmul.u32 %v3788, %v3790
    %v3793 = vmul.u32 %v3788, %v3791
    %v3794 = vmul.u32 %v3789, %v3790
    %v3795 = vmul.u32 %v3789, %v3791
    %v3796 = vshll.u32 %v3793, 16
    %v3797 = vshrl.u32 %v3793, 16
    %v3798 = vshll.u32 %v3794, 16
    %v3799 = vshrl.u32 %v3794, 16
    %vm3800 = vc.u32 %v3792, %v3796
    %v3801 = vsel %vm3800, 1, 0
    %v3802 = vadd.s32 %v3792, %v3796
    %v3803 = vadd.s32 %v3795, %v3801
    %vm3804 = vc.u32 %v3802, %v3798
    %v3805 = vsel %vm3804, 1, 0
    %v3806 = vadd.s32 %v3802, %v3798
    %v3807 = vadd.s32 %v3803, %v3805
    %v3808 = vadd.s32 %v3807, %v3797
    %v3809 = vadd.s32 %v3808, %v3799
    %v3810 = vmul.u32 %v3765, %v3756
    %v3811 = vadd.s32 %v3787, %v3806
    %vm3812 = vc.u32 %v3787, %v3806
    %v3813 = vadd.s32 %v3809, 1
    %v3814 = vsel %vm3812, %v3813, %v3809
    %v3815 = vadd.s32 %v3810, %v3814
    %v3816 = vadd.s32 %v3815, 536870912
    %v3817 = vshrl.u32 %v3816, 30
    %v3818 = vshll.u32 %v3817, 30
    %v3819 = vsub.s32 %v3815, %v3818
    %vm3820 = vcmp.lt.s32.totalorder %v3819, 0
    %v3821 = vsub.s32 0, %v3819
    %v3822 = vsel %vm3820, %v3821, %v3819
    %v3823 = vclz %v3822
    %v3824 = vsub.s32 %v3823, 2
    %vm3825 = vcmp.gt.s32.totalorder 0, %v3824
    %v3826 = vsel %vm3825, 0, %v3824
    %v3827 = vsub.s32 32, %v3826
    %v3828 = vshll.u32 %v3819, %v3826
    %v3829 = vshrl.u32 %v3811, %v3827
    %v3830 = vor.u32 %v3828, %v3829
    %v3831 = vsub.s32 4294967266, %v3826
    %v3832 = vadd.s32 %v3831, 127
    %v3833 = vshll.u32 %v3832, 23
    %v3834 = vor.u32 4788187, %v3833
    %v3835 = vand.u32 2147483647, %v3834
    %v3837 = vcvt.s32.f32 %v3830
    %v3838 = vmul.f32 %v3837, %v3835
    %v3839 = vxor.u32 %v3838, 2147483648
    %v3840 = vsel %vm3719, %v3839, %v3838
    %v3841 = vsub.s32 4, %v3817
    %v3842 = vsel %vm3719, %v3841, %v3817
    %v3843 = vsel %vm3718, %v2785, %v3840
    %v3844 = vsel %vm3718, 0, %v3842
    %v3845 = vmul.f32 %v3843, %v3843
    %v3846 = vmul.f32 %v3845, -0.001358992
    %v3847 = vadd.f32 %v3846, 0.041655596
    %v3848 = vmul.f32 %v3845, %v3847
    %v3849 = vadd.f32 %v3848, -0.4999988
    %v3850 = vmul.f32 %v3845, %v3849
    %v3851 = vadd.f32 1.0, %v3850
    %v3852 = vmul.f32 %v3843, %v3843
    %v3853 = vmul.f32 %v3852, -0.00019511016
    %v3854 = vadd.f32 %v3853, 0.008332121
    %v3855 = vmul.f32 %v3852, %v3854
    %v3856 = vadd.f32 %v3855, -0.16666654
    %v3857 = vmul.f32 %v3852, %v3856
    %v3858 = vadd.f32 %v3857, 1.0
    %v3859 = vmul.f32 %v3858, %v3843
    %vm3860 = vweird.f32 %v2785
    %v3861 = vadd.s32 %v3844, 3
    %v3862 = vand.u32 %v3861, 3
    %vm3863 = vcmp.lt.s32.totalorder %v3862, 2
    %vm3864 = vcmp.eq.s32.totalorder %v3862, 0
    %v3865 = vxor.u32 %v3859, 2147483648
    %v3866 = vsel %vm3864, %v3851, %v3865
    %vm3867 = vcmp.eq.s32.totalorder %v3862, 2
    %v3868 = vxor.u32 %v3851, 2147483648
    %v3869 = vsel %vm3867, %v3868, %v3859
    %v3870 = vsel %vm3863, %v3866, %v3869
    %v3871 = vsel %vm3860, nan, %v3870
    %v3872 = vand.u32 2147483647, %v2786
    %vm3873 = vcmp.le.f32.partialorder %v3872, 0.7853982
    %vm3874 = vcmp.lt.s32.totalorder %v2786, 0
    %v3875 = vand.u32 %v2786, 2139095040
    %v3876 = vshrl.u32 %v3875, 23
    %v3877 = vsub.s32 %v3876, 127
    %v3878 = vand.u32 2147483647, %v2786
    %v3879 = vand.u32 %v3878, 8388607
    %v3880 = vor.u32 %v3879, 8388608
    %v3881 = vsub.s32 0, %v3880
    %v3882 = vadd.s32 %v3877, 1
    %vm3883 = vcmp.gt.s32.totalorder %v3882, 0
    %v3884 = vsel %vm3883, %v3882, 0
    %v3885 = vshrl.u32 %v3884, 5
    %v3886 = vand.u32 %v3884, 31
    %v3887 = vsub.s32 32, %v3886
    %v3888 = vshrl.u32 683565275, %v3887
    %v3889 = vshll.u32 683565275, %v3886
    %v3890 = vshrl.u32 2475754826, %v3887
    %v3891 = vor.u32 %v3889, %v3890
    %v3892 = vshll.u32 2475754826, %v3886
    %v3893 = vshrl.u32 2131351028, %v3887
    %v3894 = vor.u32 %v3892, %v3893
    %v3895 = vshll.u32 2131351028, %v3886
    %v3896 = vshrl.u32 2102212464, %v3887
    %v3897 = vor.u32 %v3895, %v3896
    %v3898 = vshll.u32 2102212464, %v3886
    %v3899 = vshrl.u32 920167782, %v3887
    %v3900 = vor.u32 %v3898, %v3899
    %v3901 = vshll.u32 920167782, %v3886
    %v3902 = vshrl.u32 1326507024, %v3887
    %v3903 = vor.u32 %v3901, %v3902
    %vm3904 = vcmp.lt.s32.totalorder %v3885, 1
    %vm3905 = vcmp.lt.s32.totalorder %v3885, 2
    %vm3906 = vcmp.lt.s32.totalorder %v3885, 3
    %vm3907 = vcmp.lt.s32.totalorder %v3885, 4
    %v3908 = vsel %vm3904, %v3888, %v3891
    %v3909 = vsel %vm3907, %v3897, 2102212464
    %v3910 = vsel %vm3906, %v3894, %v3909
    %v3911 = vsel %vm3905, %v3908, %v3910
    %v3912 = vsel %vm3904, %v3891, %v3894
    %v3913 = vsel %vm3907, %v3900, 920167782
    %v3914 = vsel %vm3906, %v3897, %v3913
    %v3915 = vsel %vm3905, %v3912, %v3914
    %v3916 = vsel %vm3904, %v3894, %v3897
    %v3917 = vsel %vm3907, %v3903, 1326507024
    %v3918 = vsel %vm3906, %v3900, %v3917
    %v3919 = vsel %vm3905, %v3916, %v3918
    %v3920 = vshll.u32 %v3880, 8
    %v3921 = vand.u32 %v3920, 65535
    %v3922 = vshrl.u32 %v3920, 16
    %v3923 = vand.u32 %v3919, 65535
    %v3924 = vshrl.u32 %v3919, 16
    %v3925 = vmul.u32 %v3921, %v3923
    %v3926 = vmul.u32 %v3921, %v3924
    %v3927 = vmul.u32 %v3922, %v3923
    %v3928 = vmul.u32 %v3922, %v3924
    %v3929 = vshll.u32 %v3926, 16
    %v3930 = vshrl.u32 %v3926, 16
    %v3931 = vshll.u32 %v3927, 16
    %v3932 = vshrl.u32 %v3927, 16
    %vm3933 = vc.u32 %v3925, %v3929
    %v3934 = vsel %vm3933, 1, 0
    %v3935 = vadd.s32 %v3925, %v3929
    %v3936 = vadd.s32 %v3928, %v3934
    %vm3937 = vc.u32 %v3935, %v3931
    %v3938 = vsel %vm3937, 1, 0
    %v3939 = vadd.s32 %v3935, %v3931
    %v3940 = vadd.s32 %v3936, %v3938
    %v3941 = vadd.s32 %v3940, %v3930
    %v3942 = vadd.s32 %v3941, %v3932
    %v3943 = vand.u32 %v3920, 65535
    %v3944 = vshrl.u32 %v3920, 16
    %v3945 = vand.u32 %v3915, 65535
    %v3946 = vshrl.u32 %v3915, 16
    %v3947 = vmul.u32 %v3943, %v3945
    %v3948 = vmul.u32 %v3943, %v3946
    %v3949 = vmul.u32 %v3944, %v3945
    %v3950 = vmul.u32 %v3944, %v3946
    %v3951 = vshll.u32 %v3948, 16
    %v3952 = vshrl.u32 %v3948, 16
    %v3953 = vshll.u32 %v3949, 16
    %v3954 = vshrl.u32 %v3949, 16
    %vm3955 = vc.u32 %v3947, %v3951
    %v3956 = vsel %vm3955, 1, 0
    %v3957 = vadd.s32 %v3947, %v3951
    %v3958 = vadd.s32 %v3950, %v3956
    %vm3959 = vc.u32 %v3957, %v3953
    %v3960 = vsel %vm3959, 1, 0
    %v3961 = vadd.s32 %v3957, %v3953
    %v3962 = vadd.s32 %v3958, %v3960
    %v3963 = vadd.s32 %v3962, %v3952
    %v3964 = vadd.s32 %v3963, %v3954
    %v3965 = vmul.u32 %v3920, %v3911
    %v3966 = vadd.s32 %v3942, %v3961
    %vm3967 = vc.u32 %v3942, %v3961
    %v3968 = vadd.s32 %v3964, 1
    %v3969 = vsel %vm3967, %v3968, %v3964
    %v3970 = vadd.s32 %v3965, %v3969
    %v3971 = vadd.s32 %v3970, 536870912
    %v3972 = vshrl.u32 %v3971, 30
    %v3973 = vshll.u32 %v3972, 30
    %v3974 = vsub.s32 %v3970, %v3973
    %vm3975 = vcmp.lt.s32.totalorder %v3974, 0
    %v3976 = vsub.s32 0, %v3974
    %v3977 = vsel %vm3975, %v3976, %v3974
    %v3978 = vclz %v3977
    %v3979 = vsub.s32 %v3978, 2
    %vm3980 = vcmp.gt.s32.totalorder 0, %v3979
    %v3981 = vsel %vm3980, 0, %v3979
    %v3982 = vsub.s32 32, %v3981
    %v3983 = vshll.u32 %v3974, %v3981
    %v3984 = vshrl.u32 %v3966, %v3982
    %v3985 = vor.u32 %v3983, %v3984
    %v3986 = vsub.s32 4294967266, %v3981
    %v3987 = vadd.s32 %v3986, 127
    %v3988 = vshll.u32 %v3987, 23
    %v3989 = vor.u32 4788187, %v3988
    %v3990 = vand.u32 2147483647, %v3989
    %v3992 = vcvt.s32.f32 %v3985
    %v3993 = vmul.f32 %v3992, %v3990
    %v3994 = vxor.u32 %v3993, 2147483648
    %v3995 = vsel %vm3874, %v3994, %v3993
    %v3996 = vsub.s32 4, %v3972
    %v3997 = vsel %vm3874, %v3996, %v3972
    %v3998 = vsel %vm3873, %v2786, %v3995
    %v3999 = vsel %vm3873, 0, %v3997
    %v4000 = vmul.f32 %v3998, %v3998
    %v4001 = vmul.f32 %v4000, -0.001358992
    %v4002 = vadd.f32 %v4001, 0.041655596
    %v4003 = vmul.f32 %v4000, %v4002
    %v4004 = vadd.f32 %v4003, -0.4999988
    %v4005 = vmul.f32 %v4000, %v4004
    %v4006 = vadd.f32 1.0, %v4005
    %v4007 = vmul.f32 %v3998, %v3998
    %v4008 = vmul.f32 %v4007, -0.00019511016
    %v4009 = vadd.f32 %v4008, 0.008332121
    %v4010 = vmul.f32 %v4007, %v4009
    %v4011 = vadd.f32 %v4010, -0.16666654
    %v4012 = vmul.f32 %v4007, %v4011
    %v4013 = vadd.f32 %v4012, 1.0
    %v4014 = vmul.f32 %v4013, %v3998
    %vm4015 = vweird.f32 %v2786
    %v4016 = vadd.s32 %v3999, 3
    %v4017 = vand.u32 %v4016, 3
    %vm4018 = vcmp.lt.s32.totalorder %v4017, 2
    %vm4019 = vcmp.eq.s32.totalorder %v4017, 0
    %v4020 = vxor.u32 %v4014, 2147483648
    %v4021 = vsel %vm4019, %v4006, %v4020
    %vm4022 = vcmp.eq.s32.totalorder %v4017, 2
    %v4023 = vxor.u32 %v4006, 2147483648
    %v4024 = vsel %vm4022, %v4023, %v4014
    %v4025 = vsel %vm4018, %v4021, %v4024
    %v4026 = vsel %vm4015, nan, %v4025
    %v4027 = vmul.f32 %v2941, 0.5
    %v4028 = vmul.f32 %v3096, 0.5
    %v4029 = vmul.f32 %v3251, 0.5
    %v4030 = vmul.f32 %v3406, 0.5
    %v4031 = vmul.f32 %v3561, 0.5
    %v4032 = vmul.f32 %v3716, 0.5
    %v4033 = vmul.f32 %v3871, 0.5
    %v4034 = vmul.f32 %v4026, 0.5
    %v4035 = vadd.f32 %v2759, %v4027
    %v4036 = vadd.f32 %v2760, %v4028
    %v4037 = vadd.f32 %v2761, %v4029
    %v4038 = vadd.f32 %v2762, %v4030
    %v4039 = vadd.f32 %v2763, %v4031
    %v4040 = vadd.f32 %v2764, %v4032
    %v4041 = vadd.f32 %v2765, %v4033
    %v4042 = vadd.f32 %v2766, %v4034
    %v4043 = vperm.slane %v73, 4
    %v4044 = vperm.slane %v74, 4
    %v4045 = vperm.slane %v75, 4
    %v4046 = vperm.slane %v76, 4
    %v4047 = vperm.slane %v77, 4
    %v4048 = vperm.slane %v78, 4
    %v4049 = vperm.slane %v79, 4
    %v4050 = vperm.slane %v80, 4
    %4051 = vset.pattern.permute.xlu0 6
    %4052 = vperm.xlu0 %4051, %v81
    %v4053 = vpop.permute.xlu0 %4052
    %v4055 = vadd.f32 %v4043, %v4053
    %v4056 = vadd.f32 %v4044, %v4053
    %v4057 = vadd.f32 %v4045, %v4053
    %v4058 = vadd.f32 %v4046, %v4053
    %v4059 = vadd.f32 %v4047, %v4053
    %v4060 = vadd.f32 %v4048, %v4053
    %v4061 = vadd.f32 %v4049, %v4053
    %v4062 = vadd.f32 %v4050, %v4053
    %v4063 = vand.u32 2147483647, %v4055
    %vm4064 = vcmp.le.f32.partialorder %v4063, 0.7853982
    %vm4065 = vcmp.lt.s32.totalorder %v4055, 0
    %v4066 = vand.u32 %v4055, 2139095040
    %v4067 = vshrl.u32 %v4066, 23
    %v4068 = vsub.s32 %v4067, 127
    %v4069 = vand.u32 2147483647, %v4055
    %v4070 = vand.u32 %v4069, 8388607
    %v4071 = vor.u32 %v4070, 8388608
    %v4072 = vsub.s32 0, %v4071
    %v4073 = vadd.s32 %v4068, 1
    %vm4074 = vcmp.gt.s32.totalorder %v4073, 0
    %v4075 = vsel %vm4074, %v4073, 0
    %v4076 = vshrl.u32 %v4075, 5
    %v4077 = vand.u32 %v4075, 31
    %v4078 = vsub.s32 32, %v4077
    %v4079 = vshrl.u32 683565275, %v4078
    %v4080 = vshll.u32 683565275, %v4077
    %v4081 = vshrl.u32 2475754826, %v4078
    %v4082 = vor.u32 %v4080, %v4081
    %v4083 = vshll.u32 2475754826, %v4077
    %v4084 = vshrl.u32 2131351028, %v4078
    %v4085 = vor.u32 %v4083, %v4084
    %v4086 = vshll.u32 2131351028, %v4077
    %v4087 = vshrl.u32 2102212464, %v4078
    %v4088 = vor.u32 %v4086, %v4087
    %v4089 = vshll.u32 2102212464, %v4077
    %v4090 = vshrl.u32 920167782, %v4078
    %v4091 = vor.u32 %v4089, %v4090
    %v4092 = vshll.u32 920167782, %v4077
    %v4093 = vshrl.u32 1326507024, %v4078
    %v4094 = vor.u32 %v4092, %v4093
    %vm4095 = vcmp.lt.s32.totalorder %v4076, 1
    %vm4096 = vcmp.lt.s32.totalorder %v4076, 2
    %vm4097 = vcmp.lt.s32.totalorder %v4076, 3
    %vm4098 = vcmp.lt.s32.totalorder %v4076, 4
    %v4099 = vsel %vm4095, %v4079, %v4082
    %v4100 = vsel %vm4098, %v4088, 2102212464
    %v4101 = vsel %vm4097, %v4085, %v4100
    %v4102 = vsel %vm4096, %v4099, %v4101
    %v4103 = vsel %vm4095, %v4082, %v4085
    %v4104 = vsel %vm4098, %v4091, 920167782
    %v4105 = vsel %vm4097, %v4088, %v4104
    %v4106 = vsel %vm4096, %v4103, %v4105
    %v4107 = vsel %vm4095, %v4085, %v4088
    %v4108 = vsel %vm4098, %v4094, 1326507024
    %v4109 = vsel %vm4097, %v4091, %v4108
    %v4110 = vsel %vm4096, %v4107, %v4109
    %v4111 = vshll.u32 %v4071, 8
    %v4112 = vand.u32 %v4111, 65535
    %v4113 = vshrl.u32 %v4111, 16
    %v4114 = vand.u32 %v4110, 65535
    %v4115 = vshrl.u32 %v4110, 16
    %v4116 = vmul.u32 %v4112, %v4114
    %v4117 = vmul.u32 %v4112, %v4115
    %v4118 = vmul.u32 %v4113, %v4114
    %v4119 = vmul.u32 %v4113, %v4115
    %v4120 = vshll.u32 %v4117, 16
    %v4121 = vshrl.u32 %v4117, 16
    %v4122 = vshll.u32 %v4118, 16
    %v4123 = vshrl.u32 %v4118, 16
    %vm4124 = vc.u32 %v4116, %v4120
    %v4125 = vsel %vm4124, 1, 0
    %v4126 = vadd.s32 %v4116, %v4120
    %v4127 = vadd.s32 %v4119, %v4125
    %vm4128 = vc.u32 %v4126, %v4122
    %v4129 = vsel %vm4128, 1, 0
    %v4130 = vadd.s32 %v4126, %v4122
    %v4131 = vadd.s32 %v4127, %v4129
    %v4132 = vadd.s32 %v4131, %v4121
    %v4133 = vadd.s32 %v4132, %v4123
    %v4134 = vand.u32 %v4111, 65535
    %v4135 = vshrl.u32 %v4111, 16
    %v4136 = vand.u32 %v4106, 65535
    %v4137 = vshrl.u32 %v4106, 16
    %v4138 = vmul.u32 %v4134, %v4136
    %v4139 = vmul.u32 %v4134, %v4137
    %v4140 = vmul.u32 %v4135, %v4136
    %v4141 = vmul.u32 %v4135, %v4137
    %v4142 = vshll.u32 %v4139, 16
    %v4143 = vshrl.u32 %v4139, 16
    %v4144 = vshll.u32 %v4140, 16
    %v4145 = vshrl.u32 %v4140, 16
    %vm4146 = vc.u32 %v4138, %v4142
    %v4147 = vsel %vm4146, 1, 0
    %v4148 = vadd.s32 %v4138, %v4142
    %v4149 = vadd.s32 %v4141, %v4147
    %vm4150 = vc.u32 %v4148, %v4144
    %v4151 = vsel %vm4150, 1, 0
    %v4152 = vadd.s32 %v4148, %v4144
    %v4153 = vadd.s32 %v4149, %v4151
    %v4154 = vadd.s32 %v4153, %v4143
    %v4155 = vadd.s32 %v4154, %v4145
    %v4156 = vmul.u32 %v4111, %v4102
    %v4157 = vadd.s32 %v4133, %v4152
    %vm4158 = vc.u32 %v4133, %v4152
    %v4159 = vadd.s32 %v4155, 1
    %v4160 = vsel %vm4158, %v4159, %v4155
    %v4161 = vadd.s32 %v4156, %v4160
    %v4162 = vadd.s32 %v4161, 536870912
    %v4163 = vshrl.u32 %v4162, 30
    %v4164 = vshll.u32 %v4163, 30
    %v4165 = vsub.s32 %v4161, %v4164
    %vm4166 = vcmp.lt.s32.totalorder %v4165, 0
    %v4167 = vsub.s32 0, %v4165
    %v4168 = vsel %vm4166, %v4167, %v4165
    %v4169 = vclz %v4168
    %v4170 = vsub.s32 %v4169, 2
    %vm4171 = vcmp.gt.s32.totalorder 0, %v4170
    %v4172 = vsel %vm4171, 0, %v4170
    %v4173 = vsub.s32 32, %v4172
    %v4174 = vshll.u32 %v4165, %v4172
    %v4175 = vshrl.u32 %v4157, %v4173
    %v4176 = vor.u32 %v4174, %v4175
    %v4177 = vsub.s32 4294967266, %v4172
    %v4178 = vadd.s32 %v4177, 127
    %v4179 = vshll.u32 %v4178, 23
    %v4180 = vor.u32 4788187, %v4179
    %v4181 = vand.u32 2147483647, %v4180
    %v4183 = vcvt.s32.f32 %v4176
    %v4184 = vmul.f32 %v4183, %v4181
    %v4185 = vxor.u32 %v4184, 2147483648
    %v4186 = vsel %vm4065, %v4185, %v4184
    %v4187 = vsub.s32 4, %v4163
    %v4188 = vsel %vm4065, %v4187, %v4163
    %v4189 = vsel %vm4064, %v4055, %v4186
    %v4190 = vsel %vm4064, 0, %v4188
    %v4191 = vmul.f32 %v4189, %v4189
    %v4192 = vmul.f32 %v4191, -0.001358992
    %v4193 = vadd.f32 %v4192, 0.041655596
    %v4194 = vmul.f32 %v4191, %v4193
    %v4195 = vadd.f32 %v4194, -0.4999988
    %v4196 = vmul.f32 %v4191, %v4195
    %v4197 = vadd.f32 1.0, %v4196
    %v4198 = vmul.f32 %v4189, %v4189
    %v4199 = vmul.f32 %v4198, -0.00019511016
    %v4200 = vadd.f32 %v4199, 0.008332121
    %v4201 = vmul.f32 %v4198, %v4200
    %v4202 = vadd.f32 %v4201, -0.16666654
    %v4203 = vmul.f32 %v4198, %v4202
    %v4204 = vadd.f32 %v4203, 1.0
    %v4205 = vmul.f32 %v4204, %v4189
    %vm4206 = vweird.f32 %v4055
    %v4207 = vadd.s32 %v4190, 3
    %v4208 = vand.u32 %v4207, 3
    %vm4209 = vcmp.lt.s32.totalorder %v4208, 2
    %vm4210 = vcmp.eq.s32.totalorder %v4208, 0
    %v4211 = vxor.u32 %v4205, 2147483648
    %v4212 = vsel %vm4210, %v4197, %v4211
    %vm4213 = vcmp.eq.s32.totalorder %v4208, 2
    %v4214 = vxor.u32 %v4197, 2147483648
    %v4215 = vsel %vm4213, %v4214, %v4205
    %v4216 = vsel %vm4209, %v4212, %v4215
    %v4217 = vsel %vm4206, nan, %v4216
    %v4218 = vand.u32 2147483647, %v4056
    %vm4219 = vcmp.le.f32.partialorder %v4218, 0.7853982
    %vm4220 = vcmp.lt.s32.totalorder %v4056, 0
    %v4221 = vand.u32 %v4056, 2139095040
    %v4222 = vshrl.u32 %v4221, 23
    %v4223 = vsub.s32 %v4222, 127
    %v4224 = vand.u32 2147483647, %v4056
    %v4225 = vand.u32 %v4224, 8388607
    %v4226 = vor.u32 %v4225, 8388608
    %v4227 = vsub.s32 0, %v4226
    %v4228 = vadd.s32 %v4223, 1
    %vm4229 = vcmp.gt.s32.totalorder %v4228, 0
    %v4230 = vsel %vm4229, %v4228, 0
    %v4231 = vshrl.u32 %v4230, 5
    %v4232 = vand.u32 %v4230, 31
    %v4233 = vsub.s32 32, %v4232
    %v4234 = vshrl.u32 683565275, %v4233
    %v4235 = vshll.u32 683565275, %v4232
    %v4236 = vshrl.u32 2475754826, %v4233
    %v4237 = vor.u32 %v4235, %v4236
    %v4238 = vshll.u32 2475754826, %v4232
    %v4239 = vshrl.u32 2131351028, %v4233
    %v4240 = vor.u32 %v4238, %v4239
    %v4241 = vshll.u32 2131351028, %v4232
    %v4242 = vshrl.u32 2102212464, %v4233
    %v4243 = vor.u32 %v4241, %v4242
    %v4244 = vshll.u32 2102212464, %v4232
    %v4245 = vshrl.u32 920167782, %v4233
    %v4246 = vor.u32 %v4244, %v4245
    %v4247 = vshll.u32 920167782, %v4232
    %v4248 = vshrl.u32 1326507024, %v4233
    %v4249 = vor.u32 %v4247, %v4248
    %vm4250 = vcmp.lt.s32.totalorder %v4231, 1
    %vm4251 = vcmp.lt.s32.totalorder %v4231, 2
    %vm4252 = vcmp.lt.s32.totalorder %v4231, 3
    %vm4253 = vcmp.lt.s32.totalorder %v4231, 4
    %v4254 = vsel %vm4250, %v4234, %v4237
    %v4255 = vsel %vm4253, %v4243, 2102212464
    %v4256 = vsel %vm4252, %v4240, %v4255
    %v4257 = vsel %vm4251, %v4254, %v4256
    %v4258 = vsel %vm4250, %v4237, %v4240
    %v4259 = vsel %vm4253, %v4246, 920167782
    %v4260 = vsel %vm4252, %v4243, %v4259
    %v4261 = vsel %vm4251, %v4258, %v4260
    %v4262 = vsel %vm4250, %v4240, %v4243
    %v4263 = vsel %vm4253, %v4249, 1326507024
    %v4264 = vsel %vm4252, %v4246, %v4263
    %v4265 = vsel %vm4251, %v4262, %v4264
    %v4266 = vshll.u32 %v4226, 8
    %v4267 = vand.u32 %v4266, 65535
    %v4268 = vshrl.u32 %v4266, 16
    %v4269 = vand.u32 %v4265, 65535
    %v4270 = vshrl.u32 %v4265, 16
    %v4271 = vmul.u32 %v4267, %v4269
    %v4272 = vmul.u32 %v4267, %v4270
    %v4273 = vmul.u32 %v4268, %v4269
    %v4274 = vmul.u32 %v4268, %v4270
    %v4275 = vshll.u32 %v4272, 16
    %v4276 = vshrl.u32 %v4272, 16
    %v4277 = vshll.u32 %v4273, 16
    %v4278 = vshrl.u32 %v4273, 16
    %vm4279 = vc.u32 %v4271, %v4275
    %v4280 = vsel %vm4279, 1, 0
    %v4281 = vadd.s32 %v4271, %v4275
    %v4282 = vadd.s32 %v4274, %v4280
    %vm4283 = vc.u32 %v4281, %v4277
    %v4284 = vsel %vm4283, 1, 0
    %v4285 = vadd.s32 %v4281, %v4277
    %v4286 = vadd.s32 %v4282, %v4284
    %v4287 = vadd.s32 %v4286, %v4276
    %v4288 = vadd.s32 %v4287, %v4278
    %v4289 = vand.u32 %v4266, 65535
    %v4290 = vshrl.u32 %v4266, 16
    %v4291 = vand.u32 %v4261, 65535
    %v4292 = vshrl.u32 %v4261, 16
    %v4293 = vmul.u32 %v4289, %v4291
    %v4294 = vmul.u32 %v4289, %v4292
    %v4295 = vmul.u32 %v4290, %v4291
    %v4296 = vmul.u32 %v4290, %v4292
    %v4297 = vshll.u32 %v4294, 16
    %v4298 = vshrl.u32 %v4294, 16
    %v4299 = vshll.u32 %v4295, 16
    %v4300 = vshrl.u32 %v4295, 16
    %vm4301 = vc.u32 %v4293, %v4297
    %v4302 = vsel %vm4301, 1, 0
    %v4303 = vadd.s32 %v4293, %v4297
    %v4304 = vadd.s32 %v4296, %v4302
    %vm4305 = vc.u32 %v4303, %v4299
    %v4306 = vsel %vm4305, 1, 0
    %v4307 = vadd.s32 %v4303, %v4299
    %v4308 = vadd.s32 %v4304, %v4306
    %v4309 = vadd.s32 %v4308, %v4298
    %v4310 = vadd.s32 %v4309, %v4300
    %v4311 = vmul.u32 %v4266, %v4257
    %v4312 = vadd.s32 %v4288, %v4307
    %vm4313 = vc.u32 %v4288, %v4307
    %v4314 = vadd.s32 %v4310, 1
    %v4315 = vsel %vm4313, %v4314, %v4310
    %v4316 = vadd.s32 %v4311, %v4315
    %v4317 = vadd.s32 %v4316, 536870912
    %v4318 = vshrl.u32 %v4317, 30
    %v4319 = vshll.u32 %v4318, 30
    %v4320 = vsub.s32 %v4316, %v4319
    %vm4321 = vcmp.lt.s32.totalorder %v4320, 0
    %v4322 = vsub.s32 0, %v4320
    %v4323 = vsel %vm4321, %v4322, %v4320
    %v4324 = vclz %v4323
    %v4325 = vsub.s32 %v4324, 2
    %vm4326 = vcmp.gt.s32.totalorder 0, %v4325
    %v4327 = vsel %vm4326, 0, %v4325
    %v4328 = vsub.s32 32, %v4327
    %v4329 = vshll.u32 %v4320, %v4327
    %v4330 = vshrl.u32 %v4312, %v4328
    %v4331 = vor.u32 %v4329, %v4330
    %v4332 = vsub.s32 4294967266, %v4327
    %v4333 = vadd.s32 %v4332, 127
    %v4334 = vshll.u32 %v4333, 23
    %v4335 = vor.u32 4788187, %v4334
    %v4336 = vand.u32 2147483647, %v4335
    %v4338 = vcvt.s32.f32 %v4331
    %v4339 = vmul.f32 %v4338, %v4336
    %v4340 = vxor.u32 %v4339, 2147483648
    %v4341 = vsel %vm4220, %v4340, %v4339
    %v4342 = vsub.s32 4, %v4318
    %v4343 = vsel %vm4220, %v4342, %v4318
    %v4344 = vsel %vm4219, %v4056, %v4341
    %v4345 = vsel %vm4219, 0, %v4343
    %v4346 = vmul.f32 %v4344, %v4344
    %v4347 = vmul.f32 %v4346, -0.001358992
    %v4348 = vadd.f32 %v4347, 0.041655596
    %v4349 = vmul.f32 %v4346, %v4348
    %v4350 = vadd.f32 %v4349, -0.4999988
    %v4351 = vmul.f32 %v4346, %v4350
    %v4352 = vadd.f32 1.0, %v4351
    %v4353 = vmul.f32 %v4344, %v4344
    %v4354 = vmul.f32 %v4353, -0.00019511016
    %v4355 = vadd.f32 %v4354, 0.008332121
    %v4356 = vmul.f32 %v4353, %v4355
    %v4357 = vadd.f32 %v4356, -0.16666654
    %v4358 = vmul.f32 %v4353, %v4357
    %v4359 = vadd.f32 %v4358, 1.0
    %v4360 = vmul.f32 %v4359, %v4344
    %vm4361 = vweird.f32 %v4056
    %v4362 = vadd.s32 %v4345, 3
    %v4363 = vand.u32 %v4362, 3
    %vm4364 = vcmp.lt.s32.totalorder %v4363, 2
    %vm4365 = vcmp.eq.s32.totalorder %v4363, 0
    %v4366 = vxor.u32 %v4360, 2147483648
    %v4367 = vsel %vm4365, %v4352, %v4366
    %vm4368 = vcmp.eq.s32.totalorder %v4363, 2
    %v4369 = vxor.u32 %v4352, 2147483648
    %v4370 = vsel %vm4368, %v4369, %v4360
    %v4371 = vsel %vm4364, %v4367, %v4370
    %v4372 = vsel %vm4361, nan, %v4371
    %v4373 = vand.u32 2147483647, %v4057
    %vm4374 = vcmp.le.f32.partialorder %v4373, 0.7853982
    %vm4375 = vcmp.lt.s32.totalorder %v4057, 0
    %v4376 = vand.u32 %v4057, 2139095040
    %v4377 = vshrl.u32 %v4376, 23
    %v4378 = vsub.s32 %v4377, 127
    %v4379 = vand.u32 2147483647, %v4057
    %v4380 = vand.u32 %v4379, 8388607
    %v4381 = vor.u32 %v4380, 8388608
    %v4382 = vsub.s32 0, %v4381
    %v4383 = vadd.s32 %v4378, 1
    %vm4384 = vcmp.gt.s32.totalorder %v4383, 0
    %v4385 = vsel %vm4384, %v4383, 0
    %v4386 = vshrl.u32 %v4385, 5
    %v4387 = vand.u32 %v4385, 31
    %v4388 = vsub.s32 32, %v4387
    %v4389 = vshrl.u32 683565275, %v4388
    %v4390 = vshll.u32 683565275, %v4387
    %v4391 = vshrl.u32 2475754826, %v4388
    %v4392 = vor.u32 %v4390, %v4391
    %v4393 = vshll.u32 2475754826, %v4387
    %v4394 = vshrl.u32 2131351028, %v4388
    %v4395 = vor.u32 %v4393, %v4394
    %v4396 = vshll.u32 2131351028, %v4387
    %v4397 = vshrl.u32 2102212464, %v4388
    %v4398 = vor.u32 %v4396, %v4397
    %v4399 = vshll.u32 2102212464, %v4387
    %v4400 = vshrl.u32 920167782, %v4388
    %v4401 = vor.u32 %v4399, %v4400
    %v4402 = vshll.u32 920167782, %v4387
    %v4403 = vshrl.u32 1326507024, %v4388
    %v4404 = vor.u32 %v4402, %v4403
    %vm4405 = vcmp.lt.s32.totalorder %v4386, 1
    %vm4406 = vcmp.lt.s32.totalorder %v4386, 2
    %vm4407 = vcmp.lt.s32.totalorder %v4386, 3
    %vm4408 = vcmp.lt.s32.totalorder %v4386, 4
    %v4409 = vsel %vm4405, %v4389, %v4392
    %v4410 = vsel %vm4408, %v4398, 2102212464
    %v4411 = vsel %vm4407, %v4395, %v4410
    %v4412 = vsel %vm4406, %v4409, %v4411
    %v4413 = vsel %vm4405, %v4392, %v4395
    %v4414 = vsel %vm4408, %v4401, 920167782
    %v4415 = vsel %vm4407, %v4398, %v4414
    %v4416 = vsel %vm4406, %v4413, %v4415
    %v4417 = vsel %vm4405, %v4395, %v4398
    %v4418 = vsel %vm4408, %v4404, 1326507024
    %v4419 = vsel %vm4407, %v4401, %v4418
    %v4420 = vsel %vm4406, %v4417, %v4419
    %v4421 = vshll.u32 %v4381, 8
    %v4422 = vand.u32 %v4421, 65535
    %v4423 = vshrl.u32 %v4421, 16
    %v4424 = vand.u32 %v4420, 65535
    %v4425 = vshrl.u32 %v4420, 16
    %v4426 = vmul.u32 %v4422, %v4424
    %v4427 = vmul.u32 %v4422, %v4425
    %v4428 = vmul.u32 %v4423, %v4424
    %v4429 = vmul.u32 %v4423, %v4425
    %v4430 = vshll.u32 %v4427, 16
    %v4431 = vshrl.u32 %v4427, 16
    %v4432 = vshll.u32 %v4428, 16
    %v4433 = vshrl.u32 %v4428, 16
    %vm4434 = vc.u32 %v4426, %v4430
    %v4435 = vsel %vm4434, 1, 0
    %v4436 = vadd.s32 %v4426, %v4430
    %v4437 = vadd.s32 %v4429, %v4435
    %vm4438 = vc.u32 %v4436, %v4432
    %v4439 = vsel %vm4438, 1, 0
    %v4440 = vadd.s32 %v4436, %v4432
    %v4441 = vadd.s32 %v4437, %v4439
    %v4442 = vadd.s32 %v4441, %v4431
    %v4443 = vadd.s32 %v4442, %v4433
    %v4444 = vand.u32 %v4421, 65535
    %v4445 = vshrl.u32 %v4421, 16
    %v4446 = vand.u32 %v4416, 65535
    %v4447 = vshrl.u32 %v4416, 16
    %v4448 = vmul.u32 %v4444, %v4446
    %v4449 = vmul.u32 %v4444, %v4447
    %v4450 = vmul.u32 %v4445, %v4446
    %v4451 = vmul.u32 %v4445, %v4447
    %v4452 = vshll.u32 %v4449, 16
    %v4453 = vshrl.u32 %v4449, 16
    %v4454 = vshll.u32 %v4450, 16
    %v4455 = vshrl.u32 %v4450, 16
    %vm4456 = vc.u32 %v4448, %v4452
    %v4457 = vsel %vm4456, 1, 0
    %v4458 = vadd.s32 %v4448, %v4452
    %v4459 = vadd.s32 %v4451, %v4457
    %vm4460 = vc.u32 %v4458, %v4454
    %v4461 = vsel %vm4460, 1, 0
    %v4462 = vadd.s32 %v4458, %v4454
    %v4463 = vadd.s32 %v4459, %v4461
    %v4464 = vadd.s32 %v4463, %v4453
    %v4465 = vadd.s32 %v4464, %v4455
    %v4466 = vmul.u32 %v4421, %v4412
    %v4467 = vadd.s32 %v4443, %v4462
    %vm4468 = vc.u32 %v4443, %v4462
    %v4469 = vadd.s32 %v4465, 1
    %v4470 = vsel %vm4468, %v4469, %v4465
    %v4471 = vadd.s32 %v4466, %v4470
    %v4472 = vadd.s32 %v4471, 536870912
    %v4473 = vshrl.u32 %v4472, 30
    %v4474 = vshll.u32 %v4473, 30
    %v4475 = vsub.s32 %v4471, %v4474
    %vm4476 = vcmp.lt.s32.totalorder %v4475, 0
    %v4477 = vsub.s32 0, %v4475
    %v4478 = vsel %vm4476, %v4477, %v4475
    %v4479 = vclz %v4478
    %v4480 = vsub.s32 %v4479, 2
    %vm4481 = vcmp.gt.s32.totalorder 0, %v4480
    %v4482 = vsel %vm4481, 0, %v4480
    %v4483 = vsub.s32 32, %v4482
    %v4484 = vshll.u32 %v4475, %v4482
    %v4485 = vshrl.u32 %v4467, %v4483
    %v4486 = vor.u32 %v4484, %v4485
    %v4487 = vsub.s32 4294967266, %v4482
    %v4488 = vadd.s32 %v4487, 127
    %v4489 = vshll.u32 %v4488, 23
    %v4490 = vor.u32 4788187, %v4489
    %v4491 = vand.u32 2147483647, %v4490
    %v4493 = vcvt.s32.f32 %v4486
    %v4494 = vmul.f32 %v4493, %v4491
    %v4495 = vxor.u32 %v4494, 2147483648
    %v4496 = vsel %vm4375, %v4495, %v4494
    %v4497 = vsub.s32 4, %v4473
    %v4498 = vsel %vm4375, %v4497, %v4473
    %v4499 = vsel %vm4374, %v4057, %v4496
    %v4500 = vsel %vm4374, 0, %v4498
    %v4501 = vmul.f32 %v4499, %v4499
    %v4502 = vmul.f32 %v4501, -0.001358992
    %v4503 = vadd.f32 %v4502, 0.041655596
    %v4504 = vmul.f32 %v4501, %v4503
    %v4505 = vadd.f32 %v4504, -0.4999988
    %v4506 = vmul.f32 %v4501, %v4505
    %v4507 = vadd.f32 1.0, %v4506
    %v4508 = vmul.f32 %v4499, %v4499
    %v4509 = vmul.f32 %v4508, -0.00019511016
    %v4510 = vadd.f32 %v4509, 0.008332121
    %v4511 = vmul.f32 %v4508, %v4510
    %v4512 = vadd.f32 %v4511, -0.16666654
    %v4513 = vmul.f32 %v4508, %v4512
    %v4514 = vadd.f32 %v4513, 1.0
    %v4515 = vmul.f32 %v4514, %v4499
    %vm4516 = vweird.f32 %v4057
    %v4517 = vadd.s32 %v4500, 3
    %v4518 = vand.u32 %v4517, 3
    %vm4519 = vcmp.lt.s32.totalorder %v4518, 2
    %vm4520 = vcmp.eq.s32.totalorder %v4518, 0
    %v4521 = vxor.u32 %v4515, 2147483648
    %v4522 = vsel %vm4520, %v4507, %v4521
    %vm4523 = vcmp.eq.s32.totalorder %v4518, 2
    %v4524 = vxor.u32 %v4507, 2147483648
    %v4525 = vsel %vm4523, %v4524, %v4515
    %v4526 = vsel %vm4519, %v4522, %v4525
    %v4527 = vsel %vm4516, nan, %v4526
    %v4528 = vand.u32 2147483647, %v4058
    %vm4529 = vcmp.le.f32.partialorder %v4528, 0.7853982
    %vm4530 = vcmp.lt.s32.totalorder %v4058, 0
    %v4531 = vand.u32 %v4058, 2139095040
    %v4532 = vshrl.u32 %v4531, 23
    %v4533 = vsub.s32 %v4532, 127
    %v4534 = vand.u32 2147483647, %v4058
    %v4535 = vand.u32 %v4534, 8388607
    %v4536 = vor.u32 %v4535, 8388608
    %v4537 = vsub.s32 0, %v4536
    %v4538 = vadd.s32 %v4533, 1
    %vm4539 = vcmp.gt.s32.totalorder %v4538, 0
    %v4540 = vsel %vm4539, %v4538, 0
    %v4541 = vshrl.u32 %v4540, 5
    %v4542 = vand.u32 %v4540, 31
    %v4543 = vsub.s32 32, %v4542
    %v4544 = vshrl.u32 683565275, %v4543
    %v4545 = vshll.u32 683565275, %v4542
    %v4546 = vshrl.u32 2475754826, %v4543
    %v4547 = vor.u32 %v4545, %v4546
    %v4548 = vshll.u32 2475754826, %v4542
    %v4549 = vshrl.u32 2131351028, %v4543
    %v4550 = vor.u32 %v4548, %v4549
    %v4551 = vshll.u32 2131351028, %v4542
    %v4552 = vshrl.u32 2102212464, %v4543
    %v4553 = vor.u32 %v4551, %v4552
    %v4554 = vshll.u32 2102212464, %v4542
    %v4555 = vshrl.u32 920167782, %v4543
    %v4556 = vor.u32 %v4554, %v4555
    %v4557 = vshll.u32 920167782, %v4542
    %v4558 = vshrl.u32 1326507024, %v4543
    %v4559 = vor.u32 %v4557, %v4558
    %vm4560 = vcmp.lt.s32.totalorder %v4541, 1
    %vm4561 = vcmp.lt.s32.totalorder %v4541, 2
    %vm4562 = vcmp.lt.s32.totalorder %v4541, 3
    %vm4563 = vcmp.lt.s32.totalorder %v4541, 4
    %v4564 = vsel %vm4560, %v4544, %v4547
    %v4565 = vsel %vm4563, %v4553, 2102212464
    %v4566 = vsel %vm4562, %v4550, %v4565
    %v4567 = vsel %vm4561, %v4564, %v4566
    %v4568 = vsel %vm4560, %v4547, %v4550
    %v4569 = vsel %vm4563, %v4556, 920167782
    %v4570 = vsel %vm4562, %v4553, %v4569
    %v4571 = vsel %vm4561, %v4568, %v4570
    %v4572 = vsel %vm4560, %v4550, %v4553
    %v4573 = vsel %vm4563, %v4559, 1326507024
    %v4574 = vsel %vm4562, %v4556, %v4573
    %v4575 = vsel %vm4561, %v4572, %v4574
    %v4576 = vshll.u32 %v4536, 8
    %v4577 = vand.u32 %v4576, 65535
    %v4578 = vshrl.u32 %v4576, 16
    %v4579 = vand.u32 %v4575, 65535
    %v4580 = vshrl.u32 %v4575, 16
    %v4581 = vmul.u32 %v4577, %v4579
    %v4582 = vmul.u32 %v4577, %v4580
    %v4583 = vmul.u32 %v4578, %v4579
    %v4584 = vmul.u32 %v4578, %v4580
    %v4585 = vshll.u32 %v4582, 16
    %v4586 = vshrl.u32 %v4582, 16
    %v4587 = vshll.u32 %v4583, 16
    %v4588 = vshrl.u32 %v4583, 16
    %vm4589 = vc.u32 %v4581, %v4585
    %v4590 = vsel %vm4589, 1, 0
    %v4591 = vadd.s32 %v4581, %v4585
    %v4592 = vadd.s32 %v4584, %v4590
    %vm4593 = vc.u32 %v4591, %v4587
    %v4594 = vsel %vm4593, 1, 0
    %v4595 = vadd.s32 %v4591, %v4587
    %v4596 = vadd.s32 %v4592, %v4594
    %v4597 = vadd.s32 %v4596, %v4586
    %v4598 = vadd.s32 %v4597, %v4588
    %v4599 = vand.u32 %v4576, 65535
    %v4600 = vshrl.u32 %v4576, 16
    %v4601 = vand.u32 %v4571, 65535
    %v4602 = vshrl.u32 %v4571, 16
    %v4603 = vmul.u32 %v4599, %v4601
    %v4604 = vmul.u32 %v4599, %v4602
    %v4605 = vmul.u32 %v4600, %v4601
    %v4606 = vmul.u32 %v4600, %v4602
    %v4607 = vshll.u32 %v4604, 16
    %v4608 = vshrl.u32 %v4604, 16
    %v4609 = vshll.u32 %v4605, 16
    %v4610 = vshrl.u32 %v4605, 16
    %vm4611 = vc.u32 %v4603, %v4607
    %v4612 = vsel %vm4611, 1, 0
    %v4613 = vadd.s32 %v4603, %v4607
    %v4614 = vadd.s32 %v4606, %v4612
    %vm4615 = vc.u32 %v4613, %v4609
    %v4616 = vsel %vm4615, 1, 0
    %v4617 = vadd.s32 %v4613, %v4609
    %v4618 = vadd.s32 %v4614, %v4616
    %v4619 = vadd.s32 %v4618, %v4608
    %v4620 = vadd.s32 %v4619, %v4610
    %v4621 = vmul.u32 %v4576, %v4567
    %v4622 = vadd.s32 %v4598, %v4617
    %vm4623 = vc.u32 %v4598, %v4617
    %v4624 = vadd.s32 %v4620, 1
    %v4625 = vsel %vm4623, %v4624, %v4620
    %v4626 = vadd.s32 %v4621, %v4625
    %v4627 = vadd.s32 %v4626, 536870912
    %v4628 = vshrl.u32 %v4627, 30
    %v4629 = vshll.u32 %v4628, 30
    %v4630 = vsub.s32 %v4626, %v4629
    %vm4631 = vcmp.lt.s32.totalorder %v4630, 0
    %v4632 = vsub.s32 0, %v4630
    %v4633 = vsel %vm4631, %v4632, %v4630
    %v4634 = vclz %v4633
    %v4635 = vsub.s32 %v4634, 2
    %vm4636 = vcmp.gt.s32.totalorder 0, %v4635
    %v4637 = vsel %vm4636, 0, %v4635
    %v4638 = vsub.s32 32, %v4637
    %v4639 = vshll.u32 %v4630, %v4637
    %v4640 = vshrl.u32 %v4622, %v4638
    %v4641 = vor.u32 %v4639, %v4640
    %v4642 = vsub.s32 4294967266, %v4637
    %v4643 = vadd.s32 %v4642, 127
    %v4644 = vshll.u32 %v4643, 23
    %v4645 = vor.u32 4788187, %v4644
    %v4646 = vand.u32 2147483647, %v4645
    %v4648 = vcvt.s32.f32 %v4641
    %v4649 = vmul.f32 %v4648, %v4646
    %v4650 = vxor.u32 %v4649, 2147483648
    %v4651 = vsel %vm4530, %v4650, %v4649
    %v4652 = vsub.s32 4, %v4628
    %v4653 = vsel %vm4530, %v4652, %v4628
    %v4654 = vsel %vm4529, %v4058, %v4651
    %v4655 = vsel %vm4529, 0, %v4653
    %v4656 = vmul.f32 %v4654, %v4654
    %v4657 = vmul.f32 %v4656, -0.001358992
    %v4658 = vadd.f32 %v4657, 0.041655596
    %v4659 = vmul.f32 %v4656, %v4658
    %v4660 = vadd.f32 %v4659, -0.4999988
    %v4661 = vmul.f32 %v4656, %v4660
    %v4662 = vadd.f32 1.0, %v4661
    %v4663 = vmul.f32 %v4654, %v4654
    %v4664 = vmul.f32 %v4663, -0.00019511016
    %v4665 = vadd.f32 %v4664, 0.008332121
    %v4666 = vmul.f32 %v4663, %v4665
    %v4667 = vadd.f32 %v4666, -0.16666654
    %v4668 = vmul.f32 %v4663, %v4667
    %v4669 = vadd.f32 %v4668, 1.0
    %v4670 = vmul.f32 %v4669, %v4654
    %vm4671 = vweird.f32 %v4058
    %v4672 = vadd.s32 %v4655, 3
    %v4673 = vand.u32 %v4672, 3
    %vm4674 = vcmp.lt.s32.totalorder %v4673, 2
    %vm4675 = vcmp.eq.s32.totalorder %v4673, 0
    %v4676 = vxor.u32 %v4670, 2147483648
    %v4677 = vsel %vm4675, %v4662, %v4676
    %vm4678 = vcmp.eq.s32.totalorder %v4673, 2
    %v4679 = vxor.u32 %v4662, 2147483648
    %v4680 = vsel %vm4678, %v4679, %v4670
    %v4681 = vsel %vm4674, %v4677, %v4680
    %v4682 = vsel %vm4671, nan, %v4681
    %v4683 = vand.u32 2147483647, %v4059
    %vm4684 = vcmp.le.f32.partialorder %v4683, 0.7853982
    %vm4685 = vcmp.lt.s32.totalorder %v4059, 0
    %v4686 = vand.u32 %v4059, 2139095040
    %v4687 = vshrl.u32 %v4686, 23
    %v4688 = vsub.s32 %v4687, 127
    %v4689 = vand.u32 2147483647, %v4059
    %v4690 = vand.u32 %v4689, 8388607
    %v4691 = vor.u32 %v4690, 8388608
    %v4692 = vsub.s32 0, %v4691
    %v4693 = vadd.s32 %v4688, 1
    %vm4694 = vcmp.gt.s32.totalorder %v4693, 0
    %v4695 = vsel %vm4694, %v4693, 0
    %v4696 = vshrl.u32 %v4695, 5
    %v4697 = vand.u32 %v4695, 31
    %v4698 = vsub.s32 32, %v4697
    %v4699 = vshrl.u32 683565275, %v4698
    %v4700 = vshll.u32 683565275, %v4697
    %v4701 = vshrl.u32 2475754826, %v4698
    %v4702 = vor.u32 %v4700, %v4701
    %v4703 = vshll.u32 2475754826, %v4697
    %v4704 = vshrl.u32 2131351028, %v4698
    %v4705 = vor.u32 %v4703, %v4704
    %v4706 = vshll.u32 2131351028, %v4697
    %v4707 = vshrl.u32 2102212464, %v4698
    %v4708 = vor.u32 %v4706, %v4707
    %v4709 = vshll.u32 2102212464, %v4697
    %v4710 = vshrl.u32 920167782, %v4698
    %v4711 = vor.u32 %v4709, %v4710
    %v4712 = vshll.u32 920167782, %v4697
    %v4713 = vshrl.u32 1326507024, %v4698
    %v4714 = vor.u32 %v4712, %v4713
    %vm4715 = vcmp.lt.s32.totalorder %v4696, 1
    %vm4716 = vcmp.lt.s32.totalorder %v4696, 2
    %vm4717 = vcmp.lt.s32.totalorder %v4696, 3
    %vm4718 = vcmp.lt.s32.totalorder %v4696, 4
    %v4719 = vsel %vm4715, %v4699, %v4702
    %v4720 = vsel %vm4718, %v4708, 2102212464
    %v4721 = vsel %vm4717, %v4705, %v4720
    %v4722 = vsel %vm4716, %v4719, %v4721
    %v4723 = vsel %vm4715, %v4702, %v4705
    %v4724 = vsel %vm4718, %v4711, 920167782
    %v4725 = vsel %vm4717, %v4708, %v4724
    %v4726 = vsel %vm4716, %v4723, %v4725
    %v4727 = vsel %vm4715, %v4705, %v4708
    %v4728 = vsel %vm4718, %v4714, 1326507024
    %v4729 = vsel %vm4717, %v4711, %v4728
    %v4730 = vsel %vm4716, %v4727, %v4729
    %v4731 = vshll.u32 %v4691, 8
    %v4732 = vand.u32 %v4731, 65535
    %v4733 = vshrl.u32 %v4731, 16
    %v4734 = vand.u32 %v4730, 65535
    %v4735 = vshrl.u32 %v4730, 16
    %v4736 = vmul.u32 %v4732, %v4734
    %v4737 = vmul.u32 %v4732, %v4735
    %v4738 = vmul.u32 %v4733, %v4734
    %v4739 = vmul.u32 %v4733, %v4735
    %v4740 = vshll.u32 %v4737, 16
    %v4741 = vshrl.u32 %v4737, 16
    %v4742 = vshll.u32 %v4738, 16
    %v4743 = vshrl.u32 %v4738, 16
    %vm4744 = vc.u32 %v4736, %v4740
    %v4745 = vsel %vm4744, 1, 0
    %v4746 = vadd.s32 %v4736, %v4740
    %v4747 = vadd.s32 %v4739, %v4745
    %vm4748 = vc.u32 %v4746, %v4742
    %v4749 = vsel %vm4748, 1, 0
    %v4750 = vadd.s32 %v4746, %v4742
    %v4751 = vadd.s32 %v4747, %v4749
    %v4752 = vadd.s32 %v4751, %v4741
    %v4753 = vadd.s32 %v4752, %v4743
    %v4754 = vand.u32 %v4731, 65535
    %v4755 = vshrl.u32 %v4731, 16
    %v4756 = vand.u32 %v4726, 65535
    %v4757 = vshrl.u32 %v4726, 16
    %v4758 = vmul.u32 %v4754, %v4756
    %v4759 = vmul.u32 %v4754, %v4757
    %v4760 = vmul.u32 %v4755, %v4756
    %v4761 = vmul.u32 %v4755, %v4757
    %v4762 = vshll.u32 %v4759, 16
    %v4763 = vshrl.u32 %v4759, 16
    %v4764 = vshll.u32 %v4760, 16
    %v4765 = vshrl.u32 %v4760, 16
    %vm4766 = vc.u32 %v4758, %v4762
    %v4767 = vsel %vm4766, 1, 0
    %v4768 = vadd.s32 %v4758, %v4762
    %v4769 = vadd.s32 %v4761, %v4767
    %vm4770 = vc.u32 %v4768, %v4764
    %v4771 = vsel %vm4770, 1, 0
    %v4772 = vadd.s32 %v4768, %v4764
    %v4773 = vadd.s32 %v4769, %v4771
    %v4774 = vadd.s32 %v4773, %v4763
    %v4775 = vadd.s32 %v4774, %v4765
    %v4776 = vmul.u32 %v4731, %v4722
    %v4777 = vadd.s32 %v4753, %v4772
    %vm4778 = vc.u32 %v4753, %v4772
    %v4779 = vadd.s32 %v4775, 1
    %v4780 = vsel %vm4778, %v4779, %v4775
    %v4781 = vadd.s32 %v4776, %v4780
    %v4782 = vadd.s32 %v4781, 536870912
    %v4783 = vshrl.u32 %v4782, 30
    %v4784 = vshll.u32 %v4783, 30
    %v4785 = vsub.s32 %v4781, %v4784
    %vm4786 = vcmp.lt.s32.totalorder %v4785, 0
    %v4787 = vsub.s32 0, %v4785
    %v4788 = vsel %vm4786, %v4787, %v4785
    %v4789 = vclz %v4788
    %v4790 = vsub.s32 %v4789, 2
    %vm4791 = vcmp.gt.s32.totalorder 0, %v4790
    %v4792 = vsel %vm4791, 0, %v4790
    %v4793 = vsub.s32 32, %v4792
    %v4794 = vshll.u32 %v4785, %v4792
    %v4795 = vshrl.u32 %v4777, %v4793
    %v4796 = vor.u32 %v4794, %v4795
    %v4797 = vsub.s32 4294967266, %v4792
    %v4798 = vadd.s32 %v4797, 127
    %v4799 = vshll.u32 %v4798, 23
    %v4800 = vor.u32 4788187, %v4799
    %v4801 = vand.u32 2147483647, %v4800
    %v4803 = vcvt.s32.f32 %v4796
    %v4804 = vmul.f32 %v4803, %v4801
    %v4805 = vxor.u32 %v4804, 2147483648
    %v4806 = vsel %vm4685, %v4805, %v4804
    %v4807 = vsub.s32 4, %v4783
    %v4808 = vsel %vm4685, %v4807, %v4783
    %v4809 = vsel %vm4684, %v4059, %v4806
    %v4810 = vsel %vm4684, 0, %v4808
    %v4811 = vmul.f32 %v4809, %v4809
    %v4812 = vmul.f32 %v4811, -0.001358992
    %v4813 = vadd.f32 %v4812, 0.041655596
    %v4814 = vmul.f32 %v4811, %v4813
    %v4815 = vadd.f32 %v4814, -0.4999988
    %v4816 = vmul.f32 %v4811, %v4815
    %v4817 = vadd.f32 1.0, %v4816
    %v4818 = vmul.f32 %v4809, %v4809
    %v4819 = vmul.f32 %v4818, -0.00019511016
    %v4820 = vadd.f32 %v4819, 0.008332121
    %v4821 = vmul.f32 %v4818, %v4820
    %v4822 = vadd.f32 %v4821, -0.16666654
    %v4823 = vmul.f32 %v4818, %v4822
    %v4824 = vadd.f32 %v4823, 1.0
    %v4825 = vmul.f32 %v4824, %v4809
    %vm4826 = vweird.f32 %v4059
    %v4827 = vadd.s32 %v4810, 3
    %v4828 = vand.u32 %v4827, 3
    %vm4829 = vcmp.lt.s32.totalorder %v4828, 2
    %vm4830 = vcmp.eq.s32.totalorder %v4828, 0
    %v4831 = vxor.u32 %v4825, 2147483648
    %v4832 = vsel %vm4830, %v4817, %v4831
    %vm4833 = vcmp.eq.s32.totalorder %v4828, 2
    %v4834 = vxor.u32 %v4817, 2147483648
    %v4835 = vsel %vm4833, %v4834, %v4825
    %v4836 = vsel %vm4829, %v4832, %v4835
    %v4837 = vsel %vm4826, nan, %v4836
    %v4838 = vand.u32 2147483647, %v4060
    %vm4839 = vcmp.le.f32.partialorder %v4838, 0.7853982
    %vm4840 = vcmp.lt.s32.totalorder %v4060, 0
    %v4841 = vand.u32 %v4060, 2139095040
    %v4842 = vshrl.u32 %v4841, 23
    %v4843 = vsub.s32 %v4842, 127
    %v4844 = vand.u32 2147483647, %v4060
    %v4845 = vand.u32 %v4844, 8388607
    %v4846 = vor.u32 %v4845, 8388608
    %v4847 = vsub.s32 0, %v4846
    %v4848 = vadd.s32 %v4843, 1
    %vm4849 = vcmp.gt.s32.totalorder %v4848, 0
    %v4850 = vsel %vm4849, %v4848, 0
    %v4851 = vshrl.u32 %v4850, 5
    %v4852 = vand.u32 %v4850, 31
    %v4853 = vsub.s32 32, %v4852
    %v4854 = vshrl.u32 683565275, %v4853
    %v4855 = vshll.u32 683565275, %v4852
    %v4856 = vshrl.u32 2475754826, %v4853
    %v4857 = vor.u32 %v4855, %v4856
    %v4858 = vshll.u32 2475754826, %v4852
    %v4859 = vshrl.u32 2131351028, %v4853
    %v4860 = vor.u32 %v4858, %v4859
    %v4861 = vshll.u32 2131351028, %v4852
    %v4862 = vshrl.u32 2102212464, %v4853
    %v4863 = vor.u32 %v4861, %v4862
    %v4864 = vshll.u32 2102212464, %v4852
    %v4865 = vshrl.u32 920167782, %v4853
    %v4866 = vor.u32 %v4864, %v4865
    %v4867 = vshll.u32 920167782, %v4852
    %v4868 = vshrl.u32 1326507024, %v4853
    %v4869 = vor.u32 %v4867, %v4868
    %vm4870 = vcmp.lt.s32.totalorder %v4851, 1
    %vm4871 = vcmp.lt.s32.totalorder %v4851, 2
    %vm4872 = vcmp.lt.s32.totalorder %v4851, 3
    %vm4873 = vcmp.lt.s32.totalorder %v4851, 4
    %v4874 = vsel %vm4870, %v4854, %v4857
    %v4875 = vsel %vm4873, %v4863, 2102212464
    %v4876 = vsel %vm4872, %v4860, %v4875
    %v4877 = vsel %vm4871, %v4874, %v4876
    %v4878 = vsel %vm4870, %v4857, %v4860
    %v4879 = vsel %vm4873, %v4866, 920167782
    %v4880 = vsel %vm4872, %v4863, %v4879
    %v4881 = vsel %vm4871, %v4878, %v4880
    %v4882 = vsel %vm4870, %v4860, %v4863
    %v4883 = vsel %vm4873, %v4869, 1326507024
    %v4884 = vsel %vm4872, %v4866, %v4883
    %v4885 = vsel %vm4871, %v4882, %v4884
    %v4886 = vshll.u32 %v4846, 8
    %v4887 = vand.u32 %v4886, 65535
    %v4888 = vshrl.u32 %v4886, 16
    %v4889 = vand.u32 %v4885, 65535
    %v4890 = vshrl.u32 %v4885, 16
    %v4891 = vmul.u32 %v4887, %v4889
    %v4892 = vmul.u32 %v4887, %v4890
    %v4893 = vmul.u32 %v4888, %v4889
    %v4894 = vmul.u32 %v4888, %v4890
    %v4895 = vshll.u32 %v4892, 16
    %v4896 = vshrl.u32 %v4892, 16
    %v4897 = vshll.u32 %v4893, 16
    %v4898 = vshrl.u32 %v4893, 16
    %vm4899 = vc.u32 %v4891, %v4895
    %v4900 = vsel %vm4899, 1, 0
    %v4901 = vadd.s32 %v4891, %v4895
    %v4902 = vadd.s32 %v4894, %v4900
    %vm4903 = vc.u32 %v4901, %v4897
    %v4904 = vsel %vm4903, 1, 0
    %v4905 = vadd.s32 %v4901, %v4897
    %v4906 = vadd.s32 %v4902, %v4904
    %v4907 = vadd.s32 %v4906, %v4896
    %v4908 = vadd.s32 %v4907, %v4898
    %v4909 = vand.u32 %v4886, 65535
    %v4910 = vshrl.u32 %v4886, 16
    %v4911 = vand.u32 %v4881, 65535
    %v4912 = vshrl.u32 %v4881, 16
    %v4913 = vmul.u32 %v4909, %v4911
    %v4914 = vmul.u32 %v4909, %v4912
    %v4915 = vmul.u32 %v4910, %v4911
    %v4916 = vmul.u32 %v4910, %v4912
    %v4917 = vshll.u32 %v4914, 16
    %v4918 = vshrl.u32 %v4914, 16
    %v4919 = vshll.u32 %v4915, 16
    %v4920 = vshrl.u32 %v4915, 16
    %vm4921 = vc.u32 %v4913, %v4917
    %v4922 = vsel %vm4921, 1, 0
    %v4923 = vadd.s32 %v4913, %v4917
    %v4924 = vadd.s32 %v4916, %v4922
    %vm4925 = vc.u32 %v4923, %v4919
    %v4926 = vsel %vm4925, 1, 0
    %v4927 = vadd.s32 %v4923, %v4919
    %v4928 = vadd.s32 %v4924, %v4926
    %v4929 = vadd.s32 %v4928, %v4918
    %v4930 = vadd.s32 %v4929, %v4920
    %v4931 = vmul.u32 %v4886, %v4877
    %v4932 = vadd.s32 %v4908, %v4927
    %vm4933 = vc.u32 %v4908, %v4927
    %v4934 = vadd.s32 %v4930, 1
    %v4935 = vsel %vm4933, %v4934, %v4930
    %v4936 = vadd.s32 %v4931, %v4935
    %v4937 = vadd.s32 %v4936, 536870912
    %v4938 = vshrl.u32 %v4937, 30
    %v4939 = vshll.u32 %v4938, 30
    %v4940 = vsub.s32 %v4936, %v4939
    %vm4941 = vcmp.lt.s32.totalorder %v4940, 0
    %v4942 = vsub.s32 0, %v4940
    %v4943 = vsel %vm4941, %v4942, %v4940
    %v4944 = vclz %v4943
    %v4945 = vsub.s32 %v4944, 2
    %vm4946 = vcmp.gt.s32.totalorder 0, %v4945
    %v4947 = vsel %vm4946, 0, %v4945
    %v4948 = vsub.s32 32, %v4947
    %v4949 = vshll.u32 %v4940, %v4947
    %v4950 = vshrl.u32 %v4932, %v4948
    %v4951 = vor.u32 %v4949, %v4950
    %v4952 = vsub.s32 4294967266, %v4947
    %v4953 = vadd.s32 %v4952, 127
    %v4954 = vshll.u32 %v4953, 23
    %v4955 = vor.u32 4788187, %v4954
    %v4956 = vand.u32 2147483647, %v4955
    %v4958 = vcvt.s32.f32 %v4951
    %v4959 = vmul.f32 %v4958, %v4956
    %v4960 = vxor.u32 %v4959, 2147483648
    %v4961 = vsel %vm4840, %v4960, %v4959
    %v4962 = vsub.s32 4, %v4938
    %v4963 = vsel %vm4840, %v4962, %v4938
    %v4964 = vsel %vm4839, %v4060, %v4961
    %v4965 = vsel %vm4839, 0, %v4963
    %v4966 = vmul.f32 %v4964, %v4964
    %v4967 = vmul.f32 %v4966, -0.001358992
    %v4968 = vadd.f32 %v4967, 0.041655596
    %v4969 = vmul.f32 %v4966, %v4968
    %v4970 = vadd.f32 %v4969, -0.4999988
    %v4971 = vmul.f32 %v4966, %v4970
    %v4972 = vadd.f32 1.0, %v4971
    %v4973 = vmul.f32 %v4964, %v4964
    %v4974 = vmul.f32 %v4973, -0.00019511016
    %v4975 = vadd.f32 %v4974, 0.008332121
    %v4976 = vmul.f32 %v4973, %v4975
    %v4977 = vadd.f32 %v4976, -0.16666654
    %v4978 = vmul.f32 %v4973, %v4977
    %v4979 = vadd.f32 %v4978, 1.0
    %v4980 = vmul.f32 %v4979, %v4964
    %vm4981 = vweird.f32 %v4060
    %v4982 = vadd.s32 %v4965, 3
    %v4983 = vand.u32 %v4982, 3
    %vm4984 = vcmp.lt.s32.totalorder %v4983, 2
    %vm4985 = vcmp.eq.s32.totalorder %v4983, 0
    %v4986 = vxor.u32 %v4980, 2147483648
    %v4987 = vsel %vm4985, %v4972, %v4986
    %vm4988 = vcmp.eq.s32.totalorder %v4983, 2
    %v4989 = vxor.u32 %v4972, 2147483648
    %v4990 = vsel %vm4988, %v4989, %v4980
    %v4991 = vsel %vm4984, %v4987, %v4990
    %v4992 = vsel %vm4981, nan, %v4991
    %v4993 = vand.u32 2147483647, %v4061
    %vm4994 = vcmp.le.f32.partialorder %v4993, 0.7853982
    %vm4995 = vcmp.lt.s32.totalorder %v4061, 0
    %v4996 = vand.u32 %v4061, 2139095040
    %v4997 = vshrl.u32 %v4996, 23
    %v4998 = vsub.s32 %v4997, 127
    %v4999 = vand.u32 2147483647, %v4061
    %v5000 = vand.u32 %v4999, 8388607
    %v5001 = vor.u32 %v5000, 8388608
    %v5002 = vsub.s32 0, %v5001
    %v5003 = vadd.s32 %v4998, 1
    %vm5004 = vcmp.gt.s32.totalorder %v5003, 0
    %v5005 = vsel %vm5004, %v5003, 0
    %v5006 = vshrl.u32 %v5005, 5
    %v5007 = vand.u32 %v5005, 31
    %v5008 = vsub.s32 32, %v5007
    %v5009 = vshrl.u32 683565275, %v5008
    %v5010 = vshll.u32 683565275, %v5007
    %v5011 = vshrl.u32 2475754826, %v5008
    %v5012 = vor.u32 %v5010, %v5011
    %v5013 = vshll.u32 2475754826, %v5007
    %v5014 = vshrl.u32 2131351028, %v5008
    %v5015 = vor.u32 %v5013, %v5014
    %v5016 = vshll.u32 2131351028, %v5007
    %v5017 = vshrl.u32 2102212464, %v5008
    %v5018 = vor.u32 %v5016, %v5017
    %v5019 = vshll.u32 2102212464, %v5007
    %v5020 = vshrl.u32 920167782, %v5008
    %v5021 = vor.u32 %v5019, %v5020
    %v5022 = vshll.u32 920167782, %v5007
    %v5023 = vshrl.u32 1326507024, %v5008
    %v5024 = vor.u32 %v5022, %v5023
    %vm5025 = vcmp.lt.s32.totalorder %v5006, 1
    %vm5026 = vcmp.lt.s32.totalorder %v5006, 2
    %vm5027 = vcmp.lt.s32.totalorder %v5006, 3
    %vm5028 = vcmp.lt.s32.totalorder %v5006, 4
    %v5029 = vsel %vm5025, %v5009, %v5012
    %v5030 = vsel %vm5028, %v5018, 2102212464
    %v5031 = vsel %vm5027, %v5015, %v5030
    %v5032 = vsel %vm5026, %v5029, %v5031
    %v5033 = vsel %vm5025, %v5012, %v5015
    %v5034 = vsel %vm5028, %v5021, 920167782
    %v5035 = vsel %vm5027, %v5018, %v5034
    %v5036 = vsel %vm5026, %v5033, %v5035
    %v5037 = vsel %vm5025, %v5015, %v5018
    %v5038 = vsel %vm5028, %v5024, 1326507024
    %v5039 = vsel %vm5027, %v5021, %v5038
    %v5040 = vsel %vm5026, %v5037, %v5039
    %v5041 = vshll.u32 %v5001, 8
    %v5042 = vand.u32 %v5041, 65535
    %v5043 = vshrl.u32 %v5041, 16
    %v5044 = vand.u32 %v5040, 65535
    %v5045 = vshrl.u32 %v5040, 16
    %v5046 = vmul.u32 %v5042, %v5044
    %v5047 = vmul.u32 %v5042, %v5045
    %v5048 = vmul.u32 %v5043, %v5044
    %v5049 = vmul.u32 %v5043, %v5045
    %v5050 = vshll.u32 %v5047, 16
    %v5051 = vshrl.u32 %v5047, 16
    %v5052 = vshll.u32 %v5048, 16
    %v5053 = vshrl.u32 %v5048, 16
    %vm5054 = vc.u32 %v5046, %v5050
    %v5055 = vsel %vm5054, 1, 0
    %v5056 = vadd.s32 %v5046, %v5050
    %v5057 = vadd.s32 %v5049, %v5055
    %vm5058 = vc.u32 %v5056, %v5052
    %v5059 = vsel %vm5058, 1, 0
    %v5060 = vadd.s32 %v5056, %v5052
    %v5061 = vadd.s32 %v5057, %v5059
    %v5062 = vadd.s32 %v5061, %v5051
    %v5063 = vadd.s32 %v5062, %v5053
    %v5064 = vand.u32 %v5041, 65535
    %v5065 = vshrl.u32 %v5041, 16
    %v5066 = vand.u32 %v5036, 65535
    %v5067 = vshrl.u32 %v5036, 16
    %v5068 = vmul.u32 %v5064, %v5066
    %v5069 = vmul.u32 %v5064, %v5067
    %v5070 = vmul.u32 %v5065, %v5066
    %v5071 = vmul.u32 %v5065, %v5067
    %v5072 = vshll.u32 %v5069, 16
    %v5073 = vshrl.u32 %v5069, 16
    %v5074 = vshll.u32 %v5070, 16
    %v5075 = vshrl.u32 %v5070, 16
    %vm5076 = vc.u32 %v5068, %v5072
    %v5077 = vsel %vm5076, 1, 0
    %v5078 = vadd.s32 %v5068, %v5072
    %v5079 = vadd.s32 %v5071, %v5077
    %vm5080 = vc.u32 %v5078, %v5074
    %v5081 = vsel %vm5080, 1, 0
    %v5082 = vadd.s32 %v5078, %v5074
    %v5083 = vadd.s32 %v5079, %v5081
    %v5084 = vadd.s32 %v5083, %v5073
    %v5085 = vadd.s32 %v5084, %v5075
    %v5086 = vmul.u32 %v5041, %v5032
    %v5087 = vadd.s32 %v5063, %v5082
    %vm5088 = vc.u32 %v5063, %v5082
    %v5089 = vadd.s32 %v5085, 1
    %v5090 = vsel %vm5088, %v5089, %v5085
    %v5091 = vadd.s32 %v5086, %v5090
    %v5092 = vadd.s32 %v5091, 536870912
    %v5093 = vshrl.u32 %v5092, 30
    %v5094 = vshll.u32 %v5093, 30
    %v5095 = vsub.s32 %v5091, %v5094
    %vm5096 = vcmp.lt.s32.totalorder %v5095, 0
    %v5097 = vsub.s32 0, %v5095
    %v5098 = vsel %vm5096, %v5097, %v5095
    %v5099 = vclz %v5098
    %v5100 = vsub.s32 %v5099, 2
    %vm5101 = vcmp.gt.s32.totalorder 0, %v5100
    %v5102 = vsel %vm5101, 0, %v5100
    %v5103 = vsub.s32 32, %v5102
    %v5104 = vshll.u32 %v5095, %v5102
    %v5105 = vshrl.u32 %v5087, %v5103
    %v5106 = vor.u32 %v5104, %v5105
    %v5107 = vsub.s32 4294967266, %v5102
    %v5108 = vadd.s32 %v5107, 127
    %v5109 = vshll.u32 %v5108, 23
    %v5110 = vor.u32 4788187, %v5109
    %v5111 = vand.u32 2147483647, %v5110
    %v5113 = vcvt.s32.f32 %v5106
    %v5114 = vmul.f32 %v5113, %v5111
    %v5115 = vxor.u32 %v5114, 2147483648
    %v5116 = vsel %vm4995, %v5115, %v5114
    %v5117 = vsub.s32 4, %v5093
    %v5118 = vsel %vm4995, %v5117, %v5093
    %v5119 = vsel %vm4994, %v4061, %v5116
    %v5120 = vsel %vm4994, 0, %v5118
    %v5121 = vmul.f32 %v5119, %v5119
    %v5122 = vmul.f32 %v5121, -0.001358992
    %v5123 = vadd.f32 %v5122, 0.041655596
    %v5124 = vmul.f32 %v5121, %v5123
    %v5125 = vadd.f32 %v5124, -0.4999988
    %v5126 = vmul.f32 %v5121, %v5125
    %v5127 = vadd.f32 1.0, %v5126
    %v5128 = vmul.f32 %v5119, %v5119
    %v5129 = vmul.f32 %v5128, -0.00019511016
    %v5130 = vadd.f32 %v5129, 0.008332121
    %v5131 = vmul.f32 %v5128, %v5130
    %v5132 = vadd.f32 %v5131, -0.16666654
    %v5133 = vmul.f32 %v5128, %v5132
    %v5134 = vadd.f32 %v5133, 1.0
    %v5135 = vmul.f32 %v5134, %v5119
    %vm5136 = vweird.f32 %v4061
    %v5137 = vadd.s32 %v5120, 3
    %v5138 = vand.u32 %v5137, 3
    %vm5139 = vcmp.lt.s32.totalorder %v5138, 2
    %vm5140 = vcmp.eq.s32.totalorder %v5138, 0
    %v5141 = vxor.u32 %v5135, 2147483648
    %v5142 = vsel %vm5140, %v5127, %v5141
    %vm5143 = vcmp.eq.s32.totalorder %v5138, 2
    %v5144 = vxor.u32 %v5127, 2147483648
    %v5145 = vsel %vm5143, %v5144, %v5135
    %v5146 = vsel %vm5139, %v5142, %v5145
    %v5147 = vsel %vm5136, nan, %v5146
    %v5148 = vand.u32 2147483647, %v4062
    %vm5149 = vcmp.le.f32.partialorder %v5148, 0.7853982
    %vm5150 = vcmp.lt.s32.totalorder %v4062, 0
    %v5151 = vand.u32 %v4062, 2139095040
    %v5152 = vshrl.u32 %v5151, 23
    %v5153 = vsub.s32 %v5152, 127
    %v5154 = vand.u32 2147483647, %v4062
    %v5155 = vand.u32 %v5154, 8388607
    %v5156 = vor.u32 %v5155, 8388608
    %v5157 = vsub.s32 0, %v5156
    %v5158 = vadd.s32 %v5153, 1
    %vm5159 = vcmp.gt.s32.totalorder %v5158, 0
    %v5160 = vsel %vm5159, %v5158, 0
    %v5161 = vshrl.u32 %v5160, 5
    %v5162 = vand.u32 %v5160, 31
    %v5163 = vsub.s32 32, %v5162
    %v5164 = vshrl.u32 683565275, %v5163
    %v5165 = vshll.u32 683565275, %v5162
    %v5166 = vshrl.u32 2475754826, %v5163
    %v5167 = vor.u32 %v5165, %v5166
    %v5168 = vshll.u32 2475754826, %v5162
    %v5169 = vshrl.u32 2131351028, %v5163
    %v5170 = vor.u32 %v5168, %v5169
    %v5171 = vshll.u32 2131351028, %v5162
    %v5172 = vshrl.u32 2102212464, %v5163
    %v5173 = vor.u32 %v5171, %v5172
    %v5174 = vshll.u32 2102212464, %v5162
    %v5175 = vshrl.u32 920167782, %v5163
    %v5176 = vor.u32 %v5174, %v5175
    %v5177 = vshll.u32 920167782, %v5162
    %v5178 = vshrl.u32 1326507024, %v5163
    %v5179 = vor.u32 %v5177, %v5178
    %vm5180 = vcmp.lt.s32.totalorder %v5161, 1
    %vm5181 = vcmp.lt.s32.totalorder %v5161, 2
    %vm5182 = vcmp.lt.s32.totalorder %v5161, 3
    %vm5183 = vcmp.lt.s32.totalorder %v5161, 4
    %v5184 = vsel %vm5180, %v5164, %v5167
    %v5185 = vsel %vm5183, %v5173, 2102212464
    %v5186 = vsel %vm5182, %v5170, %v5185
    %v5187 = vsel %vm5181, %v5184, %v5186
    %v5188 = vsel %vm5180, %v5167, %v5170
    %v5189 = vsel %vm5183, %v5176, 920167782
    %v5190 = vsel %vm5182, %v5173, %v5189
    %v5191 = vsel %vm5181, %v5188, %v5190
    %v5192 = vsel %vm5180, %v5170, %v5173
    %v5193 = vsel %vm5183, %v5179, 1326507024
    %v5194 = vsel %vm5182, %v5176, %v5193
    %v5195 = vsel %vm5181, %v5192, %v5194
    %v5196 = vshll.u32 %v5156, 8
    %v5197 = vand.u32 %v5196, 65535
    %v5198 = vshrl.u32 %v5196, 16
    %v5199 = vand.u32 %v5195, 65535
    %v5200 = vshrl.u32 %v5195, 16
    %v5201 = vmul.u32 %v5197, %v5199
    %v5202 = vmul.u32 %v5197, %v5200
    %v5203 = vmul.u32 %v5198, %v5199
    %v5204 = vmul.u32 %v5198, %v5200
    %v5205 = vshll.u32 %v5202, 16
    %v5206 = vshrl.u32 %v5202, 16
    %v5207 = vshll.u32 %v5203, 16
    %v5208 = vshrl.u32 %v5203, 16
    %vm5209 = vc.u32 %v5201, %v5205
    %v5210 = vsel %vm5209, 1, 0
    %v5211 = vadd.s32 %v5201, %v5205
    %v5212 = vadd.s32 %v5204, %v5210
    %vm5213 = vc.u32 %v5211, %v5207
    %v5214 = vsel %vm5213, 1, 0
    %v5215 = vadd.s32 %v5211, %v5207
    %v5216 = vadd.s32 %v5212, %v5214
    %v5217 = vadd.s32 %v5216, %v5206
    %v5218 = vadd.s32 %v5217, %v5208
    %v5219 = vand.u32 %v5196, 65535
    %v5220 = vshrl.u32 %v5196, 16
    %v5221 = vand.u32 %v5191, 65535
    %v5222 = vshrl.u32 %v5191, 16
    %v5223 = vmul.u32 %v5219, %v5221
    %v5224 = vmul.u32 %v5219, %v5222
    %v5225 = vmul.u32 %v5220, %v5221
    %v5226 = vmul.u32 %v5220, %v5222
    %v5227 = vshll.u32 %v5224, 16
    %v5228 = vshrl.u32 %v5224, 16
    %v5229 = vshll.u32 %v5225, 16
    %v5230 = vshrl.u32 %v5225, 16
    %vm5231 = vc.u32 %v5223, %v5227
    %v5232 = vsel %vm5231, 1, 0
    %v5233 = vadd.s32 %v5223, %v5227
    %v5234 = vadd.s32 %v5226, %v5232
    %vm5235 = vc.u32 %v5233, %v5229
    %v5236 = vsel %vm5235, 1, 0
    %v5237 = vadd.s32 %v5233, %v5229
    %v5238 = vadd.s32 %v5234, %v5236
    %v5239 = vadd.s32 %v5238, %v5228
    %v5240 = vadd.s32 %v5239, %v5230
    %v5241 = vmul.u32 %v5196, %v5187
    %v5242 = vadd.s32 %v5218, %v5237
    %vm5243 = vc.u32 %v5218, %v5237
    %v5244 = vadd.s32 %v5240, 1
    %v5245 = vsel %vm5243, %v5244, %v5240
    %v5246 = vadd.s32 %v5241, %v5245
    %v5247 = vadd.s32 %v5246, 536870912
    %v5248 = vshrl.u32 %v5247, 30
    %v5249 = vshll.u32 %v5248, 30
    %v5250 = vsub.s32 %v5246, %v5249
    %vm5251 = vcmp.lt.s32.totalorder %v5250, 0
    %v5252 = vsub.s32 0, %v5250
    %v5253 = vsel %vm5251, %v5252, %v5250
    %v5254 = vclz %v5253
    %v5255 = vsub.s32 %v5254, 2
    %vm5256 = vcmp.gt.s32.totalorder 0, %v5255
    %v5257 = vsel %vm5256, 0, %v5255
    %v5258 = vsub.s32 32, %v5257
    %v5259 = vshll.u32 %v5250, %v5257
    %v5260 = vshrl.u32 %v5242, %v5258
    %v5261 = vor.u32 %v5259, %v5260
    %v5262 = vsub.s32 4294967266, %v5257
    %v5263 = vadd.s32 %v5262, 127
    %v5264 = vshll.u32 %v5263, 23
    %v5265 = vor.u32 4788187, %v5264
    %v5266 = vand.u32 2147483647, %v5265
    %v5268 = vcvt.s32.f32 %v5261
    %v5269 = vmul.f32 %v5268, %v5266
    %v5270 = vxor.u32 %v5269, 2147483648
    %v5271 = vsel %vm5150, %v5270, %v5269
    %v5272 = vsub.s32 4, %v5248
    %v5273 = vsel %vm5150, %v5272, %v5248
    %v5274 = vsel %vm5149, %v4062, %v5271
    %v5275 = vsel %vm5149, 0, %v5273
    %v5276 = vmul.f32 %v5274, %v5274
    %v5277 = vmul.f32 %v5276, -0.001358992
    %v5278 = vadd.f32 %v5277, 0.041655596
    %v5279 = vmul.f32 %v5276, %v5278
    %v5280 = vadd.f32 %v5279, -0.4999988
    %v5281 = vmul.f32 %v5276, %v5280
    %v5282 = vadd.f32 1.0, %v5281
    %v5283 = vmul.f32 %v5274, %v5274
    %v5284 = vmul.f32 %v5283, -0.00019511016
    %v5285 = vadd.f32 %v5284, 0.008332121
    %v5286 = vmul.f32 %v5283, %v5285
    %v5287 = vadd.f32 %v5286, -0.16666654
    %v5288 = vmul.f32 %v5283, %v5287
    %v5289 = vadd.f32 %v5288, 1.0
    %v5290 = vmul.f32 %v5289, %v5274
    %vm5291 = vweird.f32 %v4062
    %v5292 = vadd.s32 %v5275, 3
    %v5293 = vand.u32 %v5292, 3
    %vm5294 = vcmp.lt.s32.totalorder %v5293, 2
    %vm5295 = vcmp.eq.s32.totalorder %v5293, 0
    %v5296 = vxor.u32 %v5290, 2147483648
    %v5297 = vsel %vm5295, %v5282, %v5296
    %vm5298 = vcmp.eq.s32.totalorder %v5293, 2
    %v5299 = vxor.u32 %v5282, 2147483648
    %v5300 = vsel %vm5298, %v5299, %v5290
    %v5301 = vsel %vm5294, %v5297, %v5300
    %v5302 = vsel %vm5291, nan, %v5301
    %v5303 = vmul.f32 %v4217, 0.5
    %v5304 = vmul.f32 %v4372, 0.5
    %v5305 = vmul.f32 %v4527, 0.5
    %v5306 = vmul.f32 %v4682, 0.5
    %v5307 = vmul.f32 %v4837, 0.5
    %v5308 = vmul.f32 %v4992, 0.5
    %v5309 = vmul.f32 %v5147, 0.5
    %v5310 = vmul.f32 %v5302, 0.5
    %v5311 = vadd.f32 %v4035, %v5303
    %v5312 = vadd.f32 %v4036, %v5304
    %v5313 = vadd.f32 %v4037, %v5305
    %v5314 = vadd.f32 %v4038, %v5306
    %v5315 = vadd.f32 %v4039, %v5307
    %v5316 = vadd.f32 %v4040, %v5308
    %v5317 = vadd.f32 %v4041, %v5309
    %v5318 = vadd.f32 %v4042, %v5310
    %5319 = vset.pattern.permute.xlu0 7
    %5320 = vperm.xlu0 %5319, %v81
    %v5321 = vpop.permute.xlu0 %5320
    %v5323 = vadd.f32 %v5311, %v5321
    %v5324 = vadd.f32 %v5312, %v5321
    %v5325 = vadd.f32 %v5313, %v5321
    %v5326 = vadd.f32 %v5314, %v5321
    %v5327 = vadd.f32 %v5315, %v5321
    %v5328 = vadd.f32 %v5316, %v5321
    %v5329 = vadd.f32 %v5317, %v5321
    %v5330 = vadd.f32 %v5318, %v5321
    %5331 = vset.pattern.permute.xlu0 8
    %5332 = vperm.xlu0 %5331, %v81
    %v5333 = vpop.permute.xlu0 %5332
    %v5335 = vsub.f32 %v119, %v5333
    %v5336 = vsub.f32 %v120, %v5333
    %v5337 = vsub.f32 %v121, %v5333
    %v5338 = vsub.f32 %v122, %v5333
    %v5339 = vsub.f32 %v123, %v5333
    %v5340 = vsub.f32 %v124, %v5333
    %v5341 = vsub.f32 %v125, %v5333
    %v5342 = vsub.f32 %v126, %v5333
    %v5343 = vsub.f32 %v159, %v5333
    %v5344 = vsub.f32 %v160, %v5333
    %v5345 = vsub.f32 %v161, %v5333
    %v5346 = vsub.f32 %v162, %v5333
    %v5347 = vsub.f32 %v163, %v5333
    %v5348 = vsub.f32 %v164, %v5333
    %v5349 = vsub.f32 %v165, %v5333
    %v5350 = vsub.f32 %v166, %v5333
    %v5351 = vmul.f32 %v5335, %v5335
    %v5352 = vmul.f32 %v5336, %v5336
    %v5353 = vmul.f32 %v5337, %v5337
    %v5354 = vmul.f32 %v5338, %v5338
    %v5355 = vmul.f32 %v5339, %v5339
    %v5356 = vmul.f32 %v5340, %v5340
    %v5357 = vmul.f32 %v5341, %v5341
    %v5358 = vmul.f32 %v5342, %v5342
    %v5359 = vmul.f32 %v5343, %v5343
    %v5360 = vmul.f32 %v5344, %v5344
    %v5361 = vmul.f32 %v5345, %v5345
    %v5362 = vmul.f32 %v5346, %v5346
    %v5363 = vmul.f32 %v5347, %v5347
    %v5364 = vmul.f32 %v5348, %v5348
    %v5365 = vmul.f32 %v5349, %v5349
    %v5366 = vmul.f32 %v5350, %v5350
    %v5367 = vadd.f32 %v5351, %v5359
    %v5368 = vadd.f32 %v5352, %v5360
    %v5369 = vadd.f32 %v5353, %v5361
    %v5370 = vadd.f32 %v5354, %v5362
    %v5371 = vadd.f32 %v5355, %v5363
    %v5372 = vadd.f32 %v5356, %v5364
    %v5373 = vadd.f32 %v5357, %v5365
    %v5374 = vadd.f32 %v5358, %v5366
    %5375 = vset.pattern.permute.xlu0 9
    %5376 = vperm.xlu0 %5375, %v81
    %v5377 = vpop.permute.xlu0 %5376
    %v5379 = vmul.f32 %v5367, %v5377
    %v5380 = vmul.f32 %v5368, %v5377
    %v5381 = vmul.f32 %v5369, %v5377
    %v5382 = vmul.f32 %v5370, %v5377
    %v5383 = vmul.f32 %v5371, %v5377
    %v5384 = vmul.f32 %v5372, %v5377
    %v5385 = vmul.f32 %v5373, %v5377
    %v5386 = vmul.f32 %v5374, %v5377
    %v5387 = vmul.f32 %v5379, 1.442695
    %v5388 = vpow.pop %v5387
    %v5389 = vmul.f32 %v5380, 1.442695
    %v5390 = vpow.pop %v5389
    %v5391 = vmul.f32 %v5381, 1.442695
    %v5392 = vpow.pop %v5391
    %v5393 = vmul.f32 %v5382, 1.442695
    %v5394 = vpow.pop %v5393
    %v5395 = vmul.f32 %v5383, 1.442695
    %v5396 = vpow.pop %v5395
    %v5397 = vmul.f32 %v5384, 1.442695
    %v5398 = vpow.pop %v5397
    %v5399 = vmul.f32 %v5385, 1.442695
    %v5400 = vpow.pop %v5399
    %v5401 = vmul.f32 %v5386, 1.442695
    %v5402 = vpow.pop %v5401
    %v5403 = vadd.f32 %v5323, %v5388
    %v5404 = vadd.f32 %v5324, %v5390
    %v5405 = vadd.f32 %v5325, %v5392
    %v5406 = vadd.f32 %v5326, %v5394
    %v5407 = vadd.f32 %v5327, %v5396
    %v5408 = vadd.f32 %v5328, %v5398
    %v5409 = vadd.f32 %v5329, %v5400
    %v5410 = vadd.f32 %v5330, %v5402
    %5411 = vset.pattern.permute.xlu0 10
    %5412 = vperm.xlu0 %5411, %v81
    %v5413 = vpop.permute.xlu0 %5412
    %v5415 = vsub.f32 %v87, %v5413
    %v5416 = vsub.f32 %v88, %v5413
    %v5417 = vsub.f32 %v89, %v5413
    %v5418 = vsub.f32 %v90, %v5413
    %v5419 = vsub.f32 %v91, %v5413
    %v5420 = vsub.f32 %v92, %v5413
    %v5421 = vsub.f32 %v93, %v5413
    %v5422 = vsub.f32 %v94, %v5413
    %v5423 = vmul.f32 %v5415, %v5415
    %v5424 = vmul.f32 %v5416, %v5416
    %v5425 = vmul.f32 %v5417, %v5417
    %v5426 = vmul.f32 %v5418, %v5418
    %v5427 = vmul.f32 %v5419, %v5419
    %v5428 = vmul.f32 %v5420, %v5420
    %v5429 = vmul.f32 %v5421, %v5421
    %v5430 = vmul.f32 %v5422, %v5422
    %vm5431 = vcmp.lt.f32.partialorder %v5423, 10.0
    %vm5432 = vcmp.lt.f32.partialorder %v5424, 10.0
    %vm5433 = vcmp.lt.f32.partialorder %v5425, 10.0
    %vm5434 = vcmp.lt.f32.partialorder %v5426, 10.0
    %vm5435 = vcmp.lt.f32.partialorder %v5427, 10.0
    %vm5436 = vcmp.lt.f32.partialorder %v5428, 10.0
    %vm5437 = vcmp.lt.f32.partialorder %v5429, 10.0
    %vm5438 = vcmp.lt.f32.partialorder %v5430, 10.0
    %v5439 = vsel %vm5431, 1, 0
    %v5440 = vsel %vm5432, 1, 0
    %v5441 = vsel %vm5433, 1, 0
    %v5442 = vsel %vm5434, 1, 0
    %v5443 = vsel %vm5435, 1, 0
    %v5444 = vsel %vm5436, 1, 0
    %v5445 = vsel %vm5437, 1, 0
    %v5446 = vsel %vm5438, 1, 0
    %v5447 = vcvt.s32.f32 %v5439
    %v5448 = vcvt.s32.f32 %v5440
    %v5449 = vcvt.s32.f32 %v5441
    %v5450 = vcvt.s32.f32 %v5442
    %v5451 = vcvt.s32.f32 %v5443
    %v5452 = vcvt.s32.f32 %v5444
    %v5453 = vcvt.s32.f32 %v5445
    %v5454 = vcvt.s32.f32 %v5446
    %v5455 = vadd.f32 %v5403, %v5447
    %v5456 = vadd.f32 %v5404, %v5448
    %v5457 = vadd.f32 %v5405, %v5449
    %v5458 = vadd.f32 %v5406, %v5450
    %v5459 = vadd.f32 %v5407, %v5451
    %v5460 = vadd.f32 %v5408, %v5452
    %v5461 = vadd.f32 %v5409, %v5453
    %v5462 = vadd.f32 %v5410, %v5454
    %5463 = vset.pattern.permute.xlu0 11
    %5464 = vperm.xlu0 %5463, %v81
    %v5465 = vpop.permute.xlu0 %5464
    %v5467 = vmul.f32 %v119, %v5465
    %v5468 = vmul.f32 %v120, %v5465
    %v5469 = vmul.f32 %v121, %v5465
    %v5470 = vmul.f32 %v122, %v5465
    %v5471 = vmul.f32 %v123, %v5465
    %v5472 = vmul.f32 %v124, %v5465
    %v5473 = vmul.f32 %v125, %v5465
    %v5474 = vmul.f32 %v126, %v5465
    %v5475 = vadd.f32 %v5467, 0.0001
    %v5476 = vadd.f32 %v5468, 0.0001
    %v5477 = vadd.f32 %v5469, 0.0001
    %v5478 = vadd.f32 %v5470, 0.0001
    %v5479 = vadd.f32 %v5471, 0.0001
    %v5480 = vadd.f32 %v5472, 0.0001
    %v5481 = vadd.f32 %v5473, 0.0001
    %v5482 = vadd.f32 %v5474, 0.0001
    %v5483 = vfloor.f32 %v5475
    %v5484 = vfloor.f32 %v5476
    %v5485 = vfloor.f32 %v5477
    %v5486 = vfloor.f32 %v5478
    %v5487 = vfloor.f32 %v5479
    %v5488 = vfloor.f32 %v5480
    %v5489 = vfloor.f32 %v5481
    %v5490 = vfloor.f32 %v5482
    %v5491 = vmul.f32 %v159, %v5465
    %v5492 = vmul.f32 %v160, %v5465
    %v5493 = vmul.f32 %v161, %v5465
    %v5494 = vmul.f32 %v162, %v5465
    %v5495 = vmul.f32 %v163, %v5465
    %v5496 = vmul.f32 %v164, %v5465
    %v5497 = vmul.f32 %v165, %v5465
    %v5498 = vmul.f32 %v166, %v5465
    %v5499 = vadd.f32 %v5491, 0.0001
    %v5500 = vadd.f32 %v5492, 0.0001
    %v5501 = vadd.f32 %v5493, 0.0001
    %v5502 = vadd.f32 %v5494, 0.0001
    %v5503 = vadd.f32 %v5495, 0.0001
    %v5504 = vadd.f32 %v5496, 0.0001
    %v5505 = vadd.f32 %v5497, 0.0001
    %v5506 = vadd.f32 %v5498, 0.0001
    %v5507 = vfloor.f32 %v5499
    %v5508 = vfloor.f32 %v5500
    %v5509 = vfloor.f32 %v5501
    %v5510 = vfloor.f32 %v5502
    %v5511 = vfloor.f32 %v5503
    %v5512 = vfloor.f32 %v5504
    %v5513 = vfloor.f32 %v5505
    %v5514 = vfloor.f32 %v5506
    %v5515 = vadd.f32 %v5483, %v5507
    %v5516 = vadd.f32 %v5484, %v5508
    %v5517 = vadd.f32 %v5485, %v5509
    %v5518 = vadd.f32 %v5486, %v5510
    %v5519 = vadd.f32 %v5487, %v5511
    %v5520 = vadd.f32 %v5488, %v5512
    %v5521 = vadd.f32 %v5489, %v5513
    %v5522 = vadd.f32 %v5490, %v5514
    %v5523 = vmul.f32 %v5515, 0.5
    %v5524 = vmul.f32 %v5516, 0.5
    %v5525 = vmul.f32 %v5517, 0.5
    %v5526 = vmul.f32 %v5518, 0.5
    %v5527 = vmul.f32 %v5519, 0.5
    %v5528 = vmul.f32 %v5520, 0.5
    %v5529 = vmul.f32 %v5521, 0.5
    %v5530 = vmul.f32 %v5522, 0.5
    %v5531 = vfloor.f32 %v5523
    %v5532 = vfloor.f32 %v5524
    %v5533 = vfloor.f32 %v5525
    %v5534 = vfloor.f32 %v5526
    %v5535 = vfloor.f32 %v5527
    %v5536 = vfloor.f32 %v5528
    %v5537 = vfloor.f32 %v5529
    %v5538 = vfloor.f32 %v5530
    %v5539 = vmul.f32 %v5531, 2.0
    %v5540 = vmul.f32 %v5532, 2.0
    %v5541 = vmul.f32 %v5533, 2.0
    %v5542 = vmul.f32 %v5534, 2.0
    %v5543 = vmul.f32 %v5535, 2.0
    %v5544 = vmul.f32 %v5536, 2.0
    %v5545 = vmul.f32 %v5537, 2.0
    %v5546 = vmul.f32 %v5538, 2.0
    %v5547 = vsub.f32 %v5515, %v5539
    %v5548 = vsub.f32 %v5516, %v5540
    %v5549 = vsub.f32 %v5517, %v5541
    %v5550 = vsub.f32 %v5518, %v5542
    %v5551 = vsub.f32 %v5519, %v5543
    %v5552 = vsub.f32 %v5520, %v5544
    %v5553 = vsub.f32 %v5521, %v5545
    %v5554 = vsub.f32 %v5522, %v5546
    %v5555 = vmul.f32 %v5547, 0.3
    %v5556 = vmul.f32 %v5548, 0.3
    %v5557 = vmul.f32 %v5549, 0.3
    %v5558 = vmul.f32 %v5550, 0.3
    %v5559 = vmul.f32 %v5551, 0.3
    %v5560 = vmul.f32 %v5552, 0.3
    %v5561 = vmul.f32 %v5553, 0.3
    %v5562 = vmul.f32 %v5554, 0.3
    %v5563 = vadd.f32 %v5455, %v5555
    %v5564 = vadd.f32 %v5456, %v5556
    %v5565 = vadd.f32 %v5457, %v5557
    %v5566 = vadd.f32 %v5458, %v5558
    %v5567 = vadd.f32 %v5459, %v5559
    %v5568 = vadd.f32 %v5460, %v5560
    %v5569 = vadd.f32 %v5461, %v5561
    %v5570 = vadd.f32 %v5462, %v5562
    %5571 = vset.pattern.permute.xlu0 12
    %5572 = vperm.xlu0 %5571, %v81
    %v5573 = vpop.permute.xlu0 %5572
    %v5575 = vperm.slane %v73, 5
    %v5576 = vperm.slane %v74, 5
    %v5577 = vperm.slane %v75, 5
    %v5578 = vperm.slane %v76, 5
    %v5579 = vperm.slane %v77, 5
    %v5580 = vperm.slane %v78, 5
    %v5581 = vperm.slane %v79, 5
    %v5582 = vperm.slane %v80, 5
    %v5583 = vmul.f32 %v5573, %v5575
    %v5584 = vmul.f32 %v5573, %v5576
    %v5585 = vmul.f32 %v5573, %v5577
    %v5586 = vmul.f32 %v5573, %v5578
    %v5587 = vmul.f32 %v5573, %v5579
    %v5588 = vmul.f32 %v5573, %v5580
    %v5589 = vmul.f32 %v5573, %v5581
    %v5590 = vmul.f32 %v5573, %v5582
    %5591 = vset.pattern.permute.xlu0 13
    %5592 = vperm.xlu0 %5591, %v81
    %v5593 = vpop.permute.xlu0 %5592
    %v5595 = vperm.slane %v73, 6
    %v5596 = vperm.slane %v74, 6
    %v5597 = vperm.slane %v75, 6
    %v5598 = vperm.slane %v76, 6
    %v5599 = vperm.slane %v77, 6
    %v5600 = vperm.slane %v78, 6
    %v5601 = vperm.slane %v79, 6
    %v5602 = vperm.slane %v80, 6
    %v5603 = vmul.f32 %v5593, %v5595
    %v5604 = vmul.f32 %v5593, %v5596
    %v5605 = vmul.f32 %v5593, %v5597
    %v5606 = vmul.f32 %v5593, %v5598
    %v5607 = vmul.f32 %v5593, %v5599
    %v5608 = vmul.f32 %v5593, %v5600
    %v5609 = vmul.f32 %v5593, %v5601
    %v5610 = vmul.f32 %v5593, %v5602
    %v5611 = vadd.f32 %v5583, %v5603
    %v5612 = vadd.f32 %v5584, %v5604
    %v5613 = vadd.f32 %v5585, %v5605
    %v5614 = vadd.f32 %v5586, %v5606
    %v5615 = vadd.f32 %v5587, %v5607
    %v5616 = vadd.f32 %v5588, %v5608
    %v5617 = vadd.f32 %v5589, %v5609
    %v5618 = vadd.f32 %v5590, %v5610
    %v5619 = vand.u32 2147483647, %v5611
    %v5620 = vand.u32 2147483647, %v5612
    %v5621 = vand.u32 2147483647, %v5613
    %v5622 = vand.u32 2147483647, %v5614
    %v5623 = vand.u32 2147483647, %v5615
    %v5624 = vand.u32 2147483647, %v5616
    %v5625 = vand.u32 2147483647, %v5617
    %v5626 = vand.u32 2147483647, %v5618
    %vm5627 = vcmp.lt.f32.partialorder %v5619, 3.0
    %vm5628 = vcmp.lt.f32.partialorder %v5620, 3.0
    %vm5629 = vcmp.lt.f32.partialorder %v5621, 3.0
    %vm5630 = vcmp.lt.f32.partialorder %v5622, 3.0
    %vm5631 = vcmp.lt.f32.partialorder %v5623, 3.0
    %vm5632 = vcmp.lt.f32.partialorder %v5624, 3.0
    %vm5633 = vcmp.lt.f32.partialorder %v5625, 3.0
    %vm5634 = vcmp.lt.f32.partialorder %v5626, 3.0
    %v5635 = vsel %vm5627, 1, 0
    %v5636 = vsel %vm5628, 1, 0
    %v5637 = vsel %vm5629, 1, 0
    %v5638 = vsel %vm5630, 1, 0
    %v5639 = vsel %vm5631, 1, 0
    %v5640 = vsel %vm5632, 1, 0
    %v5641 = vsel %vm5633, 1, 0
    %v5642 = vsel %vm5634, 1, 0
    %v5643 = vcvt.s32.f32 %v5635
    %v5644 = vcvt.s32.f32 %v5636
    %v5645 = vcvt.s32.f32 %v5637
    %v5646 = vcvt.s32.f32 %v5638
    %v5647 = vcvt.s32.f32 %v5639
    %v5648 = vcvt.s32.f32 %v5640
    %v5649 = vcvt.s32.f32 %v5641
    %v5650 = vcvt.s32.f32 %v5642
    %v5651 = vmul.f32 %v5643, 0.6
    %v5652 = vmul.f32 %v5644, 0.6
    %v5653 = vmul.f32 %v5645, 0.6
    %v5654 = vmul.f32 %v5646, 0.6
    %v5655 = vmul.f32 %v5647, 0.6
    %v5656 = vmul.f32 %v5648, 0.6
    %v5657 = vmul.f32 %v5649, 0.6
    %v5658 = vmul.f32 %v5650, 0.6
    %v5659 = vadd.f32 %v5563, %v5651
    %v5660 = vadd.f32 %v5564, %v5652
    %v5661 = vadd.f32 %v5565, %v5653
    %v5662 = vadd.f32 %v5566, %v5654
    %v5663 = vadd.f32 %v5567, %v5655
    %v5664 = vadd.f32 %v5568, %v5656
    %v5665 = vadd.f32 %v5569, %v5657
    %v5666 = vadd.f32 %v5570, %v5658
    %v5667 = vperm.slane %v73, 3
    %v5668 = vperm.slane %v74, 3
    %v5669 = vperm.slane %v75, 3
    %v5670 = vperm.slane %v76, 3
    %v5671 = vperm.slane %v77, 3
    %v5672 = vperm.slane %v78, 3
    %v5673 = vperm.slane %v79, 3
    %v5674 = vperm.slane %v80, 3
    %5675 = vset.pattern.permute.xlu0 14
    %5676 = vperm.xlu0 %5675, %v81
    %v5677 = vpop.permute.xlu0 %5676
    %v5679 = vmul.f32 %v5667, %v5677
    %v5680 = vmul.f32 %v5668, %v5677
    %v5681 = vmul.f32 %v5669, %v5677
    %v5682 = vmul.f32 %v5670, %v5677
    %v5683 = vmul.f32 %v5671, %v5677
    %v5684 = vmul.f32 %v5672, %v5677
    %v5685 = vmul.f32 %v5673, %v5677
    %v5686 = vmul.f32 %v5674, %v5677
    %v5687 = vand.u32 2147483647, %v5679
    %vm5688 = vcmp.le.f32.partialorder %v5687, 0.7853982
    %vm5689 = vcmp.lt.s32.totalorder %v5679, 0
    %v5690 = vand.u32 %v5679, 2139095040
    %v5691 = vshrl.u32 %v5690, 23
    %v5692 = vsub.s32 %v5691, 127
    %v5693 = vand.u32 2147483647, %v5679
    %v5694 = vand.u32 %v5693, 8388607
    %v5695 = vor.u32 %v5694, 8388608
    %v5696 = vsub.s32 0, %v5695
    %v5697 = vadd.s32 %v5692, 1
    %vm5698 = vcmp.gt.s32.totalorder %v5697, 0
    %v5699 = vsel %vm5698, %v5697, 0
    %v5700 = vshrl.u32 %v5699, 5
    %v5701 = vand.u32 %v5699, 31
    %v5702 = vsub.s32 32, %v5701
    %v5703 = vshrl.u32 683565275, %v5702
    %v5704 = vshll.u32 683565275, %v5701
    %v5705 = vshrl.u32 2475754826, %v5702
    %v5706 = vor.u32 %v5704, %v5705
    %v5707 = vshll.u32 2475754826, %v5701
    %v5708 = vshrl.u32 2131351028, %v5702
    %v5709 = vor.u32 %v5707, %v5708
    %v5710 = vshll.u32 2131351028, %v5701
    %v5711 = vshrl.u32 2102212464, %v5702
    %v5712 = vor.u32 %v5710, %v5711
    %v5713 = vshll.u32 2102212464, %v5701
    %v5714 = vshrl.u32 920167782, %v5702
    %v5715 = vor.u32 %v5713, %v5714
    %v5716 = vshll.u32 920167782, %v5701
    %v5717 = vshrl.u32 1326507024, %v5702
    %v5718 = vor.u32 %v5716, %v5717
    %vm5719 = vcmp.lt.s32.totalorder %v5700, 1
    %vm5720 = vcmp.lt.s32.totalorder %v5700, 2
    %vm5721 = vcmp.lt.s32.totalorder %v5700, 3
    %vm5722 = vcmp.lt.s32.totalorder %v5700, 4
    %v5723 = vsel %vm5719, %v5703, %v5706
    %v5724 = vsel %vm5722, %v5712, 2102212464
    %v5725 = vsel %vm5721, %v5709, %v5724
    %v5726 = vsel %vm5720, %v5723, %v5725
    %v5727 = vsel %vm5719, %v5706, %v5709
    %v5728 = vsel %vm5722, %v5715, 920167782
    %v5729 = vsel %vm5721, %v5712, %v5728
    %v5730 = vsel %vm5720, %v5727, %v5729
    %v5731 = vsel %vm5719, %v5709, %v5712
    %v5732 = vsel %vm5722, %v5718, 1326507024
    %v5733 = vsel %vm5721, %v5715, %v5732
    %v5734 = vsel %vm5720, %v5731, %v5733
    %v5735 = vshll.u32 %v5695, 8
    %v5736 = vand.u32 %v5735, 65535
    %v5737 = vshrl.u32 %v5735, 16
    %v5738 = vand.u32 %v5734, 65535
    %v5739 = vshrl.u32 %v5734, 16
    %v5740 = vmul.u32 %v5736, %v5738
    %v5741 = vmul.u32 %v5736, %v5739
    %v5742 = vmul.u32 %v5737, %v5738
    %v5743 = vmul.u32 %v5737, %v5739
    %v5744 = vshll.u32 %v5741, 16
    %v5745 = vshrl.u32 %v5741, 16
    %v5746 = vshll.u32 %v5742, 16
    %v5747 = vshrl.u32 %v5742, 16
    %vm5748 = vc.u32 %v5740, %v5744
    %v5749 = vsel %vm5748, 1, 0
    %v5750 = vadd.s32 %v5740, %v5744
    %v5751 = vadd.s32 %v5743, %v5749
    %vm5752 = vc.u32 %v5750, %v5746
    %v5753 = vsel %vm5752, 1, 0
    %v5754 = vadd.s32 %v5750, %v5746
    %v5755 = vadd.s32 %v5751, %v5753
    %v5756 = vadd.s32 %v5755, %v5745
    %v5757 = vadd.s32 %v5756, %v5747
    %v5758 = vand.u32 %v5735, 65535
    %v5759 = vshrl.u32 %v5735, 16
    %v5760 = vand.u32 %v5730, 65535
    %v5761 = vshrl.u32 %v5730, 16
    %v5762 = vmul.u32 %v5758, %v5760
    %v5763 = vmul.u32 %v5758, %v5761
    %v5764 = vmul.u32 %v5759, %v5760
    %v5765 = vmul.u32 %v5759, %v5761
    %v5766 = vshll.u32 %v5763, 16
    %v5767 = vshrl.u32 %v5763, 16
    %v5768 = vshll.u32 %v5764, 16
    %v5769 = vshrl.u32 %v5764, 16
    %vm5770 = vc.u32 %v5762, %v5766
    %v5771 = vsel %vm5770, 1, 0
    %v5772 = vadd.s32 %v5762, %v5766
    %v5773 = vadd.s32 %v5765, %v5771
    %vm5774 = vc.u32 %v5772, %v5768
    %v5775 = vsel %vm5774, 1, 0
    %v5776 = vadd.s32 %v5772, %v5768
    %v5777 = vadd.s32 %v5773, %v5775
    %v5778 = vadd.s32 %v5777, %v5767
    %v5779 = vadd.s32 %v5778, %v5769
    %v5780 = vmul.u32 %v5735, %v5726
    %v5781 = vadd.s32 %v5757, %v5776
    %vm5782 = vc.u32 %v5757, %v5776
    %v5783 = vadd.s32 %v5779, 1
    %v5784 = vsel %vm5782, %v5783, %v5779
    %v5785 = vadd.s32 %v5780, %v5784
    %v5786 = vadd.s32 %v5785, 536870912
    %v5787 = vshrl.u32 %v5786, 30
    %v5788 = vshll.u32 %v5787, 30
    %v5789 = vsub.s32 %v5785, %v5788
    %vm5790 = vcmp.lt.s32.totalorder %v5789, 0
    %v5791 = vsub.s32 0, %v5789
    %v5792 = vsel %vm5790, %v5791, %v5789
    %v5793 = vclz %v5792
    %v5794 = vsub.s32 %v5793, 2
    %vm5795 = vcmp.gt.s32.totalorder 0, %v5794
    %v5796 = vsel %vm5795, 0, %v5794
    %v5797 = vsub.s32 32, %v5796
    %v5798 = vshll.u32 %v5789, %v5796
    %v5799 = vshrl.u32 %v5781, %v5797
    %v5800 = vor.u32 %v5798, %v5799
    %v5801 = vsub.s32 4294967266, %v5796
    %v5802 = vadd.s32 %v5801, 127
    %v5803 = vshll.u32 %v5802, 23
    %v5804 = vor.u32 4788187, %v5803
    %v5805 = vand.u32 2147483647, %v5804
    %v5807 = vcvt.s32.f32 %v5800
    %v5808 = vmul.f32 %v5807, %v5805
    %v5809 = vxor.u32 %v5808, 2147483648
    %v5810 = vsel %vm5689, %v5809, %v5808
    %v5811 = vsub.s32 4, %v5787
    %v5812 = vsel %vm5689, %v5811, %v5787
    %v5813 = vsel %vm5688, %v5679, %v5810
    %v5814 = vsel %vm5688, 0, %v5812
    %v5815 = vmul.f32 %v5813, %v5813
    %v5816 = vmul.f32 %v5815, -0.001358992
    %v5817 = vadd.f32 %v5816, 0.041655596
    %v5818 = vmul.f32 %v5815, %v5817
    %v5819 = vadd.f32 %v5818, -0.4999988
    %v5820 = vmul.f32 %v5815, %v5819
    %v5821 = vadd.f32 1.0, %v5820
    %v5822 = vmul.f32 %v5813, %v5813
    %v5823 = vmul.f32 %v5822, -0.00019511016
    %v5824 = vadd.f32 %v5823, 0.008332121
    %v5825 = vmul.f32 %v5822, %v5824
    %v5826 = vadd.f32 %v5825, -0.16666654
    %v5827 = vmul.f32 %v5822, %v5826
    %v5828 = vadd.f32 %v5827, 1.0
    %v5829 = vmul.f32 %v5828, %v5813
    %vm5830 = vweird.f32 %v5679
    %v5831 = vadd.s32 %v5814, 3
    %v5832 = vand.u32 %v5831, 3
    %vm5833 = vcmp.lt.s32.totalorder %v5832, 2
    %vm5834 = vcmp.eq.s32.totalorder %v5832, 0
    %v5835 = vxor.u32 %v5829, 2147483648
    %v5836 = vsel %vm5834, %v5821, %v5835
    %vm5837 = vcmp.eq.s32.totalorder %v5832, 2
    %v5838 = vxor.u32 %v5821, 2147483648
    %v5839 = vsel %vm5837, %v5838, %v5829
    %v5840 = vsel %vm5833, %v5836, %v5839
    %v5841 = vsel %vm5830, nan, %v5840
    %v5842 = vand.u32 2147483647, %v5680
    %vm5843 = vcmp.le.f32.partialorder %v5842, 0.7853982
    %vm5844 = vcmp.lt.s32.totalorder %v5680, 0
    %v5845 = vand.u32 %v5680, 2139095040
    %v5846 = vshrl.u32 %v5845, 23
    %v5847 = vsub.s32 %v5846, 127
    %v5848 = vand.u32 2147483647, %v5680
    %v5849 = vand.u32 %v5848, 8388607
    %v5850 = vor.u32 %v5849, 8388608
    %v5851 = vsub.s32 0, %v5850
    %v5852 = vadd.s32 %v5847, 1
    %vm5853 = vcmp.gt.s32.totalorder %v5852, 0
    %v5854 = vsel %vm5853, %v5852, 0
    %v5855 = vshrl.u32 %v5854, 5
    %v5856 = vand.u32 %v5854, 31
    %v5857 = vsub.s32 32, %v5856
    %v5858 = vshrl.u32 683565275, %v5857
    %v5859 = vshll.u32 683565275, %v5856
    %v5860 = vshrl.u32 2475754826, %v5857
    %v5861 = vor.u32 %v5859, %v5860
    %v5862 = vshll.u32 2475754826, %v5856
    %v5863 = vshrl.u32 2131351028, %v5857
    %v5864 = vor.u32 %v5862, %v5863
    %v5865 = vshll.u32 2131351028, %v5856
    %v5866 = vshrl.u32 2102212464, %v5857
    %v5867 = vor.u32 %v5865, %v5866
    %v5868 = vshll.u32 2102212464, %v5856
    %v5869 = vshrl.u32 920167782, %v5857
    %v5870 = vor.u32 %v5868, %v5869
    %v5871 = vshll.u32 920167782, %v5856
    %v5872 = vshrl.u32 1326507024, %v5857
    %v5873 = vor.u32 %v5871, %v5872
    %vm5874 = vcmp.lt.s32.totalorder %v5855, 1
    %vm5875 = vcmp.lt.s32.totalorder %v5855, 2
    %vm5876 = vcmp.lt.s32.totalorder %v5855, 3
    %vm5877 = vcmp.lt.s32.totalorder %v5855, 4
    %v5878 = vsel %vm5874, %v5858, %v5861
    %v5879 = vsel %vm5877, %v5867, 2102212464
    %v5880 = vsel %vm5876, %v5864, %v5879
    %v5881 = vsel %vm5875, %v5878, %v5880
    %v5882 = vsel %vm5874, %v5861, %v5864
    %v5883 = vsel %vm5877, %v5870, 920167782
    %v5884 = vsel %vm5876, %v5867, %v5883
    %v5885 = vsel %vm5875, %v5882, %v5884
    %v5886 = vsel %vm5874, %v5864, %v5867
    %v5887 = vsel %vm5877, %v5873, 1326507024
    %v5888 = vsel %vm5876, %v5870, %v5887
    %v5889 = vsel %vm5875, %v5886, %v5888
    %v5890 = vshll.u32 %v5850, 8
    %v5891 = vand.u32 %v5890, 65535
    %v5892 = vshrl.u32 %v5890, 16
    %v5893 = vand.u32 %v5889, 65535
    %v5894 = vshrl.u32 %v5889, 16
    %v5895 = vmul.u32 %v5891, %v5893
    %v5896 = vmul.u32 %v5891, %v5894
    %v5897 = vmul.u32 %v5892, %v5893
    %v5898 = vmul.u32 %v5892, %v5894
    %v5899 = vshll.u32 %v5896, 16
    %v5900 = vshrl.u32 %v5896, 16
    %v5901 = vshll.u32 %v5897, 16
    %v5902 = vshrl.u32 %v5897, 16
    %vm5903 = vc.u32 %v5895, %v5899
    %v5904 = vsel %vm5903, 1, 0
    %v5905 = vadd.s32 %v5895, %v5899
    %v5906 = vadd.s32 %v5898, %v5904
    %vm5907 = vc.u32 %v5905, %v5901
    %v5908 = vsel %vm5907, 1, 0
    %v5909 = vadd.s32 %v5905, %v5901
    %v5910 = vadd.s32 %v5906, %v5908
    %v5911 = vadd.s32 %v5910, %v5900
    %v5912 = vadd.s32 %v5911, %v5902
    %v5913 = vand.u32 %v5890, 65535
    %v5914 = vshrl.u32 %v5890, 16
    %v5915 = vand.u32 %v5885, 65535
    %v5916 = vshrl.u32 %v5885, 16
    %v5917 = vmul.u32 %v5913, %v5915
    %v5918 = vmul.u32 %v5913, %v5916
    %v5919 = vmul.u32 %v5914, %v5915
    %v5920 = vmul.u32 %v5914, %v5916
    %v5921 = vshll.u32 %v5918, 16
    %v5922 = vshrl.u32 %v5918, 16
    %v5923 = vshll.u32 %v5919, 16
    %v5924 = vshrl.u32 %v5919, 16
    %vm5925 = vc.u32 %v5917, %v5921
    %v5926 = vsel %vm5925, 1, 0
    %v5927 = vadd.s32 %v5917, %v5921
    %v5928 = vadd.s32 %v5920, %v5926
    %vm5929 = vc.u32 %v5927, %v5923
    %v5930 = vsel %vm5929, 1, 0
    %v5931 = vadd.s32 %v5927, %v5923
    %v5932 = vadd.s32 %v5928, %v5930
    %v5933 = vadd.s32 %v5932, %v5922
    %v5934 = vadd.s32 %v5933, %v5924
    %v5935 = vmul.u32 %v5890, %v5881
    %v5936 = vadd.s32 %v5912, %v5931
    %vm5937 = vc.u32 %v5912, %v5931
    %v5938 = vadd.s32 %v5934, 1
    %v5939 = vsel %vm5937, %v5938, %v5934
    %v5940 = vadd.s32 %v5935, %v5939
    %v5941 = vadd.s32 %v5940, 536870912
    %v5942 = vshrl.u32 %v5941, 30
    %v5943 = vshll.u32 %v5942, 30
    %v5944 = vsub.s32 %v5940, %v5943
    %vm5945 = vcmp.lt.s32.totalorder %v5944, 0
    %v5946 = vsub.s32 0, %v5944
    %v5947 = vsel %vm5945, %v5946, %v5944
    %v5948 = vclz %v5947
    %v5949 = vsub.s32 %v5948, 2
    %vm5950 = vcmp.gt.s32.totalorder 0, %v5949
    %v5951 = vsel %vm5950, 0, %v5949
    %v5952 = vsub.s32 32, %v5951
    %v5953 = vshll.u32 %v5944, %v5951
    %v5954 = vshrl.u32 %v5936, %v5952
    %v5955 = vor.u32 %v5953, %v5954
    %v5956 = vsub.s32 4294967266, %v5951
    %v5957 = vadd.s32 %v5956, 127
    %v5958 = vshll.u32 %v5957, 23
    %v5959 = vor.u32 4788187, %v5958
    %v5960 = vand.u32 2147483647, %v5959
    %v5962 = vcvt.s32.f32 %v5955
    %v5963 = vmul.f32 %v5962, %v5960
    %v5964 = vxor.u32 %v5963, 2147483648
    %v5965 = vsel %vm5844, %v5964, %v5963
    %v5966 = vsub.s32 4, %v5942
    %v5967 = vsel %vm5844, %v5966, %v5942
    %v5968 = vsel %vm5843, %v5680, %v5965
    %v5969 = vsel %vm5843, 0, %v5967
    %v5970 = vmul.f32 %v5968, %v5968
    %v5971 = vmul.f32 %v5970, -0.001358992
    %v5972 = vadd.f32 %v5971, 0.041655596
    %v5973 = vmul.f32 %v5970, %v5972
    %v5974 = vadd.f32 %v5973, -0.4999988
    %v5975 = vmul.f32 %v5970, %v5974
    %v5976 = vadd.f32 1.0, %v5975
    %v5977 = vmul.f32 %v5968, %v5968
    %v5978 = vmul.f32 %v5977, -0.00019511016
    %v5979 = vadd.f32 %v5978, 0.008332121
    %v5980 = vmul.f32 %v5977, %v5979
    %v5981 = vadd.f32 %v5980, -0.16666654
    %v5982 = vmul.f32 %v5977, %v5981
    %v5983 = vadd.f32 %v5982, 1.0
    %v5984 = vmul.f32 %v5983, %v5968
    %vm5985 = vweird.f32 %v5680
    %v5986 = vadd.s32 %v5969, 3
    %v5987 = vand.u32 %v5986, 3
    %vm5988 = vcmp.lt.s32.totalorder %v5987, 2
    %vm5989 = vcmp.eq.s32.totalorder %v5987, 0
    %v5990 = vxor.u32 %v5984, 2147483648
    %v5991 = vsel %vm5989, %v5976, %v5990
    %vm5992 = vcmp.eq.s32.totalorder %v5987, 2
    %v5993 = vxor.u32 %v5976, 2147483648
    %v5994 = vsel %vm5992, %v5993, %v5984
    %v5995 = vsel %vm5988, %v5991, %v5994
    %v5996 = vsel %vm5985, nan, %v5995
    %v5997 = vand.u32 2147483647, %v5681
    %vm5998 = vcmp.le.f32.partialorder %v5997, 0.7853982
    %vm5999 = vcmp.lt.s32.totalorder %v5681, 0
    %v6000 = vand.u32 %v5681, 2139095040
    %v6001 = vshrl.u32 %v6000, 23
    %v6002 = vsub.s32 %v6001, 127
    %v6003 = vand.u32 2147483647, %v5681
    %v6004 = vand.u32 %v6003, 8388607
    %v6005 = vor.u32 %v6004, 8388608
    %v6006 = vsub.s32 0, %v6005
    %v6007 = vadd.s32 %v6002, 1
    %vm6008 = vcmp.gt.s32.totalorder %v6007, 0
    %v6009 = vsel %vm6008, %v6007, 0
    %v6010 = vshrl.u32 %v6009, 5
    %v6011 = vand.u32 %v6009, 31
    %v6012 = vsub.s32 32, %v6011
    %v6013 = vshrl.u32 683565275, %v6012
    %v6014 = vshll.u32 683565275, %v6011
    %v6015 = vshrl.u32 2475754826, %v6012
    %v6016 = vor.u32 %v6014, %v6015
    %v6017 = vshll.u32 2475754826, %v6011
    %v6018 = vshrl.u32 2131351028, %v6012
    %v6019 = vor.u32 %v6017, %v6018
    %v6020 = vshll.u32 2131351028, %v6011
    %v6021 = vshrl.u32 2102212464, %v6012
    %v6022 = vor.u32 %v6020, %v6021
    %v6023 = vshll.u32 2102212464, %v6011
    %v6024 = vshrl.u32 920167782, %v6012
    %v6025 = vor.u32 %v6023, %v6024
    %v6026 = vshll.u32 920167782, %v6011
    %v6027 = vshrl.u32 1326507024, %v6012
    %v6028 = vor.u32 %v6026, %v6027
    %vm6029 = vcmp.lt.s32.totalorder %v6010, 1
    %vm6030 = vcmp.lt.s32.totalorder %v6010, 2
    %vm6031 = vcmp.lt.s32.totalorder %v6010, 3
    %vm6032 = vcmp.lt.s32.totalorder %v6010, 4
    %v6033 = vsel %vm6029, %v6013, %v6016
    %v6034 = vsel %vm6032, %v6022, 2102212464
    %v6035 = vsel %vm6031, %v6019, %v6034
    %v6036 = vsel %vm6030, %v6033, %v6035
    %v6037 = vsel %vm6029, %v6016, %v6019
    %v6038 = vsel %vm6032, %v6025, 920167782
    %v6039 = vsel %vm6031, %v6022, %v6038
    %v6040 = vsel %vm6030, %v6037, %v6039
    %v6041 = vsel %vm6029, %v6019, %v6022
    %v6042 = vsel %vm6032, %v6028, 1326507024
    %v6043 = vsel %vm6031, %v6025, %v6042
    %v6044 = vsel %vm6030, %v6041, %v6043
    %v6045 = vshll.u32 %v6005, 8
    %v6046 = vand.u32 %v6045, 65535
    %v6047 = vshrl.u32 %v6045, 16
    %v6048 = vand.u32 %v6044, 65535
    %v6049 = vshrl.u32 %v6044, 16
    %v6050 = vmul.u32 %v6046, %v6048
    %v6051 = vmul.u32 %v6046, %v6049
    %v6052 = vmul.u32 %v6047, %v6048
    %v6053 = vmul.u32 %v6047, %v6049
    %v6054 = vshll.u32 %v6051, 16
    %v6055 = vshrl.u32 %v6051, 16
    %v6056 = vshll.u32 %v6052, 16
    %v6057 = vshrl.u32 %v6052, 16
    %vm6058 = vc.u32 %v6050, %v6054
    %v6059 = vsel %vm6058, 1, 0
    %v6060 = vadd.s32 %v6050, %v6054
    %v6061 = vadd.s32 %v6053, %v6059
    %vm6062 = vc.u32 %v6060, %v6056
    %v6063 = vsel %vm6062, 1, 0
    %v6064 = vadd.s32 %v6060, %v6056
    %v6065 = vadd.s32 %v6061, %v6063
    %v6066 = vadd.s32 %v6065, %v6055
    %v6067 = vadd.s32 %v6066, %v6057
    %v6068 = vand.u32 %v6045, 65535
    %v6069 = vshrl.u32 %v6045, 16
    %v6070 = vand.u32 %v6040, 65535
    %v6071 = vshrl.u32 %v6040, 16
    %v6072 = vmul.u32 %v6068, %v6070
    %v6073 = vmul.u32 %v6068, %v6071
    %v6074 = vmul.u32 %v6069, %v6070
    %v6075 = vmul.u32 %v6069, %v6071
    %v6076 = vshll.u32 %v6073, 16
    %v6077 = vshrl.u32 %v6073, 16
    %v6078 = vshll.u32 %v6074, 16
    %v6079 = vshrl.u32 %v6074, 16
    %vm6080 = vc.u32 %v6072, %v6076
    %v6081 = vsel %vm6080, 1, 0
    %v6082 = vadd.s32 %v6072, %v6076
    %v6083 = vadd.s32 %v6075, %v6081
    %vm6084 = vc.u32 %v6082, %v6078
    %v6085 = vsel %vm6084, 1, 0
    %v6086 = vadd.s32 %v6082, %v6078
    %v6087 = vadd.s32 %v6083, %v6085
    %v6088 = vadd.s32 %v6087, %v6077
    %v6089 = vadd.s32 %v6088, %v6079
    %v6090 = vmul.u32 %v6045, %v6036
    %v6091 = vadd.s32 %v6067, %v6086
    %vm6092 = vc.u32 %v6067, %v6086
    %v6093 = vadd.s32 %v6089, 1
    %v6094 = vsel %vm6092, %v6093, %v6089
    %v6095 = vadd.s32 %v6090, %v6094
    %v6096 = vadd.s32 %v6095, 536870912
    %v6097 = vshrl.u32 %v6096, 30
    %v6098 = vshll.u32 %v6097, 30
    %v6099 = vsub.s32 %v6095, %v6098
    %vm6100 = vcmp.lt.s32.totalorder %v6099, 0
    %v6101 = vsub.s32 0, %v6099
    %v6102 = vsel %vm6100, %v6101, %v6099
    %v6103 = vclz %v6102
    %v6104 = vsub.s32 %v6103, 2
    %vm6105 = vcmp.gt.s32.totalorder 0, %v6104
    %v6106 = vsel %vm6105, 0, %v6104
    %v6107 = vsub.s32 32, %v6106
    %v6108 = vshll.u32 %v6099, %v6106
    %v6109 = vshrl.u32 %v6091, %v6107
    %v6110 = vor.u32 %v6108, %v6109
    %v6111 = vsub.s32 4294967266, %v6106
    %v6112 = vadd.s32 %v6111, 127
    %v6113 = vshll.u32 %v6112, 23
    %v6114 = vor.u32 4788187, %v6113
    %v6115 = vand.u32 2147483647, %v6114
    %v6117 = vcvt.s32.f32 %v6110
    %v6118 = vmul.f32 %v6117, %v6115
    %v6119 = vxor.u32 %v6118, 2147483648
    %v6120 = vsel %vm5999, %v6119, %v6118
    %v6121 = vsub.s32 4, %v6097
    %v6122 = vsel %vm5999, %v6121, %v6097
    %v6123 = vsel %vm5998, %v5681, %v6120
    %v6124 = vsel %vm5998, 0, %v6122
    %v6125 = vmul.f32 %v6123, %v6123
    %v6126 = vmul.f32 %v6125, -0.001358992
    %v6127 = vadd.f32 %v6126, 0.041655596
    %v6128 = vmul.f32 %v6125, %v6127
    %v6129 = vadd.f32 %v6128, -0.4999988
    %v6130 = vmul.f32 %v6125, %v6129
    %v6131 = vadd.f32 1.0, %v6130
    %v6132 = vmul.f32 %v6123, %v6123
    %v6133 = vmul.f32 %v6132, -0.00019511016
    %v6134 = vadd.f32 %v6133, 0.008332121
    %v6135 = vmul.f32 %v6132, %v6134
    %v6136 = vadd.f32 %v6135, -0.16666654
    %v6137 = vmul.f32 %v6132, %v6136
    %v6138 = vadd.f32 %v6137, 1.0
    %v6139 = vmul.f32 %v6138, %v6123
    %vm6140 = vweird.f32 %v5681
    %v6141 = vadd.s32 %v6124, 3
    %v6142 = vand.u32 %v6141, 3
    %vm6143 = vcmp.lt.s32.totalorder %v6142, 2
    %vm6144 = vcmp.eq.s32.totalorder %v6142, 0
    %v6145 = vxor.u32 %v6139, 2147483648
    %v6146 = vsel %vm6144, %v6131, %v6145
    %vm6147 = vcmp.eq.s32.totalorder %v6142, 2
    %v6148 = vxor.u32 %v6131, 2147483648
    %v6149 = vsel %vm6147, %v6148, %v6139
    %v6150 = vsel %vm6143, %v6146, %v6149
    %v6151 = vsel %vm6140, nan, %v6150
    %v6152 = vand.u32 2147483647, %v5682
    %vm6153 = vcmp.le.f32.partialorder %v6152, 0.7853982
    %vm6154 = vcmp.lt.s32.totalorder %v5682, 0
    %v6155 = vand.u32 %v5682, 2139095040
    %v6156 = vshrl.u32 %v6155, 23
    %v6157 = vsub.s32 %v6156, 127
    %v6158 = vand.u32 2147483647, %v5682
    %v6159 = vand.u32 %v6158, 8388607
    %v6160 = vor.u32 %v6159, 8388608
    %v6161 = vsub.s32 0, %v6160
    %v6162 = vadd.s32 %v6157, 1
    %vm6163 = vcmp.gt.s32.totalorder %v6162, 0
    %v6164 = vsel %vm6163, %v6162, 0
    %v6165 = vshrl.u32 %v6164, 5
    %v6166 = vand.u32 %v6164, 31
    %v6167 = vsub.s32 32, %v6166
    %v6168 = vshrl.u32 683565275, %v6167
    %v6169 = vshll.u32 683565275, %v6166
    %v6170 = vshrl.u32 2475754826, %v6167
    %v6171 = vor.u32 %v6169, %v6170
    %v6172 = vshll.u32 2475754826, %v6166
    %v6173 = vshrl.u32 2131351028, %v6167
    %v6174 = vor.u32 %v6172, %v6173
    %v6175 = vshll.u32 2131351028, %v6166
    %v6176 = vshrl.u32 2102212464, %v6167
    %v6177 = vor.u32 %v6175, %v6176
    %v6178 = vshll.u32 2102212464, %v6166
    %v6179 = vshrl.u32 920167782, %v6167
    %v6180 = vor.u32 %v6178, %v6179
    %v6181 = vshll.u32 920167782, %v6166
    %v6182 = vshrl.u32 1326507024, %v6167
    %v6183 = vor.u32 %v6181, %v6182
    %vm6184 = vcmp.lt.s32.totalorder %v6165, 1
    %vm6185 = vcmp.lt.s32.totalorder %v6165, 2
    %vm6186 = vcmp.lt.s32.totalorder %v6165, 3
    %vm6187 = vcmp.lt.s32.totalorder %v6165, 4
    %v6188 = vsel %vm6184, %v6168, %v6171
    %v6189 = vsel %vm6187, %v6177, 2102212464
    %v6190 = vsel %vm6186, %v6174, %v6189
    %v6191 = vsel %vm6185, %v6188, %v6190
    %v6192 = vsel %vm6184, %v6171, %v6174
    %v6193 = vsel %vm6187, %v6180, 920167782
    %v6194 = vsel %vm6186, %v6177, %v6193
    %v6195 = vsel %vm6185, %v6192, %v6194
    %v6196 = vsel %vm6184, %v6174, %v6177
    %v6197 = vsel %vm6187, %v6183, 1326507024
    %v6198 = vsel %vm6186, %v6180, %v6197
    %v6199 = vsel %vm6185, %v6196, %v6198
    %v6200 = vshll.u32 %v6160, 8
    %v6201 = vand.u32 %v6200, 65535
    %v6202 = vshrl.u32 %v6200, 16
    %v6203 = vand.u32 %v6199, 65535
    %v6204 = vshrl.u32 %v6199, 16
    %v6205 = vmul.u32 %v6201, %v6203
    %v6206 = vmul.u32 %v6201, %v6204
    %v6207 = vmul.u32 %v6202, %v6203
    %v6208 = vmul.u32 %v6202, %v6204
    %v6209 = vshll.u32 %v6206, 16
    %v6210 = vshrl.u32 %v6206, 16
    %v6211 = vshll.u32 %v6207, 16
    %v6212 = vshrl.u32 %v6207, 16
    %vm6213 = vc.u32 %v6205, %v6209
    %v6214 = vsel %vm6213, 1, 0
    %v6215 = vadd.s32 %v6205, %v6209
    %v6216 = vadd.s32 %v6208, %v6214
    %vm6217 = vc.u32 %v6215, %v6211
    %v6218 = vsel %vm6217, 1, 0
    %v6219 = vadd.s32 %v6215, %v6211
    %v6220 = vadd.s32 %v6216, %v6218
    %v6221 = vadd.s32 %v6220, %v6210
    %v6222 = vadd.s32 %v6221, %v6212
    %v6223 = vand.u32 %v6200, 65535
    %v6224 = vshrl.u32 %v6200, 16
    %v6225 = vand.u32 %v6195, 65535
    %v6226 = vshrl.u32 %v6195, 16
    %v6227 = vmul.u32 %v6223, %v6225
    %v6228 = vmul.u32 %v6223, %v6226
    %v6229 = vmul.u32 %v6224, %v6225
    %v6230 = vmul.u32 %v6224, %v6226
    %v6231 = vshll.u32 %v6228, 16
    %v6232 = vshrl.u32 %v6228, 16
    %v6233 = vshll.u32 %v6229, 16
    %v6234 = vshrl.u32 %v6229, 16
    %vm6235 = vc.u32 %v6227, %v6231
    %v6236 = vsel %vm6235, 1, 0
    %v6237 = vadd.s32 %v6227, %v6231
    %v6238 = vadd.s32 %v6230, %v6236
    %vm6239 = vc.u32 %v6237, %v6233
    %v6240 = vsel %vm6239, 1, 0
    %v6241 = vadd.s32 %v6237, %v6233
    %v6242 = vadd.s32 %v6238, %v6240
    %v6243 = vadd.s32 %v6242, %v6232
    %v6244 = vadd.s32 %v6243, %v6234
    %v6245 = vmul.u32 %v6200, %v6191
    %v6246 = vadd.s32 %v6222, %v6241
    %vm6247 = vc.u32 %v6222, %v6241
    %v6248 = vadd.s32 %v6244, 1
    %v6249 = vsel %vm6247, %v6248, %v6244
    %v6250 = vadd.s32 %v6245, %v6249
    %v6251 = vadd.s32 %v6250, 536870912
    %v6252 = vshrl.u32 %v6251, 30
    %v6253 = vshll.u32 %v6252, 30
    %v6254 = vsub.s32 %v6250, %v6253
    %vm6255 = vcmp.lt.s32.totalorder %v6254, 0
    %v6256 = vsub.s32 0, %v6254
    %v6257 = vsel %vm6255, %v6256, %v6254
    %v6258 = vclz %v6257
    %v6259 = vsub.s32 %v6258, 2
    %vm6260 = vcmp.gt.s32.totalorder 0, %v6259
    %v6261 = vsel %vm6260, 0, %v6259
    %v6262 = vsub.s32 32, %v6261
    %v6263 = vshll.u32 %v6254, %v6261
    %v6264 = vshrl.u32 %v6246, %v6262
    %v6265 = vor.u32 %v6263, %v6264
    %v6266 = vsub.s32 4294967266, %v6261
    %v6267 = vadd.s32 %v6266, 127
    %v6268 = vshll.u32 %v6267, 23
    %v6269 = vor.u32 4788187, %v6268
    %v6270 = vand.u32 2147483647, %v6269
    %v6272 = vcvt.s32.f32 %v6265
    %v6273 = vmul.f32 %v6272, %v6270
    %v6274 = vxor.u32 %v6273, 2147483648
    %v6275 = vsel %vm6154, %v6274, %v6273
    %v6276 = vsub.s32 4, %v6252
    %v6277 = vsel %vm6154, %v6276, %v6252
    %v6278 = vsel %vm6153, %v5682, %v6275
    %v6279 = vsel %vm6153, 0, %v6277
    %v6280 = vmul.f32 %v6278, %v6278
    %v6281 = vmul.f32 %v6280, -0.001358992
    %v6282 = vadd.f32 %v6281, 0.041655596
    %v6283 = vmul.f32 %v6280, %v6282
    %v6284 = vadd.f32 %v6283, -0.4999988
    %v6285 = vmul.f32 %v6280, %v6284
    %v6286 = vadd.f32 1.0, %v6285
    %v6287 = vmul.f32 %v6278, %v6278
    %v6288 = vmul.f32 %v6287, -0.00019511016
    %v6289 = vadd.f32 %v6288, 0.008332121
    %v6290 = vmul.f32 %v6287, %v6289
    %v6291 = vadd.f32 %v6290, -0.16666654
    %v6292 = vmul.f32 %v6287, %v6291
    %v6293 = vadd.f32 %v6292, 1.0
    %v6294 = vmul.f32 %v6293, %v6278
    %vm6295 = vweird.f32 %v5682
    %v6296 = vadd.s32 %v6279, 3
    %v6297 = vand.u32 %v6296, 3
    %vm6298 = vcmp.lt.s32.totalorder %v6297, 2
    %vm6299 = vcmp.eq.s32.totalorder %v6297, 0
    %v6300 = vxor.u32 %v6294, 2147483648
    %v6301 = vsel %vm6299, %v6286, %v6300
    %vm6302 = vcmp.eq.s32.totalorder %v6297, 2
    %v6303 = vxor.u32 %v6286, 2147483648
    %v6304 = vsel %vm6302, %v6303, %v6294
    %v6305 = vsel %vm6298, %v6301, %v6304
    %v6306 = vsel %vm6295, nan, %v6305
    %v6307 = vand.u32 2147483647, %v5683
    %vm6308 = vcmp.le.f32.partialorder %v6307, 0.7853982
    %vm6309 = vcmp.lt.s32.totalorder %v5683, 0
    %v6310 = vand.u32 %v5683, 2139095040
    %v6311 = vshrl.u32 %v6310, 23
    %v6312 = vsub.s32 %v6311, 127
    %v6313 = vand.u32 2147483647, %v5683
    %v6314 = vand.u32 %v6313, 8388607
    %v6315 = vor.u32 %v6314, 8388608
    %v6316 = vsub.s32 0, %v6315
    %v6317 = vadd.s32 %v6312, 1
    %vm6318 = vcmp.gt.s32.totalorder %v6317, 0
    %v6319 = vsel %vm6318, %v6317, 0
    %v6320 = vshrl.u32 %v6319, 5
    %v6321 = vand.u32 %v6319, 31
    %v6322 = vsub.s32 32, %v6321
    %v6323 = vshrl.u32 683565275, %v6322
    %v6324 = vshll.u32 683565275, %v6321
    %v6325 = vshrl.u32 2475754826, %v6322
    %v6326 = vor.u32 %v6324, %v6325
    %v6327 = vshll.u32 2475754826, %v6321
    %v6328 = vshrl.u32 2131351028, %v6322
    %v6329 = vor.u32 %v6327, %v6328
    %v6330 = vshll.u32 2131351028, %v6321
    %v6331 = vshrl.u32 2102212464, %v6322
    %v6332 = vor.u32 %v6330, %v6331
    %v6333 = vshll.u32 2102212464, %v6321
    %v6334 = vshrl.u32 920167782, %v6322
    %v6335 = vor.u32 %v6333, %v6334
    %v6336 = vshll.u32 920167782, %v6321
    %v6337 = vshrl.u32 1326507024, %v6322
    %v6338 = vor.u32 %v6336, %v6337
    %vm6339 = vcmp.lt.s32.totalorder %v6320, 1
    %vm6340 = vcmp.lt.s32.totalorder %v6320, 2
    %vm6341 = vcmp.lt.s32.totalorder %v6320, 3
    %vm6342 = vcmp.lt.s32.totalorder %v6320, 4
    %v6343 = vsel %vm6339, %v6323, %v6326
    %v6344 = vsel %vm6342, %v6332, 2102212464
    %v6345 = vsel %vm6341, %v6329, %v6344
    %v6346 = vsel %vm6340, %v6343, %v6345
    %v6347 = vsel %vm6339, %v6326, %v6329
    %v6348 = vsel %vm6342, %v6335, 920167782
    %v6349 = vsel %vm6341, %v6332, %v6348
    %v6350 = vsel %vm6340, %v6347, %v6349
    %v6351 = vsel %vm6339, %v6329, %v6332
    %v6352 = vsel %vm6342, %v6338, 1326507024
    %v6353 = vsel %vm6341, %v6335, %v6352
    %v6354 = vsel %vm6340, %v6351, %v6353
    %v6355 = vshll.u32 %v6315, 8
    %v6356 = vand.u32 %v6355, 65535
    %v6357 = vshrl.u32 %v6355, 16
    %v6358 = vand.u32 %v6354, 65535
    %v6359 = vshrl.u32 %v6354, 16
    %v6360 = vmul.u32 %v6356, %v6358
    %v6361 = vmul.u32 %v6356, %v6359
    %v6362 = vmul.u32 %v6357, %v6358
    %v6363 = vmul.u32 %v6357, %v6359
    %v6364 = vshll.u32 %v6361, 16
    %v6365 = vshrl.u32 %v6361, 16
    %v6366 = vshll.u32 %v6362, 16
    %v6367 = vshrl.u32 %v6362, 16
    %vm6368 = vc.u32 %v6360, %v6364
    %v6369 = vsel %vm6368, 1, 0
    %v6370 = vadd.s32 %v6360, %v6364
    %v6371 = vadd.s32 %v6363, %v6369
    %vm6372 = vc.u32 %v6370, %v6366
    %v6373 = vsel %vm6372, 1, 0
    %v6374 = vadd.s32 %v6370, %v6366
    %v6375 = vadd.s32 %v6371, %v6373
    %v6376 = vadd.s32 %v6375, %v6365
    %v6377 = vadd.s32 %v6376, %v6367
    %v6378 = vand.u32 %v6355, 65535
    %v6379 = vshrl.u32 %v6355, 16
    %v6380 = vand.u32 %v6350, 65535
    %v6381 = vshrl.u32 %v6350, 16
    %v6382 = vmul.u32 %v6378, %v6380
    %v6383 = vmul.u32 %v6378, %v6381
    %v6384 = vmul.u32 %v6379, %v6380
    %v6385 = vmul.u32 %v6379, %v6381
    %v6386 = vshll.u32 %v6383, 16
    %v6387 = vshrl.u32 %v6383, 16
    %v6388 = vshll.u32 %v6384, 16
    %v6389 = vshrl.u32 %v6384, 16
    %vm6390 = vc.u32 %v6382, %v6386
    %v6391 = vsel %vm6390, 1, 0
    %v6392 = vadd.s32 %v6382, %v6386
    %v6393 = vadd.s32 %v6385, %v6391
    %vm6394 = vc.u32 %v6392, %v6388
    %v6395 = vsel %vm6394, 1, 0
    %v6396 = vadd.s32 %v6392, %v6388
    %v6397 = vadd.s32 %v6393, %v6395
    %v6398 = vadd.s32 %v6397, %v6387
    %v6399 = vadd.s32 %v6398, %v6389
    %v6400 = vmul.u32 %v6355, %v6346
    %v6401 = vadd.s32 %v6377, %v6396
    %vm6402 = vc.u32 %v6377, %v6396
    %v6403 = vadd.s32 %v6399, 1
    %v6404 = vsel %vm6402, %v6403, %v6399
    %v6405 = vadd.s32 %v6400, %v6404
    %v6406 = vadd.s32 %v6405, 536870912
    %v6407 = vshrl.u32 %v6406, 30
    %v6408 = vshll.u32 %v6407, 30
    %v6409 = vsub.s32 %v6405, %v6408
    %vm6410 = vcmp.lt.s32.totalorder %v6409, 0
    %v6411 = vsub.s32 0, %v6409
    %v6412 = vsel %vm6410, %v6411, %v6409
    %v6413 = vclz %v6412
    %v6414 = vsub.s32 %v6413, 2
    %vm6415 = vcmp.gt.s32.totalorder 0, %v6414
    %v6416 = vsel %vm6415, 0, %v6414
    %v6417 = vsub.s32 32, %v6416
    %v6418 = vshll.u32 %v6409, %v6416
    %v6419 = vshrl.u32 %v6401, %v6417
    %v6420 = vor.u32 %v6418, %v6419
    %v6421 = vsub.s32 4294967266, %v6416
    %v6422 = vadd.s32 %v6421, 127
    %v6423 = vshll.u32 %v6422, 23
    %v6424 = vor.u32 4788187, %v6423
    %v6425 = vand.u32 2147483647, %v6424
    %v6427 = vcvt.s32.f32 %v6420
    %v6428 = vmul.f32 %v6427, %v6425
    %v6429 = vxor.u32 %v6428, 2147483648
    %v6430 = vsel %vm6309, %v6429, %v6428
    %v6431 = vsub.s32 4, %v6407
    %v6432 = vsel %vm6309, %v6431, %v6407
    %v6433 = vsel %vm6308, %v5683, %v6430
    %v6434 = vsel %vm6308, 0, %v6432
    %v6435 = vmul.f32 %v6433, %v6433
    %v6436 = vmul.f32 %v6435, -0.001358992
    %v6437 = vadd.f32 %v6436, 0.041655596
    %v6438 = vmul.f32 %v6435, %v6437
    %v6439 = vadd.f32 %v6438, -0.4999988
    %v6440 = vmul.f32 %v6435, %v6439
    %v6441 = vadd.f32 1.0, %v6440
    %v6442 = vmul.f32 %v6433, %v6433
    %v6443 = vmul.f32 %v6442, -0.00019511016
    %v6444 = vadd.f32 %v6443, 0.008332121
    %v6445 = vmul.f32 %v6442, %v6444
    %v6446 = vadd.f32 %v6445, -0.16666654
    %v6447 = vmul.f32 %v6442, %v6446
    %v6448 = vadd.f32 %v6447, 1.0
    %v6449 = vmul.f32 %v6448, %v6433
    %vm6450 = vweird.f32 %v5683
    %v6451 = vadd.s32 %v6434, 3
    %v6452 = vand.u32 %v6451, 3
    %vm6453 = vcmp.lt.s32.totalorder %v6452, 2
    %vm6454 = vcmp.eq.s32.totalorder %v6452, 0
    %v6455 = vxor.u32 %v6449, 2147483648
    %v6456 = vsel %vm6454, %v6441, %v6455
    %vm6457 = vcmp.eq.s32.totalorder %v6452, 2
    %v6458 = vxor.u32 %v6441, 2147483648
    %v6459 = vsel %vm6457, %v6458, %v6449
    %v6460 = vsel %vm6453, %v6456, %v6459
    %v6461 = vsel %vm6450, nan, %v6460
    %v6462 = vand.u32 2147483647, %v5684
    %vm6463 = vcmp.le.f32.partialorder %v6462, 0.7853982
    %vm6464 = vcmp.lt.s32.totalorder %v5684, 0
    %v6465 = vand.u32 %v5684, 2139095040
    %v6466 = vshrl.u32 %v6465, 23
    %v6467 = vsub.s32 %v6466, 127
    %v6468 = vand.u32 2147483647, %v5684
    %v6469 = vand.u32 %v6468, 8388607
    %v6470 = vor.u32 %v6469, 8388608
    %v6471 = vsub.s32 0, %v6470
    %v6472 = vadd.s32 %v6467, 1
    %vm6473 = vcmp.gt.s32.totalorder %v6472, 0
    %v6474 = vsel %vm6473, %v6472, 0
    %v6475 = vshrl.u32 %v6474, 5
    %v6476 = vand.u32 %v6474, 31
    %v6477 = vsub.s32 32, %v6476
    %v6478 = vshrl.u32 683565275, %v6477
    %v6479 = vshll.u32 683565275, %v6476
    %v6480 = vshrl.u32 2475754826, %v6477
    %v6481 = vor.u32 %v6479, %v6480
    %v6482 = vshll.u32 2475754826, %v6476
    %v6483 = vshrl.u32 2131351028, %v6477
    %v6484 = vor.u32 %v6482, %v6483
    %v6485 = vshll.u32 2131351028, %v6476
    %v6486 = vshrl.u32 2102212464, %v6477
    %v6487 = vor.u32 %v6485, %v6486
    %v6488 = vshll.u32 2102212464, %v6476
    %v6489 = vshrl.u32 920167782, %v6477
    %v6490 = vor.u32 %v6488, %v6489
    %v6491 = vshll.u32 920167782, %v6476
    %v6492 = vshrl.u32 1326507024, %v6477
    %v6493 = vor.u32 %v6491, %v6492
    %vm6494 = vcmp.lt.s32.totalorder %v6475, 1
    %vm6495 = vcmp.lt.s32.totalorder %v6475, 2
    %vm6496 = vcmp.lt.s32.totalorder %v6475, 3
    %vm6497 = vcmp.lt.s32.totalorder %v6475, 4
    %v6498 = vsel %vm6494, %v6478, %v6481
    %v6499 = vsel %vm6497, %v6487, 2102212464
    %v6500 = vsel %vm6496, %v6484, %v6499
    %v6501 = vsel %vm6495, %v6498, %v6500
    %v6502 = vsel %vm6494, %v6481, %v6484
    %v6503 = vsel %vm6497, %v6490, 920167782
    %v6504 = vsel %vm6496, %v6487, %v6503
    %v6505 = vsel %vm6495, %v6502, %v6504
    %v6506 = vsel %vm6494, %v6484, %v6487
    %v6507 = vsel %vm6497, %v6493, 1326507024
    %v6508 = vsel %vm6496, %v6490, %v6507
    %v6509 = vsel %vm6495, %v6506, %v6508
    %v6510 = vshll.u32 %v6470, 8
    %v6511 = vand.u32 %v6510, 65535
    %v6512 = vshrl.u32 %v6510, 16
    %v6513 = vand.u32 %v6509, 65535
    %v6514 = vshrl.u32 %v6509, 16
    %v6515 = vmul.u32 %v6511, %v6513
    %v6516 = vmul.u32 %v6511, %v6514
    %v6517 = vmul.u32 %v6512, %v6513
    %v6518 = vmul.u32 %v6512, %v6514
    %v6519 = vshll.u32 %v6516, 16
    %v6520 = vshrl.u32 %v6516, 16
    %v6521 = vshll.u32 %v6517, 16
    %v6522 = vshrl.u32 %v6517, 16
    %vm6523 = vc.u32 %v6515, %v6519
    %v6524 = vsel %vm6523, 1, 0
    %v6525 = vadd.s32 %v6515, %v6519
    %v6526 = vadd.s32 %v6518, %v6524
    %vm6527 = vc.u32 %v6525, %v6521
    %v6528 = vsel %vm6527, 1, 0
    %v6529 = vadd.s32 %v6525, %v6521
    %v6530 = vadd.s32 %v6526, %v6528
    %v6531 = vadd.s32 %v6530, %v6520
    %v6532 = vadd.s32 %v6531, %v6522
    %v6533 = vand.u32 %v6510, 65535
    %v6534 = vshrl.u32 %v6510, 16
    %v6535 = vand.u32 %v6505, 65535
    %v6536 = vshrl.u32 %v6505, 16
    %v6537 = vmul.u32 %v6533, %v6535
    %v6538 = vmul.u32 %v6533, %v6536
    %v6539 = vmul.u32 %v6534, %v6535
    %v6540 = vmul.u32 %v6534, %v6536
    %v6541 = vshll.u32 %v6538, 16
    %v6542 = vshrl.u32 %v6538, 16
    %v6543 = vshll.u32 %v6539, 16
    %v6544 = vshrl.u32 %v6539, 16
    %vm6545 = vc.u32 %v6537, %v6541
    %v6546 = vsel %vm6545, 1, 0
    %v6547 = vadd.s32 %v6537, %v6541
    %v6548 = vadd.s32 %v6540, %v6546
    %vm6549 = vc.u32 %v6547, %v6543
    %v6550 = vsel %vm6549, 1, 0
    %v6551 = vadd.s32 %v6547, %v6543
    %v6552 = vadd.s32 %v6548, %v6550
    %v6553 = vadd.s32 %v6552, %v6542
    %v6554 = vadd.s32 %v6553, %v6544
    %v6555 = vmul.u32 %v6510, %v6501
    %v6556 = vadd.s32 %v6532, %v6551
    %vm6557 = vc.u32 %v6532, %v6551
    %v6558 = vadd.s32 %v6554, 1
    %v6559 = vsel %vm6557, %v6558, %v6554
    %v6560 = vadd.s32 %v6555, %v6559
    %v6561 = vadd.s32 %v6560, 536870912
    %v6562 = vshrl.u32 %v6561, 30
    %v6563 = vshll.u32 %v6562, 30
    %v6564 = vsub.s32 %v6560, %v6563
    %vm6565 = vcmp.lt.s32.totalorder %v6564, 0
    %v6566 = vsub.s32 0, %v6564
    %v6567 = vsel %vm6565, %v6566, %v6564
    %v6568 = vclz %v6567
    %v6569 = vsub.s32 %v6568, 2
    %vm6570 = vcmp.gt.s32.totalorder 0, %v6569
    %v6571 = vsel %vm6570, 0, %v6569
    %v6572 = vsub.s32 32, %v6571
    %v6573 = vshll.u32 %v6564, %v6571
    %v6574 = vshrl.u32 %v6556, %v6572
    %v6575 = vor.u32 %v6573, %v6574
    %v6576 = vsub.s32 4294967266, %v6571
    %v6577 = vadd.s32 %v6576, 127
    %v6578 = vshll.u32 %v6577, 23
    %v6579 = vor.u32 4788187, %v6578
    %v6580 = vand.u32 2147483647, %v6579
    %v6582 = vcvt.s32.f32 %v6575
    %v6583 = vmul.f32 %v6582, %v6580
    %v6584 = vxor.u32 %v6583, 2147483648
    %v6585 = vsel %vm6464, %v6584, %v6583
    %v6586 = vsub.s32 4, %v6562
    %v6587 = vsel %vm6464, %v6586, %v6562
    %v6588 = vsel %vm6463, %v5684, %v6585
    %v6589 = vsel %vm6463, 0, %v6587
    %v6590 = vmul.f32 %v6588, %v6588
    %v6591 = vmul.f32 %v6590, -0.001358992
    %v6592 = vadd.f32 %v6591, 0.041655596
    %v6593 = vmul.f32 %v6590, %v6592
    %v6594 = vadd.f32 %v6593, -0.4999988
    %v6595 = vmul.f32 %v6590, %v6594
    %v6596 = vadd.f32 1.0, %v6595
    %v6597 = vmul.f32 %v6588, %v6588
    %v6598 = vmul.f32 %v6597, -0.00019511016
    %v6599 = vadd.f32 %v6598, 0.008332121
    %v6600 = vmul.f32 %v6597, %v6599
    %v6601 = vadd.f32 %v6600, -0.16666654
    %v6602 = vmul.f32 %v6597, %v6601
    %v6603 = vadd.f32 %v6602, 1.0
    %v6604 = vmul.f32 %v6603, %v6588
    %vm6605 = vweird.f32 %v5684
    %v6606 = vadd.s32 %v6589, 3
    %v6607 = vand.u32 %v6606, 3
    %vm6608 = vcmp.lt.s32.totalorder %v6607, 2
    %vm6609 = vcmp.eq.s32.totalorder %v6607, 0
    %v6610 = vxor.u32 %v6604, 2147483648
    %v6611 = vsel %vm6609, %v6596, %v6610
    %vm6612 = vcmp.eq.s32.totalorder %v6607, 2
    %v6613 = vxor.u32 %v6596, 2147483648
    %v6614 = vsel %vm6612, %v6613, %v6604
    %v6615 = vsel %vm6608, %v6611, %v6614
    %v6616 = vsel %vm6605, nan, %v6615
    %v6617 = vand.u32 2147483647, %v5685
    %vm6618 = vcmp.le.f32.partialorder %v6617, 0.7853982
    %vm6619 = vcmp.lt.s32.totalorder %v5685, 0
    %v6620 = vand.u32 %v5685, 2139095040
    %v6621 = vshrl.u32 %v6620, 23
    %v6622 = vsub.s32 %v6621, 127
    %v6623 = vand.u32 2147483647, %v5685
    %v6624 = vand.u32 %v6623, 8388607
    %v6625 = vor.u32 %v6624, 8388608
    %v6626 = vsub.s32 0, %v6625
    %v6627 = vadd.s32 %v6622, 1
    %vm6628 = vcmp.gt.s32.totalorder %v6627, 0
    %v6629 = vsel %vm6628, %v6627, 0
    %v6630 = vshrl.u32 %v6629, 5
    %v6631 = vand.u32 %v6629, 31
    %v6632 = vsub.s32 32, %v6631
    %v6633 = vshrl.u32 683565275, %v6632
    %v6634 = vshll.u32 683565275, %v6631
    %v6635 = vshrl.u32 2475754826, %v6632
    %v6636 = vor.u32 %v6634, %v6635
    %v6637 = vshll.u32 2475754826, %v6631
    %v6638 = vshrl.u32 2131351028, %v6632
    %v6639 = vor.u32 %v6637, %v6638
    %v6640 = vshll.u32 2131351028, %v6631
    %v6641 = vshrl.u32 2102212464, %v6632
    %v6642 = vor.u32 %v6640, %v6641
    %v6643 = vshll.u32 2102212464, %v6631
    %v6644 = vshrl.u32 920167782, %v6632
    %v6645 = vor.u32 %v6643, %v6644
    %v6646 = vshll.u32 920167782, %v6631
    %v6647 = vshrl.u32 1326507024, %v6632
    %v6648 = vor.u32 %v6646, %v6647
    %vm6649 = vcmp.lt.s32.totalorder %v6630, 1
    %vm6650 = vcmp.lt.s32.totalorder %v6630, 2
    %vm6651 = vcmp.lt.s32.totalorder %v6630, 3
    %vm6652 = vcmp.lt.s32.totalorder %v6630, 4
    %v6653 = vsel %vm6649, %v6633, %v6636
    %v6654 = vsel %vm6652, %v6642, 2102212464
    %v6655 = vsel %vm6651, %v6639, %v6654
    %v6656 = vsel %vm6650, %v6653, %v6655
    %v6657 = vsel %vm6649, %v6636, %v6639
    %v6658 = vsel %vm6652, %v6645, 920167782
    %v6659 = vsel %vm6651, %v6642, %v6658
    %v6660 = vsel %vm6650, %v6657, %v6659
    %v6661 = vsel %vm6649, %v6639, %v6642
    %v6662 = vsel %vm6652, %v6648, 1326507024
    %v6663 = vsel %vm6651, %v6645, %v6662
    %v6664 = vsel %vm6650, %v6661, %v6663
    %v6665 = vshll.u32 %v6625, 8
    %v6666 = vand.u32 %v6665, 65535
    %v6667 = vshrl.u32 %v6665, 16
    %v6668 = vand.u32 %v6664, 65535
    %v6669 = vshrl.u32 %v6664, 16
    %v6670 = vmul.u32 %v6666, %v6668
    %v6671 = vmul.u32 %v6666, %v6669
    %v6672 = vmul.u32 %v6667, %v6668
    %v6673 = vmul.u32 %v6667, %v6669
    %v6674 = vshll.u32 %v6671, 16
    %v6675 = vshrl.u32 %v6671, 16
    %v6676 = vshll.u32 %v6672, 16
    %v6677 = vshrl.u32 %v6672, 16
    %vm6678 = vc.u32 %v6670, %v6674
    %v6679 = vsel %vm6678, 1, 0
    %v6680 = vadd.s32 %v6670, %v6674
    %v6681 = vadd.s32 %v6673, %v6679
    %vm6682 = vc.u32 %v6680, %v6676
    %v6683 = vsel %vm6682, 1, 0
    %v6684 = vadd.s32 %v6680, %v6676
    %v6685 = vadd.s32 %v6681, %v6683
    %v6686 = vadd.s32 %v6685, %v6675
    %v6687 = vadd.s32 %v6686, %v6677
    %v6688 = vand.u32 %v6665, 65535
    %v6689 = vshrl.u32 %v6665, 16
    %v6690 = vand.u32 %v6660, 65535
    %v6691 = vshrl.u32 %v6660, 16
    %v6692 = vmul.u32 %v6688, %v6690
    %v6693 = vmul.u32 %v6688, %v6691
    %v6694 = vmul.u32 %v6689, %v6690
    %v6695 = vmul.u32 %v6689, %v6691
    %v6696 = vshll.u32 %v6693, 16
    %v6697 = vshrl.u32 %v6693, 16
    %v6698 = vshll.u32 %v6694, 16
    %v6699 = vshrl.u32 %v6694, 16
    %vm6700 = vc.u32 %v6692, %v6696
    %v6701 = vsel %vm6700, 1, 0
    %v6702 = vadd.s32 %v6692, %v6696
    %v6703 = vadd.s32 %v6695, %v6701
    %vm6704 = vc.u32 %v6702, %v6698
    %v6705 = vsel %vm6704, 1, 0
    %v6706 = vadd.s32 %v6702, %v6698
    %v6707 = vadd.s32 %v6703, %v6705
    %v6708 = vadd.s32 %v6707, %v6697
    %v6709 = vadd.s32 %v6708, %v6699
    %v6710 = vmul.u32 %v6665, %v6656
    %v6711 = vadd.s32 %v6687, %v6706
    %vm6712 = vc.u32 %v6687, %v6706
    %v6713 = vadd.s32 %v6709, 1
    %v6714 = vsel %vm6712, %v6713, %v6709
    %v6715 = vadd.s32 %v6710, %v6714
    %v6716 = vadd.s32 %v6715, 536870912
    %v6717 = vshrl.u32 %v6716, 30
    %v6718 = vshll.u32 %v6717, 30
    %v6719 = vsub.s32 %v6715, %v6718
    %vm6720 = vcmp.lt.s32.totalorder %v6719, 0
    %v6721 = vsub.s32 0, %v6719
    %v6722 = vsel %vm6720, %v6721, %v6719
    %v6723 = vclz %v6722
    %v6724 = vsub.s32 %v6723, 2
    %vm6725 = vcmp.gt.s32.totalorder 0, %v6724
    %v6726 = vsel %vm6725, 0, %v6724
    %v6727 = vsub.s32 32, %v6726
    %v6728 = vshll.u32 %v6719, %v6726
    %v6729 = vshrl.u32 %v6711, %v6727
    %v6730 = vor.u32 %v6728, %v6729
    %v6731 = vsub.s32 4294967266, %v6726
    %v6732 = vadd.s32 %v6731, 127
    %v6733 = vshll.u32 %v6732, 23
    %v6734 = vor.u32 4788187, %v6733
    %v6735 = vand.u32 2147483647, %v6734
    %v6737 = vcvt.s32.f32 %v6730
    %v6738 = vmul.f32 %v6737, %v6735
    %v6739 = vxor.u32 %v6738, 2147483648
    %v6740 = vsel %vm6619, %v6739, %v6738
    %v6741 = vsub.s32 4, %v6717
    %v6742 = vsel %vm6619, %v6741, %v6717
    %v6743 = vsel %vm6618, %v5685, %v6740
    %v6744 = vsel %vm6618, 0, %v6742
    %v6745 = vmul.f32 %v6743, %v6743
    %v6746 = vmul.f32 %v6745, -0.001358992
    %v6747 = vadd.f32 %v6746, 0.041655596
    %v6748 = vmul.f32 %v6745, %v6747
    %v6749 = vadd.f32 %v6748, -0.4999988
    %v6750 = vmul.f32 %v6745, %v6749
    %v6751 = vadd.f32 1.0, %v6750
    %v6752 = vmul.f32 %v6743, %v6743
    %v6753 = vmul.f32 %v6752, -0.00019511016
    %v6754 = vadd.f32 %v6753, 0.008332121
    %v6755 = vmul.f32 %v6752, %v6754
    %v6756 = vadd.f32 %v6755, -0.16666654
    %v6757 = vmul.f32 %v6752, %v6756
    %v6758 = vadd.f32 %v6757, 1.0
    %v6759 = vmul.f32 %v6758, %v6743
    %vm6760 = vweird.f32 %v5685
    %v6761 = vadd.s32 %v6744, 3
    %v6762 = vand.u32 %v6761, 3
    %vm6763 = vcmp.lt.s32.totalorder %v6762, 2
    %vm6764 = vcmp.eq.s32.totalorder %v6762, 0
    %v6765 = vxor.u32 %v6759, 2147483648
    %v6766 = vsel %vm6764, %v6751, %v6765
    %vm6767 = vcmp.eq.s32.totalorder %v6762, 2
    %v6768 = vxor.u32 %v6751, 2147483648
    %v6769 = vsel %vm6767, %v6768, %v6759
    %v6770 = vsel %vm6763, %v6766, %v6769
    %v6771 = vsel %vm6760, nan, %v6770
    %v6772 = vand.u32 2147483647, %v5686
    %vm6773 = vcmp.le.f32.partialorder %v6772, 0.7853982
    %vm6774 = vcmp.lt.s32.totalorder %v5686, 0
    %v6775 = vand.u32 %v5686, 2139095040
    %v6776 = vshrl.u32 %v6775, 23
    %v6777 = vsub.s32 %v6776, 127
    %v6778 = vand.u32 2147483647, %v5686
    %v6779 = vand.u32 %v6778, 8388607
    %v6780 = vor.u32 %v6779, 8388608
    %v6781 = vsub.s32 0, %v6780
    %v6782 = vadd.s32 %v6777, 1
    %vm6783 = vcmp.gt.s32.totalorder %v6782, 0
    %v6784 = vsel %vm6783, %v6782, 0
    %v6785 = vshrl.u32 %v6784, 5
    %v6786 = vand.u32 %v6784, 31
    %v6787 = vsub.s32 32, %v6786
    %v6788 = vshrl.u32 683565275, %v6787
    %v6789 = vshll.u32 683565275, %v6786
    %v6790 = vshrl.u32 2475754826, %v6787
    %v6791 = vor.u32 %v6789, %v6790
    %v6792 = vshll.u32 2475754826, %v6786
    %v6793 = vshrl.u32 2131351028, %v6787
    %v6794 = vor.u32 %v6792, %v6793
    %v6795 = vshll.u32 2131351028, %v6786
    %v6796 = vshrl.u32 2102212464, %v6787
    %v6797 = vor.u32 %v6795, %v6796
    %v6798 = vshll.u32 2102212464, %v6786
    %v6799 = vshrl.u32 920167782, %v6787
    %v6800 = vor.u32 %v6798, %v6799
    %v6801 = vshll.u32 920167782, %v6786
    %v6802 = vshrl.u32 1326507024, %v6787
    %v6803 = vor.u32 %v6801, %v6802
    %vm6804 = vcmp.lt.s32.totalorder %v6785, 1
    %vm6805 = vcmp.lt.s32.totalorder %v6785, 2
    %vm6806 = vcmp.lt.s32.totalorder %v6785, 3
    %vm6807 = vcmp.lt.s32.totalorder %v6785, 4
    %v6808 = vsel %vm6804, %v6788, %v6791
    %v6809 = vsel %vm6807, %v6797, 2102212464
    %v6810 = vsel %vm6806, %v6794, %v6809
    %v6811 = vsel %vm6805, %v6808, %v6810
    %v6812 = vsel %vm6804, %v6791, %v6794
    %v6813 = vsel %vm6807, %v6800, 920167782
    %v6814 = vsel %vm6806, %v6797, %v6813
    %v6815 = vsel %vm6805, %v6812, %v6814
    %v6816 = vsel %vm6804, %v6794, %v6797
    %v6817 = vsel %vm6807, %v6803, 1326507024
    %v6818 = vsel %vm6806, %v6800, %v6817
    %v6819 = vsel %vm6805, %v6816, %v6818
    %v6820 = vshll.u32 %v6780, 8
    %v6821 = vand.u32 %v6820, 65535
    %v6822 = vshrl.u32 %v6820, 16
    %v6823 = vand.u32 %v6819, 65535
    %v6824 = vshrl.u32 %v6819, 16
    %v6825 = vmul.u32 %v6821, %v6823
    %v6826 = vmul.u32 %v6821, %v6824
    %v6827 = vmul.u32 %v6822, %v6823
    %v6828 = vmul.u32 %v6822, %v6824
    %v6829 = vshll.u32 %v6826, 16
    %v6830 = vshrl.u32 %v6826, 16
    %v6831 = vshll.u32 %v6827, 16
    %v6832 = vshrl.u32 %v6827, 16
    %vm6833 = vc.u32 %v6825, %v6829
    %v6834 = vsel %vm6833, 1, 0
    %v6835 = vadd.s32 %v6825, %v6829
    %v6836 = vadd.s32 %v6828, %v6834
    %vm6837 = vc.u32 %v6835, %v6831
    %v6838 = vsel %vm6837, 1, 0
    %v6839 = vadd.s32 %v6835, %v6831
    %v6840 = vadd.s32 %v6836, %v6838
    %v6841 = vadd.s32 %v6840, %v6830
    %v6842 = vadd.s32 %v6841, %v6832
    %v6843 = vand.u32 %v6820, 65535
    %v6844 = vshrl.u32 %v6820, 16
    %v6845 = vand.u32 %v6815, 65535
    %v6846 = vshrl.u32 %v6815, 16
    %v6847 = vmul.u32 %v6843, %v6845
    %v6848 = vmul.u32 %v6843, %v6846
    %v6849 = vmul.u32 %v6844, %v6845
    %v6850 = vmul.u32 %v6844, %v6846
    %v6851 = vshll.u32 %v6848, 16
    %v6852 = vshrl.u32 %v6848, 16
    %v6853 = vshll.u32 %v6849, 16
    %v6854 = vshrl.u32 %v6849, 16
    %vm6855 = vc.u32 %v6847, %v6851
    %v6856 = vsel %vm6855, 1, 0
    %v6857 = vadd.s32 %v6847, %v6851
    %v6858 = vadd.s32 %v6850, %v6856
    %vm6859 = vc.u32 %v6857, %v6853
    %v6860 = vsel %vm6859, 1, 0
    %v6861 = vadd.s32 %v6857, %v6853
    %v6862 = vadd.s32 %v6858, %v6860
    %v6863 = vadd.s32 %v6862, %v6852
    %v6864 = vadd.s32 %v6863, %v6854
    %v6865 = vmul.u32 %v6820, %v6811
    %v6866 = vadd.s32 %v6842, %v6861
    %vm6867 = vc.u32 %v6842, %v6861
    %v6868 = vadd.s32 %v6864, 1
    %v6869 = vsel %vm6867, %v6868, %v6864
    %v6870 = vadd.s32 %v6865, %v6869
    %v6871 = vadd.s32 %v6870, 536870912
    %v6872 = vshrl.u32 %v6871, 30
    %v6873 = vshll.u32 %v6872, 30
    %v6874 = vsub.s32 %v6870, %v6873
    %vm6875 = vcmp.lt.s32.totalorder %v6874, 0
    %v6876 = vsub.s32 0, %v6874
    %v6877 = vsel %vm6875, %v6876, %v6874
    %v6878 = vclz %v6877
    %v6879 = vsub.s32 %v6878, 2
    %vm6880 = vcmp.gt.s32.totalorder 0, %v6879
    %v6881 = vsel %vm6880, 0, %v6879
    %v6882 = vsub.s32 32, %v6881
    %v6883 = vshll.u32 %v6874, %v6881
    %v6884 = vshrl.u32 %v6866, %v6882
    %v6885 = vor.u32 %v6883, %v6884
    %v6886 = vsub.s32 4294967266, %v6881
    %v6887 = vadd.s32 %v6886, 127
    %v6888 = vshll.u32 %v6887, 23
    %v6889 = vor.u32 4788187, %v6888
    %v6890 = vand.u32 2147483647, %v6889
    %v6892 = vcvt.s32.f32 %v6885
    %v6893 = vmul.f32 %v6892, %v6890
    %v6894 = vxor.u32 %v6893, 2147483648
    %v6895 = vsel %vm6774, %v6894, %v6893
    %v6896 = vsub.s32 4, %v6872
    %v6897 = vsel %vm6774, %v6896, %v6872
    %v6898 = vsel %vm6773, %v5686, %v6895
    %v6899 = vsel %vm6773, 0, %v6897
    %v6900 = vmul.f32 %v6898, %v6898
    %v6901 = vmul.f32 %v6900, -0.001358992
    %v6902 = vadd.f32 %v6901, 0.041655596
    %v6903 = vmul.f32 %v6900, %v6902
    %v6904 = vadd.f32 %v6903, -0.4999988
    %v6905 = vmul.f32 %v6900, %v6904
    %v6906 = vadd.f32 1.0, %v6905
    %v6907 = vmul.f32 %v6898, %v6898
    %v6908 = vmul.f32 %v6907, -0.00019511016
    %v6909 = vadd.f32 %v6908, 0.008332121
    %v6910 = vmul.f32 %v6907, %v6909
    %v6911 = vadd.f32 %v6910, -0.16666654
    %v6912 = vmul.f32 %v6907, %v6911
    %v6913 = vadd.f32 %v6912, 1.0
    %v6914 = vmul.f32 %v6913, %v6898
    %vm6915 = vweird.f32 %v5686
    %v6916 = vadd.s32 %v6899, 3
    %v6917 = vand.u32 %v6916, 3
    %vm6918 = vcmp.lt.s32.totalorder %v6917, 2
    %vm6919 = vcmp.eq.s32.totalorder %v6917, 0
    %v6920 = vxor.u32 %v6914, 2147483648
    %v6921 = vsel %vm6919, %v6906, %v6920
    %vm6922 = vcmp.eq.s32.totalorder %v6917, 2
    %v6923 = vxor.u32 %v6906, 2147483648
    %v6924 = vsel %vm6922, %v6923, %v6914
    %v6925 = vsel %vm6918, %v6921, %v6924
    %v6926 = vsel %vm6915, nan, %v6925
    %v6927 = vmul.f32 %v5841, 0.5
    %v6928 = vmul.f32 %v5996, 0.5
    %v6929 = vmul.f32 %v6151, 0.5
    %v6930 = vmul.f32 %v6306, 0.5
    %v6931 = vmul.f32 %v6461, 0.5
    %v6932 = vmul.f32 %v6616, 0.5
    %v6933 = vmul.f32 %v6771, 0.5
    %v6934 = vmul.f32 %v6926, 0.5
    %v6935 = vadd.f32 %v5659, %v6927
    %v6936 = vadd.f32 %v5660, %v6928
    %v6937 = vadd.f32 %v5661, %v6929
    %v6938 = vadd.f32 %v5662, %v6930
    %v6939 = vadd.f32 %v5663, %v6931
    %v6940 = vadd.f32 %v5664, %v6932
    %v6941 = vadd.f32 %v5665, %v6933
    %v6942 = vadd.f32 %v5666, %v6934
    %v6943 = vld [vmem:[#allocation7] sm:$0xff]
    %v6944 = vld [vmem:[#allocation7 + $0x8] sm:$0xff]
    %v6945 = vld [vmem:[#allocation7 + $0x10] sm:$0xff]
    %v6946 = vld [vmem:[#allocation7 + $0x18] sm:$0xff]
    %v6947 = vld [vmem:[#allocation7 + $0x20] sm:$0xff]
    %v6948 = vld [vmem:[#allocation7 + $0x28] sm:$0xff]
    %v6949 = vld [vmem:[#allocation7 + $0x30] sm:$0xff]
    %v6950 = vld [vmem:[#allocation7 + $0x38] sm:$0xff]
    %6951 = vset.pattern.permute.xlu0 15
    %6952 = vperm.xlu0 %6951, %v81
    %v6953 = vpop.permute.xlu0 %6952
    %v6955 = vmul.f32 %v6943, %v6953
    %v6956 = vmul.f32 %v6944, %v6953
    %v6957 = vmul.f32 %v6945, %v6953
    %v6958 = vmul.f32 %v6946, %v6953
    %v6959 = vmul.f32 %v6947, %v6953
    %v6960 = vmul.f32 %v6948, %v6953
    %v6961 = vmul.f32 %v6949, %v6953
    %v6962 = vmul.f32 %v6950, %v6953
    %v6963 = vadd.f32 %v6935, %v6955
    %v6964 = vadd.f32 %v6936, %v6956
    %v6965 = vadd.f32 %v6937, %v6957
    %v6966 = vadd.f32 %v6938, %v6958
    %v6967 = vadd.f32 %v6939, %v6959
    %v6968 = vadd.f32 %v6940, %v6960
    %v6969 = vadd.f32 %v6941, %v6961
    %v6970 = vadd.f32 %v6942, %v6962
    %v6971 = vld [vmem:[#allocation8] sm:$0xff]
    %v6972 = vld [vmem:[#allocation8 + $0x8] sm:$0xff]
    %v6973 = vld [vmem:[#allocation8 + $0x10] sm:$0xff]
    %v6974 = vld [vmem:[#allocation8 + $0x18] sm:$0xff]
    %v6975 = vld [vmem:[#allocation8 + $0x20] sm:$0xff]
    %v6976 = vld [vmem:[#allocation8 + $0x28] sm:$0xff]
    %v6977 = vld [vmem:[#allocation8 + $0x30] sm:$0xff]
    %v6978 = vld [vmem:[#allocation8 + $0x38] sm:$0xff]
    %v6979 = vsub.f32 %v6971, 0.5
    %v6980 = vsub.f32 %v6972, 0.5
    %v6981 = vsub.f32 %v6973, 0.5
    %v6982 = vsub.f32 %v6974, 0.5
    %v6983 = vsub.f32 %v6975, 0.5
    %v6984 = vsub.f32 %v6976, 0.5
    %v6985 = vsub.f32 %v6977, 0.5
    %v6986 = vsub.f32 %v6978, 0.5
    %6987 = vset.pattern.permute.xlu0 16
    %6988 = vperm.xlu0 %6987, %v81
    %v6989 = vpop.permute.xlu0 %6988
    %v6991 = vmul.f32 %v6979, %v6989
    %v6992 = vmul.f32 %v6980, %v6989
    %v6993 = vmul.f32 %v6981, %v6989
    %v6994 = vmul.f32 %v6982, %v6989
    %v6995 = vmul.f32 %v6983, %v6989
    %v6996 = vmul.f32 %v6984, %v6989
    %v6997 = vmul.f32 %v6985, %v6989
    %v6998 = vmul.f32 %v6986, %v6989
    %v6999 = vadd.f32 %v6963, %v6991
    %v7000 = vadd.f32 %v6964, %v6992
    %v7001 = vadd.f32 %v6965, %v6993
    %v7002 = vadd.f32 %v6966, %v6994
    %v7003 = vadd.f32 %v6967, %v6995
    %v7004 = vadd.f32 %v6968, %v6996
    %v7005 = vadd.f32 %v6969, %v6997
    %v7006 = vadd.f32 %v6970, %v6998
    %7007 = vset.pattern.permute.xlu0 17
    %7008 = vperm.xlu0 %7007, %v81
    %v7009 = vpop.permute.xlu0 %7008
    %v7011 = vmul.f32 %v6999, %v7009
    %v7012 = vmul.f32 %v7000, %v7009
    %v7013 = vmul.f32 %v7001, %v7009
    %v7014 = vmul.f32 %v7002, %v7009
    %v7015 = vmul.f32 %v7003, %v7009
    %v7016 = vmul.f32 %v7004, %v7009
    %v7017 = vmul.f32 %v7005, %v7009
    %v7018 = vmul.f32 %v7006, %v7009
    %7019 = vset.pattern.permute.xlu0 18
    %7020 = vperm.xlu0 %7019, %v81
    %v7021 = vpop.permute.xlu0 %7020
    %v7023 = vadd.f32 %v7011, %v7021
    %v7024 = vadd.f32 %v7012, %v7021
    %v7025 = vadd.f32 %v7013, %v7021
    %v7026 = vadd.f32 %v7014, %v7021
    %v7027 = vadd.f32 %v7015, %v7021
    %v7028 = vadd.f32 %v7016, %v7021
    %v7029 = vadd.f32 %v7017, %v7021
    %v7030 = vadd.f32 %v7018, %v7021
    %v7031 = vmin.f32 %v7023, %v7027
    %v7032 = vmin.f32 %v7024, %v7028
    %v7033 = vmin.f32 %v7025, %v7029
    %v7034 = vmin.f32 %v7026, %v7030
    %v7035 = vmin.f32 %v7031, %v7032
    %v7036 = vmin.f32 %v7033, %v7034
    %v7037 = vmin.f32 %v7035, %v7036
    %7038 = vmin.xlane.f32.xlu0 %v7037
    %v7039 = vpop.xlane.xlu0 %7038
    %v7040 = vmax.f32 %v7023, %v7027
    %v7041 = vmax.f32 %v7024, %v7028
    %v7042 = vmax.f32 %v7025, %v7029
    %v7043 = vmax.f32 %v7026, %v7030
    %v7044 = vmax.f32 %v7040, %v7041
    %v7045 = vmax.f32 %v7042, %v7043
    %v7046 = vmax.f32 %v7044, %v7045
    %7047 = vmax.xlane.f32.xlu0 %v7046
    %v7048 = vpop.xlane.xlu0 %7047
    %v7049 = vsub.f32 %v7048, %v7039
    %v7050 = vadd.f32 %v7049, 1e-08
    %v7051 = vrcp.pop %v7050
    %v7052 = vmul.f32 %v7050, %v7051
    %v7053 = vsub.f32 1.0, %v7052
    %v7054 = vmul.f32 %v7051, %v7053
    %v7055 = vadd.f32 %v7051, %v7054
    %vm7056 = vweird.f32 %v7050
    %vm7057 = vweird.f32 %v7051
    %vm7058 = vmor %vm7056, %vm7057
    %v7059 = vsel %vm7058, %v7051, %v7055
    %v7060 = vand.u32 2147483647, %v7050
    %vm7061 = vcmp.eq.f32.partialorder %v7060, 8.507059e+37
    %v7062 = vand.u32 %v7050, 2147483648
    %v7063 = vor.u32 1.1754944e-38, %v7062
    %v7064 = vsel %vm7061, %v7063, %v7059
    %v7065 = vmul.f32 1.0, %v7064
    %v7066 = vsub.f32 %v7023, %v7039
    %v7067 = vsub.f32 %v7024, %v7039
    %v7068 = vsub.f32 %v7025, %v7039
    %v7069 = vsub.f32 %v7026, %v7039
    %v7070 = vsub.f32 %v7027, %v7039
    %v7071 = vsub.f32 %v7028, %v7039
    %v7072 = vsub.f32 %v7029, %v7039
    %v7073 = vsub.f32 %v7030, %v7039
    %v7074 = vmul.f32 %v7066, %v7065
    %v7075 = vmul.f32 %v7067, %v7065
    %v7076 = vmul.f32 %v7068, %v7065
    %v7077 = vmul.f32 %v7069, %v7065
    %v7078 = vmul.f32 %v7070, %v7065
    %v7079 = vmul.f32 %v7071, %v7065
    %v7080 = vmul.f32 %v7072, %v7065
    %v7081 = vmul.f32 %v7073, %v7065
    %7082 = vst [vmem:[#allocation10] sm:$0xff] %v7074
    %7083 = vst [vmem:[#allocation10 + $0x8] sm:$0xff] %v7075
    %7084 = vst [vmem:[#allocation10 + $0x10] sm:$0xff] %v7076
    %7085 = vst [vmem:[#allocation10 + $0x18] sm:$0xff] %v7077
    %7086 = vst [vmem:[#allocation10 + $0x20] sm:$0xff] %v7078
    %7087 = vst [vmem:[#allocation10 + $0x28] sm:$0xff] %v7079
    %7088 = vst [vmem:[#allocation10 + $0x30] sm:$0xff] %v7080
    %7089 = vst [vmem:[#allocation10 + $0x38] sm:$0xff] %v7081
    // Predicated region
    $region34: #{tpu_custom_call.1} parent=1 // pred_check
      _
    $region35: #{tpu_custom_call.1} parent=1 // pred_check_branch
      %7091 = sbr.rel (0) target = $region37
    $region36: #{tpu_custom_call.1} parent=1 // pred_region
      %7093 = vsyncadd [#allocation4], 0
      %s7095 = sshll.u32 [#allocation10], 4
      %s7096 = int_to_ptr.vmem [resolvable:$true] %s7095
      %s7097 = sshll.u32 %s4, 4
      %s7098 = int_to_ptr.hbm [resolvable:$true] %s7097
      %7100 = dma.vmem_to_hbm [thread:$0]  %s7096, 1024, %s7098, [#allocation4]
    $region37: #{tpu_custom_call.1} parent=1 // pred_fallthru
      _
    // Predicated region
    $region38: #{tpu_custom_call.1} parent=1 // pred_check
      _
    $region39: #{tpu_custom_call.1} parent=1 // pred_check_branch
      %7102 = sbr.rel (0) target = $region41
    $region40: #{tpu_custom_call.1} parent=1 // pred_region
      %7104 = dma.done [#allocation4], 1024
    $region41: #{tpu_custom_call.1} parent=1 // pred_fallthru
      _
    %7105 = vsyncpa [#allocation3], 1
    %7106 = vsyncpa [#allocation6], 1
    %7107 = vsyncpa [#allocation9], 1
    %7108 = vsyncpa [#allocation4], 1

</llo_original>
